<compile_context>
chip_gen: v5e
topology: v5e:2x2
jax: 0.10.0
libtpu: 0.0.40
codegen_flags: <defaults>
</compile_context>

<pallas_src>
from functools import partial

import numpy as np
import jax
import jax.numpy as jnp
from jax.experimental import pallas as pl
from jax.experimental.pallas import tpu as pltpu

ALPHA = 0.03      # LeakyReLU slope (DoubleConvLayer default)
BN_EPS = 1e-5


# ----------------------------------------------------------------------------
# The fused kernel
# ----------------------------------------------------------------------------
def make_unet_kernel(hidden):
    def kernel(*refs):
        x_ref, o_ref = refs[0], refs[-1]
        it = iter(refs[1:-1])
        nxt = lambda: next(it)

        def hshift(a, d):
            """Row h of the result holds input row h + d - 1 (zero outside)."""
            if d == 1:
                return a
            n, hh, ll = a.shape
            z = jnp.zeros((n, 1, ll), a.dtype)
            if d == 0:
                return jnp.concatenate([z, a[:, :hh - 1, :]], axis=1)
            return jnp.concatenate([a[:, 1:, :], z], axis=1)

        def conv_bn_lrelu(ins):
            """ins: [(act (n,h,Lin), w_ref (3,Lin,Lout)), ...] sharing (n,h).
            Consumes gamma, beta refs afterwards.  Returns (n, h, Lout)."""
            n, hh, _ = ins[0][0].shape
            acc = None
            for act, w_ref in ins:
                lin = act.shape[-1]
                for d in range(3):
                    a2 = hshift(act, d).reshape(n * hh, lin)
                    c = jnp.dot(a2, w_ref[d], preferred_element_type=jnp.float32)
                    acc = c if acc is None else acc + c
            gamma = nxt()[...]                      # (1, C)
            beta = nxt()[...]                       # (1, C)
            cch = gamma.shape[-1]
            lout = acc.shape[-1]
            wpx = lout // cch
            # ---- train-mode BatchNorm, one pass (sum & sum-of-squares) -----
            cnt = float(n * hh * wpx)
            s1 = jnp.sum(acc, axis=0, keepdims=True)            # (1, W*C)
            s2 = jnp.sum(acc * acc, axis=0, keepdims=True)      # (1, W*C)
            # Fold W lane-groups -> per-channel sums, and expand back, as tiny
            # matmuls on the idle MXU instead of lane-splitting reshapes.
            fold = (jax.lax.broadcasted_iota(jnp.int32, (lout, cch), 0) % cch ==
                    jax.lax.broadcasted_iota(jnp.int32, (lout, cch), 1)
                    ).astype(jnp.float32)                       # (W*C, C)
            expand = (jax.lax.broadcasted_iota(jnp.int32, (cch, lout), 0) ==
                      jax.lax.broadcasted_iota(jnp.int32, (cch, lout), 1) % cch
                      ).astype(jnp.float32)                     # (C, W*C)
            s1c = jnp.dot(s1, fold, preferred_element_type=jnp.float32)
            s2c = jnp.dot(s2, fold, preferred_element_type=jnp.float32)
            mean = s1c / cnt
            var = s2c / cnt - mean * mean
            scale = gamma * jax.lax.rsqrt(var + BN_EPS)
            shift = beta - mean * scale
            scale_l = jnp.dot(scale, expand, preferred_element_type=jnp.float32)
            shift_l = jnp.dot(shift, expand, preferred_element_type=jnp.float32)
            y = acc * scale_l + shift_l
            y = jnp.where(y > 0, y, ALPHA * y)                  # LeakyReLU
            return y.reshape(n, hh, lout)

        def double_conv(act, extra=None):
            ins = [(act, nxt())]
            if extra is not None:                   # split-weight skip path
                ins.append((extra, nxt()))
            y = conv_bn_lrelu(ins)
            return conv_bn_lrelu([(y, nxt())])

        def pool(act, c):
            """2x2/2 max pool.  H is compacted; W stays lane-uncompacted (valid
            data in even w-blocks only; the consuming conv's Toeplitz weights
            have zero rows for the odd blocks)."""
            n, hh, ll = act.shape
            shifted = jnp.concatenate([act[..., c:], act[..., -c:]], axis=-1)
            m = jnp.maximum(act, shifted).reshape(n, hh // 2, 2, ll)
            return jnp.maximum(m[:, :, 0, :], m[:, :, 1, :])

        def up(act):
            """ConvTranspose2d(k=2, s=2): 2 matmuls (dy=0/1) + row interleave."""
            wu = nxt()                  # (2, W*Cin, 2W*Cout)
            bu = nxt()[...]             # (1, 2W*Cout)
            n, hh, ll = act.shape
            a2 = act.reshape(n * hh, ll)
            y0 = jnp.dot(a2, wu[0], preferred_element_type=jnp.float32) + bu
            y1 = jnp.dot(a2, wu[1], preferred_element_type=jnp.float32) + bu
            lo = y0.shape[-1]
            y = jnp.stack([y0.reshape(n, hh, lo), y1.reshape(n, hh, lo)], axis=2)
            return y.reshape(n, 2 * hh, lo)

        h = hidden
        x = x_ref[...]                          # (N, 16, 16*Cin) lane-packed
        x1 = double_conv(x)                     # (N, 16, 16*h )
        x2 = double_conv(pool(x1, h))           # (N,  8,  8*2h)
        x3 = double_conv(pool(x2, 2 * h))       # (N,  4,  4*4h)
        x4 = double_conv(pool(x3, 4 * h))       # (N,  2,  2*8h)
        x5 = double_conv(x3, up(x4))            # (N,  4,  4*4h)  skip + up
        x6 = double_conv(x2, up(x5))            # (N,  8,  8*2h)
        x7 = double_conv(x1, up(x6))            # (N, 16, 16*h )

        n, hh, ll = x7.shape
        o_ref[...] = x7.reshape(n * hh, ll)     # lane-dense (N*H, W*C) store

    return kernel


# ----------------------------------------------------------------------------
# Host-side weight expansion (one-time, at init)
# ----------------------------------------------------------------------------
def _toeplitz_conv(k_oihw, w_in, w_out, pooled):
    """k_oihw: (Cout, Cin, 3, 3) PyTorch layout.
    Returns (3, w_in*Cin, w_out*Cout) f32 per-dy matmul matrices.
    pooled=False: input block b is pixel b (same-width conv).
    pooled=True : input block b is pixel b//2 for even b, unused for odd b
                  (W-uncompacted max-pool output)."""
    cout, cin = k_oihw.shape[0], k_oihw.shape[1]
    k = np.transpose(np.asarray(k_oihw, np.float32), (2, 3, 1, 0))  # (3,3,Cin,Cout)
    m = np.zeros((3, w_in * cin, w_out * cout), np.float32)
    for b in range(w_in):
        if pooled:
            if b % 2:
                continue
            p = b // 2
        else:
            p = b
        for wo in range(w_out):
            dx = p - wo + 1
            if 0 <= dx < 3:
                m[:, b * cin:(b + 1) * cin, wo * cout:(wo + 1) * cout] = k[:, dx]
    return m


def _toeplitz_convT(k_iohw, w_pix):
    """k_iohw: (Cin, Cout, 2, 2). Returns (2, w_pix*Cin, 2*w_pix*Cout) f32."""
    k = np.asarray(k_iohw, np.float32)
    cin, cout = k.shape[0], k.shape[1]
    m = np.zeros((2, w_pix * cin, 2 * w_pix * cout), np.float32)
    for w in range(w_pix):
        for dx in range(2):
            m[:, w * cin:(w + 1) * cin,
              (2 * w + dx) * cout:(2 * w + dx + 1) * cout] = \
                k[:, :, :, dx].transpose(2, 0, 1)
    return m


def pack_params(raw, W, hidden):
    """Flatten raw (PyTorch-layout) params into the exact order and matmul
    shapes the kernel consumes."""
    h = hidden
    flat = []

    def add_conv(p, w_in, w_out, pooled, split=None):
        w = np.asarray(p["w"], np.float32)
        if split is None:
            flat.append(_toeplitz_conv(w, w_in, w_out, pooled))
        else:
            flat.append(_toeplitz_conv(w[:, :split], w_in, w_out, False))   # skip half
            flat.append(_toeplitz_conv(w[:, split:], w_in, w_out, False))   # up half
        flat.append(np.asarray(p["gamma"], np.float32)[None, :])
        flat.append(np.asarray(p["beta"], np.float32)[None, :])

    def add_dconv(p, w_in, w_out, pooled, split=None):
        add_conv(p["a"], w_in, w_out, pooled, split)
        add_conv(p["b"], w_out, w_out, False)

    def add_up(p, w_pix):
        flat.append(_toeplitz_convT(p["w"], w_pix))
        b = np.asarray(p["b"], np.float32)
        flat.append(np.tile(b, 2 * w_pix)[None, :])

    W1, W2, W3, W4 = W, W // 2, W // 4, W // 8
    add_dconv(raw["conv1"], W1, W1, False)
    add_dconv(raw["conv2"], W1, W2, True)
    add_dconv(raw["conv3"], W2, W3, True)
    add_dconv(raw["conv4"], W3, W4, True)
    add_up(raw["uconv4"], W4)
    add_dconv(raw["conv5"], W3, W3, False, split=4 * h)
    add_up(raw["uconv5"], W3)
    add_dconv(raw["conv6"], W2, W2, False, split=2 * h)
    add_up(raw["uconv6"], W2)
    add_dconv(raw["conv7"], W1, W1, False, split=h)
    return [jnp.asarray(a) for a in flat]


# ----------------------------------------------------------------------------
# Wrapper: one pallas_call for the whole network
# ----------------------------------------------------------------------------
@partial(jax.jit, static_argnums=(2,))
def cropped_unet_forward(x_nchw, flat_params, hidden):
    N, C_in, H, W = x_nchw.shape
    # NCHW -> lane-packed (N, H, W*C_in); with C_in == 1 this is a pure reshape.
    if C_in == 1:
        x = x_nchw.reshape(N, H, W).astype(jnp.float32)
    else:
        x = jnp.transpose(x_nchw, (0, 2, 3, 1)).reshape(N, H, W * C_in)
        x = x.astype(jnp.float32)

    vmem = pl.BlockSpec(memory_space=pltpu.MemorySpace.VMEM)
    out2d = pl.pallas_call(
        make_unet_kernel(hidden),
        out_shape=jax.ShapeDtypeStruct((N * H, W * hidden), jnp.float32),
        in_specs=[vmem] * (1 + len(flat_params)),
        out_specs=vmem,
    )(x, *flat_params)

    # lane-dense (N*H, W*C) slab -> NCHW (single fused reshape+transpose)
    return jnp.transpose(out2d.reshape(N, H, W, hidden), (0, 3, 1, 2))


# ----------------------------------------------------------------------------
# Deterministic parameter construction (PyTorch-style layouts)
# ----------------------------------------------------------------------------
def init_raw_params(key, in_ch=1, hidden=8):
    def conv(k, cin, cout):
        k1, k2, k3 = jax.random.split(k, 3)
        w = jax.random.normal(k1, (cout, cin, 3, 3), jnp.float32) / np.sqrt(9.0 * cin)
        gamma = 1.0 + 0.1 * jax.random.normal(k2, (cout,), jnp.float32)
        beta = 0.1 * jax.random.normal(k3, (cout,), jnp.float32)
        # Conv2d bias omitted: exactly cancelled by train-mode BatchNorm.
        return {"w": w, "gamma": gamma, "beta": beta}

    def dconv(k, cin, cout):
        ka, kb = jax.random.split(k)
        return {"a": conv(ka, cin, cout), "b": conv(kb, cout, cout)}

    def upconv(k, cin, cout):
        k1, k2 = jax.random.split(k)
        w = jax.random.normal(k1, (cin, cout, 2, 2), jnp.float32) / np.sqrt(4.0 * cin)
        b = 0.1 * jax.random.normal(k2, (cout,), jnp.float32)
        return {"w": w, "b": b}

    ks = jax.random.split(key, 10)
    h = hidden
    return {
        "conv1": dconv(ks[0], in_ch, h),
        "conv2": dconv(ks[1], h, 2 * h),
        "conv3": dconv(ks[2], 2 * h, 4 * h),
        "conv4": dconv(ks[3], 4 * h, 8 * h),
        "uconv4": upconv(ks[4], 8 * h, 4 * h),
        "conv5": dconv(ks[5], 8 * h, 4 * h),
        "uconv5": upconv(ks[6], 4 * h, 2 * h),
        "conv6": dconv(ks[7], 4 * h, 2 * h),
        "uconv6": upconv(ks[8], 2 * h, h),
        "conv7": dconv(ks[9], 2 * h, h),
    }


if __name__ == "__main__":
    key = jax.random.PRNGKey(0)
    k_x, k_p = jax.random.split(key)

    N, C_in, H, W = 2, 1, 16, 16
    hidden = 8                                   # W*C = 128 lanes at every level
    x = jax.random.normal(k_x, (N, C_in, H, W), jnp.float32)   # NCHW like PyTorch

    raw = init_raw_params(k_p, in_ch=C_in, hidden=hidden)
    flat = pack_params(raw, W, hidden)

    out = cropped_unet_forward(x, flat, hidden)
    out = jax.block_until_ready(out)

    assert out.shape == (N, hidden, H, W), out.shape
    assert bool(jnp.all(jnp.isfinite(out)))
    print("KERNEL_OK")
</pallas_src>

<mosaic_0001>
module attributes {stable_mosaic.version = 11 : i64} {
  func.func @kernel(%arg0: memref<2x16x16xf32, #tpu.memory_space<vmem>>, %arg1: memref<3x16x128xf32, #tpu.memory_space<vmem>>, %arg2: memref<1x8xf32, #tpu.memory_space<vmem>>, %arg3: memref<1x8xf32, #tpu.memory_space<vmem>>, %arg4: memref<3x128x128xf32, #tpu.memory_space<vmem>>, %arg5: memref<1x8xf32, #tpu.memory_space<vmem>>, %arg6: memref<1x8xf32, #tpu.memory_space<vmem>>, %arg7: memref<3x128x128xf32, #tpu.memory_space<vmem>>, %arg8: memref<1x16xf32, #tpu.memory_space<vmem>>, %arg9: memref<1x16xf32, #tpu.memory_space<vmem>>, %arg10: memref<3x128x128xf32, #tpu.memory_space<vmem>>, %arg11: memref<1x16xf32, #tpu.memory_space<vmem>>, %arg12: memref<1x16xf32, #tpu.memory_space<vmem>>, %arg13: memref<3x128x128xf32, #tpu.memory_space<vmem>>, %arg14: memref<1x32xf32, #tpu.memory_space<vmem>>, %arg15: memref<1x32xf32, #tpu.memory_space<vmem>>, %arg16: memref<3x128x128xf32, #tpu.memory_space<vmem>>, %arg17: memref<1x32xf32, #tpu.memory_space<vmem>>, %arg18: memref<1x32xf32, #tpu.memory_space<vmem>>, %arg19: memref<3x128x128xf32, #tpu.memory_space<vmem>>, %arg20: memref<1x64xf32, #tpu.memory_space<vmem>>, %arg21: memref<1x64xf32, #tpu.memory_space<vmem>>, %arg22: memref<3x128x128xf32, #tpu.memory_space<vmem>>, %arg23: memref<1x64xf32, #tpu.memory_space<vmem>>, %arg24: memref<1x64xf32, #tpu.memory_space<vmem>>, %arg25: memref<2x128x128xf32, #tpu.memory_space<vmem>>, %arg26: memref<1x128xf32, #tpu.memory_space<vmem>>, %arg27: memref<3x128x128xf32, #tpu.memory_space<vmem>>, %arg28: memref<3x128x128xf32, #tpu.memory_space<vmem>>, %arg29: memref<1x32xf32, #tpu.memory_space<vmem>>, %arg30: memref<1x32xf32, #tpu.memory_space<vmem>>, %arg31: memref<3x128x128xf32, #tpu.memory_space<vmem>>, %arg32: memref<1x32xf32, #tpu.memory_space<vmem>>, %arg33: memref<1x32xf32, #tpu.memory_space<vmem>>, %arg34: memref<2x128x128xf32, #tpu.memory_space<vmem>>, %arg35: memref<1x128xf32, #tpu.memory_space<vmem>>, %arg36: memref<3x128x128xf32, #tpu.memory_space<vmem>>, %arg37: memref<3x128x128xf32, #tpu.memory_space<vmem>>, %arg38: memref<1x16xf32, #tpu.memory_space<vmem>>, %arg39: memref<1x16xf32, #tpu.memory_space<vmem>>, %arg40: memref<3x128x128xf32, #tpu.memory_space<vmem>>, %arg41: memref<1x16xf32, #tpu.memory_space<vmem>>, %arg42: memref<1x16xf32, #tpu.memory_space<vmem>>, %arg43: memref<2x128x128xf32, #tpu.memory_space<vmem>>, %arg44: memref<1x128xf32, #tpu.memory_space<vmem>>, %arg45: memref<3x128x128xf32, #tpu.memory_space<vmem>>, %arg46: memref<3x128x128xf32, #tpu.memory_space<vmem>>, %arg47: memref<1x8xf32, #tpu.memory_space<vmem>>, %arg48: memref<1x8xf32, #tpu.memory_space<vmem>>, %arg49: memref<3x128x128xf32, #tpu.memory_space<vmem>>, %arg50: memref<1x8xf32, #tpu.memory_space<vmem>>, %arg51: memref<1x8xf32, #tpu.memory_space<vmem>>, %arg52: memref<32x128xf32, #tpu.memory_space<vmem>>) attributes {dimension_semantics = [], scalar_prefetch = 0 : i64, scratch_operands = 0 : i64, tpu.core_type = #tpu.core_type<tc>} {
    %c0 = arith.constant 0 : index
    %c0_0 = arith.constant 0 : index
    %c0_1 = arith.constant 0 : index
    %0 = vector.load %arg0[%c0, %c0_0, %c0_1] : memref<2x16x16xf32, #tpu.memory_space<vmem>>, vector<2x16x16xf32>
    %cst = arith.constant 0.000000e+00 : f32
    %1 = vector.broadcast %cst : f32 to vector<2x1x16xf32>
    %2 = vector.extract_strided_slice %0 {offsets = [0, 0, 0], sizes = [2, 15, 16], strides = [1, 1, 1]} : vector<2x16x16xf32> to vector<2x15x16xf32>
    %3 = tpu.concatenate %1, %2 in 1 : vector<2x1x16xf32>, vector<2x15x16xf32> -> vector<2x16x16xf32>
    %4 = vector.shape_cast %3 : vector<2x16x16xf32> to vector<32x16xf32>
    %c0_2 = arith.constant 0 : index
    %c0_3 = arith.constant 0 : index
    %c0_4 = arith.constant 0 : index
    %5 = vector.load %arg1[%c0_2, %c0_3, %c0_4] : memref<3x16x128xf32, #tpu.memory_space<vmem>>, vector<1x16x128xf32>
    %6 = vector.shape_cast %5 : vector<1x16x128xf32> to vector<16x128xf32>
    %cst_5 = arith.constant dense<0.000000e+00> : vector<32x128xf32>
    %7 = tpu.matmul %4, %6, %cst_5 {dimension_numbers = #tpu.dot_dimension_numbers<[1], [0], [0], [1], [0, 0, 1, 1], [], []>} : vector<32x16xf32>, vector<16x128xf32>, vector<32x128xf32> -> vector<32x128xf32>
    %8 = vector.shape_cast %0 : vector<2x16x16xf32> to vector<32x16xf32>
    %c1 = arith.constant 1 : index
    %c0_6 = arith.constant 0 : index
    %c0_7 = arith.constant 0 : index
    %9 = vector.load %arg1[%c1, %c0_6, %c0_7] : memref<3x16x128xf32, #tpu.memory_space<vmem>>, vector<1x16x128xf32>
    %10 = vector.shape_cast %9 : vector<1x16x128xf32> to vector<16x128xf32>
    %cst_8 = arith.constant dense<0.000000e+00> : vector<32x128xf32>
    %11 = tpu.matmul %8, %10, %cst_8 {dimension_numbers = #tpu.dot_dimension_numbers<[1], [0], [0], [1], [0, 0, 1, 1], [], []>} : vector<32x16xf32>, vector<16x128xf32>, vector<32x128xf32> -> vector<32x128xf32>
    %12 = arith.addf %7, %11 : vector<32x128xf32>
    %cst_9 = arith.constant 0.000000e+00 : f32
    %13 = vector.broadcast %cst_9 : f32 to vector<2x1x16xf32>
    %14 = vector.extract_strided_slice %0 {offsets = [0, 1, 0], sizes = [2, 15, 16], strides = [1, 1, 1]} : vector<2x16x16xf32> to vector<2x15x16xf32>
    %15 = tpu.concatenate %14, %13 in 1 : vector<2x15x16xf32>, vector<2x1x16xf32> -> vector<2x16x16xf32>
    %16 = vector.shape_cast %15 : vector<2x16x16xf32> to vector<32x16xf32>
    %c2 = arith.constant 2 : index
    %c0_10 = arith.constant 0 : index
    %c0_11 = arith.constant 0 : index
    %17 = vector.load %arg1[%c2, %c0_10, %c0_11] : memref<3x16x128xf32, #tpu.memory_space<vmem>>, vector<1x16x128xf32>
    %18 = vector.shape_cast %17 : vector<1x16x128xf32> to vector<16x128xf32>
    %cst_12 = arith.constant dense<0.000000e+00> : vector<32x128xf32>
    %19 = tpu.matmul %16, %18, %cst_12 {dimension_numbers = #tpu.dot_dimension_numbers<[1], [0], [0], [1], [0, 0, 1, 1], [], []>} : vector<32x16xf32>, vector<16x128xf32>, vector<32x128xf32> -> vector<32x128xf32>
    %20 = arith.addf %12, %19 : vector<32x128xf32>
    %c0_13 = arith.constant 0 : index
    %c0_14 = arith.constant 0 : index
    %21 = vector.load %arg2[%c0_13, %c0_14] : memref<1x8xf32, #tpu.memory_space<vmem>>, vector<1x8xf32>
    %c0_15 = arith.constant 0 : index
    %c0_16 = arith.constant 0 : index
    %22 = vector.load %arg3[%c0_15, %c0_16] : memref<1x8xf32, #tpu.memory_space<vmem>>, vector<1x8xf32>
    %cst_17 = arith.constant dense<0.000000e+00> : vector<128xf32>
    %23 = vector.multi_reduction <add>, %20, %cst_17 [0] : vector<32x128xf32> to vector<128xf32>
    %24 = vector.shape_cast %23 : vector<128xf32> to vector<1x128xf32>
    %25 = arith.mulf %20, %20 : vector<32x128xf32>
    %cst_18 = arith.constant dense<0.000000e+00> : vector<128xf32>
    %26 = vector.multi_reduction <add>, %25, %cst_18 [0] : vector<32x128xf32> to vector<128xf32>
    %27 = vector.shape_cast %26 : vector<128xf32> to vector<1x128xf32>
    %28 = tpu.iota {dimensions = array<i32: 0>} : vector<128x8xi32>
    %c8_i32 = arith.constant 8 : i32
    %c0_i32 = arith.constant 0 : i32
    %29 = arith.cmpi eq, %c8_i32, %c0_i32 : i32
    %c1_i32 = arith.constant 1 : i32
    %30 = arith.select %29, %c1_i32, %c8_i32 : i32
    %31 = vector.broadcast %30 : i32 to vector<128x8xi32>
    %32 = arith.remsi %28, %31 : vector<128x8xi32>
    %c0_i32_19 = arith.constant 0 : i32
    %33 = vector.broadcast %c0_i32_19 : i32 to vector<128x8xi32>
    %34 = arith.cmpi ne, %32, %33 : vector<128x8xi32>
    %c0_i32_20 = arith.constant 0 : i32
    %35 = vector.broadcast %c0_i32_20 : i32 to vector<128x8xi32>
    %36 = arith.cmpi slt, %32, %35 : vector<128x8xi32>
    %c0_i32_21 = arith.constant 0 : i32
    %37 = arith.cmpi slt, %30, %c0_i32_21 : i32
    %38 = vector.broadcast %37 : i1 to vector<128x8xi1>
    %39 = vector.broadcast %38 : vector<128x8xi1> to vector<128x8xi1>
    %40 = arith.xori %36, %39 : vector<128x8xi1>
    %41 = arith.andi %40, %34 : vector<128x8xi1>
    %42 = vector.broadcast %30 : i32 to vector<128x8xi32>
    %43 = arith.addi %32, %42 : vector<128x8xi32>
    %44 = arith.select %41, %43, %32 : vector<128x8xi1>, vector<128x8xi32>
    %45 = tpu.iota {dimensions = array<i32: 1>} : vector<128x8xi32>
    %46 = arith.cmpi eq, %44, %45 : vector<128x8xi32>
    %47 = arith.extui %46 : vector<128x8xi1> to vector<128x8xi32>
    %48 = arith.sitofp %47 : vector<128x8xi32> to vector<128x8xf32>
    %49 = tpu.iota {dimensions = array<i32: 0>} : vector<8x128xi32>
    %50 = tpu.iota {dimensions = array<i32: 1>} : vector<8x128xi32>
    %c8_i32_22 = arith.constant 8 : i32
    %c0_i32_23 = arith.constant 0 : i32
    %51 = arith.cmpi eq, %c8_i32_22, %c0_i32_23 : i32
    %c1_i32_24 = arith.constant 1 : i32
    %52 = arith.select %51, %c1_i32_24, %c8_i32_22 : i32
    %53 = vector.broadcast %52 : i32 to vector<8x128xi32>
    %54 = arith.remsi %50, %53 : vector<8x128xi32>
    %c0_i32_25 = arith.constant 0 : i32
    %55 = vector.broadcast %c0_i32_25 : i32 to vector<8x128xi32>
    %56 = arith.cmpi ne, %54, %55 : vector<8x128xi32>
    %c0_i32_26 = arith.constant 0 : i32
    %57 = vector.broadcast %c0_i32_26 : i32 to vector<8x128xi32>
    %58 = arith.cmpi slt, %54, %57 : vector<8x128xi32>
    %c0_i32_27 = arith.constant 0 : i32
    %59 = arith.cmpi slt, %52, %c0_i32_27 : i32
    %60 = vector.broadcast %59 : i1 to vector<8x128xi1>
    %61 = vector.broadcast %60 : vector<8x128xi1> to vector<8x128xi1>
    %62 = arith.xori %58, %61 : vector<8x128xi1>
    %63 = arith.andi %62, %56 : vector<8x128xi1>
    %64 = vector.broadcast %52 : i32 to vector<8x128xi32>
    %65 = arith.addi %54, %64 : vector<8x128xi32>
    %66 = arith.select %63, %65, %54 : vector<8x128xi1>, vector<8x128xi32>
    %67 = arith.cmpi eq, %49, %66 : vector<8x128xi32>
    %68 = arith.extui %67 : vector<8x128xi1> to vector<8x128xi32>
    %69 = arith.sitofp %68 : vector<8x128xi32> to vector<8x128xf32>
    %cst_28 = arith.constant dense<0.000000e+00> : vector<1x8xf32>
    %70 = tpu.matmul %24, %48, %cst_28 {dimension_numbers = #tpu.dot_dimension_numbers<[1], [0], [0], [1], [0, 0, 1, 1], [], []>} : vector<1x128xf32>, vector<128x8xf32>, vector<1x8xf32> -> vector<1x8xf32>
    %cst_29 = arith.constant dense<0.000000e+00> : vector<1x8xf32>
    %71 = tpu.matmul %27, %48, %cst_29 {dimension_numbers = #tpu.dot_dimension_numbers<[1], [0], [0], [1], [0, 0, 1, 1], [], []>} : vector<1x128xf32>, vector<128x8xf32>, vector<1x8xf32> -> vector<1x8xf32>
    %cst_30 = arith.constant 5.120000e+02 : f32
    %72 = vector.broadcast %cst_30 : f32 to vector<1x8xf32>
    %73 = arith.divf %70, %72 : vector<1x8xf32>
    %cst_31 = arith.constant 5.120000e+02 : f32
    %74 = vector.broadcast %cst_31 : f32 to vector<1x8xf32>
    %75 = arith.divf %71, %74 : vector<1x8xf32>
    %76 = arith.mulf %73, %73 : vector<1x8xf32>
    %77 = arith.subf %75, %76 : vector<1x8xf32>
    %cst_32 = arith.constant 9.99999974E-6 : f32
    %78 = vector.broadcast %cst_32 : f32 to vector<1x8xf32>
    %79 = arith.addf %77, %78 : vector<1x8xf32>
    %80 = math.rsqrt %79 : vector<1x8xf32>
    %81 = arith.mulf %21, %80 : vector<1x8xf32>
    %82 = arith.mulf %73, %81 : vector<1x8xf32>
    %83 = arith.subf %22, %82 : vector<1x8xf32>
    %cst_33 = arith.constant dense<0.000000e+00> : vector<1x128xf32>
    %84 = tpu.matmul %81, %69, %cst_33 {dimension_numbers = #tpu.dot_dimension_numbers<[1], [0], [0], [1], [0, 0, 1, 1], [], []>} : vector<1x8xf32>, vector<8x128xf32>, vector<1x128xf32> -> vector<1x128xf32>
    %cst_34 = arith.constant dense<0.000000e+00> : vector<1x128xf32>
    %85 = tpu.matmul %83, %69, %cst_34 {dimension_numbers = #tpu.dot_dimension_numbers<[1], [0], [0], [1], [0, 0, 1, 1], [], []>} : vector<1x8xf32>, vector<8x128xf32>, vector<1x128xf32> -> vector<1x128xf32>
    %86 = vector.broadcast %84 : vector<1x128xf32> to vector<32x128xf32>
    %87 = arith.mulf %20, %86 : vector<32x128xf32>
    %88 = vector.broadcast %85 : vector<1x128xf32> to vector<32x128xf32>
    %89 = arith.addf %87, %88 : vector<32x128xf32>
    %cst_35 = arith.constant 0.000000e+00 : f32
    %90 = vector.broadcast %cst_35 : f32 to vector<32x128xf32>
    %91 = arith.cmpf ogt, %89, %90 : vector<32x128xf32>
    %cst_36 = arith.constant 3.000000e-02 : f32
    %92 = vector.broadcast %cst_36 : f32 to vector<32x128xf32>
    %93 = arith.mulf %92, %89 : vector<32x128xf32>
    %94 = arith.select %91, %89, %93 : vector<32x128xi1>, vector<32x128xf32>
    %95 = vector.shape_cast %94 : vector<32x128xf32> to vector<2x16x128xf32>
    %cst_37 = arith.constant 0.000000e+00 : f32
    %96 = vector.broadcast %cst_37 : f32 to vector<2x1x128xf32>
    %97 = vector.extract_strided_slice %95 {offsets = [0, 0, 0], sizes = [2, 15, 128], strides = [1, 1, 1]} : vector<2x16x128xf32> to vector<2x15x128xf32>
    %98 = tpu.concatenate %96, %97 in 1 : vector<2x1x128xf32>, vector<2x15x128xf32> -> vector<2x16x128xf32>
    %99 = vector.shape_cast %98 : vector<2x16x128xf32> to vector<32x128xf32>
    %c0_38 = arith.constant 0 : index
    %c0_39 = arith.constant 0 : index
    %c0_40 = arith.constant 0 : index
    %100 = vector.load %arg4[%c0_38, %c0_39, %c0_40] : memref<3x128x128xf32, #tpu.memory_space<vmem>>, vector<1x128x128xf32>
    %101 = vector.shape_cast %100 : vector<1x128x128xf32> to vector<128x128xf32>
    %cst_41 = arith.constant dense<0.000000e+00> : vector<32x128xf32>
    %102 = tpu.matmul %99, %101, %cst_41 {dimension_numbers = #tpu.dot_dimension_numbers<[1], [0], [0], [1], [0, 0, 1, 1], [], []>} : vector<32x128xf32>, vector<128x128xf32>, vector<32x128xf32> -> vector<32x128xf32>
    %103 = vector.shape_cast %95 : vector<2x16x128xf32> to vector<32x128xf32>
    %c1_42 = arith.constant 1 : index
    %c0_43 = arith.constant 0 : index
    %c0_44 = arith.constant 0 : index
    %104 = vector.load %arg4[%c1_42, %c0_43, %c0_44] : memref<3x128x128xf32, #tpu.memory_space<vmem>>, vector<1x128x128xf32>
    %105 = vector.shape_cast %104 : vector<1x128x128xf32> to vector<128x128xf32>
    %cst_45 = arith.constant dense<0.000000e+00> : vector<32x128xf32>
    %106 = tpu.matmul %103, %105, %cst_45 {dimension_numbers = #tpu.dot_dimension_numbers<[1], [0], [0], [1], [0, 0, 1, 1], [], []>} : vector<32x128xf32>, vector<128x128xf32>, vector<32x128xf32> -> vector<32x128xf32>
    %107 = arith.addf %102, %106 : vector<32x128xf32>
    %cst_46 = arith.constant 0.000000e+00 : f32
    %108 = vector.broadcast %cst_46 : f32 to vector<2x1x128xf32>
    %109 = vector.extract_strided_slice %95 {offsets = [0, 1, 0], sizes = [2, 15, 128], strides = [1, 1, 1]} : vector<2x16x128xf32> to vector<2x15x128xf32>
    %110 = tpu.concatenate %109, %108 in 1 : vector<2x15x128xf32>, vector<2x1x128xf32> -> vector<2x16x128xf32>
    %111 = vector.shape_cast %110 : vector<2x16x128xf32> to vector<32x128xf32>
    %c2_47 = arith.constant 2 : index
    %c0_48 = arith.constant 0 : index
    %c0_49 = arith.constant 0 : index
    %112 = vector.load %arg4[%c2_47, %c0_48, %c0_49] : memref<3x128x128xf32, #tpu.memory_space<vmem>>, vector<1x128x128xf32>
    %113 = vector.shape_cast %112 : vector<1x128x128xf32> to vector<128x128xf32>
    %cst_50 = arith.constant dense<0.000000e+00> : vector<32x128xf32>
    %114 = tpu.matmul %111, %113, %cst_50 {dimension_numbers = #tpu.dot_dimension_numbers<[1], [0], [0], [1], [0, 0, 1, 1], [], []>} : vector<32x128xf32>, vector<128x128xf32>, vector<32x128xf32> -> vector<32x128xf32>
    %115 = arith.addf %107, %114 : vector<32x128xf32>
    %c0_51 = arith.constant 0 : index
    %c0_52 = arith.constant 0 : index
    %116 = vector.load %arg5[%c0_51, %c0_52] : memref<1x8xf32, #tpu.memory_space<vmem>>, vector<1x8xf32>
    %c0_53 = arith.constant 0 : index
    %c0_54 = arith.constant 0 : index
    %117 = vector.load %arg6[%c0_53, %c0_54] : memref<1x8xf32, #tpu.memory_space<vmem>>, vector<1x8xf32>
    %cst_55 = arith.constant dense<0.000000e+00> : vector<128xf32>
    %118 = vector.multi_reduction <add>, %115, %cst_55 [0] : vector<32x128xf32> to vector<128xf32>
    %119 = vector.shape_cast %118 : vector<128xf32> to vector<1x128xf32>
    %120 = arith.mulf %115, %115 : vector<32x128xf32>
    %cst_56 = arith.constant dense<0.000000e+00> : vector<128xf32>
    %121 = vector.multi_reduction <add>, %120, %cst_56 [0] : vector<32x128xf32> to vector<128xf32>
    %122 = vector.shape_cast %121 : vector<128xf32> to vector<1x128xf32>
    %123 = tpu.iota {dimensions = array<i32: 0>} : vector<128x8xi32>
    %c8_i32_57 = arith.constant 8 : i32
    %c0_i32_58 = arith.constant 0 : i32
    %124 = arith.cmpi eq, %c8_i32_57, %c0_i32_58 : i32
    %c1_i32_59 = arith.constant 1 : i32
    %125 = arith.select %124, %c1_i32_59, %c8_i32_57 : i32
    %126 = vector.broadcast %125 : i32 to vector<128x8xi32>
    %127 = arith.remsi %123, %126 : vector<128x8xi32>
    %c0_i32_60 = arith.constant 0 : i32
    %128 = vector.broadcast %c0_i32_60 : i32 to vector<128x8xi32>
    %129 = arith.cmpi ne, %127, %128 : vector<128x8xi32>
    %c0_i32_61 = arith.constant 0 : i32
    %130 = vector.broadcast %c0_i32_61 : i32 to vector<128x8xi32>
    %131 = arith.cmpi slt, %127, %130 : vector<128x8xi32>
    %c0_i32_62 = arith.constant 0 : i32
    %132 = arith.cmpi slt, %125, %c0_i32_62 : i32
    %133 = vector.broadcast %132 : i1 to vector<128x8xi1>
    %134 = vector.broadcast %133 : vector<128x8xi1> to vector<128x8xi1>
    %135 = arith.xori %131, %134 : vector<128x8xi1>
    %136 = arith.andi %135, %129 : vector<128x8xi1>
    %137 = vector.broadcast %125 : i32 to vector<128x8xi32>
    %138 = arith.addi %127, %137 : vector<128x8xi32>
    %139 = arith.select %136, %138, %127 : vector<128x8xi1>, vector<128x8xi32>
    %140 = tpu.iota {dimensions = array<i32: 1>} : vector<128x8xi32>
    %141 = arith.cmpi eq, %139, %140 : vector<128x8xi32>
    %142 = arith.extui %141 : vector<128x8xi1> to vector<128x8xi32>
    %143 = arith.sitofp %142 : vector<128x8xi32> to vector<128x8xf32>
    %144 = tpu.iota {dimensions = array<i32: 0>} : vector<8x128xi32>
    %145 = tpu.iota {dimensions = array<i32: 1>} : vector<8x128xi32>
    %c8_i32_63 = arith.constant 8 : i32
    %c0_i32_64 = arith.constant 0 : i32
    %146 = arith.cmpi eq, %c8_i32_63, %c0_i32_64 : i32
    %c1_i32_65 = arith.constant 1 : i32
    %147 = arith.select %146, %c1_i32_65, %c8_i32_63 : i32
    %148 = vector.broadcast %147 : i32 to vector<8x128xi32>
    %149 = arith.remsi %145, %148 : vector<8x128xi32>
    %c0_i32_66 = arith.constant 0 : i32
    %150 = vector.broadcast %c0_i32_66 : i32 to vector<8x128xi32>
    %151 = arith.cmpi ne, %149, %150 : vector<8x128xi32>
    %c0_i32_67 = arith.constant 0 : i32
    %152 = vector.broadcast %c0_i32_67 : i32 to vector<8x128xi32>
    %153 = arith.cmpi slt, %149, %152 : vector<8x128xi32>
    %c0_i32_68 = arith.constant 0 : i32
    %154 = arith.cmpi slt, %147, %c0_i32_68 : i32
    %155 = vector.broadcast %154 : i1 to vector<8x128xi1>
    %156 = vector.broadcast %155 : vector<8x128xi1> to vector<8x128xi1>
    %157 = arith.xori %153, %156 : vector<8x128xi1>
    %158 = arith.andi %157, %151 : vector<8x128xi1>
    %159 = vector.broadcast %147 : i32 to vector<8x128xi32>
    %160 = arith.addi %149, %159 : vector<8x128xi32>
    %161 = arith.select %158, %160, %149 : vector<8x128xi1>, vector<8x128xi32>
    %162 = arith.cmpi eq, %144, %161 : vector<8x128xi32>
    %163 = arith.extui %162 : vector<8x128xi1> to vector<8x128xi32>
    %164 = arith.sitofp %163 : vector<8x128xi32> to vector<8x128xf32>
    %cst_69 = arith.constant dense<0.000000e+00> : vector<1x8xf32>
    %165 = tpu.matmul %119, %143, %cst_69 {dimension_numbers = #tpu.dot_dimension_numbers<[1], [0], [0], [1], [0, 0, 1, 1], [], []>} : vector<1x128xf32>, vector<128x8xf32>, vector<1x8xf32> -> vector<1x8xf32>
    %cst_70 = arith.constant dense<0.000000e+00> : vector<1x8xf32>
    %166 = tpu.matmul %122, %143, %cst_70 {dimension_numbers = #tpu.dot_dimension_numbers<[1], [0], [0], [1], [0, 0, 1, 1], [], []>} : vector<1x128xf32>, vector<128x8xf32>, vector<1x8xf32> -> vector<1x8xf32>
    %cst_71 = arith.constant 5.120000e+02 : f32
    %167 = vector.broadcast %cst_71 : f32 to vector<1x8xf32>
    %168 = arith.divf %165, %167 : vector<1x8xf32>
    %cst_72 = arith.constant 5.120000e+02 : f32
    %169 = vector.broadcast %cst_72 : f32 to vector<1x8xf32>
    %170 = arith.divf %166, %169 : vector<1x8xf32>
    %171 = arith.mulf %168, %168 : vector<1x8xf32>
    %172 = arith.subf %170, %171 : vector<1x8xf32>
    %cst_73 = arith.constant 9.99999974E-6 : f32
    %173 = vector.broadcast %cst_73 : f32 to vector<1x8xf32>
    %174 = arith.addf %172, %173 : vector<1x8xf32>
    %175 = math.rsqrt %174 : vector<1x8xf32>
    %176 = arith.mulf %116, %175 : vector<1x8xf32>
    %177 = arith.mulf %168, %176 : vector<1x8xf32>
    %178 = arith.subf %117, %177 : vector<1x8xf32>
    %cst_74 = arith.constant dense<0.000000e+00> : vector<1x128xf32>
    %179 = tpu.matmul %176, %164, %cst_74 {dimension_numbers = #tpu.dot_dimension_numbers<[1], [0], [0], [1], [0, 0, 1, 1], [], []>} : vector<1x8xf32>, vector<8x128xf32>, vector<1x128xf32> -> vector<1x128xf32>
    %cst_75 = arith.constant dense<0.000000e+00> : vector<1x128xf32>
    %180 = tpu.matmul %178, %164, %cst_75 {dimension_numbers = #tpu.dot_dimension_numbers<[1], [0], [0], [1], [0, 0, 1, 1], [], []>} : vector<1x8xf32>, vector<8x128xf32>, vector<1x128xf32> -> vector<1x128xf32>
    %181 = vector.broadcast %179 : vector<1x128xf32> to vector<32x128xf32>
    %182 = arith.mulf %115, %181 : vector<32x128xf32>
    %183 = vector.broadcast %180 : vector<1x128xf32> to vector<32x128xf32>
    %184 = arith.addf %182, %183 : vector<32x128xf32>
    %cst_76 = arith.constant 0.000000e+00 : f32
    %185 = vector.broadcast %cst_76 : f32 to vector<32x128xf32>
    %186 = arith.cmpf ogt, %184, %185 : vector<32x128xf32>
    %cst_77 = arith.constant 3.000000e-02 : f32
    %187 = vector.broadcast %cst_77 : f32 to vector<32x128xf32>
    %188 = arith.mulf %187, %184 : vector<32x128xf32>
    %189 = arith.select %186, %184, %188 : vector<32x128xi1>, vector<32x128xf32>
    %190 = vector.shape_cast %189 : vector<32x128xf32> to vector<2x16x128xf32>
    %191 = vector.extract_strided_slice %190 {offsets = [0, 0, 8], sizes = [2, 16, 120], strides = [1, 1, 1]} : vector<2x16x128xf32> to vector<2x16x120xf32>
    %192 = vector.extract_strided_slice %190 {offsets = [0, 0, 120], sizes = [2, 16, 8], strides = [1, 1, 1]} : vector<2x16x128xf32> to vector<2x16x8xf32>
    %193 = tpu.concatenate %191, %192 in 2 : vector<2x16x120xf32>, vector<2x16x8xf32> -> vector<2x16x128xf32>
    %194 = arith.maximumf %190, %193 : vector<2x16x128xf32>
    %195 = vector.shape_cast %194 : vector<2x16x128xf32> to vector<2x8x2x128xf32>
    %196 = vector.extract_strided_slice %195 {offsets = [0, 0, 0, 0], sizes = [2, 8, 1, 128], strides = [1, 1, 1, 1]} : vector<2x8x2x128xf32> to vector<2x8x1x128xf32>
    %197 = vector.shape_cast %196 : vector<2x8x1x128xf32> to vector<2x8x128xf32>
    %198 = vector.extract_strided_slice %195 {offsets = [0, 0, 1, 0], sizes = [2, 8, 1, 128], strides = [1, 1, 1, 1]} : vector<2x8x2x128xf32> to vector<2x8x1x128xf32>
    %199 = vector.shape_cast %198 : vector<2x8x1x128xf32> to vector<2x8x128xf32>
    %200 = arith.maximumf %197, %199 : vector<2x8x128xf32>
    %cst_78 = arith.constant 0.000000e+00 : f32
    %201 = vector.broadcast %cst_78 : f32 to vector<2x1x128xf32>
    %202 = vector.extract_strided_slice %200 {offsets = [0, 0, 0], sizes = [2, 7, 128], strides = [1, 1, 1]} : vector<2x8x128xf32> to vector<2x7x128xf32>
    %203 = tpu.concatenate %201, %202 in 1 : vector<2x1x128xf32>, vector<2x7x128xf32> -> vector<2x8x128xf32>
    %204 = vector.shape_cast %203 : vector<2x8x128xf32> to vector<16x128xf32>
    %c0_79 = arith.constant 0 : index
    %c0_80 = arith.constant 0 : index
    %c0_81 = arith.constant 0 : index
    %205 = vector.load %arg7[%c0_79, %c0_80, %c0_81] : memref<3x128x128xf32, #tpu.memory_space<vmem>>, vector<1x128x128xf32>
    %206 = vector.shape_cast %205 : vector<1x128x128xf32> to vector<128x128xf32>
    %cst_82 = arith.constant dense<0.000000e+00> : vector<16x128xf32>
    %207 = tpu.matmul %204, %206, %cst_82 {dimension_numbers = #tpu.dot_dimension_numbers<[1], [0], [0], [1], [0, 0, 1, 1], [], []>} : vector<16x128xf32>, vector<128x128xf32>, vector<16x128xf32> -> vector<16x128xf32>
    %208 = vector.shape_cast %200 : vector<2x8x128xf32> to vector<16x128xf32>
    %c1_83 = arith.constant 1 : index
    %c0_84 = arith.constant 0 : index
    %c0_85 = arith.constant 0 : index
    %209 = vector.load %arg7[%c1_83, %c0_84, %c0_85] : memref<3x128x128xf32, #tpu.memory_space<vmem>>, vector<1x128x128xf32>
    %210 = vector.shape_cast %209 : vector<1x128x128xf32> to vector<128x128xf32>
    %cst_86 = arith.constant dense<0.000000e+00> : vector<16x128xf32>
    %211 = tpu.matmul %208, %210, %cst_86 {dimension_numbers = #tpu.dot_dimension_numbers<[1], [0], [0], [1], [0, 0, 1, 1], [], []>} : vector<16x128xf32>, vector<128x128xf32>, vector<16x128xf32> -> vector<16x128xf32>
    %212 = arith.addf %207, %211 : vector<16x128xf32>
    %cst_87 = arith.constant 0.000000e+00 : f32
    %213 = vector.broadcast %cst_87 : f32 to vector<2x1x128xf32>
    %214 = vector.extract_strided_slice %200 {offsets = [0, 1, 0], sizes = [2, 7, 128], strides = [1, 1, 1]} : vector<2x8x128xf32> to vector<2x7x128xf32>
    %215 = tpu.concatenate %214, %213 in 1 : vector<2x7x128xf32>, vector<2x1x128xf32> -> vector<2x8x128xf32>
    %216 = vector.shape_cast %215 : vector<2x8x128xf32> to vector<16x128xf32>
    %c2_88 = arith.constant 2 : index
    %c0_89 = arith.constant 0 : index
    %c0_90 = arith.constant 0 : index
    %217 = vector.load %arg7[%c2_88, %c0_89, %c0_90] : memref<3x128x128xf32, #tpu.memory_space<vmem>>, vector<1x128x128xf32>
    %218 = vector.shape_cast %217 : vector<1x128x128xf32> to vector<128x128xf32>
    %cst_91 = arith.constant dense<0.000000e+00> : vector<16x128xf32>
    %219 = tpu.matmul %216, %218, %cst_91 {dimension_numbers = #tpu.dot_dimension_numbers<[1], [0], [0], [1], [0, 0, 1, 1], [], []>} : vector<16x128xf32>, vector<128x128xf32>, vector<16x128xf32> -> vector<16x128xf32>
    %220 = arith.addf %212, %219 : vector<16x128xf32>
    %c0_92 = arith.constant 0 : index
    %c0_93 = arith.constant 0 : index
    %221 = vector.load %arg8[%c0_92, %c0_93] : memref<1x16xf32, #tpu.memory_space<vmem>>, vector<1x16xf32>
    %c0_94 = arith.constant 0 : index
    %c0_95 = arith.constant 0 : index
    %222 = vector.load %arg9[%c0_94, %c0_95] : memref<1x16xf32, #tpu.memory_space<vmem>>, vector<1x16xf32>
    %cst_96 = arith.constant dense<0.000000e+00> : vector<128xf32>
    %223 = vector.multi_reduction <add>, %220, %cst_96 [0] : vector<16x128xf32> to vector<128xf32>
    %224 = vector.shape_cast %223 : vector<128xf32> to vector<1x128xf32>
    %225 = arith.mulf %220, %220 : vector<16x128xf32>
    %cst_97 = arith.constant dense<0.000000e+00> : vector<128xf32>
    %226 = vector.multi_reduction <add>, %225, %cst_97 [0] : vector<16x128xf32> to vector<128xf32>
    %227 = vector.shape_cast %226 : vector<128xf32> to vector<1x128xf32>
    %228 = tpu.iota {dimensions = array<i32: 0>} : vector<128x16xi32>
    %c16_i32 = arith.constant 16 : i32
    %c0_i32_98 = arith.constant 0 : i32
    %229 = arith.cmpi eq, %c16_i32, %c0_i32_98 : i32
    %c1_i32_99 = arith.constant 1 : i32
    %230 = arith.select %229, %c1_i32_99, %c16_i32 : i32
    %231 = vector.broadcast %230 : i32 to vector<128x16xi32>
    %232 = arith.remsi %228, %231 : vector<128x16xi32>
    %c0_i32_100 = arith.constant 0 : i32
    %233 = vector.broadcast %c0_i32_100 : i32 to vector<128x16xi32>
    %234 = arith.cmpi ne, %232, %233 : vector<128x16xi32>
    %c0_i32_101 = arith.constant 0 : i32
    %235 = vector.broadcast %c0_i32_101 : i32 to vector<128x16xi32>
    %236 = arith.cmpi slt, %232, %235 : vector<128x16xi32>
    %c0_i32_102 = arith.constant 0 : i32
    %237 = arith.cmpi slt, %230, %c0_i32_102 : i32
    %238 = vector.broadcast %237 : i1 to vector<128x16xi1>
    %239 = vector.broadcast %238 : vector<128x16xi1> to vector<128x16xi1>
    %240 = arith.xori %236, %239 : vector<128x16xi1>
    %241 = arith.andi %240, %234 : vector<128x16xi1>
    %242 = vector.broadcast %230 : i32 to vector<128x16xi32>
    %243 = arith.addi %232, %242 : vector<128x16xi32>
    %244 = arith.select %241, %243, %232 : vector<128x16xi1>, vector<128x16xi32>
    %245 = tpu.iota {dimensions = array<i32: 1>} : vector<128x16xi32>
    %246 = arith.cmpi eq, %244, %245 : vector<128x16xi32>
    %247 = arith.extui %246 : vector<128x16xi1> to vector<128x16xi32>
    %248 = arith.sitofp %247 : vector<128x16xi32> to vector<128x16xf32>
    %249 = tpu.iota {dimensions = array<i32: 0>} : vector<16x128xi32>
    %250 = tpu.iota {dimensions = array<i32: 1>} : vector<16x128xi32>
    %c16_i32_103 = arith.constant 16 : i32
    %c0_i32_104 = arith.constant 0 : i32
    %251 = arith.cmpi eq, %c16_i32_103, %c0_i32_104 : i32
    %c1_i32_105 = arith.constant 1 : i32
    %252 = arith.select %251, %c1_i32_105, %c16_i32_103 : i32
    %253 = vector.broadcast %252 : i32 to vector<16x128xi32>
    %254 = arith.remsi %250, %253 : vector<16x128xi32>
    %c0_i32_106 = arith.constant 0 : i32
    %255 = vector.broadcast %c0_i32_106 : i32 to vector<16x128xi32>
    %256 = arith.cmpi ne, %254, %255 : vector<16x128xi32>
    %c0_i32_107 = arith.constant 0 : i32
    %257 = vector.broadcast %c0_i32_107 : i32 to vector<16x128xi32>
    %258 = arith.cmpi slt, %254, %257 : vector<16x128xi32>
    %c0_i32_108 = arith.constant 0 : i32
    %259 = arith.cmpi slt, %252, %c0_i32_108 : i32
    %260 = vector.broadcast %259 : i1 to vector<16x128xi1>
    %261 = vector.broadcast %260 : vector<16x128xi1> to vector<16x128xi1>
    %262 = arith.xori %258, %261 : vector<16x128xi1>
    %263 = arith.andi %262, %256 : vector<16x128xi1>
    %264 = vector.broadcast %252 : i32 to vector<16x128xi32>
    %265 = arith.addi %254, %264 : vector<16x128xi32>
    %266 = arith.select %263, %265, %254 : vector<16x128xi1>, vector<16x128xi32>
    %267 = arith.cmpi eq, %249, %266 : vector<16x128xi32>
    %268 = arith.extui %267 : vector<16x128xi1> to vector<16x128xi32>
    %269 = arith.sitofp %268 : vector<16x128xi32> to vector<16x128xf32>
    %cst_109 = arith.constant dense<0.000000e+00> : vector<1x16xf32>
    %270 = tpu.matmul %224, %248, %cst_109 {dimension_numbers = #tpu.dot_dimension_numbers<[1], [0], [0], [1], [0, 0, 1, 1], [], []>} : vector<1x128xf32>, vector<128x16xf32>, vector<1x16xf32> -> vector<1x16xf32>
    %cst_110 = arith.constant dense<0.000000e+00> : vector<1x16xf32>
    %271 = tpu.matmul %227, %248, %cst_110 {dimension_numbers = #tpu.dot_dimension_numbers<[1], [0], [0], [1], [0, 0, 1, 1], [], []>} : vector<1x128xf32>, vector<128x16xf32>, vector<1x16xf32> -> vector<1x16xf32>
    %cst_111 = arith.constant 1.280000e+02 : f32
    %272 = vector.broadcast %cst_111 : f32 to vector<1x16xf32>
    %273 = arith.divf %270, %272 : vector<1x16xf32>
    %cst_112 = arith.constant 1.280000e+02 : f32
    %274 = vector.broadcast %cst_112 : f32 to vector<1x16xf32>
    %275 = arith.divf %271, %274 : vector<1x16xf32>
    %276 = arith.mulf %273, %273 : vector<1x16xf32>
    %277 = arith.subf %275, %276 : vector<1x16xf32>
    %cst_113 = arith.constant 9.99999974E-6 : f32
    %278 = vector.broadcast %cst_113 : f32 to vector<1x16xf32>
    %279 = arith.addf %277, %278 : vector<1x16xf32>
    %280 = math.rsqrt %279 : vector<1x16xf32>
    %281 = arith.mulf %221, %280 : vector<1x16xf32>
    %282 = arith.mulf %273, %281 : vector<1x16xf32>
    %283 = arith.subf %222, %282 : vector<1x16xf32>
    %cst_114 = arith.constant dense<0.000000e+00> : vector<1x128xf32>
    %284 = tpu.matmul %281, %269, %cst_114 {dimension_numbers = #tpu.dot_dimension_numbers<[1], [0], [0], [1], [0, 0, 1, 1], [], []>} : vector<1x16xf32>, vector<16x128xf32>, vector<1x128xf32> -> vector<1x128xf32>
    %cst_115 = arith.constant dense<0.000000e+00> : vector<1x128xf32>
    %285 = tpu.matmul %283, %269, %cst_115 {dimension_numbers = #tpu.dot_dimension_numbers<[1], [0], [0], [1], [0, 0, 1, 1], [], []>} : vector<1x16xf32>, vector<16x128xf32>, vector<1x128xf32> -> vector<1x128xf32>
    %286 = vector.broadcast %284 : vector<1x128xf32> to vector<16x128xf32>
    %287 = arith.mulf %220, %286 : vector<16x128xf32>
    %288 = vector.broadcast %285 : vector<1x128xf32> to vector<16x128xf32>
    %289 = arith.addf %287, %288 : vector<16x128xf32>
    %cst_116 = arith.constant 0.000000e+00 : f32
    %290 = vector.broadcast %cst_116 : f32 to vector<16x128xf32>
    %291 = arith.cmpf ogt, %289, %290 : vector<16x128xf32>
    %cst_117 = arith.constant 3.000000e-02 : f32
    %292 = vector.broadcast %cst_117 : f32 to vector<16x128xf32>
    %293 = arith.mulf %292, %289 : vector<16x128xf32>
    %294 = arith.select %291, %289, %293 : vector<16x128xi1>, vector<16x128xf32>
    %295 = vector.shape_cast %294 : vector<16x128xf32> to vector<2x8x128xf32>
    %cst_118 = arith.constant 0.000000e+00 : f32
    %296 = vector.broadcast %cst_118 : f32 to vector<2x1x128xf32>
    %297 = vector.extract_strided_slice %295 {offsets = [0, 0, 0], sizes = [2, 7, 128], strides = [1, 1, 1]} : vector<2x8x128xf32> to vector<2x7x128xf32>
    %298 = tpu.concatenate %296, %297 in 1 : vector<2x1x128xf32>, vector<2x7x128xf32> -> vector<2x8x128xf32>
    %299 = vector.shape_cast %298 : vector<2x8x128xf32> to vector<16x128xf32>
    %c0_119 = arith.constant 0 : index
    %c0_120 = arith.constant 0 : index
    %c0_121 = arith.constant 0 : index
    %300 = vector.load %arg10[%c0_119, %c0_120, %c0_121] : memref<3x128x128xf32, #tpu.memory_space<vmem>>, vector<1x128x128xf32>
    %301 = vector.shape_cast %300 : vector<1x128x128xf32> to vector<128x128xf32>
    %cst_122 = arith.constant dense<0.000000e+00> : vector<16x128xf32>
    %302 = tpu.matmul %299, %301, %cst_122 {dimension_numbers = #tpu.dot_dimension_numbers<[1], [0], [0], [1], [0, 0, 1, 1], [], []>} : vector<16x128xf32>, vector<128x128xf32>, vector<16x128xf32> -> vector<16x128xf32>
    %303 = vector.shape_cast %295 : vector<2x8x128xf32> to vector<16x128xf32>
    %c1_123 = arith.constant 1 : index
    %c0_124 = arith.constant 0 : index
    %c0_125 = arith.constant 0 : index
    %304 = vector.load %arg10[%c1_123, %c0_124, %c0_125] : memref<3x128x128xf32, #tpu.memory_space<vmem>>, vector<1x128x128xf32>
    %305 = vector.shape_cast %304 : vector<1x128x128xf32> to vector<128x128xf32>
    %cst_126 = arith.constant dense<0.000000e+00> : vector<16x128xf32>
    %306 = tpu.matmul %303, %305, %cst_126 {dimension_numbers = #tpu.dot_dimension_numbers<[1], [0], [0], [1], [0, 0, 1, 1], [], []>} : vector<16x128xf32>, vector<128x128xf32>, vector<16x128xf32> -> vector<16x128xf32>
    %307 = arith.addf %302, %306 : vector<16x128xf32>
    %cst_127 = arith.constant 0.000000e+00 : f32
    %308 = vector.broadcast %cst_127 : f32 to vector<2x1x128xf32>
    %309 = vector.extract_strided_slice %295 {offsets = [0, 1, 0], sizes = [2, 7, 128], strides = [1, 1, 1]} : vector<2x8x128xf32> to vector<2x7x128xf32>
    %310 = tpu.concatenate %309, %308 in 1 : vector<2x7x128xf32>, vector<2x1x128xf32> -> vector<2x8x128xf32>
    %311 = vector.shape_cast %310 : vector<2x8x128xf32> to vector<16x128xf32>
    %c2_128 = arith.constant 2 : index
    %c0_129 = arith.constant 0 : index
    %c0_130 = arith.constant 0 : index
    %312 = vector.load %arg10[%c2_128, %c0_129, %c0_130] : memref<3x128x128xf32, #tpu.memory_space<vmem>>, vector<1x128x128xf32>
    %313 = vector.shape_cast %312 : vector<1x128x128xf32> to vector<128x128xf32>
    %cst_131 = arith.constant dense<0.000000e+00> : vector<16x128xf32>
    %314 = tpu.matmul %311, %313, %cst_131 {dimension_numbers = #tpu.dot_dimension_numbers<[1], [0], [0], [1], [0, 0, 1, 1], [], []>} : vector<16x128xf32>, vector<128x128xf32>, vector<16x128xf32> -> vector<16x128xf32>
    %315 = arith.addf %307, %314 : vector<16x128xf32>
    %c0_132 = arith.constant 0 : index
    %c0_133 = arith.constant 0 : index
    %316 = vector.load %arg11[%c0_132, %c0_133] : memref<1x16xf32, #tpu.memory_space<vmem>>, vector<1x16xf32>
    %c0_134 = arith.constant 0 : index
    %c0_135 = arith.constant 0 : index
    %317 = vector.load %arg12[%c0_134, %c0_135] : memref<1x16xf32, #tpu.memory_space<vmem>>, vector<1x16xf32>
    %cst_136 = arith.constant dense<0.000000e+00> : vector<128xf32>
    %318 = vector.multi_reduction <add>, %315, %cst_136 [0] : vector<16x128xf32> to vector<128xf32>
    %319 = vector.shape_cast %318 : vector<128xf32> to vector<1x128xf32>
    %320 = arith.mulf %315, %315 : vector<16x128xf32>
    %cst_137 = arith.constant dense<0.000000e+00> : vector<128xf32>
    %321 = vector.multi_reduction <add>, %320, %cst_137 [0] : vector<16x128xf32> to vector<128xf32>
    %322 = vector.shape_cast %321 : vector<128xf32> to vector<1x128xf32>
    %323 = tpu.iota {dimensions = array<i32: 0>} : vector<128x16xi32>
    %c16_i32_138 = arith.constant 16 : i32
    %c0_i32_139 = arith.constant 0 : i32
    %324 = arith.cmpi eq, %c16_i32_138, %c0_i32_139 : i32
    %c1_i32_140 = arith.constant 1 : i32
    %325 = arith.select %324, %c1_i32_140, %c16_i32_138 : i32
    %326 = vector.broadcast %325 : i32 to vector<128x16xi32>
    %327 = arith.remsi %323, %326 : vector<128x16xi32>
    %c0_i32_141 = arith.constant 0 : i32
    %328 = vector.broadcast %c0_i32_141 : i32 to vector<128x16xi32>
    %329 = arith.cmpi ne, %327, %328 : vector<128x16xi32>
    %c0_i32_142 = arith.constant 0 : i32
    %330 = vector.broadcast %c0_i32_142 : i32 to vector<128x16xi32>
    %331 = arith.cmpi slt, %327, %330 : vector<128x16xi32>
    %c0_i32_143 = arith.constant 0 : i32
    %332 = arith.cmpi slt, %325, %c0_i32_143 : i32
    %333 = vector.broadcast %332 : i1 to vector<128x16xi1>
    %334 = vector.broadcast %333 : vector<128x16xi1> to vector<128x16xi1>
    %335 = arith.xori %331, %334 : vector<128x16xi1>
    %336 = arith.andi %335, %329 : vector<128x16xi1>
    %337 = vector.broadcast %325 : i32 to vector<128x16xi32>
    %338 = arith.addi %327, %337 : vector<128x16xi32>
    %339 = arith.select %336, %338, %327 : vector<128x16xi1>, vector<128x16xi32>
    %340 = tpu.iota {dimensions = array<i32: 1>} : vector<128x16xi32>
    %341 = arith.cmpi eq, %339, %340 : vector<128x16xi32>
    %342 = arith.extui %341 : vector<128x16xi1> to vector<128x16xi32>
    %343 = arith.sitofp %342 : vector<128x16xi32> to vector<128x16xf32>
    %344 = tpu.iota {dimensions = array<i32: 0>} : vector<16x128xi32>
    %345 = tpu.iota {dimensions = array<i32: 1>} : vector<16x128xi32>
    %c16_i32_144 = arith.constant 16 : i32
    %c0_i32_145 = arith.constant 0 : i32
    %346 = arith.cmpi eq, %c16_i32_144, %c0_i32_145 : i32
    %c1_i32_146 = arith.constant 1 : i32
    %347 = arith.select %346, %c1_i32_146, %c16_i32_144 : i32
    %348 = vector.broadcast %347 : i32 to vector<16x128xi32>
    %349 = arith.remsi %345, %348 : vector<16x128xi32>
    %c0_i32_147 = arith.constant 0 : i32
    %350 = vector.broadcast %c0_i32_147 : i32 to vector<16x128xi32>
    %351 = arith.cmpi ne, %349, %350 : vector<16x128xi32>
    %c0_i32_148 = arith.constant 0 : i32
    %352 = vector.broadcast %c0_i32_148 : i32 to vector<16x128xi32>
    %353 = arith.cmpi slt, %349, %352 : vector<16x128xi32>
    %c0_i32_149 = arith.constant 0 : i32
    %354 = arith.cmpi slt, %347, %c0_i32_149 : i32
    %355 = vector.broadcast %354 : i1 to vector<16x128xi1>
    %356 = vector.broadcast %355 : vector<16x128xi1> to vector<16x128xi1>
    %357 = arith.xori %353, %356 : vector<16x128xi1>
    %358 = arith.andi %357, %351 : vector<16x128xi1>
    %359 = vector.broadcast %347 : i32 to vector<16x128xi32>
    %360 = arith.addi %349, %359 : vector<16x128xi32>
    %361 = arith.select %358, %360, %349 : vector<16x128xi1>, vector<16x128xi32>
    %362 = arith.cmpi eq, %344, %361 : vector<16x128xi32>
    %363 = arith.extui %362 : vector<16x128xi1> to vector<16x128xi32>
    %364 = arith.sitofp %363 : vector<16x128xi32> to vector<16x128xf32>
    %cst_150 = arith.constant dense<0.000000e+00> : vector<1x16xf32>
    %365 = tpu.matmul %319, %343, %cst_150 {dimension_numbers = #tpu.dot_dimension_numbers<[1], [0], [0], [1], [0, 0, 1, 1], [], []>} : vector<1x128xf32>, vector<128x16xf32>, vector<1x16xf32> -> vector<1x16xf32>
    %cst_151 = arith.constant dense<0.000000e+00> : vector<1x16xf32>
    %366 = tpu.matmul %322, %343, %cst_151 {dimension_numbers = #tpu.dot_dimension_numbers<[1], [0], [0], [1], [0, 0, 1, 1], [], []>} : vector<1x128xf32>, vector<128x16xf32>, vector<1x16xf32> -> vector<1x16xf32>
    %cst_152 = arith.constant 1.280000e+02 : f32
    %367 = vector.broadcast %cst_152 : f32 to vector<1x16xf32>
    %368 = arith.divf %365, %367 : vector<1x16xf32>
    %cst_153 = arith.constant 1.280000e+02 : f32
    %369 = vector.broadcast %cst_153 : f32 to vector<1x16xf32>
    %370 = arith.divf %366, %369 : vector<1x16xf32>
    %371 = arith.mulf %368, %368 : vector<1x16xf32>
    %372 = arith.subf %370, %371 : vector<1x16xf32>
    %cst_154 = arith.constant 9.99999974E-6 : f32
    %373 = vector.broadcast %cst_154 : f32 to vector<1x16xf32>
    %374 = arith.addf %372, %373 : vector<1x16xf32>
    %375 = math.rsqrt %374 : vector<1x16xf32>
    %376 = arith.mulf %316, %375 : vector<1x16xf32>
    %377 = arith.mulf %368, %376 : vector<1x16xf32>
    %378 = arith.subf %317, %377 : vector<1x16xf32>
    %cst_155 = arith.constant dense<0.000000e+00> : vector<1x128xf32>
    %379 = tpu.matmul %376, %364, %cst_155 {dimension_numbers = #tpu.dot_dimension_numbers<[1], [0], [0], [1], [0, 0, 1, 1], [], []>} : vector<1x16xf32>, vector<16x128xf32>, vector<1x128xf32> -> vector<1x128xf32>
    %cst_156 = arith.constant dense<0.000000e+00> : vector<1x128xf32>
    %380 = tpu.matmul %378, %364, %cst_156 {dimension_numbers = #tpu.dot_dimension_numbers<[1], [0], [0], [1], [0, 0, 1, 1], [], []>} : vector<1x16xf32>, vector<16x128xf32>, vector<1x128xf32> -> vector<1x128xf32>
    %381 = vector.broadcast %379 : vector<1x128xf32> to vector<16x128xf32>
    %382 = arith.mulf %315, %381 : vector<16x128xf32>
    %383 = vector.broadcast %380 : vector<1x128xf32> to vector<16x128xf32>
    %384 = arith.addf %382, %383 : vector<16x128xf32>
    %cst_157 = arith.constant 0.000000e+00 : f32
    %385 = vector.broadcast %cst_157 : f32 to vector<16x128xf32>
    %386 = arith.cmpf ogt, %384, %385 : vector<16x128xf32>
    %cst_158 = arith.constant 3.000000e-02 : f32
    %387 = vector.broadcast %cst_158 : f32 to vector<16x128xf32>
    %388 = arith.mulf %387, %384 : vector<16x128xf32>
    %389 = arith.select %386, %384, %388 : vector<16x128xi1>, vector<16x128xf32>
    %390 = vector.shape_cast %389 : vector<16x128xf32> to vector<2x8x128xf32>
    %391 = vector.extract_strided_slice %390 {offsets = [0, 0, 16], sizes = [2, 8, 112], strides = [1, 1, 1]} : vector<2x8x128xf32> to vector<2x8x112xf32>
    %392 = vector.extract_strided_slice %390 {offsets = [0, 0, 112], sizes = [2, 8, 16], strides = [1, 1, 1]} : vector<2x8x128xf32> to vector<2x8x16xf32>
    %393 = tpu.concatenate %391, %392 in 2 : vector<2x8x112xf32>, vector<2x8x16xf32> -> vector<2x8x128xf32>
    %394 = arith.maximumf %390, %393 : vector<2x8x128xf32>
    %395 = vector.shape_cast %394 : vector<2x8x128xf32> to vector<2x4x2x128xf32>
    %396 = vector.extract_strided_slice %395 {offsets = [0, 0, 0, 0], sizes = [2, 4, 1, 128], strides = [1, 1, 1, 1]} : vector<2x4x2x128xf32> to vector<2x4x1x128xf32>
    %397 = vector.shape_cast %396 : vector<2x4x1x128xf32> to vector<2x4x128xf32>
    %398 = vector.extract_strided_slice %395 {offsets = [0, 0, 1, 0], sizes = [2, 4, 1, 128], strides = [1, 1, 1, 1]} : vector<2x4x2x128xf32> to vector<2x4x1x128xf32>
    %399 = vector.shape_cast %398 : vector<2x4x1x128xf32> to vector<2x4x128xf32>
    %400 = arith.maximumf %397, %399 : vector<2x4x128xf32>
    %cst_159 = arith.constant 0.000000e+00 : f32
    %401 = vector.broadcast %cst_159 : f32 to vector<2x1x128xf32>
    %402 = vector.extract_strided_slice %400 {offsets = [0, 0, 0], sizes = [2, 3, 128], strides = [1, 1, 1]} : vector<2x4x128xf32> to vector<2x3x128xf32>
    %403 = tpu.concatenate %401, %402 in 1 : vector<2x1x128xf32>, vector<2x3x128xf32> -> vector<2x4x128xf32>
    %404 = vector.shape_cast %403 : vector<2x4x128xf32> to vector<8x128xf32>
    %c0_160 = arith.constant 0 : index
    %c0_161 = arith.constant 0 : index
    %c0_162 = arith.constant 0 : index
    %405 = vector.load %arg13[%c0_160, %c0_161, %c0_162] : memref<3x128x128xf32, #tpu.memory_space<vmem>>, vector<1x128x128xf32>
    %406 = vector.shape_cast %405 : vector<1x128x128xf32> to vector<128x128xf32>
    %cst_163 = arith.constant dense<0.000000e+00> : vector<8x128xf32>
    %407 = tpu.matmul %404, %406, %cst_163 {dimension_numbers = #tpu.dot_dimension_numbers<[1], [0], [0], [1], [0, 0, 1, 1], [], []>} : vector<8x128xf32>, vector<128x128xf32>, vector<8x128xf32> -> vector<8x128xf32>
    %408 = vector.shape_cast %400 : vector<2x4x128xf32> to vector<8x128xf32>
    %c1_164 = arith.constant 1 : index
    %c0_165 = arith.constant 0 : index
    %c0_166 = arith.constant 0 : index
    %409 = vector.load %arg13[%c1_164, %c0_165, %c0_166] : memref<3x128x128xf32, #tpu.memory_space<vmem>>, vector<1x128x128xf32>
    %410 = vector.shape_cast %409 : vector<1x128x128xf32> to vector<128x128xf32>
    %cst_167 = arith.constant dense<0.000000e+00> : vector<8x128xf32>
    %411 = tpu.matmul %408, %410, %cst_167 {dimension_numbers = #tpu.dot_dimension_numbers<[1], [0], [0], [1], [0, 0, 1, 1], [], []>} : vector<8x128xf32>, vector<128x128xf32>, vector<8x128xf32> -> vector<8x128xf32>
    %412 = arith.addf %407, %411 : vector<8x128xf32>
    %cst_168 = arith.constant 0.000000e+00 : f32
    %413 = vector.broadcast %cst_168 : f32 to vector<2x1x128xf32>
    %414 = vector.extract_strided_slice %400 {offsets = [0, 1, 0], sizes = [2, 3, 128], strides = [1, 1, 1]} : vector<2x4x128xf32> to vector<2x3x128xf32>
    %415 = tpu.concatenate %414, %413 in 1 : vector<2x3x128xf32>, vector<2x1x128xf32> -> vector<2x4x128xf32>
    %416 = vector.shape_cast %415 : vector<2x4x128xf32> to vector<8x128xf32>
    %c2_169 = arith.constant 2 : index
    %c0_170 = arith.constant 0 : index
    %c0_171 = arith.constant 0 : index
    %417 = vector.load %arg13[%c2_169, %c0_170, %c0_171] : memref<3x128x128xf32, #tpu.memory_space<vmem>>, vector<1x128x128xf32>
    %418 = vector.shape_cast %417 : vector<1x128x128xf32> to vector<128x128xf32>
    %cst_172 = arith.constant dense<0.000000e+00> : vector<8x128xf32>
    %419 = tpu.matmul %416, %418, %cst_172 {dimension_numbers = #tpu.dot_dimension_numbers<[1], [0], [0], [1], [0, 0, 1, 1], [], []>} : vector<8x128xf32>, vector<128x128xf32>, vector<8x128xf32> -> vector<8x128xf32>
    %420 = arith.addf %412, %419 : vector<8x128xf32>
    %c0_173 = arith.constant 0 : index
    %c0_174 = arith.constant 0 : index
    %421 = vector.load %arg14[%c0_173, %c0_174] : memref<1x32xf32, #tpu.memory_space<vmem>>, vector<1x32xf32>
    %c0_175 = arith.constant 0 : index
    %c0_176 = arith.constant 0 : index
    %422 = vector.load %arg15[%c0_175, %c0_176] : memref<1x32xf32, #tpu.memory_space<vmem>>, vector<1x32xf32>
    %cst_177 = arith.constant dense<0.000000e+00> : vector<128xf32>
    %423 = vector.multi_reduction <add>, %420, %cst_177 [0] : vector<8x128xf32> to vector<128xf32>
    %424 = vector.shape_cast %423 : vector<128xf32> to vector<1x128xf32>
    %425 = arith.mulf %420, %420 : vector<8x128xf32>
    %cst_178 = arith.constant dense<0.000000e+00> : vector<128xf32>
    %426 = vector.multi_reduction <add>, %425, %cst_178 [0] : vector<8x128xf32> to vector<128xf32>
    %427 = vector.shape_cast %426 : vector<128xf32> to vector<1x128xf32>
    %428 = tpu.iota {dimensions = array<i32: 0>} : vector<128x32xi32>
    %c32_i32 = arith.constant 32 : i32
    %c0_i32_179 = arith.constant 0 : i32
    %429 = arith.cmpi eq, %c32_i32, %c0_i32_179 : i32
    %c1_i32_180 = arith.constant 1 : i32
    %430 = arith.select %429, %c1_i32_180, %c32_i32 : i32
    %431 = vector.broadcast %430 : i32 to vector<128x32xi32>
    %432 = arith.remsi %428, %431 : vector<128x32xi32>
    %c0_i32_181 = arith.constant 0 : i32
    %433 = vector.broadcast %c0_i32_181 : i32 to vector<128x32xi32>
    %434 = arith.cmpi ne, %432, %433 : vector<128x32xi32>
    %c0_i32_182 = arith.constant 0 : i32
    %435 = vector.broadcast %c0_i32_182 : i32 to vector<128x32xi32>
    %436 = arith.cmpi slt, %432, %435 : vector<128x32xi32>
    %c0_i32_183 = arith.constant 0 : i32
    %437 = arith.cmpi slt, %430, %c0_i32_183 : i32
    %438 = vector.broadcast %437 : i1 to vector<128x32xi1>
    %439 = vector.broadcast %438 : vector<128x32xi1> to vector<128x32xi1>
    %440 = arith.xori %436, %439 : vector<128x32xi1>
    %441 = arith.andi %440, %434 : vector<128x32xi1>
    %442 = vector.broadcast %430 : i32 to vector<128x32xi32>
    %443 = arith.addi %432, %442 : vector<128x32xi32>
    %444 = arith.select %441, %443, %432 : vector<128x32xi1>, vector<128x32xi32>
    %445 = tpu.iota {dimensions = array<i32: 1>} : vector<128x32xi32>
    %446 = arith.cmpi eq, %444, %445 : vector<128x32xi32>
    %447 = arith.extui %446 : vector<128x32xi1> to vector<128x32xi32>
    %448 = arith.sitofp %447 : vector<128x32xi32> to vector<128x32xf32>
    %449 = tpu.iota {dimensions = array<i32: 0>} : vector<32x128xi32>
    %450 = tpu.iota {dimensions = array<i32: 1>} : vector<32x128xi32>
    %c32_i32_184 = arith.constant 32 : i32
    %c0_i32_185 = arith.constant 0 : i32
    %451 = arith.cmpi eq, %c32_i32_184, %c0_i32_185 : i32
    %c1_i32_186 = arith.constant 1 : i32
    %452 = arith.select %451, %c1_i32_186, %c32_i32_184 : i32
    %453 = vector.broadcast %452 : i32 to vector<32x128xi32>
    %454 = arith.remsi %450, %453 : vector<32x128xi32>
    %c0_i32_187 = arith.constant 0 : i32
    %455 = vector.broadcast %c0_i32_187 : i32 to vector<32x128xi32>
    %456 = arith.cmpi ne, %454, %455 : vector<32x128xi32>
    %c0_i32_188 = arith.constant 0 : i32
    %457 = vector.broadcast %c0_i32_188 : i32 to vector<32x128xi32>
    %458 = arith.cmpi slt, %454, %457 : vector<32x128xi32>
    %c0_i32_189 = arith.constant 0 : i32
    %459 = arith.cmpi slt, %452, %c0_i32_189 : i32
    %460 = vector.broadcast %459 : i1 to vector<32x128xi1>
    %461 = vector.broadcast %460 : vector<32x128xi1> to vector<32x128xi1>
    %462 = arith.xori %458, %461 : vector<32x128xi1>
    %463 = arith.andi %462, %456 : vector<32x128xi1>
    %464 = vector.broadcast %452 : i32 to vector<32x128xi32>
    %465 = arith.addi %454, %464 : vector<32x128xi32>
    %466 = arith.select %463, %465, %454 : vector<32x128xi1>, vector<32x128xi32>
    %467 = arith.cmpi eq, %449, %466 : vector<32x128xi32>
    %468 = arith.extui %467 : vector<32x128xi1> to vector<32x128xi32>
    %469 = arith.sitofp %468 : vector<32x128xi32> to vector<32x128xf32>
    %cst_190 = arith.constant dense<0.000000e+00> : vector<1x32xf32>
    %470 = tpu.matmul %424, %448, %cst_190 {dimension_numbers = #tpu.dot_dimension_numbers<[1], [0], [0], [1], [0, 0, 1, 1], [], []>} : vector<1x128xf32>, vector<128x32xf32>, vector<1x32xf32> -> vector<1x32xf32>
    %cst_191 = arith.constant dense<0.000000e+00> : vector<1x32xf32>
    %471 = tpu.matmul %427, %448, %cst_191 {dimension_numbers = #tpu.dot_dimension_numbers<[1], [0], [0], [1], [0, 0, 1, 1], [], []>} : vector<1x128xf32>, vector<128x32xf32>, vector<1x32xf32> -> vector<1x32xf32>
    %cst_192 = arith.constant 3.200000e+01 : f32
    %472 = vector.broadcast %cst_192 : f32 to vector<1x32xf32>
    %473 = arith.divf %470, %472 : vector<1x32xf32>
    %cst_193 = arith.constant 3.200000e+01 : f32
    %474 = vector.broadcast %cst_193 : f32 to vector<1x32xf32>
    %475 = arith.divf %471, %474 : vector<1x32xf32>
    %476 = arith.mulf %473, %473 : vector<1x32xf32>
    %477 = arith.subf %475, %476 : vector<1x32xf32>
    %cst_194 = arith.constant 9.99999974E-6 : f32
    %478 = vector.broadcast %cst_194 : f32 to vector<1x32xf32>
    %479 = arith.addf %477, %478 : vector<1x32xf32>
    %480 = math.rsqrt %479 : vector<1x32xf32>
    %481 = arith.mulf %421, %480 : vector<1x32xf32>
    %482 = arith.mulf %473, %481 : vector<1x32xf32>
    %483 = arith.subf %422, %482 : vector<1x32xf32>
    %cst_195 = arith.constant dense<0.000000e+00> : vector<1x128xf32>
    %484 = tpu.matmul %481, %469, %cst_195 {dimension_numbers = #tpu.dot_dimension_numbers<[1], [0], [0], [1], [0, 0, 1, 1], [], []>} : vector<1x32xf32>, vector<32x128xf32>, vector<1x128xf32> -> vector<1x128xf32>
    %cst_196 = arith.constant dense<0.000000e+00> : vector<1x128xf32>
    %485 = tpu.matmul %483, %469, %cst_196 {dimension_numbers = #tpu.dot_dimension_numbers<[1], [0], [0], [1], [0, 0, 1, 1], [], []>} : vector<1x32xf32>, vector<32x128xf32>, vector<1x128xf32> -> vector<1x128xf32>
    %486 = vector.broadcast %484 : vector<1x128xf32> to vector<8x128xf32>
    %487 = arith.mulf %420, %486 : vector<8x128xf32>
    %488 = vector.broadcast %485 : vector<1x128xf32> to vector<8x128xf32>
    %489 = arith.addf %487, %488 : vector<8x128xf32>
    %cst_197 = arith.constant 0.000000e+00 : f32
    %490 = vector.broadcast %cst_197 : f32 to vector<8x128xf32>
    %491 = arith.cmpf ogt, %489, %490 : vector<8x128xf32>
    %cst_198 = arith.constant 3.000000e-02 : f32
    %492 = vector.broadcast %cst_198 : f32 to vector<8x128xf32>
    %493 = arith.mulf %492, %489 : vector<8x128xf32>
    %494 = arith.select %491, %489, %493 : vector<8x128xi1>, vector<8x128xf32>
    %495 = vector.shape_cast %494 : vector<8x128xf32> to vector<2x4x128xf32>
    %cst_199 = arith.constant 0.000000e+00 : f32
    %496 = vector.broadcast %cst_199 : f32 to vector<2x1x128xf32>
    %497 = vector.extract_strided_slice %495 {offsets = [0, 0, 0], sizes = [2, 3, 128], strides = [1, 1, 1]} : vector<2x4x128xf32> to vector<2x3x128xf32>
    %498 = tpu.concatenate %496, %497 in 1 : vector<2x1x128xf32>, vector<2x3x128xf32> -> vector<2x4x128xf32>
    %499 = vector.shape_cast %498 : vector<2x4x128xf32> to vector<8x128xf32>
    %c0_200 = arith.constant 0 : index
    %c0_201 = arith.constant 0 : index
    %c0_202 = arith.constant 0 : index
    %500 = vector.load %arg16[%c0_200, %c0_201, %c0_202] : memref<3x128x128xf32, #tpu.memory_space<vmem>>, vector<1x128x128xf32>
    %501 = vector.shape_cast %500 : vector<1x128x128xf32> to vector<128x128xf32>
    %cst_203 = arith.constant dense<0.000000e+00> : vector<8x128xf32>
    %502 = tpu.matmul %499, %501, %cst_203 {dimension_numbers = #tpu.dot_dimension_numbers<[1], [0], [0], [1], [0, 0, 1, 1], [], []>} : vector<8x128xf32>, vector<128x128xf32>, vector<8x128xf32> -> vector<8x128xf32>
    %503 = vector.shape_cast %495 : vector<2x4x128xf32> to vector<8x128xf32>
    %c1_204 = arith.constant 1 : index
    %c0_205 = arith.constant 0 : index
    %c0_206 = arith.constant 0 : index
    %504 = vector.load %arg16[%c1_204, %c0_205, %c0_206] : memref<3x128x128xf32, #tpu.memory_space<vmem>>, vector<1x128x128xf32>
    %505 = vector.shape_cast %504 : vector<1x128x128xf32> to vector<128x128xf32>
    %cst_207 = arith.constant dense<0.000000e+00> : vector<8x128xf32>
    %506 = tpu.matmul %503, %505, %cst_207 {dimension_numbers = #tpu.dot_dimension_numbers<[1], [0], [0], [1], [0, 0, 1, 1], [], []>} : vector<8x128xf32>, vector<128x128xf32>, vector<8x128xf32> -> vector<8x128xf32>
    %507 = arith.addf %502, %506 : vector<8x128xf32>
    %cst_208 = arith.constant 0.000000e+00 : f32
    %508 = vector.broadcast %cst_208 : f32 to vector<2x1x128xf32>
    %509 = vector.extract_strided_slice %495 {offsets = [0, 1, 0], sizes = [2, 3, 128], strides = [1, 1, 1]} : vector<2x4x128xf32> to vector<2x3x128xf32>
    %510 = tpu.concatenate %509, %508 in 1 : vector<2x3x128xf32>, vector<2x1x128xf32> -> vector<2x4x128xf32>
    %511 = vector.shape_cast %510 : vector<2x4x128xf32> to vector<8x128xf32>
    %c2_209 = arith.constant 2 : index
    %c0_210 = arith.constant 0 : index
    %c0_211 = arith.constant 0 : index
    %512 = vector.load %arg16[%c2_209, %c0_210, %c0_211] : memref<3x128x128xf32, #tpu.memory_space<vmem>>, vector<1x128x128xf32>
    %513 = vector.shape_cast %512 : vector<1x128x128xf32> to vector<128x128xf32>
    %cst_212 = arith.constant dense<0.000000e+00> : vector<8x128xf32>
    %514 = tpu.matmul %511, %513, %cst_212 {dimension_numbers = #tpu.dot_dimension_numbers<[1], [0], [0], [1], [0, 0, 1, 1], [], []>} : vector<8x128xf32>, vector<128x128xf32>, vector<8x128xf32> -> vector<8x128xf32>
    %515 = arith.addf %507, %514 : vector<8x128xf32>
    %c0_213 = arith.constant 0 : index
    %c0_214 = arith.constant 0 : index
    %516 = vector.load %arg17[%c0_213, %c0_214] : memref<1x32xf32, #tpu.memory_space<vmem>>, vector<1x32xf32>
    %c0_215 = arith.constant 0 : index
    %c0_216 = arith.constant 0 : index
    %517 = vector.load %arg18[%c0_215, %c0_216] : memref<1x32xf32, #tpu.memory_space<vmem>>, vector<1x32xf32>
    %cst_217 = arith.constant dense<0.000000e+00> : vector<128xf32>
    %518 = vector.multi_reduction <add>, %515, %cst_217 [0] : vector<8x128xf32> to vector<128xf32>
    %519 = vector.shape_cast %518 : vector<128xf32> to vector<1x128xf32>
    %520 = arith.mulf %515, %515 : vector<8x128xf32>
    %cst_218 = arith.constant dense<0.000000e+00> : vector<128xf32>
    %521 = vector.multi_reduction <add>, %520, %cst_218 [0] : vector<8x128xf32> to vector<128xf32>
    %522 = vector.shape_cast %521 : vector<128xf32> to vector<1x128xf32>
    %523 = tpu.iota {dimensions = array<i32: 0>} : vector<128x32xi32>
    %c32_i32_219 = arith.constant 32 : i32
    %c0_i32_220 = arith.constant 0 : i32
    %524 = arith.cmpi eq, %c32_i32_219, %c0_i32_220 : i32
    %c1_i32_221 = arith.constant 1 : i32
    %525 = arith.select %524, %c1_i32_221, %c32_i32_219 : i32
    %526 = vector.broadcast %525 : i32 to vector<128x32xi32>
    %527 = arith.remsi %523, %526 : vector<128x32xi32>
    %c0_i32_222 = arith.constant 0 : i32
    %528 = vector.broadcast %c0_i32_222 : i32 to vector<128x32xi32>
    %529 = arith.cmpi ne, %527, %528 : vector<128x32xi32>
    %c0_i32_223 = arith.constant 0 : i32
    %530 = vector.broadcast %c0_i32_223 : i32 to vector<128x32xi32>
    %531 = arith.cmpi slt, %527, %530 : vector<128x32xi32>
    %c0_i32_224 = arith.constant 0 : i32
    %532 = arith.cmpi slt, %525, %c0_i32_224 : i32
    %533 = vector.broadcast %532 : i1 to vector<128x32xi1>
    %534 = vector.broadcast %533 : vector<128x32xi1> to vector<128x32xi1>
    %535 = arith.xori %531, %534 : vector<128x32xi1>
    %536 = arith.andi %535, %529 : vector<128x32xi1>
    %537 = vector.broadcast %525 : i32 to vector<128x32xi32>
    %538 = arith.addi %527, %537 : vector<128x32xi32>
    %539 = arith.select %536, %538, %527 : vector<128x32xi1>, vector<128x32xi32>
    %540 = tpu.iota {dimensions = array<i32: 1>} : vector<128x32xi32>
    %541 = arith.cmpi eq, %539, %540 : vector<128x32xi32>
    %542 = arith.extui %541 : vector<128x32xi1> to vector<128x32xi32>
    %543 = arith.sitofp %542 : vector<128x32xi32> to vector<128x32xf32>
    %544 = tpu.iota {dimensions = array<i32: 0>} : vector<32x128xi32>
    %545 = tpu.iota {dimensions = array<i32: 1>} : vector<32x128xi32>
    %c32_i32_225 = arith.constant 32 : i32
    %c0_i32_226 = arith.constant 0 : i32
    %546 = arith.cmpi eq, %c32_i32_225, %c0_i32_226 : i32
    %c1_i32_227 = arith.constant 1 : i32
    %547 = arith.select %546, %c1_i32_227, %c32_i32_225 : i32
    %548 = vector.broadcast %547 : i32 to vector<32x128xi32>
    %549 = arith.remsi %545, %548 : vector<32x128xi32>
    %c0_i32_228 = arith.constant 0 : i32
    %550 = vector.broadcast %c0_i32_228 : i32 to vector<32x128xi32>
    %551 = arith.cmpi ne, %549, %550 : vector<32x128xi32>
    %c0_i32_229 = arith.constant 0 : i32
    %552 = vector.broadcast %c0_i32_229 : i32 to vector<32x128xi32>
    %553 = arith.cmpi slt, %549, %552 : vector<32x128xi32>
    %c0_i32_230 = arith.constant 0 : i32
    %554 = arith.cmpi slt, %547, %c0_i32_230 : i32
    %555 = vector.broadcast %554 : i1 to vector<32x128xi1>
    %556 = vector.broadcast %555 : vector<32x128xi1> to vector<32x128xi1>
    %557 = arith.xori %553, %556 : vector<32x128xi1>
    %558 = arith.andi %557, %551 : vector<32x128xi1>
    %559 = vector.broadcast %547 : i32 to vector<32x128xi32>
    %560 = arith.addi %549, %559 : vector<32x128xi32>
    %561 = arith.select %558, %560, %549 : vector<32x128xi1>, vector<32x128xi32>
    %562 = arith.cmpi eq, %544, %561 : vector<32x128xi32>
    %563 = arith.extui %562 : vector<32x128xi1> to vector<32x128xi32>
    %564 = arith.sitofp %563 : vector<32x128xi32> to vector<32x128xf32>
    %cst_231 = arith.constant dense<0.000000e+00> : vector<1x32xf32>
    %565 = tpu.matmul %519, %543, %cst_231 {dimension_numbers = #tpu.dot_dimension_numbers<[1], [0], [0], [1], [0, 0, 1, 1], [], []>} : vector<1x128xf32>, vector<128x32xf32>, vector<1x32xf32> -> vector<1x32xf32>
    %cst_232 = arith.constant dense<0.000000e+00> : vector<1x32xf32>
    %566 = tpu.matmul %522, %543, %cst_232 {dimension_numbers = #tpu.dot_dimension_numbers<[1], [0], [0], [1], [0, 0, 1, 1], [], []>} : vector<1x128xf32>, vector<128x32xf32>, vector<1x32xf32> -> vector<1x32xf32>
    %cst_233 = arith.constant 3.200000e+01 : f32
    %567 = vector.broadcast %cst_233 : f32 to vector<1x32xf32>
    %568 = arith.divf %565, %567 : vector<1x32xf32>
    %cst_234 = arith.constant 3.200000e+01 : f32
    %569 = vector.broadcast %cst_234 : f32 to vector<1x32xf32>
    %570 = arith.divf %566, %569 : vector<1x32xf32>
    %571 = arith.mulf %568, %568 : vector<1x32xf32>
    %572 = arith.subf %570, %571 : vector<1x32xf32>
    %cst_235 = arith.constant 9.99999974E-6 : f32
    %573 = vector.broadcast %cst_235 : f32 to vector<1x32xf32>
    %574 = arith.addf %572, %573 : vector<1x32xf32>
    %575 = math.rsqrt %574 : vector<1x32xf32>
    %576 = arith.mulf %516, %575 : vector<1x32xf32>
    %577 = arith.mulf %568, %576 : vector<1x32xf32>
    %578 = arith.subf %517, %577 : vector<1x32xf32>
    %cst_236 = arith.constant dense<0.000000e+00> : vector<1x128xf32>
    %579 = tpu.matmul %576, %564, %cst_236 {dimension_numbers = #tpu.dot_dimension_numbers<[1], [0], [0], [1], [0, 0, 1, 1], [], []>} : vector<1x32xf32>, vector<32x128xf32>, vector<1x128xf32> -> vector<1x128xf32>
    %cst_237 = arith.constant dense<0.000000e+00> : vector<1x128xf32>
    %580 = tpu.matmul %578, %564, %cst_237 {dimension_numbers = #tpu.dot_dimension_numbers<[1], [0], [0], [1], [0, 0, 1, 1], [], []>} : vector<1x32xf32>, vector<32x128xf32>, vector<1x128xf32> -> vector<1x128xf32>
    %581 = vector.broadcast %579 : vector<1x128xf32> to vector<8x128xf32>
    %582 = arith.mulf %515, %581 : vector<8x128xf32>
    %583 = vector.broadcast %580 : vector<1x128xf32> to vector<8x128xf32>
    %584 = arith.addf %582, %583 : vector<8x128xf32>
    %cst_238 = arith.constant 0.000000e+00 : f32
    %585 = vector.broadcast %cst_238 : f32 to vector<8x128xf32>
    %586 = arith.cmpf ogt, %584, %585 : vector<8x128xf32>
    %cst_239 = arith.constant 3.000000e-02 : f32
    %587 = vector.broadcast %cst_239 : f32 to vector<8x128xf32>
    %588 = arith.mulf %587, %584 : vector<8x128xf32>
    %589 = arith.select %586, %584, %588 : vector<8x128xi1>, vector<8x128xf32>
    %590 = vector.shape_cast %589 : vector<8x128xf32> to vector<2x4x128xf32>
    %591 = vector.extract_strided_slice %590 {offsets = [0, 0, 32], sizes = [2, 4, 96], strides = [1, 1, 1]} : vector<2x4x128xf32> to vector<2x4x96xf32>
    %592 = vector.extract_strided_slice %590 {offsets = [0, 0, 96], sizes = [2, 4, 32], strides = [1, 1, 1]} : vector<2x4x128xf32> to vector<2x4x32xf32>
    %593 = tpu.concatenate %591, %592 in 2 : vector<2x4x96xf32>, vector<2x4x32xf32> -> vector<2x4x128xf32>
    %594 = arith.maximumf %590, %593 : vector<2x4x128xf32>
    %595 = vector.shape_cast %594 : vector<2x4x128xf32> to vector<2x2x2x128xf32>
    %596 = vector.extract_strided_slice %595 {offsets = [0, 0, 0, 0], sizes = [2, 2, 1, 128], strides = [1, 1, 1, 1]} : vector<2x2x2x128xf32> to vector<2x2x1x128xf32>
    %597 = vector.shape_cast %596 : vector<2x2x1x128xf32> to vector<2x2x128xf32>
    %598 = vector.extract_strided_slice %595 {offsets = [0, 0, 1, 0], sizes = [2, 2, 1, 128], strides = [1, 1, 1, 1]} : vector<2x2x2x128xf32> to vector<2x2x1x128xf32>
    %599 = vector.shape_cast %598 : vector<2x2x1x128xf32> to vector<2x2x128xf32>
    %600 = arith.maximumf %597, %599 : vector<2x2x128xf32>
    %cst_240 = arith.constant 0.000000e+00 : f32
    %601 = vector.broadcast %cst_240 : f32 to vector<2x1x128xf32>
    %602 = vector.extract_strided_slice %600 {offsets = [0, 0, 0], sizes = [2, 1, 128], strides = [1, 1, 1]} : vector<2x2x128xf32> to vector<2x1x128xf32>
    %603 = tpu.concatenate %601, %602 in 1 : vector<2x1x128xf32>, vector<2x1x128xf32> -> vector<2x2x128xf32>
    %604 = vector.shape_cast %603 : vector<2x2x128xf32> to vector<4x128xf32>
    %c0_241 = arith.constant 0 : index
    %c0_242 = arith.constant 0 : index
    %c0_243 = arith.constant 0 : index
    %605 = vector.load %arg19[%c0_241, %c0_242, %c0_243] : memref<3x128x128xf32, #tpu.memory_space<vmem>>, vector<1x128x128xf32>
    %606 = vector.shape_cast %605 : vector<1x128x128xf32> to vector<128x128xf32>
    %cst_244 = arith.constant dense<0.000000e+00> : vector<4x128xf32>
    %607 = tpu.matmul %604, %606, %cst_244 {dimension_numbers = #tpu.dot_dimension_numbers<[1], [0], [0], [1], [0, 0, 1, 1], [], []>} : vector<4x128xf32>, vector<128x128xf32>, vector<4x128xf32> -> vector<4x128xf32>
    %608 = vector.shape_cast %600 : vector<2x2x128xf32> to vector<4x128xf32>
    %c1_245 = arith.constant 1 : index
    %c0_246 = arith.constant 0 : index
    %c0_247 = arith.constant 0 : index
    %609 = vector.load %arg19[%c1_245, %c0_246, %c0_247] : memref<3x128x128xf32, #tpu.memory_space<vmem>>, vector<1x128x128xf32>
    %610 = vector.shape_cast %609 : vector<1x128x128xf32> to vector<128x128xf32>
    %cst_248 = arith.constant dense<0.000000e+00> : vector<4x128xf32>
    %611 = tpu.matmul %608, %610, %cst_248 {dimension_numbers = #tpu.dot_dimension_numbers<[1], [0], [0], [1], [0, 0, 1, 1], [], []>} : vector<4x128xf32>, vector<128x128xf32>, vector<4x128xf32> -> vector<4x128xf32>
    %612 = arith.addf %607, %611 : vector<4x128xf32>
    %cst_249 = arith.constant 0.000000e+00 : f32
    %613 = vector.broadcast %cst_249 : f32 to vector<2x1x128xf32>
    %614 = vector.extract_strided_slice %600 {offsets = [0, 1, 0], sizes = [2, 1, 128], strides = [1, 1, 1]} : vector<2x2x128xf32> to vector<2x1x128xf32>
    %615 = tpu.concatenate %614, %613 in 1 : vector<2x1x128xf32>, vector<2x1x128xf32> -> vector<2x2x128xf32>
    %616 = vector.shape_cast %615 : vector<2x2x128xf32> to vector<4x128xf32>
    %c2_250 = arith.constant 2 : index
    %c0_251 = arith.constant 0 : index
    %c0_252 = arith.constant 0 : index
    %617 = vector.load %arg19[%c2_250, %c0_251, %c0_252] : memref<3x128x128xf32, #tpu.memory_space<vmem>>, vector<1x128x128xf32>
    %618 = vector.shape_cast %617 : vector<1x128x128xf32> to vector<128x128xf32>
    %cst_253 = arith.constant dense<0.000000e+00> : vector<4x128xf32>
    %619 = tpu.matmul %616, %618, %cst_253 {dimension_numbers = #tpu.dot_dimension_numbers<[1], [0], [0], [1], [0, 0, 1, 1], [], []>} : vector<4x128xf32>, vector<128x128xf32>, vector<4x128xf32> -> vector<4x128xf32>
    %620 = arith.addf %612, %619 : vector<4x128xf32>
    %c0_254 = arith.constant 0 : index
    %c0_255 = arith.constant 0 : index
    %621 = vector.load %arg20[%c0_254, %c0_255] : memref<1x64xf32, #tpu.memory_space<vmem>>, vector<1x64xf32>
    %c0_256 = arith.constant 0 : index
    %c0_257 = arith.constant 0 : index
    %622 = vector.load %arg21[%c0_256, %c0_257] : memref<1x64xf32, #tpu.memory_space<vmem>>, vector<1x64xf32>
    %cst_258 = arith.constant dense<0.000000e+00> : vector<128xf32>
    %623 = vector.multi_reduction <add>, %620, %cst_258 [0] : vector<4x128xf32> to vector<128xf32>
    %624 = vector.shape_cast %623 : vector<128xf32> to vector<1x128xf32>
    %625 = arith.mulf %620, %620 : vector<4x128xf32>
    %cst_259 = arith.constant dense<0.000000e+00> : vector<128xf32>
    %626 = vector.multi_reduction <add>, %625, %cst_259 [0] : vector<4x128xf32> to vector<128xf32>
    %627 = vector.shape_cast %626 : vector<128xf32> to vector<1x128xf32>
    %628 = tpu.iota {dimensions = array<i32: 0>} : vector<128x64xi32>
    %c64_i32 = arith.constant 64 : i32
    %c0_i32_260 = arith.constant 0 : i32
    %629 = arith.cmpi eq, %c64_i32, %c0_i32_260 : i32
    %c1_i32_261 = arith.constant 1 : i32
    %630 = arith.select %629, %c1_i32_261, %c64_i32 : i32
    %631 = vector.broadcast %630 : i32 to vector<128x64xi32>
    %632 = arith.remsi %628, %631 : vector<128x64xi32>
    %c0_i32_262 = arith.constant 0 : i32
    %633 = vector.broadcast %c0_i32_262 : i32 to vector<128x64xi32>
    %634 = arith.cmpi ne, %632, %633 : vector<128x64xi32>
    %c0_i32_263 = arith.constant 0 : i32
    %635 = vector.broadcast %c0_i32_263 : i32 to vector<128x64xi32>
    %636 = arith.cmpi slt, %632, %635 : vector<128x64xi32>
    %c0_i32_264 = arith.constant 0 : i32
    %637 = arith.cmpi slt, %630, %c0_i32_264 : i32
    %638 = vector.broadcast %637 : i1 to vector<128x64xi1>
    %639 = vector.broadcast %638 : vector<128x64xi1> to vector<128x64xi1>
    %640 = arith.xori %636, %639 : vector<128x64xi1>
    %641 = arith.andi %640, %634 : vector<128x64xi1>
    %642 = vector.broadcast %630 : i32 to vector<128x64xi32>
    %643 = arith.addi %632, %642 : vector<128x64xi32>
    %644 = arith.select %641, %643, %632 : vector<128x64xi1>, vector<128x64xi32>
    %645 = tpu.iota {dimensions = array<i32: 1>} : vector<128x64xi32>
    %646 = arith.cmpi eq, %644, %645 : vector<128x64xi32>
    %647 = arith.extui %646 : vector<128x64xi1> to vector<128x64xi32>
    %648 = arith.sitofp %647 : vector<128x64xi32> to vector<128x64xf32>
    %649 = tpu.iota {dimensions = array<i32: 0>} : vector<64x128xi32>
    %650 = tpu.iota {dimensions = array<i32: 1>} : vector<64x128xi32>
    %c64_i32_265 = arith.constant 64 : i32
    %c0_i32_266 = arith.constant 0 : i32
    %651 = arith.cmpi eq, %c64_i32_265, %c0_i32_266 : i32
    %c1_i32_267 = arith.constant 1 : i32
    %652 = arith.select %651, %c1_i32_267, %c64_i32_265 : i32
    %653 = vector.broadcast %652 : i32 to vector<64x128xi32>
    %654 = arith.remsi %650, %653 : vector<64x128xi32>
    %c0_i32_268 = arith.constant 0 : i32
    %655 = vector.broadcast %c0_i32_268 : i32 to vector<64x128xi32>
    %656 = arith.cmpi ne, %654, %655 : vector<64x128xi32>
    %c0_i32_269 = arith.constant 0 : i32
    %657 = vector.broadcast %c0_i32_269 : i32 to vector<64x128xi32>
    %658 = arith.cmpi slt, %654, %657 : vector<64x128xi32>
    %c0_i32_270 = arith.constant 0 : i32
    %659 = arith.cmpi slt, %652, %c0_i32_270 : i32
    %660 = vector.broadcast %659 : i1 to vector<64x128xi1>
    %661 = vector.broadcast %660 : vector<64x128xi1> to vector<64x128xi1>
    %662 = arith.xori %658, %661 : vector<64x128xi1>
    %663 = arith.andi %662, %656 : vector<64x128xi1>
    %664 = vector.broadcast %652 : i32 to vector<64x128xi32>
    %665 = arith.addi %654, %664 : vector<64x128xi32>
    %666 = arith.select %663, %665, %654 : vector<64x128xi1>, vector<64x128xi32>
    %667 = arith.cmpi eq, %649, %666 : vector<64x128xi32>
    %668 = arith.extui %667 : vector<64x128xi1> to vector<64x128xi32>
    %669 = arith.sitofp %668 : vector<64x128xi32> to vector<64x128xf32>
    %cst_271 = arith.constant dense<0.000000e+00> : vector<1x64xf32>
    %670 = tpu.matmul %624, %648, %cst_271 {dimension_numbers = #tpu.dot_dimension_numbers<[1], [0], [0], [1], [0, 0, 1, 1], [], []>} : vector<1x128xf32>, vector<128x64xf32>, vector<1x64xf32> -> vector<1x64xf32>
    %cst_272 = arith.constant dense<0.000000e+00> : vector<1x64xf32>
    %671 = tpu.matmul %627, %648, %cst_272 {dimension_numbers = #tpu.dot_dimension_numbers<[1], [0], [0], [1], [0, 0, 1, 1], [], []>} : vector<1x128xf32>, vector<128x64xf32>, vector<1x64xf32> -> vector<1x64xf32>
    %cst_273 = arith.constant 8.000000e+00 : f32
    %672 = vector.broadcast %cst_273 : f32 to vector<1x64xf32>
    %673 = arith.divf %670, %672 : vector<1x64xf32>
    %cst_274 = arith.constant 8.000000e+00 : f32
    %674 = vector.broadcast %cst_274 : f32 to vector<1x64xf32>
    %675 = arith.divf %671, %674 : vector<1x64xf32>
    %676 = arith.mulf %673, %673 : vector<1x64xf32>
    %677 = arith.subf %675, %676 : vector<1x64xf32>
    %cst_275 = arith.constant 9.99999974E-6 : f32
    %678 = vector.broadcast %cst_275 : f32 to vector<1x64xf32>
    %679 = arith.addf %677, %678 : vector<1x64xf32>
    %680 = math.rsqrt %679 : vector<1x64xf32>
    %681 = arith.mulf %621, %680 : vector<1x64xf32>
    %682 = arith.mulf %673, %681 : vector<1x64xf32>
    %683 = arith.subf %622, %682 : vector<1x64xf32>
    %cst_276 = arith.constant dense<0.000000e+00> : vector<1x128xf32>
    %684 = tpu.matmul %681, %669, %cst_276 {dimension_numbers = #tpu.dot_dimension_numbers<[1], [0], [0], [1], [0, 0, 1, 1], [], []>} : vector<1x64xf32>, vector<64x128xf32>, vector<1x128xf32> -> vector<1x128xf32>
    %cst_277 = arith.constant dense<0.000000e+00> : vector<1x128xf32>
    %685 = tpu.matmul %683, %669, %cst_277 {dimension_numbers = #tpu.dot_dimension_numbers<[1], [0], [0], [1], [0, 0, 1, 1], [], []>} : vector<1x64xf32>, vector<64x128xf32>, vector<1x128xf32> -> vector<1x128xf32>
    %686 = vector.broadcast %684 : vector<1x128xf32> to vector<4x128xf32>
    %687 = arith.mulf %620, %686 : vector<4x128xf32>
    %688 = vector.broadcast %685 : vector<1x128xf32> to vector<4x128xf32>
    %689 = arith.addf %687, %688 : vector<4x128xf32>
    %cst_278 = arith.constant 0.000000e+00 : f32
    %690 = vector.broadcast %cst_278 : f32 to vector<4x128xf32>
    %691 = arith.cmpf ogt, %689, %690 : vector<4x128xf32>
    %cst_279 = arith.constant 3.000000e-02 : f32
    %692 = vector.broadcast %cst_279 : f32 to vector<4x128xf32>
    %693 = arith.mulf %692, %689 : vector<4x128xf32>
    %694 = arith.select %691, %689, %693 : vector<4x128xi1>, vector<4x128xf32>
    %695 = vector.shape_cast %694 : vector<4x128xf32> to vector<2x2x128xf32>
    %cst_280 = arith.constant 0.000000e+00 : f32
    %696 = vector.broadcast %cst_280 : f32 to vector<2x1x128xf32>
    %697 = vector.extract_strided_slice %695 {offsets = [0, 0, 0], sizes = [2, 1, 128], strides = [1, 1, 1]} : vector<2x2x128xf32> to vector<2x1x128xf32>
    %698 = tpu.concatenate %696, %697 in 1 : vector<2x1x128xf32>, vector<2x1x128xf32> -> vector<2x2x128xf32>
    %699 = vector.shape_cast %698 : vector<2x2x128xf32> to vector<4x128xf32>
    %c0_281 = arith.constant 0 : index
    %c0_282 = arith.constant 0 : index
    %c0_283 = arith.constant 0 : index
    %700 = vector.load %arg22[%c0_281, %c0_282, %c0_283] : memref<3x128x128xf32, #tpu.memory_space<vmem>>, vector<1x128x128xf32>
    %701 = vector.shape_cast %700 : vector<1x128x128xf32> to vector<128x128xf32>
    %cst_284 = arith.constant dense<0.000000e+00> : vector<4x128xf32>
    %702 = tpu.matmul %699, %701, %cst_284 {dimension_numbers = #tpu.dot_dimension_numbers<[1], [0], [0], [1], [0, 0, 1, 1], [], []>} : vector<4x128xf32>, vector<128x128xf32>, vector<4x128xf32> -> vector<4x128xf32>
    %703 = vector.shape_cast %695 : vector<2x2x128xf32> to vector<4x128xf32>
    %c1_285 = arith.constant 1 : index
    %c0_286 = arith.constant 0 : index
    %c0_287 = arith.constant 0 : index
    %704 = vector.load %arg22[%c1_285, %c0_286, %c0_287] : memref<3x128x128xf32, #tpu.memory_space<vmem>>, vector<1x128x128xf32>
    %705 = vector.shape_cast %704 : vector<1x128x128xf32> to vector<128x128xf32>
    %cst_288 = arith.constant dense<0.000000e+00> : vector<4x128xf32>
    %706 = tpu.matmul %703, %705, %cst_288 {dimension_numbers = #tpu.dot_dimension_numbers<[1], [0], [0], [1], [0, 0, 1, 1], [], []>} : vector<4x128xf32>, vector<128x128xf32>, vector<4x128xf32> -> vector<4x128xf32>
    %707 = arith.addf %702, %706 : vector<4x128xf32>
    %cst_289 = arith.constant 0.000000e+00 : f32
    %708 = vector.broadcast %cst_289 : f32 to vector<2x1x128xf32>
    %709 = vector.extract_strided_slice %695 {offsets = [0, 1, 0], sizes = [2, 1, 128], strides = [1, 1, 1]} : vector<2x2x128xf32> to vector<2x1x128xf32>
    %710 = tpu.concatenate %709, %708 in 1 : vector<2x1x128xf32>, vector<2x1x128xf32> -> vector<2x2x128xf32>
    %711 = vector.shape_cast %710 : vector<2x2x128xf32> to vector<4x128xf32>
    %c2_290 = arith.constant 2 : index
    %c0_291 = arith.constant 0 : index
    %c0_292 = arith.constant 0 : index
    %712 = vector.load %arg22[%c2_290, %c0_291, %c0_292] : memref<3x128x128xf32, #tpu.memory_space<vmem>>, vector<1x128x128xf32>
    %713 = vector.shape_cast %712 : vector<1x128x128xf32> to vector<128x128xf32>
    %cst_293 = arith.constant dense<0.000000e+00> : vector<4x128xf32>
    %714 = tpu.matmul %711, %713, %cst_293 {dimension_numbers = #tpu.dot_dimension_numbers<[1], [0], [0], [1], [0, 0, 1, 1], [], []>} : vector<4x128xf32>, vector<128x128xf32>, vector<4x128xf32> -> vector<4x128xf32>
    %715 = arith.addf %707, %714 : vector<4x128xf32>
    %c0_294 = arith.constant 0 : index
    %c0_295 = arith.constant 0 : index
    %716 = vector.load %arg23[%c0_294, %c0_295] : memref<1x64xf32, #tpu.memory_space<vmem>>, vector<1x64xf32>
    %c0_296 = arith.constant 0 : index
    %c0_297 = arith.constant 0 : index
    %717 = vector.load %arg24[%c0_296, %c0_297] : memref<1x64xf32, #tpu.memory_space<vmem>>, vector<1x64xf32>
    %cst_298 = arith.constant dense<0.000000e+00> : vector<128xf32>
    %718 = vector.multi_reduction <add>, %715, %cst_298 [0] : vector<4x128xf32> to vector<128xf32>
    %719 = vector.shape_cast %718 : vector<128xf32> to vector<1x128xf32>
    %720 = arith.mulf %715, %715 : vector<4x128xf32>
    %cst_299 = arith.constant dense<0.000000e+00> : vector<128xf32>
    %721 = vector.multi_reduction <add>, %720, %cst_299 [0] : vector<4x128xf32> to vector<128xf32>
    %722 = vector.shape_cast %721 : vector<128xf32> to vector<1x128xf32>
    %723 = tpu.iota {dimensions = array<i32: 0>} : vector<128x64xi32>
    %c64_i32_300 = arith.constant 64 : i32
    %c0_i32_301 = arith.constant 0 : i32
    %724 = arith.cmpi eq, %c64_i32_300, %c0_i32_301 : i32
    %c1_i32_302 = arith.constant 1 : i32
    %725 = arith.select %724, %c1_i32_302, %c64_i32_300 : i32
    %726 = vector.broadcast %725 : i32 to vector<128x64xi32>
    %727 = arith.remsi %723, %726 : vector<128x64xi32>
    %c0_i32_303 = arith.constant 0 : i32
    %728 = vector.broadcast %c0_i32_303 : i32 to vector<128x64xi32>
    %729 = arith.cmpi ne, %727, %728 : vector<128x64xi32>
    %c0_i32_304 = arith.constant 0 : i32
    %730 = vector.broadcast %c0_i32_304 : i32 to vector<128x64xi32>
    %731 = arith.cmpi slt, %727, %730 : vector<128x64xi32>
    %c0_i32_305 = arith.constant 0 : i32
    %732 = arith.cmpi slt, %725, %c0_i32_305 : i32
    %733 = vector.broadcast %732 : i1 to vector<128x64xi1>
    %734 = vector.broadcast %733 : vector<128x64xi1> to vector<128x64xi1>
    %735 = arith.xori %731, %734 : vector<128x64xi1>
    %736 = arith.andi %735, %729 : vector<128x64xi1>
    %737 = vector.broadcast %725 : i32 to vector<128x64xi32>
    %738 = arith.addi %727, %737 : vector<128x64xi32>
    %739 = arith.select %736, %738, %727 : vector<128x64xi1>, vector<128x64xi32>
    %740 = tpu.iota {dimensions = array<i32: 1>} : vector<128x64xi32>
    %741 = arith.cmpi eq, %739, %740 : vector<128x64xi32>
    %742 = arith.extui %741 : vector<128x64xi1> to vector<128x64xi32>
    %743 = arith.sitofp %742 : vector<128x64xi32> to vector<128x64xf32>
    %744 = tpu.iota {dimensions = array<i32: 0>} : vector<64x128xi32>
    %745 = tpu.iota {dimensions = array<i32: 1>} : vector<64x128xi32>
    %c64_i32_306 = arith.constant 64 : i32
    %c0_i32_307 = arith.constant 0 : i32
    %746 = arith.cmpi eq, %c64_i32_306, %c0_i32_307 : i32
    %c1_i32_308 = arith.constant 1 : i32
    %747 = arith.select %746, %c1_i32_308, %c64_i32_306 : i32
    %748 = vector.broadcast %747 : i32 to vector<64x128xi32>
    %749 = arith.remsi %745, %748 : vector<64x128xi32>
    %c0_i32_309 = arith.constant 0 : i32
    %750 = vector.broadcast %c0_i32_309 : i32 to vector<64x128xi32>
    %751 = arith.cmpi ne, %749, %750 : vector<64x128xi32>
    %c0_i32_310 = arith.constant 0 : i32
    %752 = vector.broadcast %c0_i32_310 : i32 to vector<64x128xi32>
    %753 = arith.cmpi slt, %749, %752 : vector<64x128xi32>
    %c0_i32_311 = arith.constant 0 : i32
    %754 = arith.cmpi slt, %747, %c0_i32_311 : i32
    %755 = vector.broadcast %754 : i1 to vector<64x128xi1>
    %756 = vector.broadcast %755 : vector<64x128xi1> to vector<64x128xi1>
    %757 = arith.xori %753, %756 : vector<64x128xi1>
    %758 = arith.andi %757, %751 : vector<64x128xi1>
    %759 = vector.broadcast %747 : i32 to vector<64x128xi32>
    %760 = arith.addi %749, %759 : vector<64x128xi32>
    %761 = arith.select %758, %760, %749 : vector<64x128xi1>, vector<64x128xi32>
    %762 = arith.cmpi eq, %744, %761 : vector<64x128xi32>
    %763 = arith.extui %762 : vector<64x128xi1> to vector<64x128xi32>
    %764 = arith.sitofp %763 : vector<64x128xi32> to vector<64x128xf32>
    %cst_312 = arith.constant dense<0.000000e+00> : vector<1x64xf32>
    %765 = tpu.matmul %719, %743, %cst_312 {dimension_numbers = #tpu.dot_dimension_numbers<[1], [0], [0], [1], [0, 0, 1, 1], [], []>} : vector<1x128xf32>, vector<128x64xf32>, vector<1x64xf32> -> vector<1x64xf32>
    %cst_313 = arith.constant dense<0.000000e+00> : vector<1x64xf32>
    %766 = tpu.matmul %722, %743, %cst_313 {dimension_numbers = #tpu.dot_dimension_numbers<[1], [0], [0], [1], [0, 0, 1, 1], [], []>} : vector<1x128xf32>, vector<128x64xf32>, vector<1x64xf32> -> vector<1x64xf32>
    %cst_314 = arith.constant 8.000000e+00 : f32
    %767 = vector.broadcast %cst_314 : f32 to vector<1x64xf32>
    %768 = arith.divf %765, %767 : vector<1x64xf32>
    %cst_315 = arith.constant 8.000000e+00 : f32
    %769 = vector.broadcast %cst_315 : f32 to vector<1x64xf32>
    %770 = arith.divf %766, %769 : vector<1x64xf32>
    %771 = arith.mulf %768, %768 : vector<1x64xf32>
    %772 = arith.subf %770, %771 : vector<1x64xf32>
    %cst_316 = arith.constant 9.99999974E-6 : f32
    %773 = vector.broadcast %cst_316 : f32 to vector<1x64xf32>
    %774 = arith.addf %772, %773 : vector<1x64xf32>
    %775 = math.rsqrt %774 : vector<1x64xf32>
    %776 = arith.mulf %716, %775 : vector<1x64xf32>
    %777 = arith.mulf %768, %776 : vector<1x64xf32>
    %778 = arith.subf %717, %777 : vector<1x64xf32>
    %cst_317 = arith.constant dense<0.000000e+00> : vector<1x128xf32>
    %779 = tpu.matmul %776, %764, %cst_317 {dimension_numbers = #tpu.dot_dimension_numbers<[1], [0], [0], [1], [0, 0, 1, 1], [], []>} : vector<1x64xf32>, vector<64x128xf32>, vector<1x128xf32> -> vector<1x128xf32>
    %cst_318 = arith.constant dense<0.000000e+00> : vector<1x128xf32>
    %780 = tpu.matmul %778, %764, %cst_318 {dimension_numbers = #tpu.dot_dimension_numbers<[1], [0], [0], [1], [0, 0, 1, 1], [], []>} : vector<1x64xf32>, vector<64x128xf32>, vector<1x128xf32> -> vector<1x128xf32>
    %781 = vector.broadcast %779 : vector<1x128xf32> to vector<4x128xf32>
    %782 = arith.mulf %715, %781 : vector<4x128xf32>
    %783 = vector.broadcast %780 : vector<1x128xf32> to vector<4x128xf32>
    %784 = arith.addf %782, %783 : vector<4x128xf32>
    %cst_319 = arith.constant 0.000000e+00 : f32
    %785 = vector.broadcast %cst_319 : f32 to vector<4x128xf32>
    %786 = arith.cmpf ogt, %784, %785 : vector<4x128xf32>
    %cst_320 = arith.constant 3.000000e-02 : f32
    %787 = vector.broadcast %cst_320 : f32 to vector<4x128xf32>
    %788 = arith.mulf %787, %784 : vector<4x128xf32>
    %789 = arith.select %786, %784, %788 : vector<4x128xi1>, vector<4x128xf32>
    %790 = vector.shape_cast %789 : vector<4x128xf32> to vector<2x2x128xf32>
    %c0_321 = arith.constant 0 : index
    %c0_322 = arith.constant 0 : index
    %791 = vector.load %arg26[%c0_321, %c0_322] : memref<1x128xf32, #tpu.memory_space<vmem>>, vector<1x128xf32>
    %792 = vector.shape_cast %790 : vector<2x2x128xf32> to vector<4x128xf32>
    %c0_323 = arith.constant 0 : index
    %c0_324 = arith.constant 0 : index
    %c0_325 = arith.constant 0 : index
    %793 = vector.load %arg25[%c0_323, %c0_324, %c0_325] : memref<2x128x128xf32, #tpu.memory_space<vmem>>, vector<1x128x128xf32>
    %794 = vector.shape_cast %793 : vector<1x128x128xf32> to vector<128x128xf32>
    %cst_326 = arith.constant dense<0.000000e+00> : vector<4x128xf32>
    %795 = tpu.matmul %792, %794, %cst_326 {dimension_numbers = #tpu.dot_dimension_numbers<[1], [0], [0], [1], [0, 0, 1, 1], [], []>} : vector<4x128xf32>, vector<128x128xf32>, vector<4x128xf32> -> vector<4x128xf32>
    %796 = vector.broadcast %791 : vector<1x128xf32> to vector<4x128xf32>
    %797 = arith.addf %795, %796 : vector<4x128xf32>
    %c1_327 = arith.constant 1 : index
    %c0_328 = arith.constant 0 : index
    %c0_329 = arith.constant 0 : index
    %798 = vector.load %arg25[%c1_327, %c0_328, %c0_329] : memref<2x128x128xf32, #tpu.memory_space<vmem>>, vector<1x128x128xf32>
    %799 = vector.shape_cast %798 : vector<1x128x128xf32> to vector<128x128xf32>
    %cst_330 = arith.constant dense<0.000000e+00> : vector<4x128xf32>
    %800 = tpu.matmul %792, %799, %cst_330 {dimension_numbers = #tpu.dot_dimension_numbers<[1], [0], [0], [1], [0, 0, 1, 1], [], []>} : vector<4x128xf32>, vector<128x128xf32>, vector<4x128xf32> -> vector<4x128xf32>
    %801 = vector.broadcast %791 : vector<1x128xf32> to vector<4x128xf32>
    %802 = arith.addf %800, %801 : vector<4x128xf32>
    %803 = vector.shape_cast %797 : vector<4x128xf32> to vector<2x2x128xf32>
    %804 = vector.shape_cast %802 : vector<4x128xf32> to vector<2x2x128xf32>
    %805 = vector.shape_cast %803 : vector<2x2x128xf32> to vector<2x2x1x128xf32>
    %806 = vector.shape_cast %804 : vector<2x2x128xf32> to vector<2x2x1x128xf32>
    %807 = tpu.concatenate %805, %806 in 2 : vector<2x2x1x128xf32>, vector<2x2x1x128xf32> -> vector<2x2x2x128xf32>
    %808 = vector.shape_cast %807 : vector<2x2x2x128xf32> to vector<2x4x128xf32>
    %cst_331 = arith.constant 0.000000e+00 : f32
    %809 = vector.broadcast %cst_331 : f32 to vector<2x1x128xf32>
    %810 = vector.extract_strided_slice %590 {offsets = [0, 0, 0], sizes = [2, 3, 128], strides = [1, 1, 1]} : vector<2x4x128xf32> to vector<2x3x128xf32>
    %811 = tpu.concatenate %809, %810 in 1 : vector<2x1x128xf32>, vector<2x3x128xf32> -> vector<2x4x128xf32>
    %812 = vector.shape_cast %811 : vector<2x4x128xf32> to vector<8x128xf32>
    %c0_332 = arith.constant 0 : index
    %c0_333 = arith.constant 0 : index
    %c0_334 = arith.constant 0 : index
    %813 = vector.load %arg27[%c0_332, %c0_333, %c0_334] : memref<3x128x128xf32, #tpu.memory_space<vmem>>, vector<1x128x128xf32>
    %814 = vector.shape_cast %813 : vector<1x128x128xf32> to vector<128x128xf32>
    %cst_335 = arith.constant dense<0.000000e+00> : vector<8x128xf32>
    %815 = tpu.matmul %812, %814, %cst_335 {dimension_numbers = #tpu.dot_dimension_numbers<[1], [0], [0], [1], [0, 0, 1, 1], [], []>} : vector<8x128xf32>, vector<128x128xf32>, vector<8x128xf32> -> vector<8x128xf32>
    %816 = vector.shape_cast %590 : vector<2x4x128xf32> to vector<8x128xf32>
    %c1_336 = arith.constant 1 : index
    %c0_337 = arith.constant 0 : index
    %c0_338 = arith.constant 0 : index
    %817 = vector.load %arg27[%c1_336, %c0_337, %c0_338] : memref<3x128x128xf32, #tpu.memory_space<vmem>>, vector<1x128x128xf32>
    %818 = vector.shape_cast %817 : vector<1x128x128xf32> to vector<128x128xf32>
    %cst_339 = arith.constant dense<0.000000e+00> : vector<8x128xf32>
    %819 = tpu.matmul %816, %818, %cst_339 {dimension_numbers = #tpu.dot_dimension_numbers<[1], [0], [0], [1], [0, 0, 1, 1], [], []>} : vector<8x128xf32>, vector<128x128xf32>, vector<8x128xf32> -> vector<8x128xf32>
    %820 = arith.addf %815, %819 : vector<8x128xf32>
    %cst_340 = arith.constant 0.000000e+00 : f32
    %821 = vector.broadcast %cst_340 : f32 to vector<2x1x128xf32>
    %822 = vector.extract_strided_slice %590 {offsets = [0, 1, 0], sizes = [2, 3, 128], strides = [1, 1, 1]} : vector<2x4x128xf32> to vector<2x3x128xf32>
    %823 = tpu.concatenate %822, %821 in 1 : vector<2x3x128xf32>, vector<2x1x128xf32> -> vector<2x4x128xf32>
    %824 = vector.shape_cast %823 : vector<2x4x128xf32> to vector<8x128xf32>
    %c2_341 = arith.constant 2 : index
    %c0_342 = arith.constant 0 : index
    %c0_343 = arith.constant 0 : index
    %825 = vector.load %arg27[%c2_341, %c0_342, %c0_343] : memref<3x128x128xf32, #tpu.memory_space<vmem>>, vector<1x128x128xf32>
    %826 = vector.shape_cast %825 : vector<1x128x128xf32> to vector<128x128xf32>
    %cst_344 = arith.constant dense<0.000000e+00> : vector<8x128xf32>
    %827 = tpu.matmul %824, %826, %cst_344 {dimension_numbers = #tpu.dot_dimension_numbers<[1], [0], [0], [1], [0, 0, 1, 1], [], []>} : vector<8x128xf32>, vector<128x128xf32>, vector<8x128xf32> -> vector<8x128xf32>
    %828 = arith.addf %820, %827 : vector<8x128xf32>
    %cst_345 = arith.constant 0.000000e+00 : f32
    %829 = vector.broadcast %cst_345 : f32 to vector<2x1x128xf32>
    %830 = vector.extract_strided_slice %808 {offsets = [0, 0, 0], sizes = [2, 3, 128], strides = [1, 1, 1]} : vector<2x4x128xf32> to vector<2x3x128xf32>
    %831 = tpu.concatenate %829, %830 in 1 : vector<2x1x128xf32>, vector<2x3x128xf32> -> vector<2x4x128xf32>
    %832 = vector.shape_cast %831 : vector<2x4x128xf32> to vector<8x128xf32>
    %c0_346 = arith.constant 0 : index
    %c0_347 = arith.constant 0 : index
    %c0_348 = arith.constant 0 : index
    %833 = vector.load %arg28[%c0_346, %c0_347, %c0_348] : memref<3x128x128xf32, #tpu.memory_space<vmem>>, vector<1x128x128xf32>
    %834 = vector.shape_cast %833 : vector<1x128x128xf32> to vector<128x128xf32>
    %cst_349 = arith.constant dense<0.000000e+00> : vector<8x128xf32>
    %835 = tpu.matmul %832, %834, %cst_349 {dimension_numbers = #tpu.dot_dimension_numbers<[1], [0], [0], [1], [0, 0, 1, 1], [], []>} : vector<8x128xf32>, vector<128x128xf32>, vector<8x128xf32> -> vector<8x128xf32>
    %836 = arith.addf %828, %835 : vector<8x128xf32>
    %837 = vector.shape_cast %808 : vector<2x4x128xf32> to vector<8x128xf32>
    %c1_350 = arith.constant 1 : index
    %c0_351 = arith.constant 0 : index
    %c0_352 = arith.constant 0 : index
    %838 = vector.load %arg28[%c1_350, %c0_351, %c0_352] : memref<3x128x128xf32, #tpu.memory_space<vmem>>, vector<1x128x128xf32>
    %839 = vector.shape_cast %838 : vector<1x128x128xf32> to vector<128x128xf32>
    %cst_353 = arith.constant dense<0.000000e+00> : vector<8x128xf32>
    %840 = tpu.matmul %837, %839, %cst_353 {dimension_numbers = #tpu.dot_dimension_numbers<[1], [0], [0], [1], [0, 0, 1, 1], [], []>} : vector<8x128xf32>, vector<128x128xf32>, vector<8x128xf32> -> vector<8x128xf32>
    %841 = arith.addf %836, %840 : vector<8x128xf32>
    %cst_354 = arith.constant 0.000000e+00 : f32
    %842 = vector.broadcast %cst_354 : f32 to vector<2x1x128xf32>
    %843 = vector.extract_strided_slice %808 {offsets = [0, 1, 0], sizes = [2, 3, 128], strides = [1, 1, 1]} : vector<2x4x128xf32> to vector<2x3x128xf32>
    %844 = tpu.concatenate %843, %842 in 1 : vector<2x3x128xf32>, vector<2x1x128xf32> -> vector<2x4x128xf32>
    %845 = vector.shape_cast %844 : vector<2x4x128xf32> to vector<8x128xf32>
    %c2_355 = arith.constant 2 : index
    %c0_356 = arith.constant 0 : index
    %c0_357 = arith.constant 0 : index
    %846 = vector.load %arg28[%c2_355, %c0_356, %c0_357] : memref<3x128x128xf32, #tpu.memory_space<vmem>>, vector<1x128x128xf32>
    %847 = vector.shape_cast %846 : vector<1x128x128xf32> to vector<128x128xf32>
    %cst_358 = arith.constant dense<0.000000e+00> : vector<8x128xf32>
    %848 = tpu.matmul %845, %847, %cst_358 {dimension_numbers = #tpu.dot_dimension_numbers<[1], [0], [0], [1], [0, 0, 1, 1], [], []>} : vector<8x128xf32>, vector<128x128xf32>, vector<8x128xf32> -> vector<8x128xf32>
    %849 = arith.addf %841, %848 : vector<8x128xf32>
    %c0_359 = arith.constant 0 : index
    %c0_360 = arith.constant 0 : index
    %850 = vector.load %arg29[%c0_359, %c0_360] : memref<1x32xf32, #tpu.memory_space<vmem>>, vector<1x32xf32>
    %c0_361 = arith.constant 0 : index
    %c0_362 = arith.constant 0 : index
    %851 = vector.load %arg30[%c0_361, %c0_362] : memref<1x32xf32, #tpu.memory_space<vmem>>, vector<1x32xf32>
    %cst_363 = arith.constant dense<0.000000e+00> : vector<128xf32>
    %852 = vector.multi_reduction <add>, %849, %cst_363 [0] : vector<8x128xf32> to vector<128xf32>
    %853 = vector.shape_cast %852 : vector<128xf32> to vector<1x128xf32>
    %854 = arith.mulf %849, %849 : vector<8x128xf32>
    %cst_364 = arith.constant dense<0.000000e+00> : vector<128xf32>
    %855 = vector.multi_reduction <add>, %854, %cst_364 [0] : vector<8x128xf32> to vector<128xf32>
    %856 = vector.shape_cast %855 : vector<128xf32> to vector<1x128xf32>
    %857 = tpu.iota {dimensions = array<i32: 0>} : vector<128x32xi32>
    %c32_i32_365 = arith.constant 32 : i32
    %c0_i32_366 = arith.constant 0 : i32
    %858 = arith.cmpi eq, %c32_i32_365, %c0_i32_366 : i32
    %c1_i32_367 = arith.constant 1 : i32
    %859 = arith.select %858, %c1_i32_367, %c32_i32_365 : i32
    %860 = vector.broadcast %859 : i32 to vector<128x32xi32>
    %861 = arith.remsi %857, %860 : vector<128x32xi32>
    %c0_i32_368 = arith.constant 0 : i32
    %862 = vector.broadcast %c0_i32_368 : i32 to vector<128x32xi32>
    %863 = arith.cmpi ne, %861, %862 : vector<128x32xi32>
    %c0_i32_369 = arith.constant 0 : i32
    %864 = vector.broadcast %c0_i32_369 : i32 to vector<128x32xi32>
    %865 = arith.cmpi slt, %861, %864 : vector<128x32xi32>
    %c0_i32_370 = arith.constant 0 : i32
    %866 = arith.cmpi slt, %859, %c0_i32_370 : i32
    %867 = vector.broadcast %866 : i1 to vector<128x32xi1>
    %868 = vector.broadcast %867 : vector<128x32xi1> to vector<128x32xi1>
    %869 = arith.xori %865, %868 : vector<128x32xi1>
    %870 = arith.andi %869, %863 : vector<128x32xi1>
    %871 = vector.broadcast %859 : i32 to vector<128x32xi32>
    %872 = arith.addi %861, %871 : vector<128x32xi32>
    %873 = arith.select %870, %872, %861 : vector<128x32xi1>, vector<128x32xi32>
    %874 = tpu.iota {dimensions = array<i32: 1>} : vector<128x32xi32>
    %875 = arith.cmpi eq, %873, %874 : vector<128x32xi32>
    %876 = arith.extui %875 : vector<128x32xi1> to vector<128x32xi32>
    %877 = arith.sitofp %876 : vector<128x32xi32> to vector<128x32xf32>
    %878 = tpu.iota {dimensions = array<i32: 0>} : vector<32x128xi32>
    %879 = tpu.iota {dimensions = array<i32: 1>} : vector<32x128xi32>
    %c32_i32_371 = arith.constant 32 : i32
    %c0_i32_372 = arith.constant 0 : i32
    %880 = arith.cmpi eq, %c32_i32_371, %c0_i32_372 : i32
    %c1_i32_373 = arith.constant 1 : i32
    %881 = arith.select %880, %c1_i32_373, %c32_i32_371 : i32
    %882 = vector.broadcast %881 : i32 to vector<32x128xi32>
    %883 = arith.remsi %879, %882 : vector<32x128xi32>
    %c0_i32_374 = arith.constant 0 : i32
    %884 = vector.broadcast %c0_i32_374 : i32 to vector<32x128xi32>
    %885 = arith.cmpi ne, %883, %884 : vector<32x128xi32>
    %c0_i32_375 = arith.constant 0 : i32
    %886 = vector.broadcast %c0_i32_375 : i32 to vector<32x128xi32>
    %887 = arith.cmpi slt, %883, %886 : vector<32x128xi32>
    %c0_i32_376 = arith.constant 0 : i32
    %888 = arith.cmpi slt, %881, %c0_i32_376 : i32
    %889 = vector.broadcast %888 : i1 to vector<32x128xi1>
    %890 = vector.broadcast %889 : vector<32x128xi1> to vector<32x128xi1>
    %891 = arith.xori %887, %890 : vector<32x128xi1>
    %892 = arith.andi %891, %885 : vector<32x128xi1>
    %893 = vector.broadcast %881 : i32 to vector<32x128xi32>
    %894 = arith.addi %883, %893 : vector<32x128xi32>
    %895 = arith.select %892, %894, %883 : vector<32x128xi1>, vector<32x128xi32>
    %896 = arith.cmpi eq, %878, %895 : vector<32x128xi32>
    %897 = arith.extui %896 : vector<32x128xi1> to vector<32x128xi32>
    %898 = arith.sitofp %897 : vector<32x128xi32> to vector<32x128xf32>
    %cst_377 = arith.constant dense<0.000000e+00> : vector<1x32xf32>
    %899 = tpu.matmul %853, %877, %cst_377 {dimension_numbers = #tpu.dot_dimension_numbers<[1], [0], [0], [1], [0, 0, 1, 1], [], []>} : vector<1x128xf32>, vector<128x32xf32>, vector<1x32xf32> -> vector<1x32xf32>
    %cst_378 = arith.constant dense<0.000000e+00> : vector<1x32xf32>
    %900 = tpu.matmul %856, %877, %cst_378 {dimension_numbers = #tpu.dot_dimension_numbers<[1], [0], [0], [1], [0, 0, 1, 1], [], []>} : vector<1x128xf32>, vector<128x32xf32>, vector<1x32xf32> -> vector<1x32xf32>
    %cst_379 = arith.constant 3.200000e+01 : f32
    %901 = vector.broadcast %cst_379 : f32 to vector<1x32xf32>
    %902 = arith.divf %899, %901 : vector<1x32xf32>
    %cst_380 = arith.constant 3.200000e+01 : f32
    %903 = vector.broadcast %cst_380 : f32 to vector<1x32xf32>
    %904 = arith.divf %900, %903 : vector<1x32xf32>
    %905 = arith.mulf %902, %902 : vector<1x32xf32>
    %906 = arith.subf %904, %905 : vector<1x32xf32>
    %cst_381 = arith.constant 9.99999974E-6 : f32
    %907 = vector.broadcast %cst_381 : f32 to vector<1x32xf32>
    %908 = arith.addf %906, %907 : vector<1x32xf32>
    %909 = math.rsqrt %908 : vector<1x32xf32>
    %910 = arith.mulf %850, %909 : vector<1x32xf32>
    %911 = arith.mulf %902, %910 : vector<1x32xf32>
    %912 = arith.subf %851, %911 : vector<1x32xf32>
    %cst_382 = arith.constant dense<0.000000e+00> : vector<1x128xf32>
    %913 = tpu.matmul %910, %898, %cst_382 {dimension_numbers = #tpu.dot_dimension_numbers<[1], [0], [0], [1], [0, 0, 1, 1], [], []>} : vector<1x32xf32>, vector<32x128xf32>, vector<1x128xf32> -> vector<1x128xf32>
    %cst_383 = arith.constant dense<0.000000e+00> : vector<1x128xf32>
    %914 = tpu.matmul %912, %898, %cst_383 {dimension_numbers = #tpu.dot_dimension_numbers<[1], [0], [0], [1], [0, 0, 1, 1], [], []>} : vector<1x32xf32>, vector<32x128xf32>, vector<1x128xf32> -> vector<1x128xf32>
    %915 = vector.broadcast %913 : vector<1x128xf32> to vector<8x128xf32>
    %916 = arith.mulf %849, %915 : vector<8x128xf32>
    %917 = vector.broadcast %914 : vector<1x128xf32> to vector<8x128xf32>
    %918 = arith.addf %916, %917 : vector<8x128xf32>
    %cst_384 = arith.constant 0.000000e+00 : f32
    %919 = vector.broadcast %cst_384 : f32 to vector<8x128xf32>
    %920 = arith.cmpf ogt, %918, %919 : vector<8x128xf32>
    %cst_385 = arith.constant 3.000000e-02 : f32
    %921 = vector.broadcast %cst_385 : f32 to vector<8x128xf32>
    %922 = arith.mulf %921, %918 : vector<8x128xf32>
    %923 = arith.select %920, %918, %922 : vector<8x128xi1>, vector<8x128xf32>
    %924 = vector.shape_cast %923 : vector<8x128xf32> to vector<2x4x128xf32>
    %cst_386 = arith.constant 0.000000e+00 : f32
    %925 = vector.broadcast %cst_386 : f32 to vector<2x1x128xf32>
    %926 = vector.extract_strided_slice %924 {offsets = [0, 0, 0], sizes = [2, 3, 128], strides = [1, 1, 1]} : vector<2x4x128xf32> to vector<2x3x128xf32>
    %927 = tpu.concatenate %925, %926 in 1 : vector<2x1x128xf32>, vector<2x3x128xf32> -> vector<2x4x128xf32>
    %928 = vector.shape_cast %927 : vector<2x4x128xf32> to vector<8x128xf32>
    %c0_387 = arith.constant 0 : index
    %c0_388 = arith.constant 0 : index
    %c0_389 = arith.constant 0 : index
    %929 = vector.load %arg31[%c0_387, %c0_388, %c0_389] : memref<3x128x128xf32, #tpu.memory_space<vmem>>, vector<1x128x128xf32>
    %930 = vector.shape_cast %929 : vector<1x128x128xf32> to vector<128x128xf32>
    %cst_390 = arith.constant dense<0.000000e+00> : vector<8x128xf32>
    %931 = tpu.matmul %928, %930, %cst_390 {dimension_numbers = #tpu.dot_dimension_numbers<[1], [0], [0], [1], [0, 0, 1, 1], [], []>} : vector<8x128xf32>, vector<128x128xf32>, vector<8x128xf32> -> vector<8x128xf32>
    %932 = vector.shape_cast %924 : vector<2x4x128xf32> to vector<8x128xf32>
    %c1_391 = arith.constant 1 : index
    %c0_392 = arith.constant 0 : index
    %c0_393 = arith.constant 0 : index
    %933 = vector.load %arg31[%c1_391, %c0_392, %c0_393] : memref<3x128x128xf32, #tpu.memory_space<vmem>>, vector<1x128x128xf32>
    %934 = vector.shape_cast %933 : vector<1x128x128xf32> to vector<128x128xf32>
    %cst_394 = arith.constant dense<0.000000e+00> : vector<8x128xf32>
    %935 = tpu.matmul %932, %934, %cst_394 {dimension_numbers = #tpu.dot_dimension_numbers<[1], [0], [0], [1], [0, 0, 1, 1], [], []>} : vector<8x128xf32>, vector<128x128xf32>, vector<8x128xf32> -> vector<8x128xf32>
    %936 = arith.addf %931, %935 : vector<8x128xf32>
    %cst_395 = arith.constant 0.000000e+00 : f32
    %937 = vector.broadcast %cst_395 : f32 to vector<2x1x128xf32>
    %938 = vector.extract_strided_slice %924 {offsets = [0, 1, 0], sizes = [2, 3, 128], strides = [1, 1, 1]} : vector<2x4x128xf32> to vector<2x3x128xf32>
    %939 = tpu.concatenate %938, %937 in 1 : vector<2x3x128xf32>, vector<2x1x128xf32> -> vector<2x4x128xf32>
    %940 = vector.shape_cast %939 : vector<2x4x128xf32> to vector<8x128xf32>
    %c2_396 = arith.constant 2 : index
    %c0_397 = arith.constant 0 : index
    %c0_398 = arith.constant 0 : index
    %941 = vector.load %arg31[%c2_396, %c0_397, %c0_398] : memref<3x128x128xf32, #tpu.memory_space<vmem>>, vector<1x128x128xf32>
    %942 = vector.shape_cast %941 : vector<1x128x128xf32> to vector<128x128xf32>
    %cst_399 = arith.constant dense<0.000000e+00> : vector<8x128xf32>
    %943 = tpu.matmul %940, %942, %cst_399 {dimension_numbers = #tpu.dot_dimension_numbers<[1], [0], [0], [1], [0, 0, 1, 1], [], []>} : vector<8x128xf32>, vector<128x128xf32>, vector<8x128xf32> -> vector<8x128xf32>
    %944 = arith.addf %936, %943 : vector<8x128xf32>
    %c0_400 = arith.constant 0 : index
    %c0_401 = arith.constant 0 : index
    %945 = vector.load %arg32[%c0_400, %c0_401] : memref<1x32xf32, #tpu.memory_space<vmem>>, vector<1x32xf32>
    %c0_402 = arith.constant 0 : index
    %c0_403 = arith.constant 0 : index
    %946 = vector.load %arg33[%c0_402, %c0_403] : memref<1x32xf32, #tpu.memory_space<vmem>>, vector<1x32xf32>
    %cst_404 = arith.constant dense<0.000000e+00> : vector<128xf32>
    %947 = vector.multi_reduction <add>, %944, %cst_404 [0] : vector<8x128xf32> to vector<128xf32>
    %948 = vector.shape_cast %947 : vector<128xf32> to vector<1x128xf32>
    %949 = arith.mulf %944, %944 : vector<8x128xf32>
    %cst_405 = arith.constant dense<0.000000e+00> : vector<128xf32>
    %950 = vector.multi_reduction <add>, %949, %cst_405 [0] : vector<8x128xf32> to vector<128xf32>
    %951 = vector.shape_cast %950 : vector<128xf32> to vector<1x128xf32>
    %952 = tpu.iota {dimensions = array<i32: 0>} : vector<128x32xi32>
    %c32_i32_406 = arith.constant 32 : i32
    %c0_i32_407 = arith.constant 0 : i32
    %953 = arith.cmpi eq, %c32_i32_406, %c0_i32_407 : i32
    %c1_i32_408 = arith.constant 1 : i32
    %954 = arith.select %953, %c1_i32_408, %c32_i32_406 : i32
    %955 = vector.broadcast %954 : i32 to vector<128x32xi32>
    %956 = arith.remsi %952, %955 : vector<128x32xi32>
    %c0_i32_409 = arith.constant 0 : i32
    %957 = vector.broadcast %c0_i32_409 : i32 to vector<128x32xi32>
    %958 = arith.cmpi ne, %956, %957 : vector<128x32xi32>
    %c0_i32_410 = arith.constant 0 : i32
    %959 = vector.broadcast %c0_i32_410 : i32 to vector<128x32xi32>
    %960 = arith.cmpi slt, %956, %959 : vector<128x32xi32>
    %c0_i32_411 = arith.constant 0 : i32
    %961 = arith.cmpi slt, %954, %c0_i32_411 : i32
    %962 = vector.broadcast %961 : i1 to vector<128x32xi1>
    %963 = vector.broadcast %962 : vector<128x32xi1> to vector<128x32xi1>
    %964 = arith.xori %960, %963 : vector<128x32xi1>
    %965 = arith.andi %964, %958 : vector<128x32xi1>
    %966 = vector.broadcast %954 : i32 to vector<128x32xi32>
    %967 = arith.addi %956, %966 : vector<128x32xi32>
    %968 = arith.select %965, %967, %956 : vector<128x32xi1>, vector<128x32xi32>
    %969 = tpu.iota {dimensions = array<i32: 1>} : vector<128x32xi32>
    %970 = arith.cmpi eq, %968, %969 : vector<128x32xi32>
    %971 = arith.extui %970 : vector<128x32xi1> to vector<128x32xi32>
    %972 = arith.sitofp %971 : vector<128x32xi32> to vector<128x32xf32>
    %973 = tpu.iota {dimensions = array<i32: 0>} : vector<32x128xi32>
    %974 = tpu.iota {dimensions = array<i32: 1>} : vector<32x128xi32>
    %c32_i32_412 = arith.constant 32 : i32
    %c0_i32_413 = arith.constant 0 : i32
    %975 = arith.cmpi eq, %c32_i32_412, %c0_i32_413 : i32
    %c1_i32_414 = arith.constant 1 : i32
    %976 = arith.select %975, %c1_i32_414, %c32_i32_412 : i32
    %977 = vector.broadcast %976 : i32 to vector<32x128xi32>
    %978 = arith.remsi %974, %977 : vector<32x128xi32>
    %c0_i32_415 = arith.constant 0 : i32
    %979 = vector.broadcast %c0_i32_415 : i32 to vector<32x128xi32>
    %980 = arith.cmpi ne, %978, %979 : vector<32x128xi32>
    %c0_i32_416 = arith.constant 0 : i32
    %981 = vector.broadcast %c0_i32_416 : i32 to vector<32x128xi32>
    %982 = arith.cmpi slt, %978, %981 : vector<32x128xi32>
    %c0_i32_417 = arith.constant 0 : i32
    %983 = arith.cmpi slt, %976, %c0_i32_417 : i32
    %984 = vector.broadcast %983 : i1 to vector<32x128xi1>
    %985 = vector.broadcast %984 : vector<32x128xi1> to vector<32x128xi1>
    %986 = arith.xori %982, %985 : vector<32x128xi1>
    %987 = arith.andi %986, %980 : vector<32x128xi1>
    %988 = vector.broadcast %976 : i32 to vector<32x128xi32>
    %989 = arith.addi %978, %988 : vector<32x128xi32>
    %990 = arith.select %987, %989, %978 : vector<32x128xi1>, vector<32x128xi32>
    %991 = arith.cmpi eq, %973, %990 : vector<32x128xi32>
    %992 = arith.extui %991 : vector<32x128xi1> to vector<32x128xi32>
    %993 = arith.sitofp %992 : vector<32x128xi32> to vector<32x128xf32>
    %cst_418 = arith.constant dense<0.000000e+00> : vector<1x32xf32>
    %994 = tpu.matmul %948, %972, %cst_418 {dimension_numbers = #tpu.dot_dimension_numbers<[1], [0], [0], [1], [0, 0, 1, 1], [], []>} : vector<1x128xf32>, vector<128x32xf32>, vector<1x32xf32> -> vector<1x32xf32>
    %cst_419 = arith.constant dense<0.000000e+00> : vector<1x32xf32>
    %995 = tpu.matmul %951, %972, %cst_419 {dimension_numbers = #tpu.dot_dimension_numbers<[1], [0], [0], [1], [0, 0, 1, 1], [], []>} : vector<1x128xf32>, vector<128x32xf32>, vector<1x32xf32> -> vector<1x32xf32>
    %cst_420 = arith.constant 3.200000e+01 : f32
    %996 = vector.broadcast %cst_420 : f32 to vector<1x32xf32>
    %997 = arith.divf %994, %996 : vector<1x32xf32>
    %cst_421 = arith.constant 3.200000e+01 : f32
    %998 = vector.broadcast %cst_421 : f32 to vector<1x32xf32>
    %999 = arith.divf %995, %998 : vector<1x32xf32>
    %1000 = arith.mulf %997, %997 : vector<1x32xf32>
    %1001 = arith.subf %999, %1000 : vector<1x32xf32>
    %cst_422 = arith.constant 9.99999974E-6 : f32
    %1002 = vector.broadcast %cst_422 : f32 to vector<1x32xf32>
    %1003 = arith.addf %1001, %1002 : vector<1x32xf32>
    %1004 = math.rsqrt %1003 : vector<1x32xf32>
    %1005 = arith.mulf %945, %1004 : vector<1x32xf32>
    %1006 = arith.mulf %997, %1005 : vector<1x32xf32>
    %1007 = arith.subf %946, %1006 : vector<1x32xf32>
    %cst_423 = arith.constant dense<0.000000e+00> : vector<1x128xf32>
    %1008 = tpu.matmul %1005, %993, %cst_423 {dimension_numbers = #tpu.dot_dimension_numbers<[1], [0], [0], [1], [0, 0, 1, 1], [], []>} : vector<1x32xf32>, vector<32x128xf32>, vector<1x128xf32> -> vector<1x128xf32>
    %cst_424 = arith.constant dense<0.000000e+00> : vector<1x128xf32>
    %1009 = tpu.matmul %1007, %993, %cst_424 {dimension_numbers = #tpu.dot_dimension_numbers<[1], [0], [0], [1], [0, 0, 1, 1], [], []>} : vector<1x32xf32>, vector<32x128xf32>, vector<1x128xf32> -> vector<1x128xf32>
    %1010 = vector.broadcast %1008 : vector<1x128xf32> to vector<8x128xf32>
    %1011 = arith.mulf %944, %1010 : vector<8x128xf32>
    %1012 = vector.broadcast %1009 : vector<1x128xf32> to vector<8x128xf32>
    %1013 = arith.addf %1011, %1012 : vector<8x128xf32>
    %cst_425 = arith.constant 0.000000e+00 : f32
    %1014 = vector.broadcast %cst_425 : f32 to vector<8x128xf32>
    %1015 = arith.cmpf ogt, %1013, %1014 : vector<8x128xf32>
    %cst_426 = arith.constant 3.000000e-02 : f32
    %1016 = vector.broadcast %cst_426 : f32 to vector<8x128xf32>
    %1017 = arith.mulf %1016, %1013 : vector<8x128xf32>
    %1018 = arith.select %1015, %1013, %1017 : vector<8x128xi1>, vector<8x128xf32>
    %1019 = vector.shape_cast %1018 : vector<8x128xf32> to vector<2x4x128xf32>
    %c0_427 = arith.constant 0 : index
    %c0_428 = arith.constant 0 : index
    %1020 = vector.load %arg35[%c0_427, %c0_428] : memref<1x128xf32, #tpu.memory_space<vmem>>, vector<1x128xf32>
    %1021 = vector.shape_cast %1019 : vector<2x4x128xf32> to vector<8x128xf32>
    %c0_429 = arith.constant 0 : index
    %c0_430 = arith.constant 0 : index
    %c0_431 = arith.constant 0 : index
    %1022 = vector.load %arg34[%c0_429, %c0_430, %c0_431] : memref<2x128x128xf32, #tpu.memory_space<vmem>>, vector<1x128x128xf32>
    %1023 = vector.shape_cast %1022 : vector<1x128x128xf32> to vector<128x128xf32>
    %cst_432 = arith.constant dense<0.000000e+00> : vector<8x128xf32>
    %1024 = tpu.matmul %1021, %1023, %cst_432 {dimension_numbers = #tpu.dot_dimension_numbers<[1], [0], [0], [1], [0, 0, 1, 1], [], []>} : vector<8x128xf32>, vector<128x128xf32>, vector<8x128xf32> -> vector<8x128xf32>
    %1025 = vector.broadcast %1020 : vector<1x128xf32> to vector<8x128xf32>
    %1026 = arith.addf %1024, %1025 : vector<8x128xf32>
    %c1_433 = arith.constant 1 : index
    %c0_434 = arith.constant 0 : index
    %c0_435 = arith.constant 0 : index
    %1027 = vector.load %arg34[%c1_433, %c0_434, %c0_435] : memref<2x128x128xf32, #tpu.memory_space<vmem>>, vector<1x128x128xf32>
    %1028 = vector.shape_cast %1027 : vector<1x128x128xf32> to vector<128x128xf32>
    %cst_436 = arith.constant dense<0.000000e+00> : vector<8x128xf32>
    %1029 = tpu.matmul %1021, %1028, %cst_436 {dimension_numbers = #tpu.dot_dimension_numbers<[1], [0], [0], [1], [0, 0, 1, 1], [], []>} : vector<8x128xf32>, vector<128x128xf32>, vector<8x128xf32> -> vector<8x128xf32>
    %1030 = vector.broadcast %1020 : vector<1x128xf32> to vector<8x128xf32>
    %1031 = arith.addf %1029, %1030 : vector<8x128xf32>
    %1032 = vector.shape_cast %1026 : vector<8x128xf32> to vector<2x4x128xf32>
    %1033 = vector.shape_cast %1031 : vector<8x128xf32> to vector<2x4x128xf32>
    %1034 = vector.shape_cast %1032 : vector<2x4x128xf32> to vector<2x4x1x128xf32>
    %1035 = vector.shape_cast %1033 : vector<2x4x128xf32> to vector<2x4x1x128xf32>
    %1036 = tpu.concatenate %1034, %1035 in 2 : vector<2x4x1x128xf32>, vector<2x4x1x128xf32> -> vector<2x4x2x128xf32>
    %1037 = vector.shape_cast %1036 : vector<2x4x2x128xf32> to vector<2x8x128xf32>
    %cst_437 = arith.constant 0.000000e+00 : f32
    %1038 = vector.broadcast %cst_437 : f32 to vector<2x1x128xf32>
    %1039 = vector.extract_strided_slice %390 {offsets = [0, 0, 0], sizes = [2, 7, 128], strides = [1, 1, 1]} : vector<2x8x128xf32> to vector<2x7x128xf32>
    %1040 = tpu.concatenate %1038, %1039 in 1 : vector<2x1x128xf32>, vector<2x7x128xf32> -> vector<2x8x128xf32>
    %1041 = vector.shape_cast %1040 : vector<2x8x128xf32> to vector<16x128xf32>
    %c0_438 = arith.constant 0 : index
    %c0_439 = arith.constant 0 : index
    %c0_440 = arith.constant 0 : index
    %1042 = vector.load %arg36[%c0_438, %c0_439, %c0_440] : memref<3x128x128xf32, #tpu.memory_space<vmem>>, vector<1x128x128xf32>
    %1043 = vector.shape_cast %1042 : vector<1x128x128xf32> to vector<128x128xf32>
    %cst_441 = arith.constant dense<0.000000e+00> : vector<16x128xf32>
    %1044 = tpu.matmul %1041, %1043, %cst_441 {dimension_numbers = #tpu.dot_dimension_numbers<[1], [0], [0], [1], [0, 0, 1, 1], [], []>} : vector<16x128xf32>, vector<128x128xf32>, vector<16x128xf32> -> vector<16x128xf32>
    %1045 = vector.shape_cast %390 : vector<2x8x128xf32> to vector<16x128xf32>
    %c1_442 = arith.constant 1 : index
    %c0_443 = arith.constant 0 : index
    %c0_444 = arith.constant 0 : index
    %1046 = vector.load %arg36[%c1_442, %c0_443, %c0_444] : memref<3x128x128xf32, #tpu.memory_space<vmem>>, vector<1x128x128xf32>
    %1047 = vector.shape_cast %1046 : vector<1x128x128xf32> to vector<128x128xf32>
    %cst_445 = arith.constant dense<0.000000e+00> : vector<16x128xf32>
    %1048 = tpu.matmul %1045, %1047, %cst_445 {dimension_numbers = #tpu.dot_dimension_numbers<[1], [0], [0], [1], [0, 0, 1, 1], [], []>} : vector<16x128xf32>, vector<128x128xf32>, vector<16x128xf32> -> vector<16x128xf32>
    %1049 = arith.addf %1044, %1048 : vector<16x128xf32>
    %cst_446 = arith.constant 0.000000e+00 : f32
    %1050 = vector.broadcast %cst_446 : f32 to vector<2x1x128xf32>
    %1051 = vector.extract_strided_slice %390 {offsets = [0, 1, 0], sizes = [2, 7, 128], strides = [1, 1, 1]} : vector<2x8x128xf32> to vector<2x7x128xf32>
    %1052 = tpu.concatenate %1051, %1050 in 1 : vector<2x7x128xf32>, vector<2x1x128xf32> -> vector<2x8x128xf32>
    %1053 = vector.shape_cast %1052 : vector<2x8x128xf32> to vector<16x128xf32>
    %c2_447 = arith.constant 2 : index
    %c0_448 = arith.constant 0 : index
    %c0_449 = arith.constant 0 : index
    %1054 = vector.load %arg36[%c2_447, %c0_448, %c0_449] : memref<3x128x128xf32, #tpu.memory_space<vmem>>, vector<1x128x128xf32>
    %1055 = vector.shape_cast %1054 : vector<1x128x128xf32> to vector<128x128xf32>
    %cst_450 = arith.constant dense<0.000000e+00> : vector<16x128xf32>
    %1056 = tpu.matmul %1053, %1055, %cst_450 {dimension_numbers = #tpu.dot_dimension_numbers<[1], [0], [0], [1], [0, 0, 1, 1], [], []>} : vector<16x128xf32>, vector<128x128xf32>, vector<16x128xf32> -> vector<16x128xf32>
    %1057 = arith.addf %1049, %1056 : vector<16x128xf32>
    %cst_451 = arith.constant 0.000000e+00 : f32
    %1058 = vector.broadcast %cst_451 : f32 to vector<2x1x128xf32>
    %1059 = vector.extract_strided_slice %1037 {offsets = [0, 0, 0], sizes = [2, 7, 128], strides = [1, 1, 1]} : vector<2x8x128xf32> to vector<2x7x128xf32>
    %1060 = tpu.concatenate %1058, %1059 in 1 : vector<2x1x128xf32>, vector<2x7x128xf32> -> vector<2x8x128xf32>
    %1061 = vector.shape_cast %1060 : vector<2x8x128xf32> to vector<16x128xf32>
    %c0_452 = arith.constant 0 : index
    %c0_453 = arith.constant 0 : index
    %c0_454 = arith.constant 0 : index
    %1062 = vector.load %arg37[%c0_452, %c0_453, %c0_454] : memref<3x128x128xf32, #tpu.memory_space<vmem>>, vector<1x128x128xf32>
    %1063 = vector.shape_cast %1062 : vector<1x128x128xf32> to vector<128x128xf32>
    %cst_455 = arith.constant dense<0.000000e+00> : vector<16x128xf32>
    %1064 = tpu.matmul %1061, %1063, %cst_455 {dimension_numbers = #tpu.dot_dimension_numbers<[1], [0], [0], [1], [0, 0, 1, 1], [], []>} : vector<16x128xf32>, vector<128x128xf32>, vector<16x128xf32> -> vector<16x128xf32>
    %1065 = arith.addf %1057, %1064 : vector<16x128xf32>
    %1066 = vector.shape_cast %1037 : vector<2x8x128xf32> to vector<16x128xf32>
    %c1_456 = arith.constant 1 : index
    %c0_457 = arith.constant 0 : index
    %c0_458 = arith.constant 0 : index
    %1067 = vector.load %arg37[%c1_456, %c0_457, %c0_458] : memref<3x128x128xf32, #tpu.memory_space<vmem>>, vector<1x128x128xf32>
    %1068 = vector.shape_cast %1067 : vector<1x128x128xf32> to vector<128x128xf32>
    %cst_459 = arith.constant dense<0.000000e+00> : vector<16x128xf32>
    %1069 = tpu.matmul %1066, %1068, %cst_459 {dimension_numbers = #tpu.dot_dimension_numbers<[1], [0], [0], [1], [0, 0, 1, 1], [], []>} : vector<16x128xf32>, vector<128x128xf32>, vector<16x128xf32> -> vector<16x128xf32>
    %1070 = arith.addf %1065, %1069 : vector<16x128xf32>
    %cst_460 = arith.constant 0.000000e+00 : f32
    %1071 = vector.broadcast %cst_460 : f32 to vector<2x1x128xf32>
    %1072 = vector.extract_strided_slice %1037 {offsets = [0, 1, 0], sizes = [2, 7, 128], strides = [1, 1, 1]} : vector<2x8x128xf32> to vector<2x7x128xf32>
    %1073 = tpu.concatenate %1072, %1071 in 1 : vector<2x7x128xf32>, vector<2x1x128xf32> -> vector<2x8x128xf32>
    %1074 = vector.shape_cast %1073 : vector<2x8x128xf32> to vector<16x128xf32>
    %c2_461 = arith.constant 2 : index
    %c0_462 = arith.constant 0 : index
    %c0_463 = arith.constant 0 : index
    %1075 = vector.load %arg37[%c2_461, %c0_462, %c0_463] : memref<3x128x128xf32, #tpu.memory_space<vmem>>, vector<1x128x128xf32>
    %1076 = vector.shape_cast %1075 : vector<1x128x128xf32> to vector<128x128xf32>
    %cst_464 = arith.constant dense<0.000000e+00> : vector<16x128xf32>
    %1077 = tpu.matmul %1074, %1076, %cst_464 {dimension_numbers = #tpu.dot_dimension_numbers<[1], [0], [0], [1], [0, 0, 1, 1], [], []>} : vector<16x128xf32>, vector<128x128xf32>, vector<16x128xf32> -> vector<16x128xf32>
    %1078 = arith.addf %1070, %1077 : vector<16x128xf32>
    %c0_465 = arith.constant 0 : index
    %c0_466 = arith.constant 0 : index
    %1079 = vector.load %arg38[%c0_465, %c0_466] : memref<1x16xf32, #tpu.memory_space<vmem>>, vector<1x16xf32>
    %c0_467 = arith.constant 0 : index
    %c0_468 = arith.constant 0 : index
    %1080 = vector.load %arg39[%c0_467, %c0_468] : memref<1x16xf32, #tpu.memory_space<vmem>>, vector<1x16xf32>
    %cst_469 = arith.constant dense<0.000000e+00> : vector<128xf32>
    %1081 = vector.multi_reduction <add>, %1078, %cst_469 [0] : vector<16x128xf32> to vector<128xf32>
    %1082 = vector.shape_cast %1081 : vector<128xf32> to vector<1x128xf32>
    %1083 = arith.mulf %1078, %1078 : vector<16x128xf32>
    %cst_470 = arith.constant dense<0.000000e+00> : vector<128xf32>
    %1084 = vector.multi_reduction <add>, %1083, %cst_470 [0] : vector<16x128xf32> to vector<128xf32>
    %1085 = vector.shape_cast %1084 : vector<128xf32> to vector<1x128xf32>
    %1086 = tpu.iota {dimensions = array<i32: 0>} : vector<128x16xi32>
    %c16_i32_471 = arith.constant 16 : i32
    %c0_i32_472 = arith.constant 0 : i32
    %1087 = arith.cmpi eq, %c16_i32_471, %c0_i32_472 : i32
    %c1_i32_473 = arith.constant 1 : i32
    %1088 = arith.select %1087, %c1_i32_473, %c16_i32_471 : i32
    %1089 = vector.broadcast %1088 : i32 to vector<128x16xi32>
    %1090 = arith.remsi %1086, %1089 : vector<128x16xi32>
    %c0_i32_474 = arith.constant 0 : i32
    %1091 = vector.broadcast %c0_i32_474 : i32 to vector<128x16xi32>
    %1092 = arith.cmpi ne, %1090, %1091 : vector<128x16xi32>
    %c0_i32_475 = arith.constant 0 : i32
    %1093 = vector.broadcast %c0_i32_475 : i32 to vector<128x16xi32>
    %1094 = arith.cmpi slt, %1090, %1093 : vector<128x16xi32>
    %c0_i32_476 = arith.constant 0 : i32
    %1095 = arith.cmpi slt, %1088, %c0_i32_476 : i32
    %1096 = vector.broadcast %1095 : i1 to vector<128x16xi1>
    %1097 = vector.broadcast %1096 : vector<128x16xi1> to vector<128x16xi1>
    %1098 = arith.xori %1094, %1097 : vector<128x16xi1>
    %1099 = arith.andi %1098, %1092 : vector<128x16xi1>
    %1100 = vector.broadcast %1088 : i32 to vector<128x16xi32>
    %1101 = arith.addi %1090, %1100 : vector<128x16xi32>
    %1102 = arith.select %1099, %1101, %1090 : vector<128x16xi1>, vector<128x16xi32>
    %1103 = tpu.iota {dimensions = array<i32: 1>} : vector<128x16xi32>
    %1104 = arith.cmpi eq, %1102, %1103 : vector<128x16xi32>
    %1105 = arith.extui %1104 : vector<128x16xi1> to vector<128x16xi32>
    %1106 = arith.sitofp %1105 : vector<128x16xi32> to vector<128x16xf32>
    %1107 = tpu.iota {dimensions = array<i32: 0>} : vector<16x128xi32>
    %1108 = tpu.iota {dimensions = array<i32: 1>} : vector<16x128xi32>
    %c16_i32_477 = arith.constant 16 : i32
    %c0_i32_478 = arith.constant 0 : i32
    %1109 = arith.cmpi eq, %c16_i32_477, %c0_i32_478 : i32
    %c1_i32_479 = arith.constant 1 : i32
    %1110 = arith.select %1109, %c1_i32_479, %c16_i32_477 : i32
    %1111 = vector.broadcast %1110 : i32 to vector<16x128xi32>
    %1112 = arith.remsi %1108, %1111 : vector<16x128xi32>
    %c0_i32_480 = arith.constant 0 : i32
    %1113 = vector.broadcast %c0_i32_480 : i32 to vector<16x128xi32>
    %1114 = arith.cmpi ne, %1112, %1113 : vector<16x128xi32>
    %c0_i32_481 = arith.constant 0 : i32
    %1115 = vector.broadcast %c0_i32_481 : i32 to vector<16x128xi32>
    %1116 = arith.cmpi slt, %1112, %1115 : vector<16x128xi32>
    %c0_i32_482 = arith.constant 0 : i32
    %1117 = arith.cmpi slt, %1110, %c0_i32_482 : i32
    %1118 = vector.broadcast %1117 : i1 to vector<16x128xi1>
    %1119 = vector.broadcast %1118 : vector<16x128xi1> to vector<16x128xi1>
    %1120 = arith.xori %1116, %1119 : vector<16x128xi1>
    %1121 = arith.andi %1120, %1114 : vector<16x128xi1>
    %1122 = vector.broadcast %1110 : i32 to vector<16x128xi32>
    %1123 = arith.addi %1112, %1122 : vector<16x128xi32>
    %1124 = arith.select %1121, %1123, %1112 : vector<16x128xi1>, vector<16x128xi32>
    %1125 = arith.cmpi eq, %1107, %1124 : vector<16x128xi32>
    %1126 = arith.extui %1125 : vector<16x128xi1> to vector<16x128xi32>
    %1127 = arith.sitofp %1126 : vector<16x128xi32> to vector<16x128xf32>
    %cst_483 = arith.constant dense<0.000000e+00> : vector<1x16xf32>
    %1128 = tpu.matmul %1082, %1106, %cst_483 {dimension_numbers = #tpu.dot_dimension_numbers<[1], [0], [0], [1], [0, 0, 1, 1], [], []>} : vector<1x128xf32>, vector<128x16xf32>, vector<1x16xf32> -> vector<1x16xf32>
    %cst_484 = arith.constant dense<0.000000e+00> : vector<1x16xf32>
    %1129 = tpu.matmul %1085, %1106, %cst_484 {dimension_numbers = #tpu.dot_dimension_numbers<[1], [0], [0], [1], [0, 0, 1, 1], [], []>} : vector<1x128xf32>, vector<128x16xf32>, vector<1x16xf32> -> vector<1x16xf32>
    %cst_485 = arith.constant 1.280000e+02 : f32
    %1130 = vector.broadcast %cst_485 : f32 to vector<1x16xf32>
    %1131 = arith.divf %1128, %1130 : vector<1x16xf32>
    %cst_486 = arith.constant 1.280000e+02 : f32
    %1132 = vector.broadcast %cst_486 : f32 to vector<1x16xf32>
    %1133 = arith.divf %1129, %1132 : vector<1x16xf32>
    %1134 = arith.mulf %1131, %1131 : vector<1x16xf32>
    %1135 = arith.subf %1133, %1134 : vector<1x16xf32>
    %cst_487 = arith.constant 9.99999974E-6 : f32
    %1136 = vector.broadcast %cst_487 : f32 to vector<1x16xf32>
    %1137 = arith.addf %1135, %1136 : vector<1x16xf32>
    %1138 = math.rsqrt %1137 : vector<1x16xf32>
    %1139 = arith.mulf %1079, %1138 : vector<1x16xf32>
    %1140 = arith.mulf %1131, %1139 : vector<1x16xf32>
    %1141 = arith.subf %1080, %1140 : vector<1x16xf32>
    %cst_488 = arith.constant dense<0.000000e+00> : vector<1x128xf32>
    %1142 = tpu.matmul %1139, %1127, %cst_488 {dimension_numbers = #tpu.dot_dimension_numbers<[1], [0], [0], [1], [0, 0, 1, 1], [], []>} : vector<1x16xf32>, vector<16x128xf32>, vector<1x128xf32> -> vector<1x128xf32>
    %cst_489 = arith.constant dense<0.000000e+00> : vector<1x128xf32>
    %1143 = tpu.matmul %1141, %1127, %cst_489 {dimension_numbers = #tpu.dot_dimension_numbers<[1], [0], [0], [1], [0, 0, 1, 1], [], []>} : vector<1x16xf32>, vector<16x128xf32>, vector<1x128xf32> -> vector<1x128xf32>
    %1144 = vector.broadcast %1142 : vector<1x128xf32> to vector<16x128xf32>
    %1145 = arith.mulf %1078, %1144 : vector<16x128xf32>
    %1146 = vector.broadcast %1143 : vector<1x128xf32> to vector<16x128xf32>
    %1147 = arith.addf %1145, %1146 : vector<16x128xf32>
    %cst_490 = arith.constant 0.000000e+00 : f32
    %1148 = vector.broadcast %cst_490 : f32 to vector<16x128xf32>
    %1149 = arith.cmpf ogt, %1147, %1148 : vector<16x128xf32>
    %cst_491 = arith.constant 3.000000e-02 : f32
    %1150 = vector.broadcast %cst_491 : f32 to vector<16x128xf32>
    %1151 = arith.mulf %1150, %1147 : vector<16x128xf32>
    %1152 = arith.select %1149, %1147, %1151 : vector<16x128xi1>, vector<16x128xf32>
    %1153 = vector.shape_cast %1152 : vector<16x128xf32> to vector<2x8x128xf32>
    %cst_492 = arith.constant 0.000000e+00 : f32
    %1154 = vector.broadcast %cst_492 : f32 to vector<2x1x128xf32>
    %1155 = vector.extract_strided_slice %1153 {offsets = [0, 0, 0], sizes = [2, 7, 128], strides = [1, 1, 1]} : vector<2x8x128xf32> to vector<2x7x128xf32>
    %1156 = tpu.concatenate %1154, %1155 in 1 : vector<2x1x128xf32>, vector<2x7x128xf32> -> vector<2x8x128xf32>
    %1157 = vector.shape_cast %1156 : vector<2x8x128xf32> to vector<16x128xf32>
    %c0_493 = arith.constant 0 : index
    %c0_494 = arith.constant 0 : index
    %c0_495 = arith.constant 0 : index
    %1158 = vector.load %arg40[%c0_493, %c0_494, %c0_495] : memref<3x128x128xf32, #tpu.memory_space<vmem>>, vector<1x128x128xf32>
    %1159 = vector.shape_cast %1158 : vector<1x128x128xf32> to vector<128x128xf32>
    %cst_496 = arith.constant dense<0.000000e+00> : vector<16x128xf32>
    %1160 = tpu.matmul %1157, %1159, %cst_496 {dimension_numbers = #tpu.dot_dimension_numbers<[1], [0], [0], [1], [0, 0, 1, 1], [], []>} : vector<16x128xf32>, vector<128x128xf32>, vector<16x128xf32> -> vector<16x128xf32>
    %1161 = vector.shape_cast %1153 : vector<2x8x128xf32> to vector<16x128xf32>
    %c1_497 = arith.constant 1 : index
    %c0_498 = arith.constant 0 : index
    %c0_499 = arith.constant 0 : index
    %1162 = vector.load %arg40[%c1_497, %c0_498, %c0_499] : memref<3x128x128xf32, #tpu.memory_space<vmem>>, vector<1x128x128xf32>
    %1163 = vector.shape_cast %1162 : vector<1x128x128xf32> to vector<128x128xf32>
    %cst_500 = arith.constant dense<0.000000e+00> : vector<16x128xf32>
    %1164 = tpu.matmul %1161, %1163, %cst_500 {dimension_numbers = #tpu.dot_dimension_numbers<[1], [0], [0], [1], [0, 0, 1, 1], [], []>} : vector<16x128xf32>, vector<128x128xf32>, vector<16x128xf32> -> vector<16x128xf32>
    %1165 = arith.addf %1160, %1164 : vector<16x128xf32>
    %cst_501 = arith.constant 0.000000e+00 : f32
    %1166 = vector.broadcast %cst_501 : f32 to vector<2x1x128xf32>
    %1167 = vector.extract_strided_slice %1153 {offsets = [0, 1, 0], sizes = [2, 7, 128], strides = [1, 1, 1]} : vector<2x8x128xf32> to vector<2x7x128xf32>
    %1168 = tpu.concatenate %1167, %1166 in 1 : vector<2x7x128xf32>, vector<2x1x128xf32> -> vector<2x8x128xf32>
    %1169 = vector.shape_cast %1168 : vector<2x8x128xf32> to vector<16x128xf32>
    %c2_502 = arith.constant 2 : index
    %c0_503 = arith.constant 0 : index
    %c0_504 = arith.constant 0 : index
    %1170 = vector.load %arg40[%c2_502, %c0_503, %c0_504] : memref<3x128x128xf32, #tpu.memory_space<vmem>>, vector<1x128x128xf32>
    %1171 = vector.shape_cast %1170 : vector<1x128x128xf32> to vector<128x128xf32>
    %cst_505 = arith.constant dense<0.000000e+00> : vector<16x128xf32>
    %1172 = tpu.matmul %1169, %1171, %cst_505 {dimension_numbers = #tpu.dot_dimension_numbers<[1], [0], [0], [1], [0, 0, 1, 1], [], []>} : vector<16x128xf32>, vector<128x128xf32>, vector<16x128xf32> -> vector<16x128xf32>
    %1173 = arith.addf %1165, %1172 : vector<16x128xf32>
    %c0_506 = arith.constant 0 : index
    %c0_507 = arith.constant 0 : index
    %1174 = vector.load %arg41[%c0_506, %c0_507] : memref<1x16xf32, #tpu.memory_space<vmem>>, vector<1x16xf32>
    %c0_508 = arith.constant 0 : index
    %c0_509 = arith.constant 0 : index
    %1175 = vector.load %arg42[%c0_508, %c0_509] : memref<1x16xf32, #tpu.memory_space<vmem>>, vector<1x16xf32>
    %cst_510 = arith.constant dense<0.000000e+00> : vector<128xf32>
    %1176 = vector.multi_reduction <add>, %1173, %cst_510 [0] : vector<16x128xf32> to vector<128xf32>
    %1177 = vector.shape_cast %1176 : vector<128xf32> to vector<1x128xf32>
    %1178 = arith.mulf %1173, %1173 : vector<16x128xf32>
    %cst_511 = arith.constant dense<0.000000e+00> : vector<128xf32>
    %1179 = vector.multi_reduction <add>, %1178, %cst_511 [0] : vector<16x128xf32> to vector<128xf32>
    %1180 = vector.shape_cast %1179 : vector<128xf32> to vector<1x128xf32>
    %1181 = tpu.iota {dimensions = array<i32: 0>} : vector<128x16xi32>
    %c16_i32_512 = arith.constant 16 : i32
    %c0_i32_513 = arith.constant 0 : i32
    %1182 = arith.cmpi eq, %c16_i32_512, %c0_i32_513 : i32
    %c1_i32_514 = arith.constant 1 : i32
    %1183 = arith.select %1182, %c1_i32_514, %c16_i32_512 : i32
    %1184 = vector.broadcast %1183 : i32 to vector<128x16xi32>
    %1185 = arith.remsi %1181, %1184 : vector<128x16xi32>
    %c0_i32_515 = arith.constant 0 : i32
    %1186 = vector.broadcast %c0_i32_515 : i32 to vector<128x16xi32>
    %1187 = arith.cmpi ne, %1185, %1186 : vector<128x16xi32>
    %c0_i32_516 = arith.constant 0 : i32
    %1188 = vector.broadcast %c0_i32_516 : i32 to vector<128x16xi32>
    %1189 = arith.cmpi slt, %1185, %1188 : vector<128x16xi32>
    %c0_i32_517 = arith.constant 0 : i32
    %1190 = arith.cmpi slt, %1183, %c0_i32_517 : i32
    %1191 = vector.broadcast %1190 : i1 to vector<128x16xi1>
    %1192 = vector.broadcast %1191 : vector<128x16xi1> to vector<128x16xi1>
    %1193 = arith.xori %1189, %1192 : vector<128x16xi1>
    %1194 = arith.andi %1193, %1187 : vector<128x16xi1>
    %1195 = vector.broadcast %1183 : i32 to vector<128x16xi32>
    %1196 = arith.addi %1185, %1195 : vector<128x16xi32>
    %1197 = arith.select %1194, %1196, %1185 : vector<128x16xi1>, vector<128x16xi32>
    %1198 = tpu.iota {dimensions = array<i32: 1>} : vector<128x16xi32>
    %1199 = arith.cmpi eq, %1197, %1198 : vector<128x16xi32>
    %1200 = arith.extui %1199 : vector<128x16xi1> to vector<128x16xi32>
    %1201 = arith.sitofp %1200 : vector<128x16xi32> to vector<128x16xf32>
    %1202 = tpu.iota {dimensions = array<i32: 0>} : vector<16x128xi32>
    %1203 = tpu.iota {dimensions = array<i32: 1>} : vector<16x128xi32>
    %c16_i32_518 = arith.constant 16 : i32
    %c0_i32_519 = arith.constant 0 : i32
    %1204 = arith.cmpi eq, %c16_i32_518, %c0_i32_519 : i32
    %c1_i32_520 = arith.constant 1 : i32
    %1205 = arith.select %1204, %c1_i32_520, %c16_i32_518 : i32
    %1206 = vector.broadcast %1205 : i32 to vector<16x128xi32>
    %1207 = arith.remsi %1203, %1206 : vector<16x128xi32>
    %c0_i32_521 = arith.constant 0 : i32
    %1208 = vector.broadcast %c0_i32_521 : i32 to vector<16x128xi32>
    %1209 = arith.cmpi ne, %1207, %1208 : vector<16x128xi32>
    %c0_i32_522 = arith.constant 0 : i32
    %1210 = vector.broadcast %c0_i32_522 : i32 to vector<16x128xi32>
    %1211 = arith.cmpi slt, %1207, %1210 : vector<16x128xi32>
    %c0_i32_523 = arith.constant 0 : i32
    %1212 = arith.cmpi slt, %1205, %c0_i32_523 : i32
    %1213 = vector.broadcast %1212 : i1 to vector<16x128xi1>
    %1214 = vector.broadcast %1213 : vector<16x128xi1> to vector<16x128xi1>
    %1215 = arith.xori %1211, %1214 : vector<16x128xi1>
    %1216 = arith.andi %1215, %1209 : vector<16x128xi1>
    %1217 = vector.broadcast %1205 : i32 to vector<16x128xi32>
    %1218 = arith.addi %1207, %1217 : vector<16x128xi32>
    %1219 = arith.select %1216, %1218, %1207 : vector<16x128xi1>, vector<16x128xi32>
    %1220 = arith.cmpi eq, %1202, %1219 : vector<16x128xi32>
    %1221 = arith.extui %1220 : vector<16x128xi1> to vector<16x128xi32>
    %1222 = arith.sitofp %1221 : vector<16x128xi32> to vector<16x128xf32>
    %cst_524 = arith.constant dense<0.000000e+00> : vector<1x16xf32>
    %1223 = tpu.matmul %1177, %1201, %cst_524 {dimension_numbers = #tpu.dot_dimension_numbers<[1], [0], [0], [1], [0, 0, 1, 1], [], []>} : vector<1x128xf32>, vector<128x16xf32>, vector<1x16xf32> -> vector<1x16xf32>
    %cst_525 = arith.constant dense<0.000000e+00> : vector<1x16xf32>
    %1224 = tpu.matmul %1180, %1201, %cst_525 {dimension_numbers = #tpu.dot_dimension_numbers<[1], [0], [0], [1], [0, 0, 1, 1], [], []>} : vector<1x128xf32>, vector<128x16xf32>, vector<1x16xf32> -> vector<1x16xf32>
    %cst_526 = arith.constant 1.280000e+02 : f32
    %1225 = vector.broadcast %cst_526 : f32 to vector<1x16xf32>
    %1226 = arith.divf %1223, %1225 : vector<1x16xf32>
    %cst_527 = arith.constant 1.280000e+02 : f32
    %1227 = vector.broadcast %cst_527 : f32 to vector<1x16xf32>
    %1228 = arith.divf %1224, %1227 : vector<1x16xf32>
    %1229 = arith.mulf %1226, %1226 : vector<1x16xf32>
    %1230 = arith.subf %1228, %1229 : vector<1x16xf32>
    %cst_528 = arith.constant 9.99999974E-6 : f32
    %1231 = vector.broadcast %cst_528 : f32 to vector<1x16xf32>
    %1232 = arith.addf %1230, %1231 : vector<1x16xf32>
    %1233 = math.rsqrt %1232 : vector<1x16xf32>
    %1234 = arith.mulf %1174, %1233 : vector<1x16xf32>
    %1235 = arith.mulf %1226, %1234 : vector<1x16xf32>
    %1236 = arith.subf %1175, %1235 : vector<1x16xf32>
    %cst_529 = arith.constant dense<0.000000e+00> : vector<1x128xf32>
    %1237 = tpu.matmul %1234, %1222, %cst_529 {dimension_numbers = #tpu.dot_dimension_numbers<[1], [0], [0], [1], [0, 0, 1, 1], [], []>} : vector<1x16xf32>, vector<16x128xf32>, vector<1x128xf32> -> vector<1x128xf32>
    %cst_530 = arith.constant dense<0.000000e+00> : vector<1x128xf32>
    %1238 = tpu.matmul %1236, %1222, %cst_530 {dimension_numbers = #tpu.dot_dimension_numbers<[1], [0], [0], [1], [0, 0, 1, 1], [], []>} : vector<1x16xf32>, vector<16x128xf32>, vector<1x128xf32> -> vector<1x128xf32>
    %1239 = vector.broadcast %1237 : vector<1x128xf32> to vector<16x128xf32>
    %1240 = arith.mulf %1173, %1239 : vector<16x128xf32>
    %1241 = vector.broadcast %1238 : vector<1x128xf32> to vector<16x128xf32>
    %1242 = arith.addf %1240, %1241 : vector<16x128xf32>
    %cst_531 = arith.constant 0.000000e+00 : f32
    %1243 = vector.broadcast %cst_531 : f32 to vector<16x128xf32>
    %1244 = arith.cmpf ogt, %1242, %1243 : vector<16x128xf32>
    %cst_532 = arith.constant 3.000000e-02 : f32
    %1245 = vector.broadcast %cst_532 : f32 to vector<16x128xf32>
    %1246 = arith.mulf %1245, %1242 : vector<16x128xf32>
    %1247 = arith.select %1244, %1242, %1246 : vector<16x128xi1>, vector<16x128xf32>
    %1248 = vector.shape_cast %1247 : vector<16x128xf32> to vector<2x8x128xf32>
    %c0_533 = arith.constant 0 : index
    %c0_534 = arith.constant 0 : index
    %1249 = vector.load %arg44[%c0_533, %c0_534] : memref<1x128xf32, #tpu.memory_space<vmem>>, vector<1x128xf32>
    %1250 = vector.shape_cast %1248 : vector<2x8x128xf32> to vector<16x128xf32>
    %c0_535 = arith.constant 0 : index
    %c0_536 = arith.constant 0 : index
    %c0_537 = arith.constant 0 : index
    %1251 = vector.load %arg43[%c0_535, %c0_536, %c0_537] : memref<2x128x128xf32, #tpu.memory_space<vmem>>, vector<1x128x128xf32>
    %1252 = vector.shape_cast %1251 : vector<1x128x128xf32> to vector<128x128xf32>
    %cst_538 = arith.constant dense<0.000000e+00> : vector<16x128xf32>
    %1253 = tpu.matmul %1250, %1252, %cst_538 {dimension_numbers = #tpu.dot_dimension_numbers<[1], [0], [0], [1], [0, 0, 1, 1], [], []>} : vector<16x128xf32>, vector<128x128xf32>, vector<16x128xf32> -> vector<16x128xf32>
    %1254 = vector.broadcast %1249 : vector<1x128xf32> to vector<16x128xf32>
    %1255 = arith.addf %1253, %1254 : vector<16x128xf32>
    %c1_539 = arith.constant 1 : index
    %c0_540 = arith.constant 0 : index
    %c0_541 = arith.constant 0 : index
    %1256 = vector.load %arg43[%c1_539, %c0_540, %c0_541] : memref<2x128x128xf32, #tpu.memory_space<vmem>>, vector<1x128x128xf32>
    %1257 = vector.shape_cast %1256 : vector<1x128x128xf32> to vector<128x128xf32>
    %cst_542 = arith.constant dense<0.000000e+00> : vector<16x128xf32>
    %1258 = tpu.matmul %1250, %1257, %cst_542 {dimension_numbers = #tpu.dot_dimension_numbers<[1], [0], [0], [1], [0, 0, 1, 1], [], []>} : vector<16x128xf32>, vector<128x128xf32>, vector<16x128xf32> -> vector<16x128xf32>
    %1259 = vector.broadcast %1249 : vector<1x128xf32> to vector<16x128xf32>
    %1260 = arith.addf %1258, %1259 : vector<16x128xf32>
    %1261 = vector.shape_cast %1255 : vector<16x128xf32> to vector<2x8x128xf32>
    %1262 = vector.shape_cast %1260 : vector<16x128xf32> to vector<2x8x128xf32>
    %1263 = vector.shape_cast %1261 : vector<2x8x128xf32> to vector<2x8x1x128xf32>
    %1264 = vector.shape_cast %1262 : vector<2x8x128xf32> to vector<2x8x1x128xf32>
    %1265 = tpu.concatenate %1263, %1264 in 2 : vector<2x8x1x128xf32>, vector<2x8x1x128xf32> -> vector<2x8x2x128xf32>
    %1266 = vector.shape_cast %1265 : vector<2x8x2x128xf32> to vector<2x16x128xf32>
    %cst_543 = arith.constant 0.000000e+00 : f32
    %1267 = vector.broadcast %cst_543 : f32 to vector<2x1x128xf32>
    %1268 = vector.extract_strided_slice %190 {offsets = [0, 0, 0], sizes = [2, 15, 128], strides = [1, 1, 1]} : vector<2x16x128xf32> to vector<2x15x128xf32>
    %1269 = tpu.concatenate %1267, %1268 in 1 : vector<2x1x128xf32>, vector<2x15x128xf32> -> vector<2x16x128xf32>
    %1270 = vector.shape_cast %1269 : vector<2x16x128xf32> to vector<32x128xf32>
    %c0_544 = arith.constant 0 : index
    %c0_545 = arith.constant 0 : index
    %c0_546 = arith.constant 0 : index
    %1271 = vector.load %arg45[%c0_544, %c0_545, %c0_546] : memref<3x128x128xf32, #tpu.memory_space<vmem>>, vector<1x128x128xf32>
    %1272 = vector.shape_cast %1271 : vector<1x128x128xf32> to vector<128x128xf32>
    %cst_547 = arith.constant dense<0.000000e+00> : vector<32x128xf32>
    %1273 = tpu.matmul %1270, %1272, %cst_547 {dimension_numbers = #tpu.dot_dimension_numbers<[1], [0], [0], [1], [0, 0, 1, 1], [], []>} : vector<32x128xf32>, vector<128x128xf32>, vector<32x128xf32> -> vector<32x128xf32>
    %1274 = vector.shape_cast %190 : vector<2x16x128xf32> to vector<32x128xf32>
    %c1_548 = arith.constant 1 : index
    %c0_549 = arith.constant 0 : index
    %c0_550 = arith.constant 0 : index
    %1275 = vector.load %arg45[%c1_548, %c0_549, %c0_550] : memref<3x128x128xf32, #tpu.memory_space<vmem>>, vector<1x128x128xf32>
    %1276 = vector.shape_cast %1275 : vector<1x128x128xf32> to vector<128x128xf32>
    %cst_551 = arith.constant dense<0.000000e+00> : vector<32x128xf32>
    %1277 = tpu.matmul %1274, %1276, %cst_551 {dimension_numbers = #tpu.dot_dimension_numbers<[1], [0], [0], [1], [0, 0, 1, 1], [], []>} : vector<32x128xf32>, vector<128x128xf32>, vector<32x128xf32> -> vector<32x128xf32>
    %1278 = arith.addf %1273, %1277 : vector<32x128xf32>
    %cst_552 = arith.constant 0.000000e+00 : f32
    %1279 = vector.broadcast %cst_552 : f32 to vector<2x1x128xf32>
    %1280 = vector.extract_strided_slice %190 {offsets = [0, 1, 0], sizes = [2, 15, 128], strides = [1, 1, 1]} : vector<2x16x128xf32> to vector<2x15x128xf32>
    %1281 = tpu.concatenate %1280, %1279 in 1 : vector<2x15x128xf32>, vector<2x1x128xf32> -> vector<2x16x128xf32>
    %1282 = vector.shape_cast %1281 : vector<2x16x128xf32> to vector<32x128xf32>
    %c2_553 = arith.constant 2 : index
    %c0_554 = arith.constant 0 : index
    %c0_555 = arith.constant 0 : index
    %1283 = vector.load %arg45[%c2_553, %c0_554, %c0_555] : memref<3x128x128xf32, #tpu.memory_space<vmem>>, vector<1x128x128xf32>
    %1284 = vector.shape_cast %1283 : vector<1x128x128xf32> to vector<128x128xf32>
    %cst_556 = arith.constant dense<0.000000e+00> : vector<32x128xf32>
    %1285 = tpu.matmul %1282, %1284, %cst_556 {dimension_numbers = #tpu.dot_dimension_numbers<[1], [0], [0], [1], [0, 0, 1, 1], [], []>} : vector<32x128xf32>, vector<128x128xf32>, vector<32x128xf32> -> vector<32x128xf32>
    %1286 = arith.addf %1278, %1285 : vector<32x128xf32>
    %cst_557 = arith.constant 0.000000e+00 : f32
    %1287 = vector.broadcast %cst_557 : f32 to vector<2x1x128xf32>
    %1288 = vector.extract_strided_slice %1266 {offsets = [0, 0, 0], sizes = [2, 15, 128], strides = [1, 1, 1]} : vector<2x16x128xf32> to vector<2x15x128xf32>
    %1289 = tpu.concatenate %1287, %1288 in 1 : vector<2x1x128xf32>, vector<2x15x128xf32> -> vector<2x16x128xf32>
    %1290 = vector.shape_cast %1289 : vector<2x16x128xf32> to vector<32x128xf32>
    %c0_558 = arith.constant 0 : index
    %c0_559 = arith.constant 0 : index
    %c0_560 = arith.constant 0 : index
    %1291 = vector.load %arg46[%c0_558, %c0_559, %c0_560] : memref<3x128x128xf32, #tpu.memory_space<vmem>>, vector<1x128x128xf32>
    %1292 = vector.shape_cast %1291 : vector<1x128x128xf32> to vector<128x128xf32>
    %cst_561 = arith.constant dense<0.000000e+00> : vector<32x128xf32>
    %1293 = tpu.matmul %1290, %1292, %cst_561 {dimension_numbers = #tpu.dot_dimension_numbers<[1], [0], [0], [1], [0, 0, 1, 1], [], []>} : vector<32x128xf32>, vector<128x128xf32>, vector<32x128xf32> -> vector<32x128xf32>
    %1294 = arith.addf %1286, %1293 : vector<32x128xf32>
    %1295 = vector.shape_cast %1266 : vector<2x16x128xf32> to vector<32x128xf32>
    %c1_562 = arith.constant 1 : index
    %c0_563 = arith.constant 0 : index
    %c0_564 = arith.constant 0 : index
    %1296 = vector.load %arg46[%c1_562, %c0_563, %c0_564] : memref<3x128x128xf32, #tpu.memory_space<vmem>>, vector<1x128x128xf32>
    %1297 = vector.shape_cast %1296 : vector<1x128x128xf32> to vector<128x128xf32>
    %cst_565 = arith.constant dense<0.000000e+00> : vector<32x128xf32>
    %1298 = tpu.matmul %1295, %1297, %cst_565 {dimension_numbers = #tpu.dot_dimension_numbers<[1], [0], [0], [1], [0, 0, 1, 1], [], []>} : vector<32x128xf32>, vector<128x128xf32>, vector<32x128xf32> -> vector<32x128xf32>
    %1299 = arith.addf %1294, %1298 : vector<32x128xf32>
    %cst_566 = arith.constant 0.000000e+00 : f32
    %1300 = vector.broadcast %cst_566 : f32 to vector<2x1x128xf32>
    %1301 = vector.extract_strided_slice %1266 {offsets = [0, 1, 0], sizes = [2, 15, 128], strides = [1, 1, 1]} : vector<2x16x128xf32> to vector<2x15x128xf32>
    %1302 = tpu.concatenate %1301, %1300 in 1 : vector<2x15x128xf32>, vector<2x1x128xf32> -> vector<2x16x128xf32>
    %1303 = vector.shape_cast %1302 : vector<2x16x128xf32> to vector<32x128xf32>
    %c2_567 = arith.constant 2 : index
    %c0_568 = arith.constant 0 : index
    %c0_569 = arith.constant 0 : index
    %1304 = vector.load %arg46[%c2_567, %c0_568, %c0_569] : memref<3x128x128xf32, #tpu.memory_space<vmem>>, vector<1x128x128xf32>
    %1305 = vector.shape_cast %1304 : vector<1x128x128xf32> to vector<128x128xf32>
    %cst_570 = arith.constant dense<0.000000e+00> : vector<32x128xf32>
    %1306 = tpu.matmul %1303, %1305, %cst_570 {dimension_numbers = #tpu.dot_dimension_numbers<[1], [0], [0], [1], [0, 0, 1, 1], [], []>} : vector<32x128xf32>, vector<128x128xf32>, vector<32x128xf32> -> vector<32x128xf32>
    %1307 = arith.addf %1299, %1306 : vector<32x128xf32>
    %c0_571 = arith.constant 0 : index
    %c0_572 = arith.constant 0 : index
    %1308 = vector.load %arg47[%c0_571, %c0_572] : memref<1x8xf32, #tpu.memory_space<vmem>>, vector<1x8xf32>
    %c0_573 = arith.constant 0 : index
    %c0_574 = arith.constant 0 : index
    %1309 = vector.load %arg48[%c0_573, %c0_574] : memref<1x8xf32, #tpu.memory_space<vmem>>, vector<1x8xf32>
    %cst_575 = arith.constant dense<0.000000e+00> : vector<128xf32>
    %1310 = vector.multi_reduction <add>, %1307, %cst_575 [0] : vector<32x128xf32> to vector<128xf32>
    %1311 = vector.shape_cast %1310 : vector<128xf32> to vector<1x128xf32>
    %1312 = arith.mulf %1307, %1307 : vector<32x128xf32>
    %cst_576 = arith.constant dense<0.000000e+00> : vector<128xf32>
    %1313 = vector.multi_reduction <add>, %1312, %cst_576 [0] : vector<32x128xf32> to vector<128xf32>
    %1314 = vector.shape_cast %1313 : vector<128xf32> to vector<1x128xf32>
    %1315 = tpu.iota {dimensions = array<i32: 0>} : vector<128x8xi32>
    %c8_i32_577 = arith.constant 8 : i32
    %c0_i32_578 = arith.constant 0 : i32
    %1316 = arith.cmpi eq, %c8_i32_577, %c0_i32_578 : i32
    %c1_i32_579 = arith.constant 1 : i32
    %1317 = arith.select %1316, %c1_i32_579, %c8_i32_577 : i32
    %1318 = vector.broadcast %1317 : i32 to vector<128x8xi32>
    %1319 = arith.remsi %1315, %1318 : vector<128x8xi32>
    %c0_i32_580 = arith.constant 0 : i32
    %1320 = vector.broadcast %c0_i32_580 : i32 to vector<128x8xi32>
    %1321 = arith.cmpi ne, %1319, %1320 : vector<128x8xi32>
    %c0_i32_581 = arith.constant 0 : i32
    %1322 = vector.broadcast %c0_i32_581 : i32 to vector<128x8xi32>
    %1323 = arith.cmpi slt, %1319, %1322 : vector<128x8xi32>
    %c0_i32_582 = arith.constant 0 : i32
    %1324 = arith.cmpi slt, %1317, %c0_i32_582 : i32
    %1325 = vector.broadcast %1324 : i1 to vector<128x8xi1>
    %1326 = vector.broadcast %1325 : vector<128x8xi1> to vector<128x8xi1>
    %1327 = arith.xori %1323, %1326 : vector<128x8xi1>
    %1328 = arith.andi %1327, %1321 : vector<128x8xi1>
    %1329 = vector.broadcast %1317 : i32 to vector<128x8xi32>
    %1330 = arith.addi %1319, %1329 : vector<128x8xi32>
    %1331 = arith.select %1328, %1330, %1319 : vector<128x8xi1>, vector<128x8xi32>
    %1332 = tpu.iota {dimensions = array<i32: 1>} : vector<128x8xi32>
    %1333 = arith.cmpi eq, %1331, %1332 : vector<128x8xi32>
    %1334 = arith.extui %1333 : vector<128x8xi1> to vector<128x8xi32>
    %1335 = arith.sitofp %1334 : vector<128x8xi32> to vector<128x8xf32>
    %1336 = tpu.iota {dimensions = array<i32: 0>} : vector<8x128xi32>
    %1337 = tpu.iota {dimensions = array<i32: 1>} : vector<8x128xi32>
    %c8_i32_583 = arith.constant 8 : i32
    %c0_i32_584 = arith.constant 0 : i32
    %1338 = arith.cmpi eq, %c8_i32_583, %c0_i32_584 : i32
    %c1_i32_585 = arith.constant 1 : i32
    %1339 = arith.select %1338, %c1_i32_585, %c8_i32_583 : i32
    %1340 = vector.broadcast %1339 : i32 to vector<8x128xi32>
    %1341 = arith.remsi %1337, %1340 : vector<8x128xi32>
    %c0_i32_586 = arith.constant 0 : i32
    %1342 = vector.broadcast %c0_i32_586 : i32 to vector<8x128xi32>
    %1343 = arith.cmpi ne, %1341, %1342 : vector<8x128xi32>
    %c0_i32_587 = arith.constant 0 : i32
    %1344 = vector.broadcast %c0_i32_587 : i32 to vector<8x128xi32>
    %1345 = arith.cmpi slt, %1341, %1344 : vector<8x128xi32>
    %c0_i32_588 = arith.constant 0 : i32
    %1346 = arith.cmpi slt, %1339, %c0_i32_588 : i32
    %1347 = vector.broadcast %1346 : i1 to vector<8x128xi1>
    %1348 = vector.broadcast %1347 : vector<8x128xi1> to vector<8x128xi1>
    %1349 = arith.xori %1345, %1348 : vector<8x128xi1>
    %1350 = arith.andi %1349, %1343 : vector<8x128xi1>
    %1351 = vector.broadcast %1339 : i32 to vector<8x128xi32>
    %1352 = arith.addi %1341, %1351 : vector<8x128xi32>
    %1353 = arith.select %1350, %1352, %1341 : vector<8x128xi1>, vector<8x128xi32>
    %1354 = arith.cmpi eq, %1336, %1353 : vector<8x128xi32>
    %1355 = arith.extui %1354 : vector<8x128xi1> to vector<8x128xi32>
    %1356 = arith.sitofp %1355 : vector<8x128xi32> to vector<8x128xf32>
    %cst_589 = arith.constant dense<0.000000e+00> : vector<1x8xf32>
    %1357 = tpu.matmul %1311, %1335, %cst_589 {dimension_numbers = #tpu.dot_dimension_numbers<[1], [0], [0], [1], [0, 0, 1, 1], [], []>} : vector<1x128xf32>, vector<128x8xf32>, vector<1x8xf32> -> vector<1x8xf32>
    %cst_590 = arith.constant dense<0.000000e+00> : vector<1x8xf32>
    %1358 = tpu.matmul %1314, %1335, %cst_590 {dimension_numbers = #tpu.dot_dimension_numbers<[1], [0], [0], [1], [0, 0, 1, 1], [], []>} : vector<1x128xf32>, vector<128x8xf32>, vector<1x8xf32> -> vector<1x8xf32>
    %cst_591 = arith.constant 5.120000e+02 : f32
    %1359 = vector.broadcast %cst_591 : f32 to vector<1x8xf32>
    %1360 = arith.divf %1357, %1359 : vector<1x8xf32>
    %cst_592 = arith.constant 5.120000e+02 : f32
    %1361 = vector.broadcast %cst_592 : f32 to vector<1x8xf32>
    %1362 = arith.divf %1358, %1361 : vector<1x8xf32>
    %1363 = arith.mulf %1360, %1360 : vector<1x8xf32>
    %1364 = arith.subf %1362, %1363 : vector<1x8xf32>
    %cst_593 = arith.constant 9.99999974E-6 : f32
    %1365 = vector.broadcast %cst_593 : f32 to vector<1x8xf32>
    %1366 = arith.addf %1364, %1365 : vector<1x8xf32>
    %1367 = math.rsqrt %1366 : vector<1x8xf32>
    %1368 = arith.mulf %1308, %1367 : vector<1x8xf32>
    %1369 = arith.mulf %1360, %1368 : vector<1x8xf32>
    %1370 = arith.subf %1309, %1369 : vector<1x8xf32>
    %cst_594 = arith.constant dense<0.000000e+00> : vector<1x128xf32>
    %1371 = tpu.matmul %1368, %1356, %cst_594 {dimension_numbers = #tpu.dot_dimension_numbers<[1], [0], [0], [1], [0, 0, 1, 1], [], []>} : vector<1x8xf32>, vector<8x128xf32>, vector<1x128xf32> -> vector<1x128xf32>
    %cst_595 = arith.constant dense<0.000000e+00> : vector<1x128xf32>
    %1372 = tpu.matmul %1370, %1356, %cst_595 {dimension_numbers = #tpu.dot_dimension_numbers<[1], [0], [0], [1], [0, 0, 1, 1], [], []>} : vector<1x8xf32>, vector<8x128xf32>, vector<1x128xf32> -> vector<1x128xf32>
    %1373 = vector.broadcast %1371 : vector<1x128xf32> to vector<32x128xf32>
    %1374 = arith.mulf %1307, %1373 : vector<32x128xf32>
    %1375 = vector.broadcast %1372 : vector<1x128xf32> to vector<32x128xf32>
    %1376 = arith.addf %1374, %1375 : vector<32x128xf32>
    %cst_596 = arith.constant 0.000000e+00 : f32
    %1377 = vector.broadcast %cst_596 : f32 to vector<32x128xf32>
    %1378 = arith.cmpf ogt, %1376, %1377 : vector<32x128xf32>
    %cst_597 = arith.constant 3.000000e-02 : f32
    %1379 = vector.broadcast %cst_597 : f32 to vector<32x128xf32>
    %1380 = arith.mulf %1379, %1376 : vector<32x128xf32>
    %1381 = arith.select %1378, %1376, %1380 : vector<32x128xi1>, vector<32x128xf32>
    %1382 = vector.shape_cast %1381 : vector<32x128xf32> to vector<2x16x128xf32>
    %cst_598 = arith.constant 0.000000e+00 : f32
    %1383 = vector.broadcast %cst_598 : f32 to vector<2x1x128xf32>
    %1384 = vector.extract_strided_slice %1382 {offsets = [0, 0, 0], sizes = [2, 15, 128], strides = [1, 1, 1]} : vector<2x16x128xf32> to vector<2x15x128xf32>
    %1385 = tpu.concatenate %1383, %1384 in 1 : vector<2x1x128xf32>, vector<2x15x128xf32> -> vector<2x16x128xf32>
    %1386 = vector.shape_cast %1385 : vector<2x16x128xf32> to vector<32x128xf32>
    %c0_599 = arith.constant 0 : index
    %c0_600 = arith.constant 0 : index
    %c0_601 = arith.constant 0 : index
    %1387 = vector.load %arg49[%c0_599, %c0_600, %c0_601] : memref<3x128x128xf32, #tpu.memory_space<vmem>>, vector<1x128x128xf32>
    %1388 = vector.shape_cast %1387 : vector<1x128x128xf32> to vector<128x128xf32>
    %cst_602 = arith.constant dense<0.000000e+00> : vector<32x128xf32>
    %1389 = tpu.matmul %1386, %1388, %cst_602 {dimension_numbers = #tpu.dot_dimension_numbers<[1], [0], [0], [1], [0, 0, 1, 1], [], []>} : vector<32x128xf32>, vector<128x128xf32>, vector<32x128xf32> -> vector<32x128xf32>
    %1390 = vector.shape_cast %1382 : vector<2x16x128xf32> to vector<32x128xf32>
    %c1_603 = arith.constant 1 : index
    %c0_604 = arith.constant 0 : index
    %c0_605 = arith.constant 0 : index
    %1391 = vector.load %arg49[%c1_603, %c0_604, %c0_605] : memref<3x128x128xf32, #tpu.memory_space<vmem>>, vector<1x128x128xf32>
    %1392 = vector.shape_cast %1391 : vector<1x128x128xf32> to vector<128x128xf32>
    %cst_606 = arith.constant dense<0.000000e+00> : vector<32x128xf32>
    %1393 = tpu.matmul %1390, %1392, %cst_606 {dimension_numbers = #tpu.dot_dimension_numbers<[1], [0], [0], [1], [0, 0, 1, 1], [], []>} : vector<32x128xf32>, vector<128x128xf32>, vector<32x128xf32> -> vector<32x128xf32>
    %1394 = arith.addf %1389, %1393 : vector<32x128xf32>
    %cst_607 = arith.constant 0.000000e+00 : f32
    %1395 = vector.broadcast %cst_607 : f32 to vector<2x1x128xf32>
    %1396 = vector.extract_strided_slice %1382 {offsets = [0, 1, 0], sizes = [2, 15, 128], strides = [1, 1, 1]} : vector<2x16x128xf32> to vector<2x15x128xf32>
    %1397 = tpu.concatenate %1396, %1395 in 1 : vector<2x15x128xf32>, vector<2x1x128xf32> -> vector<2x16x128xf32>
    %1398 = vector.shape_cast %1397 : vector<2x16x128xf32> to vector<32x128xf32>
    %c2_608 = arith.constant 2 : index
    %c0_609 = arith.constant 0 : index
    %c0_610 = arith.constant 0 : index
    %1399 = vector.load %arg49[%c2_608, %c0_609, %c0_610] : memref<3x128x128xf32, #tpu.memory_space<vmem>>, vector<1x128x128xf32>
    %1400 = vector.shape_cast %1399 : vector<1x128x128xf32> to vector<128x128xf32>
    %cst_611 = arith.constant dense<0.000000e+00> : vector<32x128xf32>
    %1401 = tpu.matmul %1398, %1400, %cst_611 {dimension_numbers = #tpu.dot_dimension_numbers<[1], [0], [0], [1], [0, 0, 1, 1], [], []>} : vector<32x128xf32>, vector<128x128xf32>, vector<32x128xf32> -> vector<32x128xf32>
    %1402 = arith.addf %1394, %1401 : vector<32x128xf32>
    %c0_612 = arith.constant 0 : index
    %c0_613 = arith.constant 0 : index
    %1403 = vector.load %arg50[%c0_612, %c0_613] : memref<1x8xf32, #tpu.memory_space<vmem>>, vector<1x8xf32>
    %c0_614 = arith.constant 0 : index
    %c0_615 = arith.constant 0 : index
    %1404 = vector.load %arg51[%c0_614, %c0_615] : memref<1x8xf32, #tpu.memory_space<vmem>>, vector<1x8xf32>
    %cst_616 = arith.constant dense<0.000000e+00> : vector<128xf32>
    %1405 = vector.multi_reduction <add>, %1402, %cst_616 [0] : vector<32x128xf32> to vector<128xf32>
    %1406 = vector.shape_cast %1405 : vector<128xf32> to vector<1x128xf32>
    %1407 = arith.mulf %1402, %1402 : vector<32x128xf32>
    %cst_617 = arith.constant dense<0.000000e+00> : vector<128xf32>
    %1408 = vector.multi_reduction <add>, %1407, %cst_617 [0] : vector<32x128xf32> to vector<128xf32>
    %1409 = vector.shape_cast %1408 : vector<128xf32> to vector<1x128xf32>
    %1410 = tpu.iota {dimensions = array<i32: 0>} : vector<128x8xi32>
    %c8_i32_618 = arith.constant 8 : i32
    %c0_i32_619 = arith.constant 0 : i32
    %1411 = arith.cmpi eq, %c8_i32_618, %c0_i32_619 : i32
    %c1_i32_620 = arith.constant 1 : i32
    %1412 = arith.select %1411, %c1_i32_620, %c8_i32_618 : i32
    %1413 = vector.broadcast %1412 : i32 to vector<128x8xi32>
    %1414 = arith.remsi %1410, %1413 : vector<128x8xi32>
    %c0_i32_621 = arith.constant 0 : i32
    %1415 = vector.broadcast %c0_i32_621 : i32 to vector<128x8xi32>
    %1416 = arith.cmpi ne, %1414, %1415 : vector<128x8xi32>
    %c0_i32_622 = arith.constant 0 : i32
    %1417 = vector.broadcast %c0_i32_622 : i32 to vector<128x8xi32>
    %1418 = arith.cmpi slt, %1414, %1417 : vector<128x8xi32>
    %c0_i32_623 = arith.constant 0 : i32
    %1419 = arith.cmpi slt, %1412, %c0_i32_623 : i32
    %1420 = vector.broadcast %1419 : i1 to vector<128x8xi1>
    %1421 = vector.broadcast %1420 : vector<128x8xi1> to vector<128x8xi1>
    %1422 = arith.xori %1418, %1421 : vector<128x8xi1>
    %1423 = arith.andi %1422, %1416 : vector<128x8xi1>
    %1424 = vector.broadcast %1412 : i32 to vector<128x8xi32>
    %1425 = arith.addi %1414, %1424 : vector<128x8xi32>
    %1426 = arith.select %1423, %1425, %1414 : vector<128x8xi1>, vector<128x8xi32>
    %1427 = tpu.iota {dimensions = array<i32: 1>} : vector<128x8xi32>
    %1428 = arith.cmpi eq, %1426, %1427 : vector<128x8xi32>
    %1429 = arith.extui %1428 : vector<128x8xi1> to vector<128x8xi32>
    %1430 = arith.sitofp %1429 : vector<128x8xi32> to vector<128x8xf32>
    %1431 = tpu.iota {dimensions = array<i32: 0>} : vector<8x128xi32>
    %1432 = tpu.iota {dimensions = array<i32: 1>} : vector<8x128xi32>
    %c8_i32_624 = arith.constant 8 : i32
    %c0_i32_625 = arith.constant 0 : i32
    %1433 = arith.cmpi eq, %c8_i32_624, %c0_i32_625 : i32
    %c1_i32_626 = arith.constant 1 : i32
    %1434 = arith.select %1433, %c1_i32_626, %c8_i32_624 : i32
    %1435 = vector.broadcast %1434 : i32 to vector<8x128xi32>
    %1436 = arith.remsi %1432, %1435 : vector<8x128xi32>
    %c0_i32_627 = arith.constant 0 : i32
    %1437 = vector.broadcast %c0_i32_627 : i32 to vector<8x128xi32>
    %1438 = arith.cmpi ne, %1436, %1437 : vector<8x128xi32>
    %c0_i32_628 = arith.constant 0 : i32
    %1439 = vector.broadcast %c0_i32_628 : i32 to vector<8x128xi32>
    %1440 = arith.cmpi slt, %1436, %1439 : vector<8x128xi32>
    %c0_i32_629 = arith.constant 0 : i32
    %1441 = arith.cmpi slt, %1434, %c0_i32_629 : i32
    %1442 = vector.broadcast %1441 : i1 to vector<8x128xi1>
    %1443 = vector.broadcast %1442 : vector<8x128xi1> to vector<8x128xi1>
    %1444 = arith.xori %1440, %1443 : vector<8x128xi1>
    %1445 = arith.andi %1444, %1438 : vector<8x128xi1>
    %1446 = vector.broadcast %1434 : i32 to vector<8x128xi32>
    %1447 = arith.addi %1436, %1446 : vector<8x128xi32>
    %1448 = arith.select %1445, %1447, %1436 : vector<8x128xi1>, vector<8x128xi32>
    %1449 = arith.cmpi eq, %1431, %1448 : vector<8x128xi32>
    %1450 = arith.extui %1449 : vector<8x128xi1> to vector<8x128xi32>
    %1451 = arith.sitofp %1450 : vector<8x128xi32> to vector<8x128xf32>
    %cst_630 = arith.constant dense<0.000000e+00> : vector<1x8xf32>
    %1452 = tpu.matmul %1406, %1430, %cst_630 {dimension_numbers = #tpu.dot_dimension_numbers<[1], [0], [0], [1], [0, 0, 1, 1], [], []>} : vector<1x128xf32>, vector<128x8xf32>, vector<1x8xf32> -> vector<1x8xf32>
    %cst_631 = arith.constant dense<0.000000e+00> : vector<1x8xf32>
    %1453 = tpu.matmul %1409, %1430, %cst_631 {dimension_numbers = #tpu.dot_dimension_numbers<[1], [0], [0], [1], [0, 0, 1, 1], [], []>} : vector<1x128xf32>, vector<128x8xf32>, vector<1x8xf32> -> vector<1x8xf32>
    %cst_632 = arith.constant 5.120000e+02 : f32
    %1454 = vector.broadcast %cst_632 : f32 to vector<1x8xf32>
    %1455 = arith.divf %1452, %1454 : vector<1x8xf32>
    %cst_633 = arith.constant 5.120000e+02 : f32
    %1456 = vector.broadcast %cst_633 : f32 to vector<1x8xf32>
    %1457 = arith.divf %1453, %1456 : vector<1x8xf32>
    %1458 = arith.mulf %1455, %1455 : vector<1x8xf32>
    %1459 = arith.subf %1457, %1458 : vector<1x8xf32>
    %cst_634 = arith.constant 9.99999974E-6 : f32
    %1460 = vector.broadcast %cst_634 : f32 to vector<1x8xf32>
    %1461 = arith.addf %1459, %1460 : vector<1x8xf32>
    %1462 = math.rsqrt %1461 : vector<1x8xf32>
    %1463 = arith.mulf %1403, %1462 : vector<1x8xf32>
    %1464 = arith.mulf %1455, %1463 : vector<1x8xf32>
    %1465 = arith.subf %1404, %1464 : vector<1x8xf32>
    %cst_635 = arith.constant dense<0.000000e+00> : vector<1x128xf32>
    %1466 = tpu.matmul %1463, %1451, %cst_635 {dimension_numbers = #tpu.dot_dimension_numbers<[1], [0], [0], [1], [0, 0, 1, 1], [], []>} : vector<1x8xf32>, vector<8x128xf32>, vector<1x128xf32> -> vector<1x128xf32>
    %cst_636 = arith.constant dense<0.000000e+00> : vector<1x128xf32>
    %1467 = tpu.matmul %1465, %1451, %cst_636 {dimension_numbers = #tpu.dot_dimension_numbers<[1], [0], [0], [1], [0, 0, 1, 1], [], []>} : vector<1x8xf32>, vector<8x128xf32>, vector<1x128xf32> -> vector<1x128xf32>
    %1468 = vector.broadcast %1466 : vector<1x128xf32> to vector<32x128xf32>
    %1469 = arith.mulf %1402, %1468 : vector<32x128xf32>
    %1470 = vector.broadcast %1467 : vector<1x128xf32> to vector<32x128xf32>
    %1471 = arith.addf %1469, %1470 : vector<32x128xf32>
    %cst_637 = arith.constant 0.000000e+00 : f32
    %1472 = vector.broadcast %cst_637 : f32 to vector<32x128xf32>
    %1473 = arith.cmpf ogt, %1471, %1472 : vector<32x128xf32>
    %cst_638 = arith.constant 3.000000e-02 : f32
    %1474 = vector.broadcast %cst_638 : f32 to vector<32x128xf32>
    %1475 = arith.mulf %1474, %1471 : vector<32x128xf32>
    %1476 = arith.select %1473, %1471, %1475 : vector<32x128xi1>, vector<32x128xf32>
    %1477 = vector.shape_cast %1476 : vector<32x128xf32> to vector<2x16x128xf32>
    %1478 = vector.shape_cast %1477 : vector<2x16x128xf32> to vector<32x128xf32>
    %c0_639 = arith.constant 0 : index
    %c0_640 = arith.constant 0 : index
    %1479 = vector.load %arg52[%c0_639, %c0_640] : memref<32x128xf32, #tpu.memory_space<vmem>>, vector<32x128xf32>
    tpu.vector_store %arg52[%c0_639, %c0_640], %1478 {strides = array<i32>} : memref<32x128xf32, #tpu.memory_space<vmem>>, vector<32x128xf32>,
    return
  }
}

</mosaic_0001>

<llo_original>
// kernel: cropped_unet_forward.1
$region0: #{cropped_unet_forward.1}
  #allocation0 [shape = 'u32[]', space=smem, size = 0x4, offset = 0x4, fixed_abs, tag = 'smem constant byte address 0x4 - core index']
  #allocation1 [shape = 'u32[72,128]{1,0:T(1,128)}', space=vmem, size = 0x9000, scoped, tag = 'internal scratch']
  %s0 = inlined_call_operand.smem [shape: u32[53], index: -1, kind: input, shape index: {}]
  %s1 = sld [smem:[%s0]]
  %s2 = scalar_lea.smem %s0, 1
  %s3 = sld [smem:[%s2]]
  %s4 = scalar_lea.smem %s0, 2
  %s5 = sld [smem:[%s4]]
  %s6 = scalar_lea.smem %s0, 3
  %s7 = sld [smem:[%s6]]
  %s8 = scalar_lea.smem %s0, 4
  %s9 = sld [smem:[%s8]]
  %s10 = scalar_lea.smem %s0, 5
  %s11 = sld [smem:[%s10]]
  %s12 = scalar_lea.smem %s0, 6
  %s13 = sld [smem:[%s12]]
  %s14 = scalar_lea.smem %s0, 7
  %s15 = sld [smem:[%s14]]
  %s16 = scalar_lea.smem %s0, 8
  %s17 = sld [smem:[%s16]]
  %s18 = scalar_lea.smem %s0, 9
  %s19 = sld [smem:[%s18]]
  %s20 = scalar_lea.smem %s0, 10
  %s21 = sld [smem:[%s20]]
  %s22 = scalar_lea.smem %s0, 11
  %s23 = sld [smem:[%s22]]
  %s24 = scalar_lea.smem %s0, 12
  %s25 = sld [smem:[%s24]]
  %s26 = scalar_lea.smem %s0, 13
  %s27 = sld [smem:[%s26]]
  %s28 = scalar_lea.smem %s0, 14
  %s29 = sld [smem:[%s28]]
  %s30 = scalar_lea.smem %s0, 15
  %s31 = sld [smem:[%s30]]
  %s32 = scalar_lea.smem %s0, 16
  %s33 = sld [smem:[%s32]]
  %s34 = scalar_lea.smem %s0, 17
  %s35 = sld [smem:[%s34]]
  %s36 = scalar_lea.smem %s0, 18
  %s37 = sld [smem:[%s36]]
  %s38 = scalar_lea.smem %s0, 19
  %s39 = sld [smem:[%s38]]
  %s40 = scalar_lea.smem %s0, 20
  %s41 = sld [smem:[%s40]]
  %s42 = scalar_lea.smem %s0, 21
  %s43 = sld [smem:[%s42]]
  %s44 = scalar_lea.smem %s0, 22
  %s45 = sld [smem:[%s44]]
  %s46 = scalar_lea.smem %s0, 23
  %s47 = sld [smem:[%s46]]
  %s48 = scalar_lea.smem %s0, 24
  %s49 = sld [smem:[%s48]]
  %s50 = scalar_lea.smem %s0, 25
  %s51 = sld [smem:[%s50]]
  %s52 = scalar_lea.smem %s0, 26
  %s53 = sld [smem:[%s52]]
  %s54 = scalar_lea.smem %s0, 27
  %s55 = sld [smem:[%s54]]
  %s56 = scalar_lea.smem %s0, 28
  %s57 = sld [smem:[%s56]]
  %s58 = scalar_lea.smem %s0, 29
  %s59 = sld [smem:[%s58]]
  %s60 = scalar_lea.smem %s0, 30
  %s61 = sld [smem:[%s60]]
  %s62 = scalar_lea.smem %s0, 31
  %s63 = sld [smem:[%s62]]
  %s64 = scalar_lea.smem %s0, 32
  %s65 = sld [smem:[%s64]]
  %s66 = scalar_lea.smem %s0, 33
  %s67 = sld [smem:[%s66]]
  %s68 = scalar_lea.smem %s0, 34
  %s69 = sld [smem:[%s68]]
  %s70 = scalar_lea.smem %s0, 35
  %s71 = sld [smem:[%s70]]
  %s72 = scalar_lea.smem %s0, 36
  %s73 = sld [smem:[%s72]]
  %s74 = scalar_lea.smem %s0, 37
  %s75 = sld [smem:[%s74]]
  %s76 = scalar_lea.smem %s0, 38
  %s77 = sld [smem:[%s76]]
  %s78 = scalar_lea.smem %s0, 39
  %s79 = sld [smem:[%s78]]
  %s80 = scalar_lea.smem %s0, 40
  %s81 = sld [smem:[%s80]]
  %s82 = scalar_lea.smem %s0, 41
  %s83 = sld [smem:[%s82]]
  %s84 = scalar_lea.smem %s0, 42
  %s85 = sld [smem:[%s84]]
  %s86 = scalar_lea.smem %s0, 43
  %s87 = sld [smem:[%s86]]
  %s88 = scalar_lea.smem %s0, 44
  %s89 = sld [smem:[%s88]]
  %s90 = scalar_lea.smem %s0, 45
  %s91 = sld [smem:[%s90]]
  %s92 = scalar_lea.smem %s0, 46
  %s93 = sld [smem:[%s92]]
  %s94 = scalar_lea.smem %s0, 47
  %s95 = sld [smem:[%s94]]
  %s96 = scalar_lea.smem %s0, 48
  %s97 = sld [smem:[%s96]]
  %s98 = scalar_lea.smem %s0, 49
  %s99 = sld [smem:[%s98]]
  %s100 = scalar_lea.smem %s0, 50
  %s101 = sld [smem:[%s100]]
  %s102 = scalar_lea.smem %s0, 51
  %s103 = sld [smem:[%s102]]
  %s104 = scalar_lea.smem %s0, 52
  %s105 = sld [smem:[%s104]]
  %s106 = sld [smem:[#allocation0]]
  $region302: #{cropped_unet_forward.1} parent=0
    _
  %s108 = ssub.s32 1, %s106
  %s109 = scalar_select 0, %s108, %s106
  $region1: #{cropped_unet_forward.1} parent=0
    #allocation2 [shape = 'u8[16384]{0}', space=vmem, size = 0x4000, scoped, tag = 'input window, operand 0, single buffered']
    #allocation3 [shape = 's32[1]{0}', space=sflag, size = 0x4, scoped, tag = 'scoped memory for cropped_unet_forward.1']
    #allocation4 [shape = 'u8[24576]{0}', space=vmem, size = 0x6000, scoped, tag = 'input window, operand 1, single buffered']
    #allocation5 [shape = 's32[1]{0}', space=sflag, size = 0x4, scoped, tag = 'scoped memory for cropped_unet_forward.1']
    #allocation6 [shape = 'u8[196608]{0}', space=vmem, size = 0x30000, scoped, tag = 'input window, operand 4, single buffered']
    #allocation7 [shape = 'u8[196608]{0}', space=vmem, size = 0x30000, scoped, tag = 'input window, operand 7, single buffered']
    #allocation8 [shape = 's32[1]{0}', space=sflag, size = 0x4, scoped, tag = 'scoped memory for cropped_unet_forward.1']
    #allocation9 [shape = 'u8[196608]{0}', space=vmem, size = 0x30000, scoped, tag = 'input window, operand 10, single buffered']
    #allocation10 [shape = 'u8[196608]{0}', space=vmem, size = 0x30000, scoped, tag = 'input window, operand 13, single buffered']
    #allocation11 [shape = 's32[1]{0}', space=sflag, size = 0x4, scoped, tag = 'scoped memory for cropped_unet_forward.1']
    #allocation12 [shape = 'u8[196608]{0}', space=vmem, size = 0x30000, scoped, tag = 'input window, operand 16, single buffered']
    #allocation13 [shape = 'u8[196608]{0}', space=vmem, size = 0x30000, scoped, tag = 'input window, operand 19, single buffered']
    #allocation14 [shape = 's32[1]{0}', space=sflag, size = 0x4, scoped, tag = 'scoped memory for cropped_unet_forward.1']
    #allocation15 [shape = 'u8[196608]{0}', space=vmem, size = 0x30000, scoped, tag = 'input window, operand 22, single buffered']
    #allocation16 [shape = 'u8[131072]{0}', space=vmem, size = 0x20000, scoped, tag = 'input window, operand 25, single buffered']
    #allocation17 [shape = 's32[1]{0}', space=sflag, size = 0x4, scoped, tag = 'scoped memory for cropped_unet_forward.1']
    #allocation18 [shape = 'u8[196608]{0}', space=vmem, size = 0x30000, scoped, tag = 'input window, operand 27, single buffered']
    #allocation19 [shape = 'u8[196608]{0}', space=vmem, size = 0x30000, scoped, tag = 'input window, operand 28, single buffered']
    #allocation20 [shape = 's32[1]{0}', space=sflag, size = 0x4, scoped, tag = 'scoped memory for cropped_unet_forward.1']
    #allocation21 [shape = 'u8[196608]{0}', space=vmem, size = 0x30000, scoped, tag = 'input window, operand 31, single buffered']
    #allocation22 [shape = 'u8[131072]{0}', space=vmem, size = 0x20000, scoped, tag = 'input window, operand 34, single buffered']
    #allocation23 [shape = 's32[1]{0}', space=sflag, size = 0x4, scoped, tag = 'scoped memory for cropped_unet_forward.1']
    #allocation24 [shape = 'u8[196608]{0}', space=vmem, size = 0x30000, scoped, tag = 'input window, operand 36, single buffered']
    #allocation25 [shape = 'u8[196608]{0}', space=vmem, size = 0x30000, scoped, tag = 'input window, operand 37, single buffered']
    #allocation26 [shape = 's32[1]{0}', space=sflag, size = 0x4, scoped, tag = 'scoped memory for cropped_unet_forward.1']
    #allocation27 [shape = 'u8[196608]{0}', space=vmem, size = 0x30000, scoped, tag = 'input window, operand 40, single buffered']
    #allocation28 [shape = 'u8[131072]{0}', space=vmem, size = 0x20000, scoped, tag = 'input window, operand 43, single buffered']
    #allocation29 [shape = 's32[1]{0}', space=sflag, size = 0x4, scoped, tag = 'scoped memory for cropped_unet_forward.1']
    #allocation30 [shape = 'u8[196608]{0}', space=vmem, size = 0x30000, scoped, tag = 'input window, operand 45, single buffered']
    #allocation31 [shape = 'u8[196608]{0}', space=vmem, size = 0x30000, scoped, tag = 'input window, operand 46, single buffered']
    #allocation32 [shape = 's32[1]{0}', space=sflag, size = 0x4, scoped, tag = 'scoped memory for cropped_unet_forward.1']
    #allocation33 [shape = 'u8[196608]{0}', space=vmem, size = 0x30000, scoped, tag = 'input window, operand 49, single buffered']
    %110 = vsyncpa [#allocation3], 0
    %111 = vsyncpa [#allocation5], 0
    %112 = vsyncpa [#allocation8], 0
    %113 = vsyncpa [#allocation11], 0
    %114 = vsyncpa [#allocation14], 0
    %115 = vsyncpa [#allocation17], 0
    %116 = vsyncpa [#allocation20], 0
    %117 = vsyncpa [#allocation23], 0
    %118 = vsyncpa [#allocation26], 0
    %119 = vsyncpa [#allocation29], 0
    %120 = vsyncpa [#allocation32], 0
    // Predicated region
    $region2: #{cropped_unet_forward.1} parent=1 // pred_check
      _
    $region3: #{cropped_unet_forward.1} parent=1 // pred_check_branch
      %122 = sbr.rel (0) target = $region5
    $region4: #{cropped_unet_forward.1} parent=1 // pred_region
      %124 = vsyncadd [#allocation3], 0
      %s125 = sshll.u32 %s1, 4
      %s126 = int_to_ptr.hbm [resolvable:$true] %s125
      %s127 = sshll.u32 [#allocation2], 4
      %s128 = int_to_ptr.vmem [resolvable:$true] %s127
      %133 = dma.hbm_to_vmem [thread:$0]  %s126, 512, %s128, [#allocation3], 128, 128, 8
    $region5: #{cropped_unet_forward.1} parent=1 // pred_fallthru
      _
    // Predicated region
    $region6: #{cropped_unet_forward.1} parent=1 // pred_check
      _
    $region7: #{cropped_unet_forward.1} parent=1 // pred_check_branch
      %135 = sbr.rel (0) target = $region9
    $region8: #{cropped_unet_forward.1} parent=1 // pred_region
      %137 = vsyncadd [#allocation5], 0
      %s138 = sshll.u32 %s3, 4
      %s139 = int_to_ptr.hbm [resolvable:$true] %s138
      %s140 = sshll.u32 [#allocation4], 4
      %s141 = int_to_ptr.vmem [resolvable:$true] %s140
      %146 = dma.hbm_to_vmem [thread:$0]  %s139, 768, %s141, [#allocation5], 128, 128, 8
    $region9: #{cropped_unet_forward.1} parent=1 // pred_fallthru
      _
    // Predicated region
    $region10: #{cropped_unet_forward.1} parent=1 // pred_check
      _
    $region11: #{cropped_unet_forward.1} parent=1 // pred_check_branch
      %148 = sbr.rel (0) target = $region13
    $region12: #{cropped_unet_forward.1} parent=1 // pred_region
      _
    $region13: #{cropped_unet_forward.1} parent=1 // pred_fallthru
      _
    // Predicated region
    $region14: #{cropped_unet_forward.1} parent=1 // pred_check
      _
    $region15: #{cropped_unet_forward.1} parent=1 // pred_check_branch
      %150 = sbr.rel (0) target = $region17
    $region16: #{cropped_unet_forward.1} parent=1 // pred_region
      _
    $region17: #{cropped_unet_forward.1} parent=1 // pred_fallthru
      _
    // Predicated region
    $region18: #{cropped_unet_forward.1} parent=1 // pred_check
      _
    $region19: #{cropped_unet_forward.1} parent=1 // pred_check_branch
      %152 = sbr.rel (0) target = $region21
    $region20: #{cropped_unet_forward.1} parent=1 // pred_region
      %154 = vsyncadd [#allocation5], 0
      %s155 = sshll.u32 %s9, 4
      %s156 = int_to_ptr.hbm [resolvable:$true] %s155
      %s157 = sshll.u32 [#allocation6], 4
      %s158 = int_to_ptr.vmem [resolvable:$true] %s157
      %163 = dma.hbm_to_vmem [thread:$0]  %s156, 6144, %s158, [#allocation5], 128, 128, 8
    $region21: #{cropped_unet_forward.1} parent=1 // pred_fallthru
      _
    // Predicated region
    $region22: #{cropped_unet_forward.1} parent=1 // pred_check
      _
    $region23: #{cropped_unet_forward.1} parent=1 // pred_check_branch
      %165 = sbr.rel (0) target = $region25
    $region24: #{cropped_unet_forward.1} parent=1 // pred_region
      _
    $region25: #{cropped_unet_forward.1} parent=1 // pred_fallthru
      _
    // Predicated region
    $region26: #{cropped_unet_forward.1} parent=1 // pred_check
      _
    $region27: #{cropped_unet_forward.1} parent=1 // pred_check_branch
      %167 = sbr.rel (0) target = $region29
    $region28: #{cropped_unet_forward.1} parent=1 // pred_region
      _
    $region29: #{cropped_unet_forward.1} parent=1 // pred_fallthru
      _
    // Predicated region
    $region30: #{cropped_unet_forward.1} parent=1 // pred_check
      _
    $region31: #{cropped_unet_forward.1} parent=1 // pred_check_branch
      %169 = sbr.rel (0) target = $region33
    $region32: #{cropped_unet_forward.1} parent=1 // pred_region
      %171 = vsyncadd [#allocation8], 0
      %s172 = sshll.u32 %s15, 4
      %s173 = int_to_ptr.hbm [resolvable:$true] %s172
      %s174 = sshll.u32 [#allocation7], 4
      %s175 = int_to_ptr.vmem [resolvable:$true] %s174
      %180 = dma.hbm_to_vmem [thread:$0]  %s173, 6144, %s175, [#allocation8], 128, 128, 8
    $region33: #{cropped_unet_forward.1} parent=1 // pred_fallthru
      _
    // Predicated region
    $region34: #{cropped_unet_forward.1} parent=1 // pred_check
      _
    $region35: #{cropped_unet_forward.1} parent=1 // pred_check_branch
      %182 = sbr.rel (0) target = $region37
    $region36: #{cropped_unet_forward.1} parent=1 // pred_region
      _
    $region37: #{cropped_unet_forward.1} parent=1 // pred_fallthru
      _
    // Predicated region
    $region38: #{cropped_unet_forward.1} parent=1 // pred_check
      _
    $region39: #{cropped_unet_forward.1} parent=1 // pred_check_branch
      %184 = sbr.rel (0) target = $region41
    $region40: #{cropped_unet_forward.1} parent=1 // pred_region
      _
    $region41: #{cropped_unet_forward.1} parent=1 // pred_fallthru
      _
    // Predicated region
    $region42: #{cropped_unet_forward.1} parent=1 // pred_check
      _
    $region43: #{cropped_unet_forward.1} parent=1 // pred_check_branch
      %186 = sbr.rel (0) target = $region45
    $region44: #{cropped_unet_forward.1} parent=1 // pred_region
      %188 = vsyncadd [#allocation8], 0
      %s189 = sshll.u32 %s21, 4
      %s190 = int_to_ptr.hbm [resolvable:$true] %s189
      %s191 = sshll.u32 [#allocation9], 4
      %s192 = int_to_ptr.vmem [resolvable:$true] %s191
      %197 = dma.hbm_to_vmem [thread:$0]  %s190, 6144, %s192, [#allocation8], 128, 128, 8
    $region45: #{cropped_unet_forward.1} parent=1 // pred_fallthru
      _
    // Predicated region
    $region46: #{cropped_unet_forward.1} parent=1 // pred_check
      _
    $region47: #{cropped_unet_forward.1} parent=1 // pred_check_branch
      %199 = sbr.rel (0) target = $region49
    $region48: #{cropped_unet_forward.1} parent=1 // pred_region
      _
    $region49: #{cropped_unet_forward.1} parent=1 // pred_fallthru
      _
    // Predicated region
    $region50: #{cropped_unet_forward.1} parent=1 // pred_check
      _
    $region51: #{cropped_unet_forward.1} parent=1 // pred_check_branch
      %201 = sbr.rel (0) target = $region53
    $region52: #{cropped_unet_forward.1} parent=1 // pred_region
      _
    $region53: #{cropped_unet_forward.1} parent=1 // pred_fallthru
      _
    // Predicated region
    $region54: #{cropped_unet_forward.1} parent=1 // pred_check
      _
    $region55: #{cropped_unet_forward.1} parent=1 // pred_check_branch
      %203 = sbr.rel (0) target = $region57
    $region56: #{cropped_unet_forward.1} parent=1 // pred_region
      %205 = vsyncadd [#allocation11], 0
      %s206 = sshll.u32 %s27, 4
      %s207 = int_to_ptr.hbm [resolvable:$true] %s206
      %s208 = sshll.u32 [#allocation10], 4
      %s209 = int_to_ptr.vmem [resolvable:$true] %s208
      %214 = dma.hbm_to_vmem [thread:$0]  %s207, 6144, %s209, [#allocation11], 128, 128, 8
    $region57: #{cropped_unet_forward.1} parent=1 // pred_fallthru
      _
    // Predicated region
    $region58: #{cropped_unet_forward.1} parent=1 // pred_check
      _
    $region59: #{cropped_unet_forward.1} parent=1 // pred_check_branch
      %216 = sbr.rel (0) target = $region61
    $region60: #{cropped_unet_forward.1} parent=1 // pred_region
      _
    $region61: #{cropped_unet_forward.1} parent=1 // pred_fallthru
      _
    // Predicated region
    $region62: #{cropped_unet_forward.1} parent=1 // pred_check
      _
    $region63: #{cropped_unet_forward.1} parent=1 // pred_check_branch
      %218 = sbr.rel (0) target = $region65
    $region64: #{cropped_unet_forward.1} parent=1 // pred_region
      _
    $region65: #{cropped_unet_forward.1} parent=1 // pred_fallthru
      _
    // Predicated region
    $region66: #{cropped_unet_forward.1} parent=1 // pred_check
      _
    $region67: #{cropped_unet_forward.1} parent=1 // pred_check_branch
      %220 = sbr.rel (0) target = $region69
    $region68: #{cropped_unet_forward.1} parent=1 // pred_region
      %222 = vsyncadd [#allocation11], 0
      %s223 = sshll.u32 %s33, 4
      %s224 = int_to_ptr.hbm [resolvable:$true] %s223
      %s225 = sshll.u32 [#allocation12], 4
      %s226 = int_to_ptr.vmem [resolvable:$true] %s225
      %231 = dma.hbm_to_vmem [thread:$0]  %s224, 6144, %s226, [#allocation11], 128, 128, 8
    $region69: #{cropped_unet_forward.1} parent=1 // pred_fallthru
      _
    // Predicated region
    $region70: #{cropped_unet_forward.1} parent=1 // pred_check
      _
    $region71: #{cropped_unet_forward.1} parent=1 // pred_check_branch
      %233 = sbr.rel (0) target = $region73
    $region72: #{cropped_unet_forward.1} parent=1 // pred_region
      _
    $region73: #{cropped_unet_forward.1} parent=1 // pred_fallthru
      _
    // Predicated region
    $region74: #{cropped_unet_forward.1} parent=1 // pred_check
      _
    $region75: #{cropped_unet_forward.1} parent=1 // pred_check_branch
      %235 = sbr.rel (0) target = $region77
    $region76: #{cropped_unet_forward.1} parent=1 // pred_region
      _
    $region77: #{cropped_unet_forward.1} parent=1 // pred_fallthru
      _
    // Predicated region
    $region78: #{cropped_unet_forward.1} parent=1 // pred_check
      _
    $region79: #{cropped_unet_forward.1} parent=1 // pred_check_branch
      %237 = sbr.rel (0) target = $region81
    $region80: #{cropped_unet_forward.1} parent=1 // pred_region
      %239 = vsyncadd [#allocation14], 0
      %s240 = sshll.u32 %s39, 4
      %s241 = int_to_ptr.hbm [resolvable:$true] %s240
      %s242 = sshll.u32 [#allocation13], 4
      %s243 = int_to_ptr.vmem [resolvable:$true] %s242
      %248 = dma.hbm_to_vmem [thread:$0]  %s241, 6144, %s243, [#allocation14], 128, 128, 8
    $region81: #{cropped_unet_forward.1} parent=1 // pred_fallthru
      _
    // Predicated region
    $region82: #{cropped_unet_forward.1} parent=1 // pred_check
      _
    $region83: #{cropped_unet_forward.1} parent=1 // pred_check_branch
      %250 = sbr.rel (0) target = $region85
    $region84: #{cropped_unet_forward.1} parent=1 // pred_region
      _
    $region85: #{cropped_unet_forward.1} parent=1 // pred_fallthru
      _
    // Predicated region
    $region86: #{cropped_unet_forward.1} parent=1 // pred_check
      _
    $region87: #{cropped_unet_forward.1} parent=1 // pred_check_branch
      %252 = sbr.rel (0) target = $region89
    $region88: #{cropped_unet_forward.1} parent=1 // pred_region
      _
    $region89: #{cropped_unet_forward.1} parent=1 // pred_fallthru
      _
    // Predicated region
    $region90: #{cropped_unet_forward.1} parent=1 // pred_check
      _
    $region91: #{cropped_unet_forward.1} parent=1 // pred_check_branch
      %254 = sbr.rel (0) target = $region93
    $region92: #{cropped_unet_forward.1} parent=1 // pred_region
      %256 = vsyncadd [#allocation14], 0
      %s257 = sshll.u32 %s45, 4
      %s258 = int_to_ptr.hbm [resolvable:$true] %s257
      %s259 = sshll.u32 [#allocation15], 4
      %s260 = int_to_ptr.vmem [resolvable:$true] %s259
      %265 = dma.hbm_to_vmem [thread:$0]  %s258, 6144, %s260, [#allocation14], 128, 128, 8
    $region93: #{cropped_unet_forward.1} parent=1 // pred_fallthru
      _
    // Predicated region
    $region94: #{cropped_unet_forward.1} parent=1 // pred_check
      _
    $region95: #{cropped_unet_forward.1} parent=1 // pred_check_branch
      %267 = sbr.rel (0) target = $region97
    $region96: #{cropped_unet_forward.1} parent=1 // pred_region
      _
    $region97: #{cropped_unet_forward.1} parent=1 // pred_fallthru
      _
    // Predicated region
    $region98: #{cropped_unet_forward.1} parent=1 // pred_check
      _
    $region99: #{cropped_unet_forward.1} parent=1 // pred_check_branch
      %269 = sbr.rel (0) target = $region101
    $region100: #{cropped_unet_forward.1} parent=1 // pred_region
      _
    $region101: #{cropped_unet_forward.1} parent=1 // pred_fallthru
      _
    // Predicated region
    $region102: #{cropped_unet_forward.1} parent=1 // pred_check
      _
    $region103: #{cropped_unet_forward.1} parent=1 // pred_check_branch
      %271 = sbr.rel (0) target = $region105
    $region104: #{cropped_unet_forward.1} parent=1 // pred_region
      %273 = vsyncadd [#allocation17], 0
      %s274 = sshll.u32 %s51, 4
      %s275 = int_to_ptr.hbm [resolvable:$true] %s274
      %s276 = sshll.u32 [#allocation16], 4
      %s277 = int_to_ptr.vmem [resolvable:$true] %s276
      %282 = dma.hbm_to_vmem [thread:$0]  %s275, 4096, %s277, [#allocation17], 128, 128, 8
    $region105: #{cropped_unet_forward.1} parent=1 // pred_fallthru
      _
    // Predicated region
    $region106: #{cropped_unet_forward.1} parent=1 // pred_check
      _
    $region107: #{cropped_unet_forward.1} parent=1 // pred_check_branch
      %284 = sbr.rel (0) target = $region109
    $region108: #{cropped_unet_forward.1} parent=1 // pred_region
      _
    $region109: #{cropped_unet_forward.1} parent=1 // pred_fallthru
      _
    // Predicated region
    $region110: #{cropped_unet_forward.1} parent=1 // pred_check
      _
    $region111: #{cropped_unet_forward.1} parent=1 // pred_check_branch
      %286 = sbr.rel (0) target = $region113
    $region112: #{cropped_unet_forward.1} parent=1 // pred_region
      %288 = vsyncadd [#allocation17], 0
      %s289 = sshll.u32 %s55, 4
      %s290 = int_to_ptr.hbm [resolvable:$true] %s289
      %s291 = sshll.u32 [#allocation18], 4
      %s292 = int_to_ptr.vmem [resolvable:$true] %s291
      %297 = dma.hbm_to_vmem [thread:$0]  %s290, 6144, %s292, [#allocation17], 128, 128, 8
    $region113: #{cropped_unet_forward.1} parent=1 // pred_fallthru
      _
    // Predicated region
    $region114: #{cropped_unet_forward.1} parent=1 // pred_check
      _
    $region115: #{cropped_unet_forward.1} parent=1 // pred_check_branch
      %299 = sbr.rel (0) target = $region117
    $region116: #{cropped_unet_forward.1} parent=1 // pred_region
      %301 = vsyncadd [#allocation20], 0
      %s302 = sshll.u32 %s57, 4
      %s303 = int_to_ptr.hbm [resolvable:$true] %s302
      %s304 = sshll.u32 [#allocation19], 4
      %s305 = int_to_ptr.vmem [resolvable:$true] %s304
      %310 = dma.hbm_to_vmem [thread:$0]  %s303, 6144, %s305, [#allocation20], 128, 128, 8
    $region117: #{cropped_unet_forward.1} parent=1 // pred_fallthru
      _
    // Predicated region
    $region118: #{cropped_unet_forward.1} parent=1 // pred_check
      _
    $region119: #{cropped_unet_forward.1} parent=1 // pred_check_branch
      %312 = sbr.rel (0) target = $region121
    $region120: #{cropped_unet_forward.1} parent=1 // pred_region
      _
    $region121: #{cropped_unet_forward.1} parent=1 // pred_fallthru
      _
    // Predicated region
    $region122: #{cropped_unet_forward.1} parent=1 // pred_check
      _
    $region123: #{cropped_unet_forward.1} parent=1 // pred_check_branch
      %314 = sbr.rel (0) target = $region125
    $region124: #{cropped_unet_forward.1} parent=1 // pred_region
      _
    $region125: #{cropped_unet_forward.1} parent=1 // pred_fallthru
      _
    // Predicated region
    $region126: #{cropped_unet_forward.1} parent=1 // pred_check
      _
    $region127: #{cropped_unet_forward.1} parent=1 // pred_check_branch
      %316 = sbr.rel (0) target = $region129
    $region128: #{cropped_unet_forward.1} parent=1 // pred_region
      %318 = vsyncadd [#allocation20], 0
      %s319 = sshll.u32 %s63, 4
      %s320 = int_to_ptr.hbm [resolvable:$true] %s319
      %s321 = sshll.u32 [#allocation21], 4
      %s322 = int_to_ptr.vmem [resolvable:$true] %s321
      %327 = dma.hbm_to_vmem [thread:$0]  %s320, 6144, %s322, [#allocation20], 128, 128, 8
    $region129: #{cropped_unet_forward.1} parent=1 // pred_fallthru
      _
    // Predicated region
    $region130: #{cropped_unet_forward.1} parent=1 // pred_check
      _
    $region131: #{cropped_unet_forward.1} parent=1 // pred_check_branch
      %329 = sbr.rel (0) target = $region133
    $region132: #{cropped_unet_forward.1} parent=1 // pred_region
      _
    $region133: #{cropped_unet_forward.1} parent=1 // pred_fallthru
      _
    // Predicated region
    $region134: #{cropped_unet_forward.1} parent=1 // pred_check
      _
    $region135: #{cropped_unet_forward.1} parent=1 // pred_check_branch
      %331 = sbr.rel (0) target = $region137
    $region136: #{cropped_unet_forward.1} parent=1 // pred_region
      _
    $region137: #{cropped_unet_forward.1} parent=1 // pred_fallthru
      _
    // Predicated region
    $region138: #{cropped_unet_forward.1} parent=1 // pred_check
      _
    $region139: #{cropped_unet_forward.1} parent=1 // pred_check_branch
      %333 = sbr.rel (0) target = $region141
    $region140: #{cropped_unet_forward.1} parent=1 // pred_region
      %335 = vsyncadd [#allocation23], 0
      %s336 = sshll.u32 %s69, 4
      %s337 = int_to_ptr.hbm [resolvable:$true] %s336
      %s338 = sshll.u32 [#allocation22], 4
      %s339 = int_to_ptr.vmem [resolvable:$true] %s338
      %344 = dma.hbm_to_vmem [thread:$0]  %s337, 4096, %s339, [#allocation23], 128, 128, 8
    $region141: #{cropped_unet_forward.1} parent=1 // pred_fallthru
      _
    // Predicated region
    $region142: #{cropped_unet_forward.1} parent=1 // pred_check
      _
    $region143: #{cropped_unet_forward.1} parent=1 // pred_check_branch
      %346 = sbr.rel (0) target = $region145
    $region144: #{cropped_unet_forward.1} parent=1 // pred_region
      _
    $region145: #{cropped_unet_forward.1} parent=1 // pred_fallthru
      _
    // Predicated region
    $region146: #{cropped_unet_forward.1} parent=1 // pred_check
      _
    $region147: #{cropped_unet_forward.1} parent=1 // pred_check_branch
      %348 = sbr.rel (0) target = $region149
    $region148: #{cropped_unet_forward.1} parent=1 // pred_region
      %350 = vsyncadd [#allocation23], 0
      %s351 = sshll.u32 %s73, 4
      %s352 = int_to_ptr.hbm [resolvable:$true] %s351
      %s353 = sshll.u32 [#allocation24], 4
      %s354 = int_to_ptr.vmem [resolvable:$true] %s353
      %359 = dma.hbm_to_vmem [thread:$0]  %s352, 6144, %s354, [#allocation23], 128, 128, 8
    $region149: #{cropped_unet_forward.1} parent=1 // pred_fallthru
      _
    // Predicated region
    $region150: #{cropped_unet_forward.1} parent=1 // pred_check
      _
    $region151: #{cropped_unet_forward.1} parent=1 // pred_check_branch
      %361 = sbr.rel (0) target = $region153
    $region152: #{cropped_unet_forward.1} parent=1 // pred_region
      %363 = vsyncadd [#allocation26], 0
      %s364 = sshll.u32 %s75, 4
      %s365 = int_to_ptr.hbm [resolvable:$true] %s364
      %s366 = sshll.u32 [#allocation25], 4
      %s367 = int_to_ptr.vmem [resolvable:$true] %s366
      %372 = dma.hbm_to_vmem [thread:$0]  %s365, 6144, %s367, [#allocation26], 128, 128, 8
    $region153: #{cropped_unet_forward.1} parent=1 // pred_fallthru
      _
    // Predicated region
    $region154: #{cropped_unet_forward.1} parent=1 // pred_check
      _
    $region155: #{cropped_unet_forward.1} parent=1 // pred_check_branch
      %374 = sbr.rel (0) target = $region157
    $region156: #{cropped_unet_forward.1} parent=1 // pred_region
      _
    $region157: #{cropped_unet_forward.1} parent=1 // pred_fallthru
      _
    // Predicated region
    $region158: #{cropped_unet_forward.1} parent=1 // pred_check
      _
    $region159: #{cropped_unet_forward.1} parent=1 // pred_check_branch
      %376 = sbr.rel (0) target = $region161
    $region160: #{cropped_unet_forward.1} parent=1 // pred_region
      _
    $region161: #{cropped_unet_forward.1} parent=1 // pred_fallthru
      _
    // Predicated region
    $region162: #{cropped_unet_forward.1} parent=1 // pred_check
      _
    $region163: #{cropped_unet_forward.1} parent=1 // pred_check_branch
      %378 = sbr.rel (0) target = $region165
    $region164: #{cropped_unet_forward.1} parent=1 // pred_region
      %380 = vsyncadd [#allocation26], 0
      %s381 = sshll.u32 %s81, 4
      %s382 = int_to_ptr.hbm [resolvable:$true] %s381
      %s383 = sshll.u32 [#allocation27], 4
      %s384 = int_to_ptr.vmem [resolvable:$true] %s383
      %389 = dma.hbm_to_vmem [thread:$0]  %s382, 6144, %s384, [#allocation26], 128, 128, 8
    $region165: #{cropped_unet_forward.1} parent=1 // pred_fallthru
      _
    // Predicated region
    $region166: #{cropped_unet_forward.1} parent=1 // pred_check
      _
    $region167: #{cropped_unet_forward.1} parent=1 // pred_check_branch
      %391 = sbr.rel (0) target = $region169
    $region168: #{cropped_unet_forward.1} parent=1 // pred_region
      _
    $region169: #{cropped_unet_forward.1} parent=1 // pred_fallthru
      _
    // Predicated region
    $region170: #{cropped_unet_forward.1} parent=1 // pred_check
      _
    $region171: #{cropped_unet_forward.1} parent=1 // pred_check_branch
      %393 = sbr.rel (0) target = $region173
    $region172: #{cropped_unet_forward.1} parent=1 // pred_region
      _
    $region173: #{cropped_unet_forward.1} parent=1 // pred_fallthru
      _
    // Predicated region
    $region174: #{cropped_unet_forward.1} parent=1 // pred_check
      _
    $region175: #{cropped_unet_forward.1} parent=1 // pred_check_branch
      %395 = sbr.rel (0) target = $region177
    $region176: #{cropped_unet_forward.1} parent=1 // pred_region
      %397 = vsyncadd [#allocation29], 0
      %s398 = sshll.u32 %s87, 4
      %s399 = int_to_ptr.hbm [resolvable:$true] %s398
      %s400 = sshll.u32 [#allocation28], 4
      %s401 = int_to_ptr.vmem [resolvable:$true] %s400
      %406 = dma.hbm_to_vmem [thread:$0]  %s399, 4096, %s401, [#allocation29], 128, 128, 8
    $region177: #{cropped_unet_forward.1} parent=1 // pred_fallthru
      _
    // Predicated region
    $region178: #{cropped_unet_forward.1} parent=1 // pred_check
      _
    $region179: #{cropped_unet_forward.1} parent=1 // pred_check_branch
      %408 = sbr.rel (0) target = $region181
    $region180: #{cropped_unet_forward.1} parent=1 // pred_region
      _
    $region181: #{cropped_unet_forward.1} parent=1 // pred_fallthru
      _
    // Predicated region
    $region182: #{cropped_unet_forward.1} parent=1 // pred_check
      _
    $region183: #{cropped_unet_forward.1} parent=1 // pred_check_branch
      %410 = sbr.rel (0) target = $region185
    $region184: #{cropped_unet_forward.1} parent=1 // pred_region
      %412 = vsyncadd [#allocation29], 0
      %s413 = sshll.u32 %s91, 4
      %s414 = int_to_ptr.hbm [resolvable:$true] %s413
      %s415 = sshll.u32 [#allocation30], 4
      %s416 = int_to_ptr.vmem [resolvable:$true] %s415
      %421 = dma.hbm_to_vmem [thread:$0]  %s414, 6144, %s416, [#allocation29], 128, 128, 8
    $region185: #{cropped_unet_forward.1} parent=1 // pred_fallthru
      _
    // Predicated region
    $region186: #{cropped_unet_forward.1} parent=1 // pred_check
      _
    $region187: #{cropped_unet_forward.1} parent=1 // pred_check_branch
      %423 = sbr.rel (0) target = $region189
    $region188: #{cropped_unet_forward.1} parent=1 // pred_region
      %425 = vsyncadd [#allocation32], 0
      %s426 = sshll.u32 %s93, 4
      %s427 = int_to_ptr.hbm [resolvable:$true] %s426
      %s428 = sshll.u32 [#allocation31], 4
      %s429 = int_to_ptr.vmem [resolvable:$true] %s428
      %434 = dma.hbm_to_vmem [thread:$0]  %s427, 6144, %s429, [#allocation32], 128, 128, 8
    $region189: #{cropped_unet_forward.1} parent=1 // pred_fallthru
      _
    // Predicated region
    $region190: #{cropped_unet_forward.1} parent=1 // pred_check
      _
    $region191: #{cropped_unet_forward.1} parent=1 // pred_check_branch
      %436 = sbr.rel (0) target = $region193
    $region192: #{cropped_unet_forward.1} parent=1 // pred_region
      _
    $region193: #{cropped_unet_forward.1} parent=1 // pred_fallthru
      _
    // Predicated region
    $region194: #{cropped_unet_forward.1} parent=1 // pred_check
      _
    $region195: #{cropped_unet_forward.1} parent=1 // pred_check_branch
      %438 = sbr.rel (0) target = $region197
    $region196: #{cropped_unet_forward.1} parent=1 // pred_region
      _
    $region197: #{cropped_unet_forward.1} parent=1 // pred_fallthru
      _
    // Predicated region
    $region198: #{cropped_unet_forward.1} parent=1 // pred_check
      _
    $region199: #{cropped_unet_forward.1} parent=1 // pred_check_branch
      %440 = sbr.rel (0) target = $region201
    $region200: #{cropped_unet_forward.1} parent=1 // pred_region
      %442 = vsyncadd [#allocation32], 0
      %s443 = sshll.u32 %s99, 4
      %s444 = int_to_ptr.hbm [resolvable:$true] %s443
      %s445 = sshll.u32 [#allocation33], 4
      %s446 = int_to_ptr.vmem [resolvable:$true] %s445
      %451 = dma.hbm_to_vmem [thread:$0]  %s444, 6144, %s446, [#allocation32], 128, 128, 8
    $region201: #{cropped_unet_forward.1} parent=1 // pred_fallthru
      _
    // Predicated region
    $region202: #{cropped_unet_forward.1} parent=1 // pred_check
      _
    $region203: #{cropped_unet_forward.1} parent=1 // pred_check_branch
      %453 = sbr.rel (0) target = $region205
    $region204: #{cropped_unet_forward.1} parent=1 // pred_region
      _
    $region205: #{cropped_unet_forward.1} parent=1 // pred_fallthru
      _
    // Predicated region
    $region206: #{cropped_unet_forward.1} parent=1 // pred_check
      _
    $region207: #{cropped_unet_forward.1} parent=1 // pred_check_branch
      %455 = sbr.rel (0) target = $region209
    $region208: #{cropped_unet_forward.1} parent=1 // pred_region
      _
    $region209: #{cropped_unet_forward.1} parent=1 // pred_fallthru
      _
    // Predicated region
    $region210: #{cropped_unet_forward.1} parent=1 // pred_check
      _
    $region211: #{cropped_unet_forward.1} parent=1 // pred_check_branch
      %457 = sbr.rel (0) target = $region213
    $region212: #{cropped_unet_forward.1} parent=1 // pred_region
      %459 = dma.done [#allocation3], 512
    $region213: #{cropped_unet_forward.1} parent=1 // pred_fallthru
      _
    // Predicated region
    $region214: #{cropped_unet_forward.1} parent=1 // pred_check
      _
    $region215: #{cropped_unet_forward.1} parent=1 // pred_check_branch
      %461 = sbr.rel (0) target = $region217
    $region216: #{cropped_unet_forward.1} parent=1 // pred_region
      %463 = dma.done [#allocation5], 768
    $region217: #{cropped_unet_forward.1} parent=1 // pred_fallthru
      _
    // Predicated region
    $region218: #{cropped_unet_forward.1} parent=1 // pred_check
      _
    $region219: #{cropped_unet_forward.1} parent=1 // pred_check_branch
      %465 = sbr.rel (0) target = $region221
    $region220: #{cropped_unet_forward.1} parent=1 // pred_region
      %467 = dma.done [#allocation5], 6144
    $region221: #{cropped_unet_forward.1} parent=1 // pred_fallthru
      _
    // Predicated region
    $region222: #{cropped_unet_forward.1} parent=1 // pred_check
      _
    $region223: #{cropped_unet_forward.1} parent=1 // pred_check_branch
      %469 = sbr.rel (0) target = $region225
    $region224: #{cropped_unet_forward.1} parent=1 // pred_region
      %471 = dma.done [#allocation8], 6144
    $region225: #{cropped_unet_forward.1} parent=1 // pred_fallthru
      _
    // Predicated region
    $region226: #{cropped_unet_forward.1} parent=1 // pred_check
      _
    $region227: #{cropped_unet_forward.1} parent=1 // pred_check_branch
      %473 = sbr.rel (0) target = $region229
    $region228: #{cropped_unet_forward.1} parent=1 // pred_region
      %475 = dma.done [#allocation8], 6144
    $region229: #{cropped_unet_forward.1} parent=1 // pred_fallthru
      _
    // Predicated region
    $region230: #{cropped_unet_forward.1} parent=1 // pred_check
      _
    $region231: #{cropped_unet_forward.1} parent=1 // pred_check_branch
      %477 = sbr.rel (0) target = $region233
    $region232: #{cropped_unet_forward.1} parent=1 // pred_region
      %479 = dma.done [#allocation11], 6144
    $region233: #{cropped_unet_forward.1} parent=1 // pred_fallthru
      _
    // Predicated region
    $region234: #{cropped_unet_forward.1} parent=1 // pred_check
      _
    $region235: #{cropped_unet_forward.1} parent=1 // pred_check_branch
      %481 = sbr.rel (0) target = $region237
    $region236: #{cropped_unet_forward.1} parent=1 // pred_region
      %483 = dma.done [#allocation11], 6144
    $region237: #{cropped_unet_forward.1} parent=1 // pred_fallthru
      _
    // Predicated region
    $region238: #{cropped_unet_forward.1} parent=1 // pred_check
      _
    $region239: #{cropped_unet_forward.1} parent=1 // pred_check_branch
      %485 = sbr.rel (0) target = $region241
    $region240: #{cropped_unet_forward.1} parent=1 // pred_region
      %487 = dma.done [#allocation14], 6144
    $region241: #{cropped_unet_forward.1} parent=1 // pred_fallthru
      _
    // Predicated region
    $region242: #{cropped_unet_forward.1} parent=1 // pred_check
      _
    $region243: #{cropped_unet_forward.1} parent=1 // pred_check_branch
      %489 = sbr.rel (0) target = $region245
    $region244: #{cropped_unet_forward.1} parent=1 // pred_region
      %491 = dma.done [#allocation14], 6144
    $region245: #{cropped_unet_forward.1} parent=1 // pred_fallthru
      _
    // Predicated region
    $region246: #{cropped_unet_forward.1} parent=1 // pred_check
      _
    $region247: #{cropped_unet_forward.1} parent=1 // pred_check_branch
      %493 = sbr.rel (0) target = $region249
    $region248: #{cropped_unet_forward.1} parent=1 // pred_region
      %495 = dma.done [#allocation17], 4096
    $region249: #{cropped_unet_forward.1} parent=1 // pred_fallthru
      _
    // Predicated region
    $region250: #{cropped_unet_forward.1} parent=1 // pred_check
      _
    $region251: #{cropped_unet_forward.1} parent=1 // pred_check_branch
      %497 = sbr.rel (0) target = $region253
    $region252: #{cropped_unet_forward.1} parent=1 // pred_region
      %499 = dma.done [#allocation17], 6144
    $region253: #{cropped_unet_forward.1} parent=1 // pred_fallthru
      _
    // Predicated region
    $region254: #{cropped_unet_forward.1} parent=1 // pred_check
      _
    $region255: #{cropped_unet_forward.1} parent=1 // pred_check_branch
      %501 = sbr.rel (0) target = $region257
    $region256: #{cropped_unet_forward.1} parent=1 // pred_region
      %503 = dma.done [#allocation20], 6144
    $region257: #{cropped_unet_forward.1} parent=1 // pred_fallthru
      _
    // Predicated region
    $region258: #{cropped_unet_forward.1} parent=1 // pred_check
      _
    $region259: #{cropped_unet_forward.1} parent=1 // pred_check_branch
      %505 = sbr.rel (0) target = $region261
    $region260: #{cropped_unet_forward.1} parent=1 // pred_region
      %507 = dma.done [#allocation20], 6144
    $region261: #{cropped_unet_forward.1} parent=1 // pred_fallthru
      _
    // Predicated region
    $region262: #{cropped_unet_forward.1} parent=1 // pred_check
      _
    $region263: #{cropped_unet_forward.1} parent=1 // pred_check_branch
      %509 = sbr.rel (0) target = $region265
    $region264: #{cropped_unet_forward.1} parent=1 // pred_region
      %511 = dma.done [#allocation23], 4096
    $region265: #{cropped_unet_forward.1} parent=1 // pred_fallthru
      _
    // Predicated region
    $region266: #{cropped_unet_forward.1} parent=1 // pred_check
      _
    $region267: #{cropped_unet_forward.1} parent=1 // pred_check_branch
      %513 = sbr.rel (0) target = $region269
    $region268: #{cropped_unet_forward.1} parent=1 // pred_region
      %515 = dma.done [#allocation23], 6144
    $region269: #{cropped_unet_forward.1} parent=1 // pred_fallthru
      _
    // Predicated region
    $region270: #{cropped_unet_forward.1} parent=1 // pred_check
      _
    $region271: #{cropped_unet_forward.1} parent=1 // pred_check_branch
      %517 = sbr.rel (0) target = $region273
    $region272: #{cropped_unet_forward.1} parent=1 // pred_region
      %519 = dma.done [#allocation26], 6144
    $region273: #{cropped_unet_forward.1} parent=1 // pred_fallthru
      _
    // Predicated region
    $region274: #{cropped_unet_forward.1} parent=1 // pred_check
      _
    $region275: #{cropped_unet_forward.1} parent=1 // pred_check_branch
      %521 = sbr.rel (0) target = $region277
    $region276: #{cropped_unet_forward.1} parent=1 // pred_region
      %523 = dma.done [#allocation26], 6144
    $region277: #{cropped_unet_forward.1} parent=1 // pred_fallthru
      _
    // Predicated region
    $region278: #{cropped_unet_forward.1} parent=1 // pred_check
      _
    $region279: #{cropped_unet_forward.1} parent=1 // pred_check_branch
      %525 = sbr.rel (0) target = $region281
    $region280: #{cropped_unet_forward.1} parent=1 // pred_region
      %527 = dma.done [#allocation29], 4096
    $region281: #{cropped_unet_forward.1} parent=1 // pred_fallthru
      _
    // Predicated region
    $region282: #{cropped_unet_forward.1} parent=1 // pred_check
      _
    $region283: #{cropped_unet_forward.1} parent=1 // pred_check_branch
      %529 = sbr.rel (0) target = $region285
    $region284: #{cropped_unet_forward.1} parent=1 // pred_region
      %531 = dma.done [#allocation29], 6144
    $region285: #{cropped_unet_forward.1} parent=1 // pred_fallthru
      _
    // Predicated region
    $region286: #{cropped_unet_forward.1} parent=1 // pred_check
      _
    $region287: #{cropped_unet_forward.1} parent=1 // pred_check_branch
      %533 = sbr.rel (0) target = $region289
    $region288: #{cropped_unet_forward.1} parent=1 // pred_region
      %535 = dma.done [#allocation32], 6144
    $region289: #{cropped_unet_forward.1} parent=1 // pred_fallthru
      _
    // Predicated region
    $region290: #{cropped_unet_forward.1} parent=1 // pred_check
      _
    $region291: #{cropped_unet_forward.1} parent=1 // pred_check_branch
      %537 = sbr.rel (0) target = $region293
    $region292: #{cropped_unet_forward.1} parent=1 // pred_region
      %539 = dma.done [#allocation32], 6144
    $region293: #{cropped_unet_forward.1} parent=1 // pred_fallthru
      _
    %v540 = vld [vmem:[#allocation2] sm:$0xff]
    %v541 = vld [vmem:[#allocation2 + $0x8] sm:$0xff]
    %v542 = vld [vmem:[#allocation2 + $0x10] sm:$0xff]
    %v543 = vld [vmem:[#allocation2 + $0x18] sm:$0xff]
    %vm548 = vcmask 1040384
    %v549 = vrot.slane %v540, 7
    %v550 = vrot.slane %v541, 7
    %v551 = vsel %vm548, %v549, %v550
    %v552 = vrot.slane %v542, 7
    %v553 = vrot.slane %v543, 7
    %v554 = vsel %vm548, %v552, %v553
    %v557 = vsel %vm548, 0.0, %v549
    %v558 = vsel %vm548, 0.0, %v552
    %v559 = vld [vmem:[#allocation4] sm:$0xff]
    %v560 = vld [vmem:[#allocation4 + $0x8] sm:$0xff]
    %s561 = scalar_lea.vmem [#allocation4], 16
    %v562 = vld [vmem:[%s561] sm:$0xff]
    %v563 = vld [vmem:[%s561 + $0x8] sm:$0xff]
    %vm564 = vcmask 130048
    %v565 = vsel %vm564, %v540, 0
    %v567 = vsel %vm564, %v541, 0
    %v569 = vsel %vm564, %v542, 0
    %v571 = vsel %vm564, %v543, 0
    %573 = vmatpush.msra.mxu0 0.0
    %574 = vmatpush.msra.mxu0 0.0
    %575 = vmatpush.msra.mxu0 0.0
    %576 = vmatpush.msra.mxu0 0.0
    %577 = vmatpush.msra.mxu0 0.0
    %578 = vmatpush.msra.mxu0 0.0
    %579 = vmatpush.msra.mxu0 0.0
    %580 = vmatpush.msra.mxu0 0.0
    %581 = vmatpush.msra.mxu0 0.0
    %582 = vmatpush.msra.mxu0 0.0
    %583 = vmatpush.msra.mxu0 0.0
    %584 = vmatpush.msra.mxu0 0.0
    %585 = vmatpush.msra.mxu0 0.0
    %586 = vmatpush.msra.mxu0 0.0
    %587 = vmatpush.msra.mxu0 %v563
    %588 = vmatpush.msra.mxu0 %v562
    %589 = vmatmul.f32.gmra.mxu0 %v565
    %v590 = vpop.f32.mrf.mxu0
    %v591 = vadd.f32 0.0, %v590
    %592 = vmatmul.f32.gmra.mxu0 %v567
    %v593 = vpop.f32.mrf.mxu0
    %v594 = vadd.f32 0.0, %v593
    %595 = vmatmul.f32.gmra.mxu0 %v569
    %v596 = vpop.f32.mrf.mxu0
    %v597 = vadd.f32 0.0, %v596
    %598 = vmatmul.f32.gmra.mxu0 %v571
    %v599 = vpop.f32.mrf.mxu0
    %v600 = vadd.f32 0.0, %v599
    %601 = vdwg.mxu0
    %v603 = vsel %vm564, %v557, 0
    %v605 = vsel %vm564, %v551, 0
    %v608 = vsel %vm564, %v558, 0
    %v610 = vsel %vm564, %v554, 0
    %612 = vmatpush.msra.mxu0 0.0
    %613 = vmatpush.msra.mxu0 0.0
    %614 = vmatpush.msra.mxu0 0.0
    %615 = vmatpush.msra.mxu0 0.0
    %616 = vmatpush.msra.mxu0 0.0
    %617 = vmatpush.msra.mxu0 0.0
    %618 = vmatpush.msra.mxu0 0.0
    %619 = vmatpush.msra.mxu0 0.0
    %620 = vmatpush.msra.mxu0 0.0
    %621 = vmatpush.msra.mxu0 0.0
    %622 = vmatpush.msra.mxu0 0.0
    %623 = vmatpush.msra.mxu0 0.0
    %624 = vmatpush.msra.mxu0 0.0
    %625 = vmatpush.msra.mxu0 0.0
    %626 = vmatpush.msra.mxu0 %v560
    %627 = vmatpush.msra.mxu0 %v559
    %628 = vmatmul.f32.gmra.mxu0 %v603
    %v629 = vpop.f32.mrf.mxu0
    %v630 = vadd.f32 %v591, %v629
    %631 = vmatmul.f32.gmra.mxu0 %v605
    %v632 = vpop.f32.mrf.mxu0
    %v633 = vadd.f32 %v594, %v632
    %634 = vmatmul.f32.gmra.mxu0 %v608
    %v635 = vpop.f32.mrf.mxu0
    %v636 = vadd.f32 %v597, %v635
    %637 = vmatmul.f32.gmra.mxu0 %v610
    %v638 = vpop.f32.mrf.mxu0
    %v639 = vadd.f32 %v600, %v638
    %640 = vdwg.mxu0
    %vm641 = vcmask 1046528
    %v642 = vrot.slane %v540, 1
    %v643 = vrot.slane %v541, 1
    %v644 = vsel %vm641, %v642, %v643
    %v645 = vrot.slane %v542, 1
    %v646 = vrot.slane %v543, 1
    %v647 = vsel %vm641, %v645, %v646
    %v650 = vsel %vm641, %v643, 0.0
    %v651 = vsel %vm641, %v646, 0.0
    %s652 = scalar_lea.vmem [#allocation4], 32
    %v653 = vld [vmem:[%s652] sm:$0xff]
    %v654 = vld [vmem:[%s652 + $0x8] sm:$0xff]
    %v655 = vsel %vm564, %v644, 0
    %v658 = vsel %vm564, %v650, 0
    %v660 = vsel %vm564, %v647, 0
    %v663 = vsel %vm564, %v651, 0
    %665 = vmatpush.msra.mxu0 0.0
    %666 = vmatpush.msra.mxu0 0.0
    %667 = vmatpush.msra.mxu0 0.0
    %668 = vmatpush.msra.mxu0 0.0
    %669 = vmatpush.msra.mxu0 0.0
    %670 = vmatpush.msra.mxu0 0.0
    %671 = vmatpush.msra.mxu0 0.0
    %672 = vmatpush.msra.mxu0 0.0
    %673 = vmatpush.msra.mxu0 0.0
    %674 = vmatpush.msra.mxu0 0.0
    %675 = vmatpush.msra.mxu0 0.0
    %676 = vmatpush.msra.mxu0 0.0
    %677 = vmatpush.msra.mxu0 0.0
    %678 = vmatpush.msra.mxu0 0.0
    %679 = vmatpush.msra.mxu0 %v654
    %680 = vmatpush.msra.mxu0 %v653
    %681 = vmatmul.f32.gmra.mxu0 %v655
    %v682 = vpop.f32.mrf.mxu0
    %v683 = vadd.f32 0.0, %v682
    %684 = vmatmul.f32.gmra.mxu0 %v658
    %v685 = vpop.f32.mrf.mxu0
    %v686 = vadd.f32 0.0, %v685
    %687 = vmatmul.f32.gmra.mxu0 %v660
    %v688 = vpop.f32.mrf.mxu0
    %v689 = vadd.f32 0.0, %v688
    %690 = vmatmul.f32.gmra.mxu0 %v663
    %v691 = vpop.f32.mrf.mxu0
    %v692 = vadd.f32 0.0, %v691
    %693 = vdwg.mxu0
    %v694 = vadd.f32 %v630, %v683
    %v695 = vadd.f32 %v633, %v686
    %v696 = vadd.f32 %v636, %v689
    %v697 = vadd.f32 %v639, %v692
    %v698 = vld [vmem:[%s5] sm:$0x1]
    %v699 = vld [vmem:[%s7] sm:$0x1]
    %v700 = vadd.f32 %v694, %v695
    %v701 = vadd.f32 %v700, %v696
    %v702 = vadd.f32 %v701, %v697
    %v703 = vrot.slane %v702, 4
    %v704 = vadd.f32 %v702, %v703
    %v705 = vrot.slane %v704, 2
    %v706 = vadd.f32 %v704, %v705
    %v707 = vrot.slane %v706, 1
    %v708 = vadd.f32 %v706, %v707
    %v709 = vmul.f32 %v694, %v694
    %v710 = vmul.f32 %v695, %v695
    %v711 = vmul.f32 %v696, %v696
    %v712 = vmul.f32 %v697, %v697
    %v713 = vadd.f32 %v709, %v710
    %v714 = vadd.f32 %v713, %v711
    %v715 = vadd.f32 %v714, %v712
    %v716 = vrot.slane %v715, 4
    %v717 = vadd.f32 %v715, %v716
    %v718 = vrot.slane %v717, 2
    %v719 = vadd.f32 %v717, %v718
    %v720 = vrot.slane %v719, 1
    %v721 = vadd.f32 %v719, %v720
    %v722 = vlaneseq
    %v723 = vshrl.u32 %v722, 7
    %v724 = vadd.s32 %v723, 8
    %v725 = vadd.s32 %v723, 16
    %v726 = vadd.s32 %v723, 24
    %v727 = vadd.s32 %v723, 32
    %v728 = vadd.s32 %v723, 40
    %v729 = vadd.s32 %v723, 48
    %v730 = vadd.s32 %v723, 56
    %v731 = vadd.s32 %v723, 64
    %v732 = vadd.s32 %v723, 72
    %v733 = vadd.s32 %v723, 80
    %v734 = vadd.s32 %v723, 88
    %v735 = vadd.s32 %v723, 96
    %v736 = vadd.s32 %v723, 104
    %v737 = vadd.s32 %v723, 112
    %v738 = vadd.s32 %v723, 120
    %vm739 = vcmp.lt.s32.totalorder %v723, 0
    %v740 = vsub.s32 0, %v723
    %v741 = vsel %vm739, %v740, %v723
    %v742 = vshrl.u32 %v741, 3
    %v743 = vand.u32 %v741, 7
    %v744 = vsub.s32 0, %v743
    %v745 = vsel %vm739, %v744, %v743
    %vm746 = vcmp.lt.s32.totalorder %v724, 0
    %v747 = vsub.s32 0, %v724
    %v748 = vsel %vm746, %v747, %v724
    %v749 = vshrl.u32 %v748, 3
    %v750 = vand.u32 %v748, 7
    %v751 = vsub.s32 0, %v750
    %v752 = vsel %vm746, %v751, %v750
    %vm753 = vcmp.lt.s32.totalorder %v725, 0
    %v754 = vsub.s32 0, %v725
    %v755 = vsel %vm753, %v754, %v725
    %v756 = vshrl.u32 %v755, 3
    %v757 = vand.u32 %v755, 7
    %v758 = vsub.s32 0, %v757
    %v759 = vsel %vm753, %v758, %v757
    %vm760 = vcmp.lt.s32.totalorder %v726, 0
    %v761 = vsub.s32 0, %v726
    %v762 = vsel %vm760, %v761, %v726
    %v763 = vshrl.u32 %v762, 3
    %v764 = vand.u32 %v762, 7
    %v765 = vsub.s32 0, %v764
    %v766 = vsel %vm760, %v765, %v764
    %vm767 = vcmp.lt.s32.totalorder %v727, 0
    %v768 = vsub.s32 0, %v727
    %v769 = vsel %vm767, %v768, %v727
    %v770 = vshrl.u32 %v769, 3
    %v771 = vand.u32 %v769, 7
    %v772 = vsub.s32 0, %v771
    %v773 = vsel %vm767, %v772, %v771
    %vm774 = vcmp.lt.s32.totalorder %v728, 0
    %v775 = vsub.s32 0, %v728
    %v776 = vsel %vm774, %v775, %v728
    %v777 = vshrl.u32 %v776, 3
    %v778 = vand.u32 %v776, 7
    %v779 = vsub.s32 0, %v778
    %v780 = vsel %vm774, %v779, %v778
    %vm781 = vcmp.lt.s32.totalorder %v729, 0
    %v782 = vsub.s32 0, %v729
    %v783 = vsel %vm781, %v782, %v729
    %v784 = vshrl.u32 %v783, 3
    %v785 = vand.u32 %v783, 7
    %v786 = vsub.s32 0, %v785
    %v787 = vsel %vm781, %v786, %v785
    %vm788 = vcmp.lt.s32.totalorder %v730, 0
    %v789 = vsub.s32 0, %v730
    %v790 = vsel %vm788, %v789, %v730
    %v791 = vshrl.u32 %v790, 3
    %v792 = vand.u32 %v790, 7
    %v793 = vsub.s32 0, %v792
    %v794 = vsel %vm788, %v793, %v792
    %vm795 = vcmp.lt.s32.totalorder %v731, 0
    %v796 = vsub.s32 0, %v731
    %v797 = vsel %vm795, %v796, %v731
    %v798 = vshrl.u32 %v797, 3
    %v799 = vand.u32 %v797, 7
    %v800 = vsub.s32 0, %v799
    %v801 = vsel %vm795, %v800, %v799
    %vm802 = vcmp.lt.s32.totalorder %v732, 0
    %v803 = vsub.s32 0, %v732
    %v804 = vsel %vm802, %v803, %v732
    %v805 = vshrl.u32 %v804, 3
    %v806 = vand.u32 %v804, 7
    %v807 = vsub.s32 0, %v806
    %v808 = vsel %vm802, %v807, %v806
    %vm809 = vcmp.lt.s32.totalorder %v733, 0
    %v810 = vsub.s32 0, %v733
    %v811 = vsel %vm809, %v810, %v733
    %v812 = vshrl.u32 %v811, 3
    %v813 = vand.u32 %v811, 7
    %v814 = vsub.s32 0, %v813
    %v815 = vsel %vm809, %v814, %v813
    %vm816 = vcmp.lt.s32.totalorder %v734, 0
    %v817 = vsub.s32 0, %v734
    %v818 = vsel %vm816, %v817, %v734
    %v819 = vshrl.u32 %v818, 3
    %v820 = vand.u32 %v818, 7
    %v821 = vsub.s32 0, %v820
    %v822 = vsel %vm816, %v821, %v820
    %vm823 = vcmp.lt.s32.totalorder %v735, 0
    %v824 = vsub.s32 0, %v735
    %v825 = vsel %vm823, %v824, %v735
    %v826 = vshrl.u32 %v825, 3
    %v827 = vand.u32 %v825, 7
    %v828 = vsub.s32 0, %v827
    %v829 = vsel %vm823, %v828, %v827
    %vm830 = vcmp.lt.s32.totalorder %v736, 0
    %v831 = vsub.s32 0, %v736
    %v832 = vsel %vm830, %v831, %v736
    %v833 = vshrl.u32 %v832, 3
    %v834 = vand.u32 %v832, 7
    %v835 = vsub.s32 0, %v834
    %v836 = vsel %vm830, %v835, %v834
    %vm837 = vcmp.lt.s32.totalorder %v737, 0
    %v838 = vsub.s32 0, %v737
    %v839 = vsel %vm837, %v838, %v737
    %v840 = vshrl.u32 %v839, 3
    %v841 = vand.u32 %v839, 7
    %v842 = vsub.s32 0, %v841
    %v843 = vsel %vm837, %v842, %v841
    %vm844 = vcmp.lt.s32.totalorder %v738, 0
    %v845 = vsub.s32 0, %v738
    %v846 = vsel %vm844, %v845, %v738
    %v847 = vshrl.u32 %v846, 3
    %v848 = vand.u32 %v846, 7
    %v849 = vsub.s32 0, %v848
    %v850 = vsel %vm844, %v849, %v848
    %vm851 = vcmp.ne.s32.totalorder %v745, 0
    %vm852 = vcmp.ne.s32.totalorder %v752, 0
    %vm853 = vcmp.ne.s32.totalorder %v759, 0
    %vm854 = vcmp.ne.s32.totalorder %v766, 0
    %vm855 = vcmp.ne.s32.totalorder %v773, 0
    %vm856 = vcmp.ne.s32.totalorder %v780, 0
    %vm857 = vcmp.ne.s32.totalorder %v787, 0
    %vm858 = vcmp.ne.s32.totalorder %v794, 0
    %vm859 = vcmp.ne.s32.totalorder %v801, 0
    %vm860 = vcmp.ne.s32.totalorder %v808, 0
    %vm861 = vcmp.ne.s32.totalorder %v815, 0
    %vm862 = vcmp.ne.s32.totalorder %v822, 0
    %vm863 = vcmp.ne.s32.totalorder %v829, 0
    %vm864 = vcmp.ne.s32.totalorder %v836, 0
    %vm865 = vcmp.ne.s32.totalorder %v843, 0
    %vm866 = vcmp.ne.s32.totalorder %v850, 0
    %vm867 = vcmp.lt.s32.totalorder %v745, 0
    %vm868 = vcmp.lt.s32.totalorder %v752, 0
    %vm869 = vcmp.lt.s32.totalorder %v759, 0
    %vm870 = vcmp.lt.s32.totalorder %v766, 0
    %vm871 = vcmp.lt.s32.totalorder %v773, 0
    %vm872 = vcmp.lt.s32.totalorder %v780, 0
    %vm873 = vcmp.lt.s32.totalorder %v787, 0
    %vm874 = vcmp.lt.s32.totalorder %v794, 0
    %vm875 = vcmp.lt.s32.totalorder %v801, 0
    %vm876 = vcmp.lt.s32.totalorder %v808, 0
    %vm877 = vcmp.lt.s32.totalorder %v815, 0
    %vm878 = vcmp.lt.s32.totalorder %v822, 0
    %vm879 = vcmp.lt.s32.totalorder %v829, 0
    %vm880 = vcmp.lt.s32.totalorder %v836, 0
    %vm881 = vcmp.lt.s32.totalorder %v843, 0
    %vm882 = vcmp.lt.s32.totalorder %v850, 0
    %vm883 = vmand %vm867, %vm851
    %vm884 = vmand %vm868, %vm852
    %vm885 = vmand %vm869, %vm853
    %vm886 = vmand %vm870, %vm854
    %vm887 = vmand %vm871, %vm855
    %vm888 = vmand %vm872, %vm856
    %vm889 = vmand %vm873, %vm857
    %vm890 = vmand %vm874, %vm858
    %vm891 = vmand %vm875, %vm859
    %vm892 = vmand %vm876, %vm860
    %vm893 = vmand %vm877, %vm861
    %vm894 = vmand %vm878, %vm862
    %vm895 = vmand %vm879, %vm863
    %vm896 = vmand %vm880, %vm864
    %vm897 = vmand %vm881, %vm865
    %vm898 = vmand %vm882, %vm866
    %v899 = vadd.s32 %v745, 8
    %v900 = vadd.s32 %v752, 8
    %v901 = vadd.s32 %v759, 8
    %v902 = vadd.s32 %v766, 8
    %v903 = vadd.s32 %v773, 8
    %v904 = vadd.s32 %v780, 8
    %v905 = vadd.s32 %v787, 8
    %v906 = vadd.s32 %v794, 8
    %v907 = vadd.s32 %v801, 8
    %v908 = vadd.s32 %v808, 8
    %v909 = vadd.s32 %v815, 8
    %v910 = vadd.s32 %v822, 8
    %v911 = vadd.s32 %v829, 8
    %v912 = vadd.s32 %v836, 8
    %v913 = vadd.s32 %v843, 8
    %v914 = vadd.s32 %v850, 8
    %v915 = vsel %vm883, %v899, %v745
    %v916 = vsel %vm884, %v900, %v752
    %v917 = vsel %vm885, %v901, %v759
    %v918 = vsel %vm886, %v902, %v766
    %v919 = vsel %vm887, %v903, %v773
    %v920 = vsel %vm888, %v904, %v780
    %v921 = vsel %vm889, %v905, %v787
    %v922 = vsel %vm890, %v906, %v794
    %v923 = vsel %vm891, %v907, %v801
    %v924 = vsel %vm892, %v908, %v808
    %v925 = vsel %vm893, %v909, %v815
    %v926 = vsel %vm894, %v910, %v822
    %v927 = vsel %vm895, %v911, %v829
    %v928 = vsel %vm896, %v912, %v836
    %v929 = vsel %vm897, %v913, %v843
    %v930 = vsel %vm898, %v914, %v850
    %v931 = vlaneseq
    %v932 = vand.u32 %v931, 127
    %vm933 = vcmp.eq.s32.totalorder %v915, %v932
    %vm934 = vcmp.eq.s32.totalorder %v916, %v932
    %vm935 = vcmp.eq.s32.totalorder %v917, %v932
    %vm936 = vcmp.eq.s32.totalorder %v918, %v932
    %vm937 = vcmp.eq.s32.totalorder %v919, %v932
    %vm938 = vcmp.eq.s32.totalorder %v920, %v932
    %vm939 = vcmp.eq.s32.totalorder %v921, %v932
    %vm940 = vcmp.eq.s32.totalorder %v922, %v932
    %vm941 = vcmp.eq.s32.totalorder %v923, %v932
    %vm942 = vcmp.eq.s32.totalorder %v924, %v932
    %vm943 = vcmp.eq.s32.totalorder %v925, %v932
    %vm944 = vcmp.eq.s32.totalorder %v926, %v932
    %vm945 = vcmp.eq.s32.totalorder %v927, %v932
    %vm946 = vcmp.eq.s32.totalorder %v928, %v932
    %vm947 = vcmp.eq.s32.totalorder %v929, %v932
    %vm948 = vcmp.eq.s32.totalorder %v930, %v932
    %v949 = vsel %vm933, 1, 0
    %v950 = vsel %vm934, 1, 0
    %v951 = vsel %vm935, 1, 0
    %v952 = vsel %vm936, 1, 0
    %v953 = vsel %vm937, 1, 0
    %v954 = vsel %vm938, 1, 0
    %v955 = vsel %vm939, 1, 0
    %v956 = vsel %vm940, 1, 0
    %v957 = vsel %vm941, 1, 0
    %v958 = vsel %vm942, 1, 0
    %v959 = vsel %vm943, 1, 0
    %v960 = vsel %vm944, 1, 0
    %v961 = vsel %vm945, 1, 0
    %v962 = vsel %vm946, 1, 0
    %v963 = vsel %vm947, 1, 0
    %v964 = vsel %vm948, 1, 0
    %v965 = vcvt.s32.f32 %v949
    %v966 = vcvt.s32.f32 %v950
    %v967 = vcvt.s32.f32 %v951
    %v968 = vcvt.s32.f32 %v952
    %v969 = vcvt.s32.f32 %v953
    %v970 = vcvt.s32.f32 %v954
    %v971 = vcvt.s32.f32 %v955
    %v972 = vcvt.s32.f32 %v956
    %v973 = vcvt.s32.f32 %v957
    %v974 = vcvt.s32.f32 %v958
    %v975 = vcvt.s32.f32 %v959
    %v976 = vcvt.s32.f32 %v960
    %v977 = vcvt.s32.f32 %v961
    %v978 = vcvt.s32.f32 %v962
    %v979 = vcvt.s32.f32 %v963
    %v980 = vcvt.s32.f32 %v964
    %vm981 = vcmp.lt.s32.totalorder %v932, 0
    %v982 = vsub.s32 0, %v932
    %v983 = vsel %vm981, %v982, %v932
    %v984 = vshrl.u32 %v983, 3
    %v985 = vand.u32 %v983, 7
    %v986 = vsub.s32 0, %v985
    %v987 = vsel %vm981, %v986, %v985
    %vm988 = vcmp.ne.s32.totalorder %v987, 0
    %vm989 = vcmp.lt.s32.totalorder %v987, 0
    %vm990 = vmand %vm989, %vm988
    %v991 = vadd.s32 %v987, 8
    %v992 = vsel %vm990, %v991, %v987
    %vm993 = vcmp.eq.s32.totalorder %v723, %v992
    %v994 = vsel %vm993, 1, 0
    %v995 = vcvt.s32.f32 %v994
    %996 = vmatpush.msra.mxu0 %v980
    %997 = vmatpush.msra.mxu0 %v979
    %998 = vmatpush.msra.mxu0 %v978
    %999 = vmatpush.msra.mxu0 %v977
    %1000 = vmatpush.msra.mxu0 %v976
    %1001 = vmatpush.msra.mxu0 %v975
    %1002 = vmatpush.msra.mxu0 %v974
    %1003 = vmatpush.msra.mxu0 %v973
    %1004 = vmatpush.msra.mxu0 %v972
    %1005 = vmatpush.msra.mxu0 %v971
    %1006 = vmatpush.msra.mxu0 %v970
    %1007 = vmatpush.msra.mxu0 %v969
    %1008 = vmatpush.msra.mxu0 %v968
    %1009 = vmatpush.msra.mxu0 %v967
    %1010 = vmatpush.msra.mxu0 %v966
    %1011 = vmatpush.msra.mxu0 %v965
    %1012 = vmatmul.f32.gmra.mxu0 %v708
    %v1013 = vpop.f32.mrf.mxu0
    %v1014 = vadd.f32 0.0, %v1013
    %1015 = vdwg.mxu0
    %1016 = vmatpush.msra.mxu0 %v980
    %1017 = vmatpush.msra.mxu0 %v979
    %1018 = vmatpush.msra.mxu0 %v978
    %1019 = vmatpush.msra.mxu0 %v977
    %1020 = vmatpush.msra.mxu0 %v976
    %1021 = vmatpush.msra.mxu0 %v975
    %1022 = vmatpush.msra.mxu0 %v974
    %1023 = vmatpush.msra.mxu0 %v973
    %1024 = vmatpush.msra.mxu0 %v972
    %1025 = vmatpush.msra.mxu0 %v971
    %1026 = vmatpush.msra.mxu0 %v970
    %1027 = vmatpush.msra.mxu0 %v969
    %1028 = vmatpush.msra.mxu0 %v968
    %1029 = vmatpush.msra.mxu0 %v967
    %1030 = vmatpush.msra.mxu0 %v966
    %1031 = vmatpush.msra.mxu0 %v965
    %1032 = vmatmul.f32.gmra.mxu0 %v721
    %v1033 = vpop.f32.mrf.mxu0
    %v1034 = vadd.f32 0.0, %v1033
    %1035 = vdwg.mxu0
    %v1036 = vrcp.pop 512.0
    %v1037 = vmul.f32 512.0, %v1036
    %v1038 = vsub.f32 1.0, %v1037
    %v1039 = vmul.f32 %v1036, %v1038
    %v1040 = vadd.f32 %v1036, %v1039
    %vm1041 = vweird.f32 %v1036
    %v1042 = vsel %vm1041, %v1036, %v1040
    %v1043 = vmul.f32 %v1014, %v1042
    %v1044 = vmul.f32 %v1034, %v1042
    %v1045 = vmul.f32 %v1043, %v1043
    %v1046 = vsub.f32 %v1044, %v1045
    %v1047 = vadd.f32 %v1046, 1e-05
    %v1048 = vrsqrt.pop %v1047
    %v1049 = vmul.f32 %v1048, %v1047
    %v1050 = vmul.f32 %v1049, %v1048
    %v1051 = vmul.f32 0.5, %v1050
    %v1052 = vsub.f32 1.5, %v1051
    %v1053 = vmul.f32 %v1048, %v1052
    %vm1054 = vweird.f32 %v1047
    %vm1055 = vweird.f32 %v1048
    %vm1056 = vmor %vm1054, %vm1055
    %v1057 = vsel %vm1056, %v1048, %v1053
    %v1058 = vmul.f32 %v698, %v1057
    %v1059 = vmul.f32 %v1043, %v1058
    %v1060 = vsub.f32 %v699, %v1059
    %vm1061 = vcmask 64512
    %v1063 = vsel %vm1061, %v1058, 0
    %1065 = vmatpush.msra.mxu0 0.0
    %1066 = vmatpush.msra.mxu0 0.0
    %1067 = vmatpush.msra.mxu0 0.0
    %1068 = vmatpush.msra.mxu0 0.0
    %1069 = vmatpush.msra.mxu0 0.0
    %1070 = vmatpush.msra.mxu0 0.0
    %1071 = vmatpush.msra.mxu0 0.0
    %1072 = vmatpush.msra.mxu0 0.0
    %1073 = vmatpush.msra.mxu0 0.0
    %1074 = vmatpush.msra.mxu0 0.0
    %1075 = vmatpush.msra.mxu0 0.0
    %1076 = vmatpush.msra.mxu0 0.0
    %1077 = vmatpush.msra.mxu0 0.0
    %1078 = vmatpush.msra.mxu0 0.0
    %1079 = vmatpush.msra.mxu0 0.0
    %1080 = vmatpush.msra.mxu0 %v995
    %1081 = vmatmul.f32.gmra.mxu0 %v1063
    %v1082 = vpop.f32.mrf.mxu0
    %v1083 = vadd.f32 0.0, %v1082
    %1084 = vdwg.mxu0
    %v1086 = vsel %vm1061, %v1060, 0
    %1088 = vmatpush.msra.mxu0 0.0
    %1089 = vmatpush.msra.mxu0 0.0
    %1090 = vmatpush.msra.mxu0 0.0
    %1091 = vmatpush.msra.mxu0 0.0
    %1092 = vmatpush.msra.mxu0 0.0
    %1093 = vmatpush.msra.mxu0 0.0
    %1094 = vmatpush.msra.mxu0 0.0
    %1095 = vmatpush.msra.mxu0 0.0
    %1096 = vmatpush.msra.mxu0 0.0
    %1097 = vmatpush.msra.mxu0 0.0
    %1098 = vmatpush.msra.mxu0 0.0
    %1099 = vmatpush.msra.mxu0 0.0
    %1100 = vmatpush.msra.mxu0 0.0
    %1101 = vmatpush.msra.mxu0 0.0
    %1102 = vmatpush.msra.mxu0 0.0
    %1103 = vmatpush.msra.mxu0 %v995
    %1104 = vmatmul.f32.gmra.mxu0 %v1086
    %v1105 = vpop.f32.mrf.mxu0
    %v1106 = vadd.f32 0.0, %v1105
    %1107 = vdwg.mxu0
    %v1108 = vperm.slane %v1083, 0
    %v1109 = vmul.f32 %v694, %v1108
    %v1110 = vmul.f32 %v695, %v1108
    %v1111 = vmul.f32 %v696, %v1108
    %v1112 = vmul.f32 %v697, %v1108
    %v1113 = vperm.slane %v1106, 0
    %v1114 = vadd.f32 %v1109, %v1113
    %v1115 = vadd.f32 %v1110, %v1113
    %v1116 = vadd.f32 %v1111, %v1113
    %v1117 = vadd.f32 %v1112, %v1113
    %vm1118 = vcmp.gt.f32.partialorder %v1114, 0.0
    %vm1119 = vcmp.gt.f32.partialorder %v1115, 0.0
    %vm1120 = vcmp.gt.f32.partialorder %v1116, 0.0
    %vm1121 = vcmp.gt.f32.partialorder %v1117, 0.0
    %v1122 = vmul.f32 %v1114, 0.03
    %v1123 = vmul.f32 %v1115, 0.03
    %v1124 = vmul.f32 %v1116, 0.03
    %v1125 = vmul.f32 %v1117, 0.03
    %v1126 = vsel %vm1118, %v1114, %v1122
    %v1127 = vsel %vm1119, %v1115, %v1123
    %v1128 = vsel %vm1120, %v1116, %v1124
    %v1129 = vsel %vm1121, %v1117, %v1125
    %v1134 = vrot.slane %v1126, 7
    %v1135 = vrot.slane %v1127, 7
    %v1136 = vsel %vm548, %v1134, %v1135
    %v1137 = vrot.slane %v1128, 7
    %v1138 = vrot.slane %v1129, 7
    %v1139 = vsel %vm548, %v1137, %v1138
    %v1144 = vsel %vm548, 0.0, %v1134
    %v1145 = vsel %vm548, 0.0, %v1137
    %v1146 = vld [vmem:[#allocation6] sm:$0xff]
    %v1147 = vld [vmem:[#allocation6 + $0x8] sm:$0xff]
    %v1148 = vld [vmem:[#allocation6 + $0x10] sm:$0xff]
    %v1149 = vld [vmem:[#allocation6 + $0x18] sm:$0xff]
    %v1150 = vld [vmem:[#allocation6 + $0x20] sm:$0xff]
    %v1151 = vld [vmem:[#allocation6 + $0x28] sm:$0xff]
    %v1152 = vld [vmem:[#allocation6 + $0x30] sm:$0xff]
    %v1153 = vld [vmem:[#allocation6 + $0x38] sm:$0xff]
    %v1154 = vld [vmem:[#allocation6 + $0x40] sm:$0xff]
    %v1155 = vld [vmem:[#allocation6 + $0x48] sm:$0xff]
    %v1156 = vld [vmem:[#allocation6 + $0x50] sm:$0xff]
    %v1157 = vld [vmem:[#allocation6 + $0x58] sm:$0xff]
    %v1158 = vld [vmem:[#allocation6 + $0x60] sm:$0xff]
    %v1159 = vld [vmem:[#allocation6 + $0x68] sm:$0xff]
    %v1160 = vld [vmem:[#allocation6 + $0x70] sm:$0xff]
    %v1161 = vld [vmem:[#allocation6 + $0x78] sm:$0xff]
    %s1162 = scalar_lea.vmem [#allocation6], 128
    %v1163 = vld [vmem:[%s1162] sm:$0xff]
    %v1164 = vld [vmem:[%s1162 + $0x8] sm:$0xff]
    %v1165 = vld [vmem:[%s1162 + $0x10] sm:$0xff]
    %v1166 = vld [vmem:[%s1162 + $0x18] sm:$0xff]
    %v1167 = vld [vmem:[%s1162 + $0x20] sm:$0xff]
    %v1168 = vld [vmem:[%s1162 + $0x28] sm:$0xff]
    %v1169 = vld [vmem:[%s1162 + $0x30] sm:$0xff]
    %v1170 = vld [vmem:[%s1162 + $0x38] sm:$0xff]
    %v1171 = vld [vmem:[%s1162 + $0x40] sm:$0xff]
    %v1172 = vld [vmem:[%s1162 + $0x48] sm:$0xff]
    %v1173 = vld [vmem:[%s1162 + $0x50] sm:$0xff]
    %v1174 = vld [vmem:[%s1162 + $0x58] sm:$0xff]
    %v1175 = vld [vmem:[%s1162 + $0x60] sm:$0xff]
    %v1176 = vld [vmem:[%s1162 + $0x68] sm:$0xff]
    %v1177 = vld [vmem:[%s1162 + $0x70] sm:$0xff]
    %v1178 = vld [vmem:[%s1162 + $0x78] sm:$0xff]
    %1179 = vmatpush.msra.mxu0 %v1178
    %1180 = vmatpush.msra.mxu0 %v1177
    %1181 = vmatpush.msra.mxu0 %v1176
    %1182 = vmatpush.msra.mxu0 %v1175
    %1183 = vmatpush.msra.mxu0 %v1174
    %1184 = vmatpush.msra.mxu0 %v1173
    %1185 = vmatpush.msra.mxu0 %v1172
    %1186 = vmatpush.msra.mxu0 %v1171
    %1187 = vmatpush.msra.mxu0 %v1170
    %1188 = vmatpush.msra.mxu0 %v1169
    %1189 = vmatpush.msra.mxu0 %v1168
    %1190 = vmatpush.msra.mxu0 %v1167
    %1191 = vmatpush.msra.mxu0 %v1166
    %1192 = vmatpush.msra.mxu0 %v1165
    %1193 = vmatpush.msra.mxu0 %v1164
    %1194 = vmatpush.msra.mxu0 %v1163
    %1195 = vmatmul.f32.gmra.mxu0 %v1126
    %v1196 = vpop.f32.mrf.mxu0
    %v1197 = vadd.f32 0.0, %v1196
    %1198 = vmatmul.f32.gmra.mxu0 %v1127
    %v1199 = vpop.f32.mrf.mxu0
    %v1200 = vadd.f32 0.0, %v1199
    %1201 = vmatmul.f32.gmra.mxu0 %v1128
    %v1202 = vpop.f32.mrf.mxu0
    %v1203 = vadd.f32 0.0, %v1202
    %1204 = vmatmul.f32.gmra.mxu0 %v1129
    %v1205 = vpop.f32.mrf.mxu0
    %v1206 = vadd.f32 0.0, %v1205
    %1207 = vdwg.mxu0
    %1208 = vmatpush.msra.mxu0 %v1161
    %1209 = vmatpush.msra.mxu0 %v1160
    %1210 = vmatpush.msra.mxu0 %v1159
    %1211 = vmatpush.msra.mxu0 %v1158
    %1212 = vmatpush.msra.mxu0 %v1157
    %1213 = vmatpush.msra.mxu0 %v1156
    %1214 = vmatpush.msra.mxu0 %v1155
    %1215 = vmatpush.msra.mxu0 %v1154
    %1216 = vmatpush.msra.mxu0 %v1153
    %1217 = vmatpush.msra.mxu0 %v1152
    %1218 = vmatpush.msra.mxu0 %v1151
    %1219 = vmatpush.msra.mxu0 %v1150
    %1220 = vmatpush.msra.mxu0 %v1149
    %1221 = vmatpush.msra.mxu0 %v1148
    %1222 = vmatpush.msra.mxu0 %v1147
    %1223 = vmatpush.msra.mxu0 %v1146
    %1224 = vmatmul.f32.gmra.mxu0 %v1144
    %v1225 = vpop.f32.mrf.mxu0
    %v1226 = vadd.f32 %v1197, %v1225
    %1227 = vmatmul.f32.gmra.mxu0 %v1136
    %v1228 = vpop.f32.mrf.mxu0
    %v1229 = vadd.f32 %v1200, %v1228
    %1230 = vmatmul.f32.gmra.mxu0 %v1145
    %v1231 = vpop.f32.mrf.mxu0
    %v1232 = vadd.f32 %v1203, %v1231
    %1233 = vmatmul.f32.gmra.mxu0 %v1139
    %v1234 = vpop.f32.mrf.mxu0
    %v1235 = vadd.f32 %v1206, %v1234
    %1236 = vdwg.mxu0
    %v1237 = vrot.slane %v1126, 1
    %v1238 = vrot.slane %v1127, 1
    %v1239 = vsel %vm641, %v1237, %v1238
    %v1240 = vrot.slane %v1128, 1
    %v1241 = vrot.slane %v1129, 1
    %v1242 = vsel %vm641, %v1240, %v1241
    %v1247 = vsel %vm641, %v1238, 0.0
    %v1248 = vsel %vm641, %v1241, 0.0
    %s1249 = scalar_lea.vmem [#allocation6], 256
    %v1250 = vld [vmem:[%s1249] sm:$0xff]
    %v1251 = vld [vmem:[%s1249 + $0x8] sm:$0xff]
    %v1252 = vld [vmem:[%s1249 + $0x10] sm:$0xff]
    %v1253 = vld [vmem:[%s1249 + $0x18] sm:$0xff]
    %v1254 = vld [vmem:[%s1249 + $0x20] sm:$0xff]
    %v1255 = vld [vmem:[%s1249 + $0x28] sm:$0xff]
    %v1256 = vld [vmem:[%s1249 + $0x30] sm:$0xff]
    %v1257 = vld [vmem:[%s1249 + $0x38] sm:$0xff]
    %v1258 = vld [vmem:[%s1249 + $0x40] sm:$0xff]
    %v1259 = vld [vmem:[%s1249 + $0x48] sm:$0xff]
    %v1260 = vld [vmem:[%s1249 + $0x50] sm:$0xff]
    %v1261 = vld [vmem:[%s1249 + $0x58] sm:$0xff]
    %v1262 = vld [vmem:[%s1249 + $0x60] sm:$0xff]
    %v1263 = vld [vmem:[%s1249 + $0x68] sm:$0xff]
    %v1264 = vld [vmem:[%s1249 + $0x70] sm:$0xff]
    %v1265 = vld [vmem:[%s1249 + $0x78] sm:$0xff]
    %1266 = vmatpush.msra.mxu0 %v1265
    %1267 = vmatpush.msra.mxu0 %v1264
    %1268 = vmatpush.msra.mxu0 %v1263
    %1269 = vmatpush.msra.mxu0 %v1262
    %1270 = vmatpush.msra.mxu0 %v1261
    %1271 = vmatpush.msra.mxu0 %v1260
    %1272 = vmatpush.msra.mxu0 %v1259
    %1273 = vmatpush.msra.mxu0 %v1258
    %1274 = vmatpush.msra.mxu0 %v1257
    %1275 = vmatpush.msra.mxu0 %v1256
    %1276 = vmatpush.msra.mxu0 %v1255
    %1277 = vmatpush.msra.mxu0 %v1254
    %1278 = vmatpush.msra.mxu0 %v1253
    %1279 = vmatpush.msra.mxu0 %v1252
    %1280 = vmatpush.msra.mxu0 %v1251
    %1281 = vmatpush.msra.mxu0 %v1250
    %1282 = vmatmul.f32.gmra.mxu0 %v1239
    %v1283 = vpop.f32.mrf.mxu0
    %v1284 = vadd.f32 0.0, %v1283
    %1285 = vmatmul.f32.gmra.mxu0 %v1247
    %v1286 = vpop.f32.mrf.mxu0
    %v1287 = vadd.f32 0.0, %v1286
    %1288 = vmatmul.f32.gmra.mxu0 %v1242
    %v1289 = vpop.f32.mrf.mxu0
    %v1290 = vadd.f32 0.0, %v1289
    %1291 = vmatmul.f32.gmra.mxu0 %v1248
    %v1292 = vpop.f32.mrf.mxu0
    %v1293 = vadd.f32 0.0, %v1292
    %1294 = vdwg.mxu0
    %v1295 = vadd.f32 %v1226, %v1284
    %v1296 = vadd.f32 %v1229, %v1287
    %v1297 = vadd.f32 %v1232, %v1290
    %v1298 = vadd.f32 %v1235, %v1293
    %v1299 = vld [vmem:[%s11] sm:$0x1]
    %v1300 = vld [vmem:[%s13] sm:$0x1]
    %v1301 = vadd.f32 %v1295, %v1296
    %v1302 = vadd.f32 %v1301, %v1297
    %v1303 = vadd.f32 %v1302, %v1298
    %v1304 = vrot.slane %v1303, 4
    %v1305 = vadd.f32 %v1303, %v1304
    %v1306 = vrot.slane %v1305, 2
    %v1307 = vadd.f32 %v1305, %v1306
    %v1308 = vrot.slane %v1307, 1
    %v1309 = vadd.f32 %v1307, %v1308
    %v1310 = vmul.f32 %v1295, %v1295
    %v1311 = vmul.f32 %v1296, %v1296
    %v1312 = vmul.f32 %v1297, %v1297
    %v1313 = vmul.f32 %v1298, %v1298
    %v1314 = vadd.f32 %v1310, %v1311
    %v1315 = vadd.f32 %v1314, %v1312
    %v1316 = vadd.f32 %v1315, %v1313
    %v1317 = vrot.slane %v1316, 4
    %v1318 = vadd.f32 %v1316, %v1317
    %v1319 = vrot.slane %v1318, 2
    %v1320 = vadd.f32 %v1318, %v1319
    %v1321 = vrot.slane %v1320, 1
    %v1322 = vadd.f32 %v1320, %v1321
    %1323 = vmatpush.msra.mxu0 %v980
    %1324 = vmatpush.msra.mxu0 %v979
    %1325 = vmatpush.msra.mxu0 %v978
    %1326 = vmatpush.msra.mxu0 %v977
    %1327 = vmatpush.msra.mxu0 %v976
    %1328 = vmatpush.msra.mxu0 %v975
    %1329 = vmatpush.msra.mxu0 %v974
    %1330 = vmatpush.msra.mxu0 %v973
    %1331 = vmatpush.msra.mxu0 %v972
    %1332 = vmatpush.msra.mxu0 %v971
    %1333 = vmatpush.msra.mxu0 %v970
    %1334 = vmatpush.msra.mxu0 %v969
    %1335 = vmatpush.msra.mxu0 %v968
    %1336 = vmatpush.msra.mxu0 %v967
    %1337 = vmatpush.msra.mxu0 %v966
    %1338 = vmatpush.msra.mxu0 %v965
    %1339 = vmatmul.f32.gmra.mxu0 %v1309
    %v1340 = vpop.f32.mrf.mxu0
    %v1341 = vadd.f32 0.0, %v1340
    %1342 = vdwg.mxu0
    %1343 = vmatpush.msra.mxu0 %v980
    %1344 = vmatpush.msra.mxu0 %v979
    %1345 = vmatpush.msra.mxu0 %v978
    %1346 = vmatpush.msra.mxu0 %v977
    %1347 = vmatpush.msra.mxu0 %v976
    %1348 = vmatpush.msra.mxu0 %v975
    %1349 = vmatpush.msra.mxu0 %v974
    %1350 = vmatpush.msra.mxu0 %v973
    %1351 = vmatpush.msra.mxu0 %v972
    %1352 = vmatpush.msra.mxu0 %v971
    %1353 = vmatpush.msra.mxu0 %v970
    %1354 = vmatpush.msra.mxu0 %v969
    %1355 = vmatpush.msra.mxu0 %v968
    %1356 = vmatpush.msra.mxu0 %v967
    %1357 = vmatpush.msra.mxu0 %v966
    %1358 = vmatpush.msra.mxu0 %v965
    %1359 = vmatmul.f32.gmra.mxu0 %v1322
    %v1360 = vpop.f32.mrf.mxu0
    %v1361 = vadd.f32 0.0, %v1360
    %1362 = vdwg.mxu0
    %v1363 = vmul.f32 %v1341, %v1042
    %v1364 = vmul.f32 %v1361, %v1042
    %v1365 = vmul.f32 %v1363, %v1363
    %v1366 = vsub.f32 %v1364, %v1365
    %v1367 = vadd.f32 %v1366, 1e-05
    %v1368 = vrsqrt.pop %v1367
    %v1369 = vmul.f32 %v1368, %v1367
    %v1370 = vmul.f32 %v1369, %v1368
    %v1371 = vmul.f32 0.5, %v1370
    %v1372 = vsub.f32 1.5, %v1371
    %v1373 = vmul.f32 %v1368, %v1372
    %vm1374 = vweird.f32 %v1367
    %vm1375 = vweird.f32 %v1368
    %vm1376 = vmor %vm1374, %vm1375
    %v1377 = vsel %vm1376, %v1368, %v1373
    %v1378 = vmul.f32 %v1299, %v1377
    %v1379 = vmul.f32 %v1363, %v1378
    %v1380 = vsub.f32 %v1300, %v1379
    %v1382 = vsel %vm1061, %v1378, 0
    %1384 = vmatpush.msra.mxu0 0.0
    %1385 = vmatpush.msra.mxu0 0.0
    %1386 = vmatpush.msra.mxu0 0.0
    %1387 = vmatpush.msra.mxu0 0.0
    %1388 = vmatpush.msra.mxu0 0.0
    %1389 = vmatpush.msra.mxu0 0.0
    %1390 = vmatpush.msra.mxu0 0.0
    %1391 = vmatpush.msra.mxu0 0.0
    %1392 = vmatpush.msra.mxu0 0.0
    %1393 = vmatpush.msra.mxu0 0.0
    %1394 = vmatpush.msra.mxu0 0.0
    %1395 = vmatpush.msra.mxu0 0.0
    %1396 = vmatpush.msra.mxu0 0.0
    %1397 = vmatpush.msra.mxu0 0.0
    %1398 = vmatpush.msra.mxu0 0.0
    %1399 = vmatpush.msra.mxu0 %v995
    %1400 = vmatmul.f32.gmra.mxu0 %v1382
    %v1401 = vpop.f32.mrf.mxu0
    %v1402 = vadd.f32 0.0, %v1401
    %1403 = vdwg.mxu0
    %v1405 = vsel %vm1061, %v1380, 0
    %1407 = vmatpush.msra.mxu0 0.0
    %1408 = vmatpush.msra.mxu0 0.0
    %1409 = vmatpush.msra.mxu0 0.0
    %1410 = vmatpush.msra.mxu0 0.0
    %1411 = vmatpush.msra.mxu0 0.0
    %1412 = vmatpush.msra.mxu0 0.0
    %1413 = vmatpush.msra.mxu0 0.0
    %1414 = vmatpush.msra.mxu0 0.0
    %1415 = vmatpush.msra.mxu0 0.0
    %1416 = vmatpush.msra.mxu0 0.0
    %1417 = vmatpush.msra.mxu0 0.0
    %1418 = vmatpush.msra.mxu0 0.0
    %1419 = vmatpush.msra.mxu0 0.0
    %1420 = vmatpush.msra.mxu0 0.0
    %1421 = vmatpush.msra.mxu0 0.0
    %1422 = vmatpush.msra.mxu0 %v995
    %1423 = vmatmul.f32.gmra.mxu0 %v1405
    %v1424 = vpop.f32.mrf.mxu0
    %v1425 = vadd.f32 0.0, %v1424
    %1426 = vdwg.mxu0
    %v1427 = vperm.slane %v1402, 0
    %v1428 = vmul.f32 %v1295, %v1427
    %v1429 = vmul.f32 %v1296, %v1427
    %v1430 = vmul.f32 %v1297, %v1427
    %v1431 = vmul.f32 %v1298, %v1427
    %v1432 = vperm.slane %v1425, 0
    %v1433 = vadd.f32 %v1428, %v1432
    %v1434 = vadd.f32 %v1429, %v1432
    %v1435 = vadd.f32 %v1430, %v1432
    %v1436 = vadd.f32 %v1431, %v1432
    %vm1437 = vcmp.gt.f32.partialorder %v1433, 0.0
    %vm1438 = vcmp.gt.f32.partialorder %v1434, 0.0
    %vm1439 = vcmp.gt.f32.partialorder %v1435, 0.0
    %vm1440 = vcmp.gt.f32.partialorder %v1436, 0.0
    %v1441 = vmul.f32 %v1433, 0.03
    %v1442 = vmul.f32 %v1434, 0.03
    %v1443 = vmul.f32 %v1435, 0.03
    %v1444 = vmul.f32 %v1436, 0.03
    %v1445 = vsel %vm1437, %v1433, %v1441
    %v1446 = vsel %vm1438, %v1434, %v1442
    %v1447 = vsel %vm1439, %v1435, %v1443
    %v1448 = vsel %vm1440, %v1436, %v1444
    %1453 = vrot.lane.b32.xlu0 %v1445, 120
    %v1454 = vpop.permute.xlu0 %1453
    %1455 = vrot.lane.b32.xlu0 %v1446, 120
    %v1456 = vpop.permute.xlu0 %1455
    %1457 = vrot.lane.b32.xlu0 %v1447, 120
    %v1458 = vpop.permute.xlu0 %1457
    %1459 = vrot.lane.b32.xlu0 %v1448, 120
    %v1460 = vpop.permute.xlu0 %1459
    %vm1465 = vcmask 982016
    %v1466 = vsel %vm1465, %v1454, %v1445
    %v1467 = vsel %vm1465, %v1456, %v1446
    %v1468 = vsel %vm1465, %v1458, %v1447
    %v1469 = vsel %vm1465, %v1460, %v1448
    %v1470 = vmax.f32 %v1445, %v1466
    %v1471 = vmax.f32 %v1446, %v1467
    %v1472 = vmax.f32 %v1447, %v1468
    %v1473 = vmax.f32 %v1448, %v1469
    %v1478 = vrot.slane %v1470, 2
    %v1479 = vrot.slane %v1470, 4
    %v1480 = vrot.slane %v1470, 6
    %v1481 = vrot.slane %v1471, 2
    %v1482 = vrot.slane %v1471, 4
    %v1483 = vrot.slane %v1471, 6
    %v1484 = vrot.slane %v1472, 2
    %v1485 = vrot.slane %v1472, 4
    %v1486 = vrot.slane %v1472, 6
    %v1487 = vrot.slane %v1473, 2
    %v1488 = vrot.slane %v1473, 4
    %v1489 = vrot.slane %v1473, 6
    %v1502 = vrot.slane %v1470, 7
    %v1503 = vrot.slane %v1502, 2
    %v1504 = vrot.slane %v1478, 7
    %v1505 = vrot.slane %v1504, 2
    %v1506 = vrot.slane %v1479, 7
    %v1507 = vrot.slane %v1506, 2
    %v1508 = vrot.slane %v1480, 7
    %v1509 = vrot.slane %v1508, 2
    %v1510 = vrot.slane %v1471, 7
    %v1511 = vrot.slane %v1510, 2
    %v1512 = vrot.slane %v1481, 7
    %v1513 = vrot.slane %v1512, 2
    %v1514 = vrot.slane %v1482, 7
    %v1515 = vrot.slane %v1514, 2
    %v1516 = vrot.slane %v1483, 7
    %v1517 = vrot.slane %v1516, 2
    %v1518 = vrot.slane %v1472, 7
    %v1519 = vrot.slane %v1518, 2
    %v1520 = vrot.slane %v1484, 7
    %v1521 = vrot.slane %v1520, 2
    %v1522 = vrot.slane %v1485, 7
    %v1523 = vrot.slane %v1522, 2
    %v1524 = vrot.slane %v1486, 7
    %v1525 = vrot.slane %v1524, 2
    %v1526 = vrot.slane %v1473, 7
    %v1527 = vrot.slane %v1526, 2
    %v1528 = vrot.slane %v1487, 7
    %v1529 = vrot.slane %v1528, 2
    %v1530 = vrot.slane %v1488, 7
    %v1531 = vrot.slane %v1530, 2
    %v1532 = vrot.slane %v1489, 7
    %v1533 = vrot.slane %v1532, 2
    %v1550 = vmax.f32 %v1470, %v1503
    %v1551 = vmax.f32 %v1478, %v1505
    %v1552 = vmax.f32 %v1479, %v1507
    %v1553 = vmax.f32 %v1480, %v1509
    %v1554 = vmax.f32 %v1471, %v1511
    %v1555 = vmax.f32 %v1481, %v1513
    %v1556 = vmax.f32 %v1482, %v1515
    %v1557 = vmax.f32 %v1483, %v1517
    %v1558 = vmax.f32 %v1472, %v1519
    %v1559 = vmax.f32 %v1484, %v1521
    %v1560 = vmax.f32 %v1485, %v1523
    %v1561 = vmax.f32 %v1486, %v1525
    %v1562 = vmax.f32 %v1473, %v1527
    %v1563 = vmax.f32 %v1487, %v1529
    %v1564 = vmax.f32 %v1488, %v1531
    %v1565 = vmax.f32 %v1489, %v1533
    %v1580 = vperm.slane %v1550, 0
    %v1581 = vperm.slane %v1551, 0
    %v1582 = vperm.slane %v1552, 0
    %v1583 = vperm.slane %v1553, 0
    %v1584 = vperm.slane %v1554, 0
    %v1585 = vperm.slane %v1555, 0
    %v1586 = vperm.slane %v1556, 0
    %v1587 = vperm.slane %v1558, 0
    %v1588 = vperm.slane %v1559, 0
    %v1589 = vperm.slane %v1560, 0
    %v1590 = vperm.slane %v1561, 0
    %v1591 = vperm.slane %v1562, 0
    %v1592 = vperm.slane %v1563, 0
    %v1593 = vperm.slane %v1564, 0
    %vm1594 = vcmask 1042434
    %v1595 = vsel %vm1594, %v1581, %v1580
    %vm1596 = vcmask 1043459
    %v1597 = vsel %vm1596, %v1582, %v1595
    %vm1598 = vcmask 1044484
    %v1599 = vsel %vm1598, %v1583, %v1597
    %vm1600 = vcmask 1045509
    %v1601 = vsel %vm1600, %v1584, %v1599
    %vm1602 = vcmask 1046534
    %v1603 = vsel %vm1602, %v1585, %v1601
    %vm1604 = vcmask 1047559
    %v1605 = vsel %vm1604, %v1586, %v1603
    %v1606 = vsel %vm1594, %v1588, %v1587
    %v1607 = vsel %vm1596, %v1589, %v1606
    %v1608 = vsel %vm1598, %v1590, %v1607
    %v1609 = vsel %vm1600, %v1591, %v1608
    %v1610 = vsel %vm1602, %v1592, %v1609
    %v1611 = vsel %vm1604, %v1593, %v1610
    %v1614 = vsel %vm548, 0.0, %v1605
    %v1615 = vsel %vm548, 0.0, %v1611
    %v1616 = vld [vmem:[#allocation7] sm:$0xff]
    %v1617 = vld [vmem:[#allocation7 + $0x8] sm:$0xff]
    %v1618 = vld [vmem:[#allocation7 + $0x10] sm:$0xff]
    %v1619 = vld [vmem:[#allocation7 + $0x18] sm:$0xff]
    %v1620 = vld [vmem:[#allocation7 + $0x20] sm:$0xff]
    %v1621 = vld [vmem:[#allocation7 + $0x28] sm:$0xff]
    %v1622 = vld [vmem:[#allocation7 + $0x30] sm:$0xff]
    %v1623 = vld [vmem:[#allocation7 + $0x38] sm:$0xff]
    %v1624 = vld [vmem:[#allocation7 + $0x40] sm:$0xff]
    %v1625 = vld [vmem:[#allocation7 + $0x48] sm:$0xff]
    %v1626 = vld [vmem:[#allocation7 + $0x50] sm:$0xff]
    %v1627 = vld [vmem:[#allocation7 + $0x58] sm:$0xff]
    %v1628 = vld [vmem:[#allocation7 + $0x60] sm:$0xff]
    %v1629 = vld [vmem:[#allocation7 + $0x68] sm:$0xff]
    %v1630 = vld [vmem:[#allocation7 + $0x70] sm:$0xff]
    %v1631 = vld [vmem:[#allocation7 + $0x78] sm:$0xff]
    %s1632 = scalar_lea.vmem [#allocation7], 128
    %v1633 = vld [vmem:[%s1632] sm:$0xff]
    %v1634 = vld [vmem:[%s1632 + $0x8] sm:$0xff]
    %v1635 = vld [vmem:[%s1632 + $0x10] sm:$0xff]
    %v1636 = vld [vmem:[%s1632 + $0x18] sm:$0xff]
    %v1637 = vld [vmem:[%s1632 + $0x20] sm:$0xff]
    %v1638 = vld [vmem:[%s1632 + $0x28] sm:$0xff]
    %v1639 = vld [vmem:[%s1632 + $0x30] sm:$0xff]
    %v1640 = vld [vmem:[%s1632 + $0x38] sm:$0xff]
    %v1641 = vld [vmem:[%s1632 + $0x40] sm:$0xff]
    %v1642 = vld [vmem:[%s1632 + $0x48] sm:$0xff]
    %v1643 = vld [vmem:[%s1632 + $0x50] sm:$0xff]
    %v1644 = vld [vmem:[%s1632 + $0x58] sm:$0xff]
    %v1645 = vld [vmem:[%s1632 + $0x60] sm:$0xff]
    %v1646 = vld [vmem:[%s1632 + $0x68] sm:$0xff]
    %v1647 = vld [vmem:[%s1632 + $0x70] sm:$0xff]
    %v1648 = vld [vmem:[%s1632 + $0x78] sm:$0xff]
    %v1651 = vperm.slane %v1557, 0
    %v1652 = vperm.slane %v1565, 0
    %vm1653 = vcmask 1041409
    %v1654 = vsel %vm1653, %v1581, %v1580
    %v1655 = vsel %vm1594, %v1582, %v1654
    %v1656 = vsel %vm1596, %v1583, %v1655
    %v1657 = vsel %vm1598, %v1584, %v1656
    %v1658 = vsel %vm1600, %v1585, %v1657
    %v1659 = vsel %vm1602, %v1586, %v1658
    %v1660 = vsel %vm1604, %v1651, %v1659
    %v1661 = vsel %vm1653, %v1588, %v1587
    %v1662 = vsel %vm1594, %v1589, %v1661
    %v1663 = vsel %vm1596, %v1590, %v1662
    %v1664 = vsel %vm1598, %v1591, %v1663
    %v1665 = vsel %vm1600, %v1592, %v1664
    %v1666 = vsel %vm1602, %v1593, %v1665
    %v1667 = vsel %vm1604, %v1652, %v1666
    %1670 = vmatpush.msra.mxu0 %v1648
    %1671 = vmatpush.msra.mxu0 %v1647
    %1672 = vmatpush.msra.mxu0 %v1646
    %1673 = vmatpush.msra.mxu0 %v1645
    %1674 = vmatpush.msra.mxu0 %v1644
    %1675 = vmatpush.msra.mxu0 %v1643
    %1676 = vmatpush.msra.mxu0 %v1642
    %1677 = vmatpush.msra.mxu0 %v1641
    %1678 = vmatpush.msra.mxu0 %v1640
    %1679 = vmatpush.msra.mxu0 %v1639
    %1680 = vmatpush.msra.mxu0 %v1638
    %1681 = vmatpush.msra.mxu0 %v1637
    %1682 = vmatpush.msra.mxu0 %v1636
    %1683 = vmatpush.msra.mxu0 %v1635
    %1684 = vmatpush.msra.mxu0 %v1634
    %1685 = vmatpush.msra.mxu0 %v1633
    %1686 = vmatmul.f32.gmra.mxu0 %v1660
    %v1687 = vpop.f32.mrf.mxu0
    %v1688 = vadd.f32 0.0, %v1687
    %1689 = vmatmul.f32.gmra.mxu0 %v1667
    %v1690 = vpop.f32.mrf.mxu0
    %v1691 = vadd.f32 0.0, %v1690
    %1692 = vdwg.mxu0
    %1693 = vmatpush.msra.mxu0 %v1631
    %1694 = vmatpush.msra.mxu0 %v1630
    %1695 = vmatpush.msra.mxu0 %v1629
    %1696 = vmatpush.msra.mxu0 %v1628
    %1697 = vmatpush.msra.mxu0 %v1627
    %1698 = vmatpush.msra.mxu0 %v1626
    %1699 = vmatpush.msra.mxu0 %v1625
    %1700 = vmatpush.msra.mxu0 %v1624
    %1701 = vmatpush.msra.mxu0 %v1623
    %1702 = vmatpush.msra.mxu0 %v1622
    %1703 = vmatpush.msra.mxu0 %v1621
    %1704 = vmatpush.msra.mxu0 %v1620
    %1705 = vmatpush.msra.mxu0 %v1619
    %1706 = vmatpush.msra.mxu0 %v1618
    %1707 = vmatpush.msra.mxu0 %v1617
    %1708 = vmatpush.msra.mxu0 %v1616
    %1709 = vmatmul.f32.gmra.mxu0 %v1614
    %v1710 = vpop.f32.mrf.mxu0
    %v1711 = vadd.f32 %v1688, %v1710
    %1712 = vmatmul.f32.gmra.mxu0 %v1615
    %v1713 = vpop.f32.mrf.mxu0
    %v1714 = vadd.f32 %v1691, %v1713
    %1715 = vdwg.mxu0
    %v1716 = vsel %vm1653, %v1582, %v1581
    %v1717 = vsel %vm1594, %v1583, %v1716
    %v1718 = vsel %vm1596, %v1584, %v1717
    %v1719 = vsel %vm1598, %v1585, %v1718
    %v1720 = vsel %vm1600, %v1586, %v1719
    %v1721 = vsel %vm1602, %v1651, %v1720
    %v1722 = vsel %vm1653, %v1589, %v1588
    %v1723 = vsel %vm1594, %v1590, %v1722
    %v1724 = vsel %vm1596, %v1591, %v1723
    %v1725 = vsel %vm1598, %v1592, %v1724
    %v1726 = vsel %vm1600, %v1593, %v1725
    %v1727 = vsel %vm1602, %v1652, %v1726
    %v1730 = vsel %vm641, %v1721, 0.0
    %v1731 = vsel %vm641, %v1727, 0.0
    %s1732 = scalar_lea.vmem [#allocation7], 256
    %v1733 = vld [vmem:[%s1732] sm:$0xff]
    %v1734 = vld [vmem:[%s1732 + $0x8] sm:$0xff]
    %v1735 = vld [vmem:[%s1732 + $0x10] sm:$0xff]
    %v1736 = vld [vmem:[%s1732 + $0x18] sm:$0xff]
    %v1737 = vld [vmem:[%s1732 + $0x20] sm:$0xff]
    %v1738 = vld [vmem:[%s1732 + $0x28] sm:$0xff]
    %v1739 = vld [vmem:[%s1732 + $0x30] sm:$0xff]
    %v1740 = vld [vmem:[%s1732 + $0x38] sm:$0xff]
    %v1741 = vld [vmem:[%s1732 + $0x40] sm:$0xff]
    %v1742 = vld [vmem:[%s1732 + $0x48] sm:$0xff]
    %v1743 = vld [vmem:[%s1732 + $0x50] sm:$0xff]
    %v1744 = vld [vmem:[%s1732 + $0x58] sm:$0xff]
    %v1745 = vld [vmem:[%s1732 + $0x60] sm:$0xff]
    %v1746 = vld [vmem:[%s1732 + $0x68] sm:$0xff]
    %v1747 = vld [vmem:[%s1732 + $0x70] sm:$0xff]
    %v1748 = vld [vmem:[%s1732 + $0x78] sm:$0xff]
    %1749 = vmatpush.msra.mxu0 %v1748
    %1750 = vmatpush.msra.mxu0 %v1747
    %1751 = vmatpush.msra.mxu0 %v1746
    %1752 = vmatpush.msra.mxu0 %v1745
    %1753 = vmatpush.msra.mxu0 %v1744
    %1754 = vmatpush.msra.mxu0 %v1743
    %1755 = vmatpush.msra.mxu0 %v1742
    %1756 = vmatpush.msra.mxu0 %v1741
    %1757 = vmatpush.msra.mxu0 %v1740
    %1758 = vmatpush.msra.mxu0 %v1739
    %1759 = vmatpush.msra.mxu0 %v1738
    %1760 = vmatpush.msra.mxu0 %v1737
    %1761 = vmatpush.msra.mxu0 %v1736
    %1762 = vmatpush.msra.mxu0 %v1735
    %1763 = vmatpush.msra.mxu0 %v1734
    %1764 = vmatpush.msra.mxu0 %v1733
    %1765 = vmatmul.f32.gmra.mxu0 %v1730
    %v1766 = vpop.f32.mrf.mxu0
    %v1767 = vadd.f32 0.0, %v1766
    %1768 = vmatmul.f32.gmra.mxu0 %v1731
    %v1769 = vpop.f32.mrf.mxu0
    %v1770 = vadd.f32 0.0, %v1769
    %1771 = vdwg.mxu0
    %v1772 = vadd.f32 %v1711, %v1767
    %v1773 = vadd.f32 %v1714, %v1770
    %v1774 = vld [vmem:[%s17] sm:$0x1]
    %v1775 = vld [vmem:[%s19] sm:$0x1]
    %v1776 = vadd.f32 %v1772, %v1773
    %v1777 = vrot.slane %v1776, 4
    %v1778 = vadd.f32 %v1776, %v1777
    %v1779 = vrot.slane %v1778, 2
    %v1780 = vadd.f32 %v1778, %v1779
    %v1781 = vrot.slane %v1780, 1
    %v1782 = vadd.f32 %v1780, %v1781
    %v1783 = vmul.f32 %v1772, %v1772
    %v1784 = vmul.f32 %v1773, %v1773
    %v1785 = vadd.f32 %v1783, %v1784
    %v1786 = vrot.slane %v1785, 4
    %v1787 = vadd.f32 %v1785, %v1786
    %v1788 = vrot.slane %v1787, 2
    %v1789 = vadd.f32 %v1787, %v1788
    %v1790 = vrot.slane %v1789, 1
    %v1791 = vadd.f32 %v1789, %v1790
    %vm1792 = vcmp.lt.s32.totalorder %v723, 0
    %v1793 = vsub.s32 0, %v723
    %v1794 = vsel %vm1792, %v1793, %v723
    %v1795 = vshrl.u32 %v1794, 4
    %v1796 = vand.u32 %v1794, 15
    %v1797 = vsub.s32 0, %v1796
    %v1798 = vsel %vm1792, %v1797, %v1796
    %vm1799 = vcmp.lt.s32.totalorder %v724, 0
    %v1800 = vsub.s32 0, %v724
    %v1801 = vsel %vm1799, %v1800, %v724
    %v1802 = vshrl.u32 %v1801, 4
    %v1803 = vand.u32 %v1801, 15
    %v1804 = vsub.s32 0, %v1803
    %v1805 = vsel %vm1799, %v1804, %v1803
    %vm1806 = vcmp.lt.s32.totalorder %v725, 0
    %v1807 = vsub.s32 0, %v725
    %v1808 = vsel %vm1806, %v1807, %v725
    %v1809 = vshrl.u32 %v1808, 4
    %v1810 = vand.u32 %v1808, 15
    %v1811 = vsub.s32 0, %v1810
    %v1812 = vsel %vm1806, %v1811, %v1810
    %vm1813 = vcmp.lt.s32.totalorder %v726, 0
    %v1814 = vsub.s32 0, %v726
    %v1815 = vsel %vm1813, %v1814, %v726
    %v1816 = vshrl.u32 %v1815, 4
    %v1817 = vand.u32 %v1815, 15
    %v1818 = vsub.s32 0, %v1817
    %v1819 = vsel %vm1813, %v1818, %v1817
    %vm1820 = vcmp.lt.s32.totalorder %v727, 0
    %v1821 = vsub.s32 0, %v727
    %v1822 = vsel %vm1820, %v1821, %v727
    %v1823 = vshrl.u32 %v1822, 4
    %v1824 = vand.u32 %v1822, 15
    %v1825 = vsub.s32 0, %v1824
    %v1826 = vsel %vm1820, %v1825, %v1824
    %vm1827 = vcmp.lt.s32.totalorder %v728, 0
    %v1828 = vsub.s32 0, %v728
    %v1829 = vsel %vm1827, %v1828, %v728
    %v1830 = vshrl.u32 %v1829, 4
    %v1831 = vand.u32 %v1829, 15
    %v1832 = vsub.s32 0, %v1831
    %v1833 = vsel %vm1827, %v1832, %v1831
    %vm1834 = vcmp.lt.s32.totalorder %v729, 0
    %v1835 = vsub.s32 0, %v729
    %v1836 = vsel %vm1834, %v1835, %v729
    %v1837 = vshrl.u32 %v1836, 4
    %v1838 = vand.u32 %v1836, 15
    %v1839 = vsub.s32 0, %v1838
    %v1840 = vsel %vm1834, %v1839, %v1838
    %vm1841 = vcmp.lt.s32.totalorder %v730, 0
    %v1842 = vsub.s32 0, %v730
    %v1843 = vsel %vm1841, %v1842, %v730
    %v1844 = vshrl.u32 %v1843, 4
    %v1845 = vand.u32 %v1843, 15
    %v1846 = vsub.s32 0, %v1845
    %v1847 = vsel %vm1841, %v1846, %v1845
    %vm1848 = vcmp.lt.s32.totalorder %v731, 0
    %v1849 = vsub.s32 0, %v731
    %v1850 = vsel %vm1848, %v1849, %v731
    %v1851 = vshrl.u32 %v1850, 4
    %v1852 = vand.u32 %v1850, 15
    %v1853 = vsub.s32 0, %v1852
    %v1854 = vsel %vm1848, %v1853, %v1852
    %vm1855 = vcmp.lt.s32.totalorder %v732, 0
    %v1856 = vsub.s32 0, %v732
    %v1857 = vsel %vm1855, %v1856, %v732
    %v1858 = vshrl.u32 %v1857, 4
    %v1859 = vand.u32 %v1857, 15
    %v1860 = vsub.s32 0, %v1859
    %v1861 = vsel %vm1855, %v1860, %v1859
    %vm1862 = vcmp.lt.s32.totalorder %v733, 0
    %v1863 = vsub.s32 0, %v733
    %v1864 = vsel %vm1862, %v1863, %v733
    %v1865 = vshrl.u32 %v1864, 4
    %v1866 = vand.u32 %v1864, 15
    %v1867 = vsub.s32 0, %v1866
    %v1868 = vsel %vm1862, %v1867, %v1866
    %vm1869 = vcmp.lt.s32.totalorder %v734, 0
    %v1870 = vsub.s32 0, %v734
    %v1871 = vsel %vm1869, %v1870, %v734
    %v1872 = vshrl.u32 %v1871, 4
    %v1873 = vand.u32 %v1871, 15
    %v1874 = vsub.s32 0, %v1873
    %v1875 = vsel %vm1869, %v1874, %v1873
    %vm1876 = vcmp.lt.s32.totalorder %v735, 0
    %v1877 = vsub.s32 0, %v735
    %v1878 = vsel %vm1876, %v1877, %v735
    %v1879 = vshrl.u32 %v1878, 4
    %v1880 = vand.u32 %v1878, 15
    %v1881 = vsub.s32 0, %v1880
    %v1882 = vsel %vm1876, %v1881, %v1880
    %vm1883 = vcmp.lt.s32.totalorder %v736, 0
    %v1884 = vsub.s32 0, %v736
    %v1885 = vsel %vm1883, %v1884, %v736
    %v1886 = vshrl.u32 %v1885, 4
    %v1887 = vand.u32 %v1885, 15
    %v1888 = vsub.s32 0, %v1887
    %v1889 = vsel %vm1883, %v1888, %v1887
    %vm1890 = vcmp.lt.s32.totalorder %v737, 0
    %v1891 = vsub.s32 0, %v737
    %v1892 = vsel %vm1890, %v1891, %v737
    %v1893 = vshrl.u32 %v1892, 4
    %v1894 = vand.u32 %v1892, 15
    %v1895 = vsub.s32 0, %v1894
    %v1896 = vsel %vm1890, %v1895, %v1894
    %vm1897 = vcmp.lt.s32.totalorder %v738, 0
    %v1898 = vsub.s32 0, %v738
    %v1899 = vsel %vm1897, %v1898, %v738
    %v1900 = vshrl.u32 %v1899, 4
    %v1901 = vand.u32 %v1899, 15
    %v1902 = vsub.s32 0, %v1901
    %v1903 = vsel %vm1897, %v1902, %v1901
    %vm1904 = vcmp.ne.s32.totalorder %v1798, 0
    %vm1905 = vcmp.ne.s32.totalorder %v1805, 0
    %vm1906 = vcmp.ne.s32.totalorder %v1812, 0
    %vm1907 = vcmp.ne.s32.totalorder %v1819, 0
    %vm1908 = vcmp.ne.s32.totalorder %v1826, 0
    %vm1909 = vcmp.ne.s32.totalorder %v1833, 0
    %vm1910 = vcmp.ne.s32.totalorder %v1840, 0
    %vm1911 = vcmp.ne.s32.totalorder %v1847, 0
    %vm1912 = vcmp.ne.s32.totalorder %v1854, 0
    %vm1913 = vcmp.ne.s32.totalorder %v1861, 0
    %vm1914 = vcmp.ne.s32.totalorder %v1868, 0
    %vm1915 = vcmp.ne.s32.totalorder %v1875, 0
    %vm1916 = vcmp.ne.s32.totalorder %v1882, 0
    %vm1917 = vcmp.ne.s32.totalorder %v1889, 0
    %vm1918 = vcmp.ne.s32.totalorder %v1896, 0
    %vm1919 = vcmp.ne.s32.totalorder %v1903, 0
    %vm1920 = vcmp.lt.s32.totalorder %v1798, 0
    %vm1921 = vcmp.lt.s32.totalorder %v1805, 0
    %vm1922 = vcmp.lt.s32.totalorder %v1812, 0
    %vm1923 = vcmp.lt.s32.totalorder %v1819, 0
    %vm1924 = vcmp.lt.s32.totalorder %v1826, 0
    %vm1925 = vcmp.lt.s32.totalorder %v1833, 0
    %vm1926 = vcmp.lt.s32.totalorder %v1840, 0
    %vm1927 = vcmp.lt.s32.totalorder %v1847, 0
    %vm1928 = vcmp.lt.s32.totalorder %v1854, 0
    %vm1929 = vcmp.lt.s32.totalorder %v1861, 0
    %vm1930 = vcmp.lt.s32.totalorder %v1868, 0
    %vm1931 = vcmp.lt.s32.totalorder %v1875, 0
    %vm1932 = vcmp.lt.s32.totalorder %v1882, 0
    %vm1933 = vcmp.lt.s32.totalorder %v1889, 0
    %vm1934 = vcmp.lt.s32.totalorder %v1896, 0
    %vm1935 = vcmp.lt.s32.totalorder %v1903, 0
    %vm1936 = vmand %vm1920, %vm1904
    %vm1937 = vmand %vm1921, %vm1905
    %vm1938 = vmand %vm1922, %vm1906
    %vm1939 = vmand %vm1923, %vm1907
    %vm1940 = vmand %vm1924, %vm1908
    %vm1941 = vmand %vm1925, %vm1909
    %vm1942 = vmand %vm1926, %vm1910
    %vm1943 = vmand %vm1927, %vm1911
    %vm1944 = vmand %vm1928, %vm1912
    %vm1945 = vmand %vm1929, %vm1913
    %vm1946 = vmand %vm1930, %vm1914
    %vm1947 = vmand %vm1931, %vm1915
    %vm1948 = vmand %vm1932, %vm1916
    %vm1949 = vmand %vm1933, %vm1917
    %vm1950 = vmand %vm1934, %vm1918
    %vm1951 = vmand %vm1935, %vm1919
    %v1952 = vadd.s32 %v1798, 16
    %v1953 = vadd.s32 %v1805, 16
    %v1954 = vadd.s32 %v1812, 16
    %v1955 = vadd.s32 %v1819, 16
    %v1956 = vadd.s32 %v1826, 16
    %v1957 = vadd.s32 %v1833, 16
    %v1958 = vadd.s32 %v1840, 16
    %v1959 = vadd.s32 %v1847, 16
    %v1960 = vadd.s32 %v1854, 16
    %v1961 = vadd.s32 %v1861, 16
    %v1962 = vadd.s32 %v1868, 16
    %v1963 = vadd.s32 %v1875, 16
    %v1964 = vadd.s32 %v1882, 16
    %v1965 = vadd.s32 %v1889, 16
    %v1966 = vadd.s32 %v1896, 16
    %v1967 = vadd.s32 %v1903, 16
    %v1968 = vsel %vm1936, %v1952, %v1798
    %v1969 = vsel %vm1937, %v1953, %v1805
    %v1970 = vsel %vm1938, %v1954, %v1812
    %v1971 = vsel %vm1939, %v1955, %v1819
    %v1972 = vsel %vm1940, %v1956, %v1826
    %v1973 = vsel %vm1941, %v1957, %v1833
    %v1974 = vsel %vm1942, %v1958, %v1840
    %v1975 = vsel %vm1943, %v1959, %v1847
    %v1976 = vsel %vm1944, %v1960, %v1854
    %v1977 = vsel %vm1945, %v1961, %v1861
    %v1978 = vsel %vm1946, %v1962, %v1868
    %v1979 = vsel %vm1947, %v1963, %v1875
    %v1980 = vsel %vm1948, %v1964, %v1882
    %v1981 = vsel %vm1949, %v1965, %v1889
    %v1982 = vsel %vm1950, %v1966, %v1896
    %v1983 = vsel %vm1951, %v1967, %v1903
    %vm1984 = vcmp.eq.s32.totalorder %v1968, %v932
    %vm1985 = vcmp.eq.s32.totalorder %v1969, %v932
    %vm1986 = vcmp.eq.s32.totalorder %v1970, %v932
    %vm1987 = vcmp.eq.s32.totalorder %v1971, %v932
    %vm1988 = vcmp.eq.s32.totalorder %v1972, %v932
    %vm1989 = vcmp.eq.s32.totalorder %v1973, %v932
    %vm1990 = vcmp.eq.s32.totalorder %v1974, %v932
    %vm1991 = vcmp.eq.s32.totalorder %v1975, %v932
    %vm1992 = vcmp.eq.s32.totalorder %v1976, %v932
    %vm1993 = vcmp.eq.s32.totalorder %v1977, %v932
    %vm1994 = vcmp.eq.s32.totalorder %v1978, %v932
    %vm1995 = vcmp.eq.s32.totalorder %v1979, %v932
    %vm1996 = vcmp.eq.s32.totalorder %v1980, %v932
    %vm1997 = vcmp.eq.s32.totalorder %v1981, %v932
    %vm1998 = vcmp.eq.s32.totalorder %v1982, %v932
    %vm1999 = vcmp.eq.s32.totalorder %v1983, %v932
    %v2000 = vsel %vm1984, 1, 0
    %v2001 = vsel %vm1985, 1, 0
    %v2002 = vsel %vm1986, 1, 0
    %v2003 = vsel %vm1987, 1, 0
    %v2004 = vsel %vm1988, 1, 0
    %v2005 = vsel %vm1989, 1, 0
    %v2006 = vsel %vm1990, 1, 0
    %v2007 = vsel %vm1991, 1, 0
    %v2008 = vsel %vm1992, 1, 0
    %v2009 = vsel %vm1993, 1, 0
    %v2010 = vsel %vm1994, 1, 0
    %v2011 = vsel %vm1995, 1, 0
    %v2012 = vsel %vm1996, 1, 0
    %v2013 = vsel %vm1997, 1, 0
    %v2014 = vsel %vm1998, 1, 0
    %v2015 = vsel %vm1999, 1, 0
    %v2016 = vcvt.s32.f32 %v2000
    %v2017 = vcvt.s32.f32 %v2001
    %v2018 = vcvt.s32.f32 %v2002
    %v2019 = vcvt.s32.f32 %v2003
    %v2020 = vcvt.s32.f32 %v2004
    %v2021 = vcvt.s32.f32 %v2005
    %v2022 = vcvt.s32.f32 %v2006
    %v2023 = vcvt.s32.f32 %v2007
    %v2024 = vcvt.s32.f32 %v2008
    %v2025 = vcvt.s32.f32 %v2009
    %v2026 = vcvt.s32.f32 %v2010
    %v2027 = vcvt.s32.f32 %v2011
    %v2028 = vcvt.s32.f32 %v2012
    %v2029 = vcvt.s32.f32 %v2013
    %v2030 = vcvt.s32.f32 %v2014
    %v2031 = vcvt.s32.f32 %v2015
    %vm2032 = vcmp.lt.s32.totalorder %v932, 0
    %v2033 = vsub.s32 0, %v932
    %v2034 = vsel %vm2032, %v2033, %v932
    %v2035 = vshrl.u32 %v2034, 4
    %v2036 = vand.u32 %v2034, 15
    %v2037 = vsub.s32 0, %v2036
    %v2038 = vsel %vm2032, %v2037, %v2036
    %vm2039 = vcmp.ne.s32.totalorder %v2038, 0
    %vm2040 = vcmp.lt.s32.totalorder %v2038, 0
    %vm2041 = vmand %vm2040, %vm2039
    %v2042 = vadd.s32 %v2038, 16
    %v2043 = vsel %vm2041, %v2042, %v2038
    %vm2044 = vcmp.eq.s32.totalorder %v723, %v2043
    %vm2045 = vcmp.eq.s32.totalorder %v724, %v2043
    %v2046 = vsel %vm2044, 1, 0
    %v2047 = vsel %vm2045, 1, 0
    %v2048 = vcvt.s32.f32 %v2046
    %v2049 = vcvt.s32.f32 %v2047
    %2050 = vmatpush.msra.mxu0 %v2031
    %2051 = vmatpush.msra.mxu0 %v2030
    %2052 = vmatpush.msra.mxu0 %v2029
    %2053 = vmatpush.msra.mxu0 %v2028
    %2054 = vmatpush.msra.mxu0 %v2027
    %2055 = vmatpush.msra.mxu0 %v2026
    %2056 = vmatpush.msra.mxu0 %v2025
    %2057 = vmatpush.msra.mxu0 %v2024
    %2058 = vmatpush.msra.mxu0 %v2023
    %2059 = vmatpush.msra.mxu0 %v2022
    %2060 = vmatpush.msra.mxu0 %v2021
    %2061 = vmatpush.msra.mxu0 %v2020
    %2062 = vmatpush.msra.mxu0 %v2019
    %2063 = vmatpush.msra.mxu0 %v2018
    %2064 = vmatpush.msra.mxu0 %v2017
    %2065 = vmatpush.msra.mxu0 %v2016
    %2066 = vmatmul.f32.gmra.mxu0 %v1782
    %v2067 = vpop.f32.mrf.mxu0
    %v2068 = vadd.f32 0.0, %v2067
    %2069 = vdwg.mxu0
    %2070 = vmatpush.msra.mxu0 %v2031
    %2071 = vmatpush.msra.mxu0 %v2030
    %2072 = vmatpush.msra.mxu0 %v2029
    %2073 = vmatpush.msra.mxu0 %v2028
    %2074 = vmatpush.msra.mxu0 %v2027
    %2075 = vmatpush.msra.mxu0 %v2026
    %2076 = vmatpush.msra.mxu0 %v2025
    %2077 = vmatpush.msra.mxu0 %v2024
    %2078 = vmatpush.msra.mxu0 %v2023
    %2079 = vmatpush.msra.mxu0 %v2022
    %2080 = vmatpush.msra.mxu0 %v2021
    %2081 = vmatpush.msra.mxu0 %v2020
    %2082 = vmatpush.msra.mxu0 %v2019
    %2083 = vmatpush.msra.mxu0 %v2018
    %2084 = vmatpush.msra.mxu0 %v2017
    %2085 = vmatpush.msra.mxu0 %v2016
    %2086 = vmatmul.f32.gmra.mxu0 %v1791
    %v2087 = vpop.f32.mrf.mxu0
    %v2088 = vadd.f32 0.0, %v2087
    %2089 = vdwg.mxu0
    %v2090 = vrcp.pop 128.0
    %v2091 = vmul.f32 128.0, %v2090
    %v2092 = vsub.f32 1.0, %v2091
    %v2093 = vmul.f32 %v2090, %v2092
    %v2094 = vadd.f32 %v2090, %v2093
    %vm2095 = vweird.f32 %v2090
    %v2096 = vsel %vm2095, %v2090, %v2094
    %v2097 = vmul.f32 %v2068, %v2096
    %v2098 = vmul.f32 %v2088, %v2096
    %v2099 = vmul.f32 %v2097, %v2097
    %v2100 = vsub.f32 %v2098, %v2099
    %v2101 = vadd.f32 %v2100, 1e-05
    %v2102 = vrsqrt.pop %v2101
    %v2103 = vmul.f32 %v2102, %v2101
    %v2104 = vmul.f32 %v2103, %v2102
    %v2105 = vmul.f32 0.5, %v2104
    %v2106 = vsub.f32 1.5, %v2105
    %v2107 = vmul.f32 %v2102, %v2106
    %vm2108 = vweird.f32 %v2101
    %vm2109 = vweird.f32 %v2102
    %vm2110 = vmor %vm2108, %vm2109
    %v2111 = vsel %vm2110, %v2102, %v2107
    %v2112 = vmul.f32 %v1774, %v2111
    %v2113 = vmul.f32 %v2097, %v2112
    %v2114 = vsub.f32 %v1775, %v2113
    %v2116 = vsel %vm564, %v2112, 0
    %2118 = vmatpush.msra.mxu0 0.0
    %2119 = vmatpush.msra.mxu0 0.0
    %2120 = vmatpush.msra.mxu0 0.0
    %2121 = vmatpush.msra.mxu0 0.0
    %2122 = vmatpush.msra.mxu0 0.0
    %2123 = vmatpush.msra.mxu0 0.0
    %2124 = vmatpush.msra.mxu0 0.0
    %2125 = vmatpush.msra.mxu0 0.0
    %2126 = vmatpush.msra.mxu0 0.0
    %2127 = vmatpush.msra.mxu0 0.0
    %2128 = vmatpush.msra.mxu0 0.0
    %2129 = vmatpush.msra.mxu0 0.0
    %2130 = vmatpush.msra.mxu0 0.0
    %2131 = vmatpush.msra.mxu0 0.0
    %2132 = vmatpush.msra.mxu0 %v2049
    %2133 = vmatpush.msra.mxu0 %v2048
    %2134 = vmatmul.f32.gmra.mxu0 %v2116
    %v2135 = vpop.f32.mrf.mxu0
    %v2136 = vadd.f32 0.0, %v2135
    %2137 = vdwg.mxu0
    %v2139 = vsel %vm564, %v2114, 0
    %2141 = vmatpush.msra.mxu0 0.0
    %2142 = vmatpush.msra.mxu0 0.0
    %2143 = vmatpush.msra.mxu0 0.0
    %2144 = vmatpush.msra.mxu0 0.0
    %2145 = vmatpush.msra.mxu0 0.0
    %2146 = vmatpush.msra.mxu0 0.0
    %2147 = vmatpush.msra.mxu0 0.0
    %2148 = vmatpush.msra.mxu0 0.0
    %2149 = vmatpush.msra.mxu0 0.0
    %2150 = vmatpush.msra.mxu0 0.0
    %2151 = vmatpush.msra.mxu0 0.0
    %2152 = vmatpush.msra.mxu0 0.0
    %2153 = vmatpush.msra.mxu0 0.0
    %2154 = vmatpush.msra.mxu0 0.0
    %2155 = vmatpush.msra.mxu0 %v2049
    %2156 = vmatpush.msra.mxu0 %v2048
    %2157 = vmatmul.f32.gmra.mxu0 %v2139
    %v2158 = vpop.f32.mrf.mxu0
    %v2159 = vadd.f32 0.0, %v2158
    %2160 = vdwg.mxu0
    %v2161 = vperm.slane %v2136, 0
    %v2162 = vmul.f32 %v1772, %v2161
    %v2163 = vmul.f32 %v1773, %v2161
    %v2164 = vperm.slane %v2159, 0
    %v2165 = vadd.f32 %v2162, %v2164
    %v2166 = vadd.f32 %v2163, %v2164
    %vm2167 = vcmp.gt.f32.partialorder %v2165, 0.0
    %vm2168 = vcmp.gt.f32.partialorder %v2166, 0.0
    %v2169 = vmul.f32 %v2165, 0.03
    %v2170 = vmul.f32 %v2166, 0.03
    %v2171 = vsel %vm2167, %v2165, %v2169
    %v2172 = vsel %vm2168, %v2166, %v2170
    %v2175 = vrot.slane %v2171, 7
    %v2176 = vrot.slane %v2172, 7
    %v2179 = vsel %vm548, 0.0, %v2175
    %v2180 = vsel %vm548, 0.0, %v2176
    %v2181 = vld [vmem:[#allocation9] sm:$0xff]
    %v2182 = vld [vmem:[#allocation9 + $0x8] sm:$0xff]
    %v2183 = vld [vmem:[#allocation9 + $0x10] sm:$0xff]
    %v2184 = vld [vmem:[#allocation9 + $0x18] sm:$0xff]
    %v2185 = vld [vmem:[#allocation9 + $0x20] sm:$0xff]
    %v2186 = vld [vmem:[#allocation9 + $0x28] sm:$0xff]
    %v2187 = vld [vmem:[#allocation9 + $0x30] sm:$0xff]
    %v2188 = vld [vmem:[#allocation9 + $0x38] sm:$0xff]
    %v2189 = vld [vmem:[#allocation9 + $0x40] sm:$0xff]
    %v2190 = vld [vmem:[#allocation9 + $0x48] sm:$0xff]
    %v2191 = vld [vmem:[#allocation9 + $0x50] sm:$0xff]
    %v2192 = vld [vmem:[#allocation9 + $0x58] sm:$0xff]
    %v2193 = vld [vmem:[#allocation9 + $0x60] sm:$0xff]
    %v2194 = vld [vmem:[#allocation9 + $0x68] sm:$0xff]
    %v2195 = vld [vmem:[#allocation9 + $0x70] sm:$0xff]
    %v2196 = vld [vmem:[#allocation9 + $0x78] sm:$0xff]
    %s2197 = scalar_lea.vmem [#allocation9], 128
    %v2198 = vld [vmem:[%s2197] sm:$0xff]
    %v2199 = vld [vmem:[%s2197 + $0x8] sm:$0xff]
    %v2200 = vld [vmem:[%s2197 + $0x10] sm:$0xff]
    %v2201 = vld [vmem:[%s2197 + $0x18] sm:$0xff]
    %v2202 = vld [vmem:[%s2197 + $0x20] sm:$0xff]
    %v2203 = vld [vmem:[%s2197 + $0x28] sm:$0xff]
    %v2204 = vld [vmem:[%s2197 + $0x30] sm:$0xff]
    %v2205 = vld [vmem:[%s2197 + $0x38] sm:$0xff]
    %v2206 = vld [vmem:[%s2197 + $0x40] sm:$0xff]
    %v2207 = vld [vmem:[%s2197 + $0x48] sm:$0xff]
    %v2208 = vld [vmem:[%s2197 + $0x50] sm:$0xff]
    %v2209 = vld [vmem:[%s2197 + $0x58] sm:$0xff]
    %v2210 = vld [vmem:[%s2197 + $0x60] sm:$0xff]
    %v2211 = vld [vmem:[%s2197 + $0x68] sm:$0xff]
    %v2212 = vld [vmem:[%s2197 + $0x70] sm:$0xff]
    %v2213 = vld [vmem:[%s2197 + $0x78] sm:$0xff]
    %2214 = vmatpush.msra.mxu0 %v2213
    %2215 = vmatpush.msra.mxu0 %v2212
    %2216 = vmatpush.msra.mxu0 %v2211
    %2217 = vmatpush.msra.mxu0 %v2210
    %2218 = vmatpush.msra.mxu0 %v2209
    %2219 = vmatpush.msra.mxu0 %v2208
    %2220 = vmatpush.msra.mxu0 %v2207
    %2221 = vmatpush.msra.mxu0 %v2206
    %2222 = vmatpush.msra.mxu0 %v2205
    %2223 = vmatpush.msra.mxu0 %v2204
    %2224 = vmatpush.msra.mxu0 %v2203
    %2225 = vmatpush.msra.mxu0 %v2202
    %2226 = vmatpush.msra.mxu0 %v2201
    %2227 = vmatpush.msra.mxu0 %v2200
    %2228 = vmatpush.msra.mxu0 %v2199
    %2229 = vmatpush.msra.mxu0 %v2198
    %2230 = vmatmul.f32.gmra.mxu0 %v2171
    %v2231 = vpop.f32.mrf.mxu0
    %v2232 = vadd.f32 0.0, %v2231
    %2233 = vmatmul.f32.gmra.mxu0 %v2172
    %v2234 = vpop.f32.mrf.mxu0
    %v2235 = vadd.f32 0.0, %v2234
    %2236 = vdwg.mxu0
    %2237 = vmatpush.msra.mxu0 %v2196
    %2238 = vmatpush.msra.mxu0 %v2195
    %2239 = vmatpush.msra.mxu0 %v2194
    %2240 = vmatpush.msra.mxu0 %v2193
    %2241 = vmatpush.msra.mxu0 %v2192
    %2242 = vmatpush.msra.mxu0 %v2191
    %2243 = vmatpush.msra.mxu0 %v2190
    %2244 = vmatpush.msra.mxu0 %v2189
    %2245 = vmatpush.msra.mxu0 %v2188
    %2246 = vmatpush.msra.mxu0 %v2187
    %2247 = vmatpush.msra.mxu0 %v2186
    %2248 = vmatpush.msra.mxu0 %v2185
    %2249 = vmatpush.msra.mxu0 %v2184
    %2250 = vmatpush.msra.mxu0 %v2183
    %2251 = vmatpush.msra.mxu0 %v2182
    %2252 = vmatpush.msra.mxu0 %v2181
    %2253 = vmatmul.f32.gmra.mxu0 %v2179
    %v2254 = vpop.f32.mrf.mxu0
    %v2255 = vadd.f32 %v2232, %v2254
    %2256 = vmatmul.f32.gmra.mxu0 %v2180
    %v2257 = vpop.f32.mrf.mxu0
    %v2258 = vadd.f32 %v2235, %v2257
    %2259 = vdwg.mxu0
    %v2260 = vrot.slane %v2171, 1
    %v2261 = vrot.slane %v2172, 1
    %v2264 = vsel %vm641, %v2260, 0.0
    %v2265 = vsel %vm641, %v2261, 0.0
    %s2266 = scalar_lea.vmem [#allocation9], 256
    %v2267 = vld [vmem:[%s2266] sm:$0xff]
    %v2268 = vld [vmem:[%s2266 + $0x8] sm:$0xff]
    %v2269 = vld [vmem:[%s2266 + $0x10] sm:$0xff]
    %v2270 = vld [vmem:[%s2266 + $0x18] sm:$0xff]
    %v2271 = vld [vmem:[%s2266 + $0x20] sm:$0xff]
    %v2272 = vld [vmem:[%s2266 + $0x28] sm:$0xff]
    %v2273 = vld [vmem:[%s2266 + $0x30] sm:$0xff]
    %v2274 = vld [vmem:[%s2266 + $0x38] sm:$0xff]
    %v2275 = vld [vmem:[%s2266 + $0x40] sm:$0xff]
    %v2276 = vld [vmem:[%s2266 + $0x48] sm:$0xff]
    %v2277 = vld [vmem:[%s2266 + $0x50] sm:$0xff]
    %v2278 = vld [vmem:[%s2266 + $0x58] sm:$0xff]
    %v2279 = vld [vmem:[%s2266 + $0x60] sm:$0xff]
    %v2280 = vld [vmem:[%s2266 + $0x68] sm:$0xff]
    %v2281 = vld [vmem:[%s2266 + $0x70] sm:$0xff]
    %v2282 = vld [vmem:[%s2266 + $0x78] sm:$0xff]
    %2283 = vmatpush.msra.mxu0 %v2282
    %2284 = vmatpush.msra.mxu0 %v2281
    %2285 = vmatpush.msra.mxu0 %v2280
    %2286 = vmatpush.msra.mxu0 %v2279
    %2287 = vmatpush.msra.mxu0 %v2278
    %2288 = vmatpush.msra.mxu0 %v2277
    %2289 = vmatpush.msra.mxu0 %v2276
    %2290 = vmatpush.msra.mxu0 %v2275
    %2291 = vmatpush.msra.mxu0 %v2274
    %2292 = vmatpush.msra.mxu0 %v2273
    %2293 = vmatpush.msra.mxu0 %v2272
    %2294 = vmatpush.msra.mxu0 %v2271
    %2295 = vmatpush.msra.mxu0 %v2270
    %2296 = vmatpush.msra.mxu0 %v2269
    %2297 = vmatpush.msra.mxu0 %v2268
    %2298 = vmatpush.msra.mxu0 %v2267
    %2299 = vmatmul.f32.gmra.mxu0 %v2264
    %v2300 = vpop.f32.mrf.mxu0
    %v2301 = vadd.f32 0.0, %v2300
    %2302 = vmatmul.f32.gmra.mxu0 %v2265
    %v2303 = vpop.f32.mrf.mxu0
    %v2304 = vadd.f32 0.0, %v2303
    %2305 = vdwg.mxu0
    %v2306 = vadd.f32 %v2255, %v2301
    %v2307 = vadd.f32 %v2258, %v2304
    %v2308 = vld [vmem:[%s23] sm:$0x1]
    %v2309 = vld [vmem:[%s25] sm:$0x1]
    %v2310 = vadd.f32 %v2306, %v2307
    %v2311 = vrot.slane %v2310, 4
    %v2312 = vadd.f32 %v2310, %v2311
    %v2313 = vrot.slane %v2312, 2
    %v2314 = vadd.f32 %v2312, %v2313
    %v2315 = vrot.slane %v2314, 1
    %v2316 = vadd.f32 %v2314, %v2315
    %v2317 = vmul.f32 %v2306, %v2306
    %v2318 = vmul.f32 %v2307, %v2307
    %v2319 = vadd.f32 %v2317, %v2318
    %v2320 = vrot.slane %v2319, 4
    %v2321 = vadd.f32 %v2319, %v2320
    %v2322 = vrot.slane %v2321, 2
    %v2323 = vadd.f32 %v2321, %v2322
    %v2324 = vrot.slane %v2323, 1
    %v2325 = vadd.f32 %v2323, %v2324
    %2326 = vmatpush.msra.mxu0 %v2031
    %2327 = vmatpush.msra.mxu0 %v2030
    %2328 = vmatpush.msra.mxu0 %v2029
    %2329 = vmatpush.msra.mxu0 %v2028
    %2330 = vmatpush.msra.mxu0 %v2027
    %2331 = vmatpush.msra.mxu0 %v2026
    %2332 = vmatpush.msra.mxu0 %v2025
    %2333 = vmatpush.msra.mxu0 %v2024
    %2334 = vmatpush.msra.mxu0 %v2023
    %2335 = vmatpush.msra.mxu0 %v2022
    %2336 = vmatpush.msra.mxu0 %v2021
    %2337 = vmatpush.msra.mxu0 %v2020
    %2338 = vmatpush.msra.mxu0 %v2019
    %2339 = vmatpush.msra.mxu0 %v2018
    %2340 = vmatpush.msra.mxu0 %v2017
    %2341 = vmatpush.msra.mxu0 %v2016
    %2342 = vmatmul.f32.gmra.mxu0 %v2316
    %v2343 = vpop.f32.mrf.mxu0
    %v2344 = vadd.f32 0.0, %v2343
    %2345 = vdwg.mxu0
    %2346 = vmatpush.msra.mxu0 %v2031
    %2347 = vmatpush.msra.mxu0 %v2030
    %2348 = vmatpush.msra.mxu0 %v2029
    %2349 = vmatpush.msra.mxu0 %v2028
    %2350 = vmatpush.msra.mxu0 %v2027
    %2351 = vmatpush.msra.mxu0 %v2026
    %2352 = vmatpush.msra.mxu0 %v2025
    %2353 = vmatpush.msra.mxu0 %v2024
    %2354 = vmatpush.msra.mxu0 %v2023
    %2355 = vmatpush.msra.mxu0 %v2022
    %2356 = vmatpush.msra.mxu0 %v2021
    %2357 = vmatpush.msra.mxu0 %v2020
    %2358 = vmatpush.msra.mxu0 %v2019
    %2359 = vmatpush.msra.mxu0 %v2018
    %2360 = vmatpush.msra.mxu0 %v2017
    %2361 = vmatpush.msra.mxu0 %v2016
    %2362 = vmatmul.f32.gmra.mxu0 %v2325
    %v2363 = vpop.f32.mrf.mxu0
    %v2364 = vadd.f32 0.0, %v2363
    %2365 = vdwg.mxu0
    %v2366 = vmul.f32 %v2344, %v2096
    %v2367 = vmul.f32 %v2364, %v2096
    %v2368 = vmul.f32 %v2366, %v2366
    %v2369 = vsub.f32 %v2367, %v2368
    %v2370 = vadd.f32 %v2369, 1e-05
    %v2371 = vrsqrt.pop %v2370
    %v2372 = vmul.f32 %v2371, %v2370
    %v2373 = vmul.f32 %v2372, %v2371
    %v2374 = vmul.f32 0.5, %v2373
    %v2375 = vsub.f32 1.5, %v2374
    %v2376 = vmul.f32 %v2371, %v2375
    %vm2377 = vweird.f32 %v2370
    %vm2378 = vweird.f32 %v2371
    %vm2379 = vmor %vm2377, %vm2378
    %v2380 = vsel %vm2379, %v2371, %v2376
    %v2381 = vmul.f32 %v2308, %v2380
    %v2382 = vmul.f32 %v2366, %v2381
    %v2383 = vsub.f32 %v2309, %v2382
    %v2385 = vsel %vm564, %v2381, 0
    %2387 = vmatpush.msra.mxu0 0.0
    %2388 = vmatpush.msra.mxu0 0.0
    %2389 = vmatpush.msra.mxu0 0.0
    %2390 = vmatpush.msra.mxu0 0.0
    %2391 = vmatpush.msra.mxu0 0.0
    %2392 = vmatpush.msra.mxu0 0.0
    %2393 = vmatpush.msra.mxu0 0.0
    %2394 = vmatpush.msra.mxu0 0.0
    %2395 = vmatpush.msra.mxu0 0.0
    %2396 = vmatpush.msra.mxu0 0.0
    %2397 = vmatpush.msra.mxu0 0.0
    %2398 = vmatpush.msra.mxu0 0.0
    %2399 = vmatpush.msra.mxu0 0.0
    %2400 = vmatpush.msra.mxu0 0.0
    %2401 = vmatpush.msra.mxu0 %v2049
    %2402 = vmatpush.msra.mxu0 %v2048
    %2403 = vmatmul.f32.gmra.mxu0 %v2385
    %v2404 = vpop.f32.mrf.mxu0
    %v2405 = vadd.f32 0.0, %v2404
    %2406 = vdwg.mxu0
    %v2408 = vsel %vm564, %v2383, 0
    %2410 = vmatpush.msra.mxu0 0.0
    %2411 = vmatpush.msra.mxu0 0.0
    %2412 = vmatpush.msra.mxu0 0.0
    %2413 = vmatpush.msra.mxu0 0.0
    %2414 = vmatpush.msra.mxu0 0.0
    %2415 = vmatpush.msra.mxu0 0.0
    %2416 = vmatpush.msra.mxu0 0.0
    %2417 = vmatpush.msra.mxu0 0.0
    %2418 = vmatpush.msra.mxu0 0.0
    %2419 = vmatpush.msra.mxu0 0.0
    %2420 = vmatpush.msra.mxu0 0.0
    %2421 = vmatpush.msra.mxu0 0.0
    %2422 = vmatpush.msra.mxu0 0.0
    %2423 = vmatpush.msra.mxu0 0.0
    %2424 = vmatpush.msra.mxu0 %v2049
    %2425 = vmatpush.msra.mxu0 %v2048
    %2426 = vmatmul.f32.gmra.mxu0 %v2408
    %v2427 = vpop.f32.mrf.mxu0
    %v2428 = vadd.f32 0.0, %v2427
    %2429 = vdwg.mxu0
    %v2430 = vperm.slane %v2405, 0
    %v2431 = vmul.f32 %v2306, %v2430
    %v2432 = vmul.f32 %v2307, %v2430
    %v2433 = vperm.slane %v2428, 0
    %v2434 = vadd.f32 %v2431, %v2433
    %v2435 = vadd.f32 %v2432, %v2433
    %vm2436 = vcmp.gt.f32.partialorder %v2434, 0.0
    %vm2437 = vcmp.gt.f32.partialorder %v2435, 0.0
    %v2438 = vmul.f32 %v2434, 0.03
    %v2439 = vmul.f32 %v2435, 0.03
    %v2440 = vsel %vm2436, %v2434, %v2438
    %v2441 = vsel %vm2437, %v2435, %v2439
    %2444 = vrot.lane.b32.xlu0 %v2440, 112
    %v2445 = vpop.permute.xlu0 %2444
    %2446 = vrot.lane.b32.xlu0 %v2441, 112
    %v2447 = vpop.permute.xlu0 %2446
    %vm2450 = vcmask 916480
    %v2451 = vsel %vm2450, %v2445, %v2440
    %v2452 = vsel %vm2450, %v2447, %v2441
    %v2453 = vmax.f32 %v2440, %v2451
    %v2454 = vmax.f32 %v2441, %v2452
    %v2457 = vrot.slane %v2453, 2
    %v2458 = vrot.slane %v2453, 4
    %v2459 = vrot.slane %v2453, 6
    %v2460 = vrot.slane %v2454, 2
    %v2461 = vrot.slane %v2454, 4
    %v2462 = vrot.slane %v2454, 6
    %v2469 = vrot.slane %v2453, 7
    %v2470 = vrot.slane %v2469, 2
    %v2471 = vrot.slane %v2457, 7
    %v2472 = vrot.slane %v2471, 2
    %v2473 = vrot.slane %v2458, 7
    %v2474 = vrot.slane %v2473, 2
    %v2475 = vrot.slane %v2459, 7
    %v2476 = vrot.slane %v2475, 2
    %v2477 = vrot.slane %v2454, 7
    %v2478 = vrot.slane %v2477, 2
    %v2479 = vrot.slane %v2460, 7
    %v2480 = vrot.slane %v2479, 2
    %v2481 = vrot.slane %v2461, 7
    %v2482 = vrot.slane %v2481, 2
    %v2483 = vrot.slane %v2462, 7
    %v2484 = vrot.slane %v2483, 2
    %v2493 = vmax.f32 %v2453, %v2470
    %v2494 = vmax.f32 %v2457, %v2472
    %v2495 = vmax.f32 %v2458, %v2474
    %v2496 = vmax.f32 %v2459, %v2476
    %v2497 = vmax.f32 %v2454, %v2478
    %v2498 = vmax.f32 %v2460, %v2480
    %v2499 = vmax.f32 %v2461, %v2482
    %v2500 = vmax.f32 %v2462, %v2484
    %v2507 = vperm.slane %v2493, 0
    %v2508 = vperm.slane %v2494, 0
    %v2509 = vperm.slane %v2495, 0
    %v2510 = vperm.slane %v2497, 0
    %v2511 = vperm.slane %v2498, 0
    %v2512 = vperm.slane %v2499, 0
    %v2513 = vsel %vm1594, %v2508, %v2507
    %v2514 = vsel %vm1596, %v2509, %v2513
    %v2515 = vsel %vm1594, %v2511, %v2510
    %v2516 = vsel %vm1596, %v2512, %v2515
    %v2519 = vsel %vm548, 0.0, %v2514
    %v2520 = vsel %vm548, 0.0, %v2516
    %v2521 = vld [vmem:[#allocation10] sm:$0xff]
    %v2522 = vld [vmem:[#allocation10 + $0x8] sm:$0xff]
    %v2523 = vld [vmem:[#allocation10 + $0x10] sm:$0xff]
    %v2524 = vld [vmem:[#allocation10 + $0x18] sm:$0xff]
    %v2525 = vld [vmem:[#allocation10 + $0x20] sm:$0xff]
    %v2526 = vld [vmem:[#allocation10 + $0x28] sm:$0xff]
    %v2527 = vld [vmem:[#allocation10 + $0x30] sm:$0xff]
    %v2528 = vld [vmem:[#allocation10 + $0x38] sm:$0xff]
    %v2529 = vld [vmem:[#allocation10 + $0x40] sm:$0xff]
    %v2530 = vld [vmem:[#allocation10 + $0x48] sm:$0xff]
    %v2531 = vld [vmem:[#allocation10 + $0x50] sm:$0xff]
    %v2532 = vld [vmem:[#allocation10 + $0x58] sm:$0xff]
    %v2533 = vld [vmem:[#allocation10 + $0x60] sm:$0xff]
    %v2534 = vld [vmem:[#allocation10 + $0x68] sm:$0xff]
    %v2535 = vld [vmem:[#allocation10 + $0x70] sm:$0xff]
    %v2536 = vld [vmem:[#allocation10 + $0x78] sm:$0xff]
    %s2537 = scalar_lea.vmem [#allocation10], 128
    %v2538 = vld [vmem:[%s2537] sm:$0xff]
    %v2539 = vld [vmem:[%s2537 + $0x8] sm:$0xff]
    %v2540 = vld [vmem:[%s2537 + $0x10] sm:$0xff]
    %v2541 = vld [vmem:[%s2537 + $0x18] sm:$0xff]
    %v2542 = vld [vmem:[%s2537 + $0x20] sm:$0xff]
    %v2543 = vld [vmem:[%s2537 + $0x28] sm:$0xff]
    %v2544 = vld [vmem:[%s2537 + $0x30] sm:$0xff]
    %v2545 = vld [vmem:[%s2537 + $0x38] sm:$0xff]
    %v2546 = vld [vmem:[%s2537 + $0x40] sm:$0xff]
    %v2547 = vld [vmem:[%s2537 + $0x48] sm:$0xff]
    %v2548 = vld [vmem:[%s2537 + $0x50] sm:$0xff]
    %v2549 = vld [vmem:[%s2537 + $0x58] sm:$0xff]
    %v2550 = vld [vmem:[%s2537 + $0x60] sm:$0xff]
    %v2551 = vld [vmem:[%s2537 + $0x68] sm:$0xff]
    %v2552 = vld [vmem:[%s2537 + $0x70] sm:$0xff]
    %v2553 = vld [vmem:[%s2537 + $0x78] sm:$0xff]
    %v2556 = vperm.slane %v2496, 0
    %v2557 = vperm.slane %v2500, 0
    %v2558 = vsel %vm1653, %v2508, %v2507
    %v2559 = vsel %vm1594, %v2509, %v2558
    %v2560 = vsel %vm1596, %v2556, %v2559
    %v2561 = vsel %vm1598, %v2510, %v2560
    %v2562 = vsel %vm1600, %v2511, %v2561
    %v2563 = vsel %vm1602, %v2512, %v2562
    %v2564 = vsel %vm1604, %v2557, %v2563
    %2566 = vmatpush.msra.mxu0 %v2553
    %2567 = vmatpush.msra.mxu0 %v2552
    %2568 = vmatpush.msra.mxu0 %v2551
    %2569 = vmatpush.msra.mxu0 %v2550
    %2570 = vmatpush.msra.mxu0 %v2549
    %2571 = vmatpush.msra.mxu0 %v2548
    %2572 = vmatpush.msra.mxu0 %v2547
    %2573 = vmatpush.msra.mxu0 %v2546
    %2574 = vmatpush.msra.mxu0 %v2545
    %2575 = vmatpush.msra.mxu0 %v2544
    %2576 = vmatpush.msra.mxu0 %v2543
    %2577 = vmatpush.msra.mxu0 %v2542
    %2578 = vmatpush.msra.mxu0 %v2541
    %2579 = vmatpush.msra.mxu0 %v2540
    %2580 = vmatpush.msra.mxu0 %v2539
    %2581 = vmatpush.msra.mxu0 %v2538
    %2582 = vmatmul.f32.gmra.mxu0 %v2564
    %v2583 = vpop.f32.mrf.mxu0
    %v2584 = vadd.f32 0.0, %v2583
    %2585 = vdwg.mxu0
    %2588 = vst [vmem:[#allocation1] ss:$2 sm:$0xff] %v2519
    %s2589 = scalar_lea.vmem [#allocation1], 1
    %2590 = vst [vmem:[%s2589] ss:$2 sm:$0xff] %v2520
    %v2591 = vld.sshfl [vmem:[#allocation1] sm:$0xff pattern:$0x75316420]
    %2593 = vmatpush.msra.mxu0 %v2536
    %2594 = vmatpush.msra.mxu0 %v2535
    %2595 = vmatpush.msra.mxu0 %v2534
    %2596 = vmatpush.msra.mxu0 %v2533
    %2597 = vmatpush.msra.mxu0 %v2532
    %2598 = vmatpush.msra.mxu0 %v2531
    %2599 = vmatpush.msra.mxu0 %v2530
    %2600 = vmatpush.msra.mxu0 %v2529
    %2601 = vmatpush.msra.mxu0 %v2528
    %2602 = vmatpush.msra.mxu0 %v2527
    %2603 = vmatpush.msra.mxu0 %v2526
    %2604 = vmatpush.msra.mxu0 %v2525
    %2605 = vmatpush.msra.mxu0 %v2524
    %2606 = vmatpush.msra.mxu0 %v2523
    %2607 = vmatpush.msra.mxu0 %v2522
    %2608 = vmatpush.msra.mxu0 %v2521
    %2609 = vmatmul.f32.gmra.mxu0 %v2591
    %v2610 = vpop.f32.mrf.mxu0
    %v2611 = vadd.f32 %v2584, %v2610
    %2612 = vdwg.mxu0
    %v2613 = vsel %vm1653, %v2509, %v2508
    %v2614 = vsel %vm1594, %v2556, %v2613
    %v2615 = vsel %vm1653, %v2512, %v2511
    %v2616 = vsel %vm1594, %v2557, %v2615
    %vm2619 = vcmask 1042432
    %v2620 = vsel %vm2619, %v2614, 0.0
    %v2621 = vsel %vm2619, %v2616, 0.0
    %s2622 = scalar_lea.vmem [#allocation10], 256
    %v2623 = vld [vmem:[%s2622] sm:$0xff]
    %v2624 = vld [vmem:[%s2622 + $0x8] sm:$0xff]
    %v2625 = vld [vmem:[%s2622 + $0x10] sm:$0xff]
    %v2626 = vld [vmem:[%s2622 + $0x18] sm:$0xff]
    %v2627 = vld [vmem:[%s2622 + $0x20] sm:$0xff]
    %v2628 = vld [vmem:[%s2622 + $0x28] sm:$0xff]
    %v2629 = vld [vmem:[%s2622 + $0x30] sm:$0xff]
    %v2630 = vld [vmem:[%s2622 + $0x38] sm:$0xff]
    %v2631 = vld [vmem:[%s2622 + $0x40] sm:$0xff]
    %v2632 = vld [vmem:[%s2622 + $0x48] sm:$0xff]
    %v2633 = vld [vmem:[%s2622 + $0x50] sm:$0xff]
    %v2634 = vld [vmem:[%s2622 + $0x58] sm:$0xff]
    %v2635 = vld [vmem:[%s2622 + $0x60] sm:$0xff]
    %v2636 = vld [vmem:[%s2622 + $0x68] sm:$0xff]
    %v2637 = vld [vmem:[%s2622 + $0x70] sm:$0xff]
    %v2638 = vld [vmem:[%s2622 + $0x78] sm:$0xff]
    %2641 = vst [vmem:[#allocation1] ss:$2 sm:$0xff] %v2620
    %s2642 = scalar_lea.vmem [#allocation1], 1
    %2643 = vst [vmem:[%s2642] ss:$2 sm:$0xff] %v2621
    %v2644 = vld.sshfl [vmem:[#allocation1] sm:$0xff pattern:$0x75316420]
    %2646 = vmatpush.msra.mxu0 %v2638
    %2647 = vmatpush.msra.mxu0 %v2637
    %2648 = vmatpush.msra.mxu0 %v2636
    %2649 = vmatpush.msra.mxu0 %v2635
    %2650 = vmatpush.msra.mxu0 %v2634
    %2651 = vmatpush.msra.mxu0 %v2633
    %2652 = vmatpush.msra.mxu0 %v2632
    %2653 = vmatpush.msra.mxu0 %v2631
    %2654 = vmatpush.msra.mxu0 %v2630
    %2655 = vmatpush.msra.mxu0 %v2629
    %2656 = vmatpush.msra.mxu0 %v2628
    %2657 = vmatpush.msra.mxu0 %v2627
    %2658 = vmatpush.msra.mxu0 %v2626
    %2659 = vmatpush.msra.mxu0 %v2625
    %2660 = vmatpush.msra.mxu0 %v2624
    %2661 = vmatpush.msra.mxu0 %v2623
    %2662 = vmatmul.f32.gmra.mxu0 %v2644
    %v2663 = vpop.f32.mrf.mxu0
    %v2664 = vadd.f32 0.0, %v2663
    %2665 = vdwg.mxu0
    %v2666 = vadd.f32 %v2611, %v2664
    %v2667 = vld [vmem:[%s29] sm:$0x1]
    %v2668 = vld [vmem:[%s31] sm:$0x1]
    %v2669 = vrot.slane %v2666, 4
    %v2670 = vadd.f32 %v2666, %v2669
    %v2671 = vrot.slane %v2670, 2
    %v2672 = vadd.f32 %v2670, %v2671
    %v2673 = vrot.slane %v2672, 1
    %v2674 = vadd.f32 %v2672, %v2673
    %v2675 = vmul.f32 %v2666, %v2666
    %v2676 = vrot.slane %v2675, 4
    %v2677 = vadd.f32 %v2675, %v2676
    %v2678 = vrot.slane %v2677, 2
    %v2679 = vadd.f32 %v2677, %v2678
    %v2680 = vrot.slane %v2679, 1
    %v2681 = vadd.f32 %v2679, %v2680
    %vm2682 = vcmp.lt.s32.totalorder %v723, 0
    %v2683 = vsub.s32 0, %v723
    %v2684 = vsel %vm2682, %v2683, %v723
    %v2685 = vshrl.u32 %v2684, 5
    %v2686 = vand.u32 %v2684, 31
    %v2687 = vsub.s32 0, %v2686
    %v2688 = vsel %vm2682, %v2687, %v2686
    %vm2689 = vcmp.lt.s32.totalorder %v724, 0
    %v2690 = vsub.s32 0, %v724
    %v2691 = vsel %vm2689, %v2690, %v724
    %v2692 = vshrl.u32 %v2691, 5
    %v2693 = vand.u32 %v2691, 31
    %v2694 = vsub.s32 0, %v2693
    %v2695 = vsel %vm2689, %v2694, %v2693
    %vm2696 = vcmp.lt.s32.totalorder %v725, 0
    %v2697 = vsub.s32 0, %v725
    %v2698 = vsel %vm2696, %v2697, %v725
    %v2699 = vshrl.u32 %v2698, 5
    %v2700 = vand.u32 %v2698, 31
    %v2701 = vsub.s32 0, %v2700
    %v2702 = vsel %vm2696, %v2701, %v2700
    %vm2703 = vcmp.lt.s32.totalorder %v726, 0
    %v2704 = vsub.s32 0, %v726
    %v2705 = vsel %vm2703, %v2704, %v726
    %v2706 = vshrl.u32 %v2705, 5
    %v2707 = vand.u32 %v2705, 31
    %v2708 = vsub.s32 0, %v2707
    %v2709 = vsel %vm2703, %v2708, %v2707
    %vm2710 = vcmp.lt.s32.totalorder %v727, 0
    %v2711 = vsub.s32 0, %v727
    %v2712 = vsel %vm2710, %v2711, %v727
    %v2713 = vshrl.u32 %v2712, 5
    %v2714 = vand.u32 %v2712, 31
    %v2715 = vsub.s32 0, %v2714
    %v2716 = vsel %vm2710, %v2715, %v2714
    %vm2717 = vcmp.lt.s32.totalorder %v728, 0
    %v2718 = vsub.s32 0, %v728
    %v2719 = vsel %vm2717, %v2718, %v728
    %v2720 = vshrl.u32 %v2719, 5
    %v2721 = vand.u32 %v2719, 31
    %v2722 = vsub.s32 0, %v2721
    %v2723 = vsel %vm2717, %v2722, %v2721
    %vm2724 = vcmp.lt.s32.totalorder %v729, 0
    %v2725 = vsub.s32 0, %v729
    %v2726 = vsel %vm2724, %v2725, %v729
    %v2727 = vshrl.u32 %v2726, 5
    %v2728 = vand.u32 %v2726, 31
    %v2729 = vsub.s32 0, %v2728
    %v2730 = vsel %vm2724, %v2729, %v2728
    %vm2731 = vcmp.lt.s32.totalorder %v730, 0
    %v2732 = vsub.s32 0, %v730
    %v2733 = vsel %vm2731, %v2732, %v730
    %v2734 = vshrl.u32 %v2733, 5
    %v2735 = vand.u32 %v2733, 31
    %v2736 = vsub.s32 0, %v2735
    %v2737 = vsel %vm2731, %v2736, %v2735
    %vm2738 = vcmp.lt.s32.totalorder %v731, 0
    %v2739 = vsub.s32 0, %v731
    %v2740 = vsel %vm2738, %v2739, %v731
    %v2741 = vshrl.u32 %v2740, 5
    %v2742 = vand.u32 %v2740, 31
    %v2743 = vsub.s32 0, %v2742
    %v2744 = vsel %vm2738, %v2743, %v2742
    %vm2745 = vcmp.lt.s32.totalorder %v732, 0
    %v2746 = vsub.s32 0, %v732
    %v2747 = vsel %vm2745, %v2746, %v732
    %v2748 = vshrl.u32 %v2747, 5
    %v2749 = vand.u32 %v2747, 31
    %v2750 = vsub.s32 0, %v2749
    %v2751 = vsel %vm2745, %v2750, %v2749
    %vm2752 = vcmp.lt.s32.totalorder %v733, 0
    %v2753 = vsub.s32 0, %v733
    %v2754 = vsel %vm2752, %v2753, %v733
    %v2755 = vshrl.u32 %v2754, 5
    %v2756 = vand.u32 %v2754, 31
    %v2757 = vsub.s32 0, %v2756
    %v2758 = vsel %vm2752, %v2757, %v2756
    %vm2759 = vcmp.lt.s32.totalorder %v734, 0
    %v2760 = vsub.s32 0, %v734
    %v2761 = vsel %vm2759, %v2760, %v734
    %v2762 = vshrl.u32 %v2761, 5
    %v2763 = vand.u32 %v2761, 31
    %v2764 = vsub.s32 0, %v2763
    %v2765 = vsel %vm2759, %v2764, %v2763
    %vm2766 = vcmp.lt.s32.totalorder %v735, 0
    %v2767 = vsub.s32 0, %v735
    %v2768 = vsel %vm2766, %v2767, %v735
    %v2769 = vshrl.u32 %v2768, 5
    %v2770 = vand.u32 %v2768, 31
    %v2771 = vsub.s32 0, %v2770
    %v2772 = vsel %vm2766, %v2771, %v2770
    %vm2773 = vcmp.lt.s32.totalorder %v736, 0
    %v2774 = vsub.s32 0, %v736
    %v2775 = vsel %vm2773, %v2774, %v736
    %v2776 = vshrl.u32 %v2775, 5
    %v2777 = vand.u32 %v2775, 31
    %v2778 = vsub.s32 0, %v2777
    %v2779 = vsel %vm2773, %v2778, %v2777
    %vm2780 = vcmp.lt.s32.totalorder %v737, 0
    %v2781 = vsub.s32 0, %v737
    %v2782 = vsel %vm2780, %v2781, %v737
    %v2783 = vshrl.u32 %v2782, 5
    %v2784 = vand.u32 %v2782, 31
    %v2785 = vsub.s32 0, %v2784
    %v2786 = vsel %vm2780, %v2785, %v2784
    %vm2787 = vcmp.lt.s32.totalorder %v738, 0
    %v2788 = vsub.s32 0, %v738
    %v2789 = vsel %vm2787, %v2788, %v738
    %v2790 = vshrl.u32 %v2789, 5
    %v2791 = vand.u32 %v2789, 31
    %v2792 = vsub.s32 0, %v2791
    %v2793 = vsel %vm2787, %v2792, %v2791
    %vm2794 = vcmp.ne.s32.totalorder %v2688, 0
    %vm2795 = vcmp.ne.s32.totalorder %v2695, 0
    %vm2796 = vcmp.ne.s32.totalorder %v2702, 0
    %vm2797 = vcmp.ne.s32.totalorder %v2709, 0
    %vm2798 = vcmp.ne.s32.totalorder %v2716, 0
    %vm2799 = vcmp.ne.s32.totalorder %v2723, 0
    %vm2800 = vcmp.ne.s32.totalorder %v2730, 0
    %vm2801 = vcmp.ne.s32.totalorder %v2737, 0
    %vm2802 = vcmp.ne.s32.totalorder %v2744, 0
    %vm2803 = vcmp.ne.s32.totalorder %v2751, 0
    %vm2804 = vcmp.ne.s32.totalorder %v2758, 0
    %vm2805 = vcmp.ne.s32.totalorder %v2765, 0
    %vm2806 = vcmp.ne.s32.totalorder %v2772, 0
    %vm2807 = vcmp.ne.s32.totalorder %v2779, 0
    %vm2808 = vcmp.ne.s32.totalorder %v2786, 0
    %vm2809 = vcmp.ne.s32.totalorder %v2793, 0
    %vm2810 = vcmp.lt.s32.totalorder %v2688, 0
    %vm2811 = vcmp.lt.s32.totalorder %v2695, 0
    %vm2812 = vcmp.lt.s32.totalorder %v2702, 0
    %vm2813 = vcmp.lt.s32.totalorder %v2709, 0
    %vm2814 = vcmp.lt.s32.totalorder %v2716, 0
    %vm2815 = vcmp.lt.s32.totalorder %v2723, 0
    %vm2816 = vcmp.lt.s32.totalorder %v2730, 0
    %vm2817 = vcmp.lt.s32.totalorder %v2737, 0
    %vm2818 = vcmp.lt.s32.totalorder %v2744, 0
    %vm2819 = vcmp.lt.s32.totalorder %v2751, 0
    %vm2820 = vcmp.lt.s32.totalorder %v2758, 0
    %vm2821 = vcmp.lt.s32.totalorder %v2765, 0
    %vm2822 = vcmp.lt.s32.totalorder %v2772, 0
    %vm2823 = vcmp.lt.s32.totalorder %v2779, 0
    %vm2824 = vcmp.lt.s32.totalorder %v2786, 0
    %vm2825 = vcmp.lt.s32.totalorder %v2793, 0
    %vm2826 = vmand %vm2810, %vm2794
    %vm2827 = vmand %vm2811, %vm2795
    %vm2828 = vmand %vm2812, %vm2796
    %vm2829 = vmand %vm2813, %vm2797
    %vm2830 = vmand %vm2814, %vm2798
    %vm2831 = vmand %vm2815, %vm2799
    %vm2832 = vmand %vm2816, %vm2800
    %vm2833 = vmand %vm2817, %vm2801
    %vm2834 = vmand %vm2818, %vm2802
    %vm2835 = vmand %vm2819, %vm2803
    %vm2836 = vmand %vm2820, %vm2804
    %vm2837 = vmand %vm2821, %vm2805
    %vm2838 = vmand %vm2822, %vm2806
    %vm2839 = vmand %vm2823, %vm2807
    %vm2840 = vmand %vm2824, %vm2808
    %vm2841 = vmand %vm2825, %vm2809
    %v2842 = vadd.s32 %v2688, 32
    %v2843 = vadd.s32 %v2695, 32
    %v2844 = vadd.s32 %v2702, 32
    %v2845 = vadd.s32 %v2709, 32
    %v2846 = vadd.s32 %v2716, 32
    %v2847 = vadd.s32 %v2723, 32
    %v2848 = vadd.s32 %v2730, 32
    %v2849 = vadd.s32 %v2737, 32
    %v2850 = vadd.s32 %v2744, 32
    %v2851 = vadd.s32 %v2751, 32
    %v2852 = vadd.s32 %v2758, 32
    %v2853 = vadd.s32 %v2765, 32
    %v2854 = vadd.s32 %v2772, 32
    %v2855 = vadd.s32 %v2779, 32
    %v2856 = vadd.s32 %v2786, 32
    %v2857 = vadd.s32 %v2793, 32
    %v2858 = vsel %vm2826, %v2842, %v2688
    %v2859 = vsel %vm2827, %v2843, %v2695
    %v2860 = vsel %vm2828, %v2844, %v2702
    %v2861 = vsel %vm2829, %v2845, %v2709
    %v2862 = vsel %vm2830, %v2846, %v2716
    %v2863 = vsel %vm2831, %v2847, %v2723
    %v2864 = vsel %vm2832, %v2848, %v2730
    %v2865 = vsel %vm2833, %v2849, %v2737
    %v2866 = vsel %vm2834, %v2850, %v2744
    %v2867 = vsel %vm2835, %v2851, %v2751
    %v2868 = vsel %vm2836, %v2852, %v2758
    %v2869 = vsel %vm2837, %v2853, %v2765
    %v2870 = vsel %vm2838, %v2854, %v2772
    %v2871 = vsel %vm2839, %v2855, %v2779
    %v2872 = vsel %vm2840, %v2856, %v2786
    %v2873 = vsel %vm2841, %v2857, %v2793
    %vm2874 = vcmp.eq.s32.totalorder %v2858, %v932
    %vm2875 = vcmp.eq.s32.totalorder %v2859, %v932
    %vm2876 = vcmp.eq.s32.totalorder %v2860, %v932
    %vm2877 = vcmp.eq.s32.totalorder %v2861, %v932
    %vm2878 = vcmp.eq.s32.totalorder %v2862, %v932
    %vm2879 = vcmp.eq.s32.totalorder %v2863, %v932
    %vm2880 = vcmp.eq.s32.totalorder %v2864, %v932
    %vm2881 = vcmp.eq.s32.totalorder %v2865, %v932
    %vm2882 = vcmp.eq.s32.totalorder %v2866, %v932
    %vm2883 = vcmp.eq.s32.totalorder %v2867, %v932
    %vm2884 = vcmp.eq.s32.totalorder %v2868, %v932
    %vm2885 = vcmp.eq.s32.totalorder %v2869, %v932
    %vm2886 = vcmp.eq.s32.totalorder %v2870, %v932
    %vm2887 = vcmp.eq.s32.totalorder %v2871, %v932
    %vm2888 = vcmp.eq.s32.totalorder %v2872, %v932
    %vm2889 = vcmp.eq.s32.totalorder %v2873, %v932
    %v2890 = vsel %vm2874, 1, 0
    %v2891 = vsel %vm2875, 1, 0
    %v2892 = vsel %vm2876, 1, 0
    %v2893 = vsel %vm2877, 1, 0
    %v2894 = vsel %vm2878, 1, 0
    %v2895 = vsel %vm2879, 1, 0
    %v2896 = vsel %vm2880, 1, 0
    %v2897 = vsel %vm2881, 1, 0
    %v2898 = vsel %vm2882, 1, 0
    %v2899 = vsel %vm2883, 1, 0
    %v2900 = vsel %vm2884, 1, 0
    %v2901 = vsel %vm2885, 1, 0
    %v2902 = vsel %vm2886, 1, 0
    %v2903 = vsel %vm2887, 1, 0
    %v2904 = vsel %vm2888, 1, 0
    %v2905 = vsel %vm2889, 1, 0
    %v2906 = vcvt.s32.f32 %v2890
    %v2907 = vcvt.s32.f32 %v2891
    %v2908 = vcvt.s32.f32 %v2892
    %v2909 = vcvt.s32.f32 %v2893
    %v2910 = vcvt.s32.f32 %v2894
    %v2911 = vcvt.s32.f32 %v2895
    %v2912 = vcvt.s32.f32 %v2896
    %v2913 = vcvt.s32.f32 %v2897
    %v2914 = vcvt.s32.f32 %v2898
    %v2915 = vcvt.s32.f32 %v2899
    %v2916 = vcvt.s32.f32 %v2900
    %v2917 = vcvt.s32.f32 %v2901
    %v2918 = vcvt.s32.f32 %v2902
    %v2919 = vcvt.s32.f32 %v2903
    %v2920 = vcvt.s32.f32 %v2904
    %v2921 = vcvt.s32.f32 %v2905
    %vm2922 = vcmp.lt.s32.totalorder %v932, 0
    %v2923 = vsub.s32 0, %v932
    %v2924 = vsel %vm2922, %v2923, %v932
    %v2925 = vshrl.u32 %v2924, 5
    %v2926 = vand.u32 %v2924, 31
    %v2927 = vsub.s32 0, %v2926
    %v2928 = vsel %vm2922, %v2927, %v2926
    %vm2929 = vcmp.ne.s32.totalorder %v2928, 0
    %vm2930 = vcmp.lt.s32.totalorder %v2928, 0
    %vm2931 = vmand %vm2930, %vm2929
    %v2932 = vadd.s32 %v2928, 32
    %v2933 = vsel %vm2931, %v2932, %v2928
    %vm2934 = vcmp.eq.s32.totalorder %v723, %v2933
    %vm2935 = vcmp.eq.s32.totalorder %v724, %v2933
    %vm2936 = vcmp.eq.s32.totalorder %v725, %v2933
    %vm2937 = vcmp.eq.s32.totalorder %v726, %v2933
    %v2938 = vsel %vm2934, 1, 0
    %v2939 = vsel %vm2935, 1, 0
    %v2940 = vsel %vm2936, 1, 0
    %v2941 = vsel %vm2937, 1, 0
    %v2942 = vcvt.s32.f32 %v2938
    %v2943 = vcvt.s32.f32 %v2939
    %v2944 = vcvt.s32.f32 %v2940
    %v2945 = vcvt.s32.f32 %v2941
    %2946 = vmatpush.msra.mxu0 %v2921
    %2947 = vmatpush.msra.mxu0 %v2920
    %2948 = vmatpush.msra.mxu0 %v2919
    %2949 = vmatpush.msra.mxu0 %v2918
    %2950 = vmatpush.msra.mxu0 %v2917
    %2951 = vmatpush.msra.mxu0 %v2916
    %2952 = vmatpush.msra.mxu0 %v2915
    %2953 = vmatpush.msra.mxu0 %v2914
    %2954 = vmatpush.msra.mxu0 %v2913
    %2955 = vmatpush.msra.mxu0 %v2912
    %2956 = vmatpush.msra.mxu0 %v2911
    %2957 = vmatpush.msra.mxu0 %v2910
    %2958 = vmatpush.msra.mxu0 %v2909
    %2959 = vmatpush.msra.mxu0 %v2908
    %2960 = vmatpush.msra.mxu0 %v2907
    %2961 = vmatpush.msra.mxu0 %v2906
    %2962 = vmatmul.f32.gmra.mxu0 %v2674
    %v2963 = vpop.f32.mrf.mxu0
    %v2964 = vadd.f32 0.0, %v2963
    %2965 = vdwg.mxu0
    %2966 = vmatpush.msra.mxu0 %v2921
    %2967 = vmatpush.msra.mxu0 %v2920
    %2968 = vmatpush.msra.mxu0 %v2919
    %2969 = vmatpush.msra.mxu0 %v2918
    %2970 = vmatpush.msra.mxu0 %v2917
    %2971 = vmatpush.msra.mxu0 %v2916
    %2972 = vmatpush.msra.mxu0 %v2915
    %2973 = vmatpush.msra.mxu0 %v2914
    %2974 = vmatpush.msra.mxu0 %v2913
    %2975 = vmatpush.msra.mxu0 %v2912
    %2976 = vmatpush.msra.mxu0 %v2911
    %2977 = vmatpush.msra.mxu0 %v2910
    %2978 = vmatpush.msra.mxu0 %v2909
    %2979 = vmatpush.msra.mxu0 %v2908
    %2980 = vmatpush.msra.mxu0 %v2907
    %2981 = vmatpush.msra.mxu0 %v2906
    %2982 = vmatmul.f32.gmra.mxu0 %v2681
    %v2983 = vpop.f32.mrf.mxu0
    %v2984 = vadd.f32 0.0, %v2983
    %2985 = vdwg.mxu0
    %v2986 = vrcp.pop 32.0
    %v2987 = vmul.f32 32.0, %v2986
    %v2988 = vsub.f32 1.0, %v2987
    %v2989 = vmul.f32 %v2986, %v2988
    %v2990 = vadd.f32 %v2986, %v2989
    %vm2991 = vweird.f32 %v2986
    %v2992 = vsel %vm2991, %v2986, %v2990
    %v2993 = vmul.f32 %v2964, %v2992
    %v2994 = vmul.f32 %v2984, %v2992
    %v2995 = vmul.f32 %v2993, %v2993
    %v2996 = vsub.f32 %v2994, %v2995
    %v2997 = vadd.f32 %v2996, 1e-05
    %v2998 = vrsqrt.pop %v2997
    %v2999 = vmul.f32 %v2998, %v2997
    %v3000 = vmul.f32 %v2999, %v2998
    %v3001 = vmul.f32 0.5, %v3000
    %v3002 = vsub.f32 1.5, %v3001
    %v3003 = vmul.f32 %v2998, %v3002
    %vm3004 = vweird.f32 %v2997
    %vm3005 = vweird.f32 %v2998
    %vm3006 = vmor %vm3004, %vm3005
    %v3007 = vsel %vm3006, %v2998, %v3003
    %v3008 = vmul.f32 %v2667, %v3007
    %v3009 = vmul.f32 %v2993, %v3008
    %v3010 = vsub.f32 %v2668, %v3009
    %vm3011 = vcmask 261120
    %v3013 = vsel %vm3011, %v3008, 0
    %3015 = vmatpush.msra.mxu0 0.0
    %3016 = vmatpush.msra.mxu0 0.0
    %3017 = vmatpush.msra.mxu0 0.0
    %3018 = vmatpush.msra.mxu0 0.0
    %3019 = vmatpush.msra.mxu0 0.0
    %3020 = vmatpush.msra.mxu0 0.0
    %3021 = vmatpush.msra.mxu0 0.0
    %3022 = vmatpush.msra.mxu0 0.0
    %3023 = vmatpush.msra.mxu0 0.0
    %3024 = vmatpush.msra.mxu0 0.0
    %3025 = vmatpush.msra.mxu0 0.0
    %3026 = vmatpush.msra.mxu0 0.0
    %3027 = vmatpush.msra.mxu0 %v2945
    %3028 = vmatpush.msra.mxu0 %v2944
    %3029 = vmatpush.msra.mxu0 %v2943
    %3030 = vmatpush.msra.mxu0 %v2942
    %3031 = vmatmul.f32.gmra.mxu0 %v3013
    %v3032 = vpop.f32.mrf.mxu0
    %v3033 = vadd.f32 0.0, %v3032
    %3034 = vdwg.mxu0
    %v3036 = vsel %vm3011, %v3010, 0
    %3038 = vmatpush.msra.mxu0 0.0
    %3039 = vmatpush.msra.mxu0 0.0
    %3040 = vmatpush.msra.mxu0 0.0
    %3041 = vmatpush.msra.mxu0 0.0
    %3042 = vmatpush.msra.mxu0 0.0
    %3043 = vmatpush.msra.mxu0 0.0
    %3044 = vmatpush.msra.mxu0 0.0
    %3045 = vmatpush.msra.mxu0 0.0
    %3046 = vmatpush.msra.mxu0 0.0
    %3047 = vmatpush.msra.mxu0 0.0
    %3048 = vmatpush.msra.mxu0 0.0
    %3049 = vmatpush.msra.mxu0 0.0
    %3050 = vmatpush.msra.mxu0 %v2945
    %3051 = vmatpush.msra.mxu0 %v2944
    %3052 = vmatpush.msra.mxu0 %v2943
    %3053 = vmatpush.msra.mxu0 %v2942
    %3054 = vmatmul.f32.gmra.mxu0 %v3036
    %v3055 = vpop.f32.mrf.mxu0
    %v3056 = vadd.f32 0.0, %v3055
    %3057 = vdwg.mxu0
    %v3058 = vperm.slane %v3033, 0
    %v3059 = vmul.f32 %v2666, %v3058
    %v3060 = vperm.slane %v3056, 0
    %v3061 = vadd.f32 %v3059, %v3060
    %vm3062 = vcmp.gt.f32.partialorder %v3061, 0.0
    %v3063 = vmul.f32 %v3061, 0.03
    %v3064 = vsel %vm3062, %v3061, %v3063
    %v3066 = vrot.slane %v3064, 4
    %3067 = vst [vmem:[#allocation1] ss:$2 sm:$0xff] %v3064
    %v3068 = vld.sshfl [vmem:[#allocation1] sm:$0xff pattern:$0x75316420]
    %s3069 = scalar_lea.vmem [#allocation1], 16
    %3070 = vst [vmem:[%s3069] ss:$2 sm:$0xff] %v3066
    %v3071 = vld.sshfl [vmem:[#allocation1 + $0x10] sm:$0xff pattern:$0x75316420]
    %v3072 = vrot.slane %v3068, 7
    %v3073 = vrot.slane %v3071, 7
    %v3076 = vsel %vm548, 0.0, %v3072
    %v3077 = vsel %vm548, 0.0, %v3073
    %v3078 = vld [vmem:[#allocation12] sm:$0xff]
    %v3079 = vld [vmem:[#allocation12 + $0x8] sm:$0xff]
    %v3080 = vld [vmem:[#allocation12 + $0x10] sm:$0xff]
    %v3081 = vld [vmem:[#allocation12 + $0x18] sm:$0xff]
    %v3082 = vld [vmem:[#allocation12 + $0x20] sm:$0xff]
    %v3083 = vld [vmem:[#allocation12 + $0x28] sm:$0xff]
    %v3084 = vld [vmem:[#allocation12 + $0x30] sm:$0xff]
    %v3085 = vld [vmem:[#allocation12 + $0x38] sm:$0xff]
    %v3086 = vld [vmem:[#allocation12 + $0x40] sm:$0xff]
    %v3087 = vld [vmem:[#allocation12 + $0x48] sm:$0xff]
    %v3088 = vld [vmem:[#allocation12 + $0x50] sm:$0xff]
    %v3089 = vld [vmem:[#allocation12 + $0x58] sm:$0xff]
    %v3090 = vld [vmem:[#allocation12 + $0x60] sm:$0xff]
    %v3091 = vld [vmem:[#allocation12 + $0x68] sm:$0xff]
    %v3092 = vld [vmem:[#allocation12 + $0x70] sm:$0xff]
    %v3093 = vld [vmem:[#allocation12 + $0x78] sm:$0xff]
    %s3094 = scalar_lea.vmem [#allocation12], 128
    %v3095 = vld [vmem:[%s3094] sm:$0xff]
    %v3096 = vld [vmem:[%s3094 + $0x8] sm:$0xff]
    %v3097 = vld [vmem:[%s3094 + $0x10] sm:$0xff]
    %v3098 = vld [vmem:[%s3094 + $0x18] sm:$0xff]
    %v3099 = vld [vmem:[%s3094 + $0x20] sm:$0xff]
    %v3100 = vld [vmem:[%s3094 + $0x28] sm:$0xff]
    %v3101 = vld [vmem:[%s3094 + $0x30] sm:$0xff]
    %v3102 = vld [vmem:[%s3094 + $0x38] sm:$0xff]
    %v3103 = vld [vmem:[%s3094 + $0x40] sm:$0xff]
    %v3104 = vld [vmem:[%s3094 + $0x48] sm:$0xff]
    %v3105 = vld [vmem:[%s3094 + $0x50] sm:$0xff]
    %v3106 = vld [vmem:[%s3094 + $0x58] sm:$0xff]
    %v3107 = vld [vmem:[%s3094 + $0x60] sm:$0xff]
    %v3108 = vld [vmem:[%s3094 + $0x68] sm:$0xff]
    %v3109 = vld [vmem:[%s3094 + $0x70] sm:$0xff]
    %v3110 = vld [vmem:[%s3094 + $0x78] sm:$0xff]
    %3111 = vmatpush.msra.mxu0 %v3110
    %3112 = vmatpush.msra.mxu0 %v3109
    %3113 = vmatpush.msra.mxu0 %v3108
    %3114 = vmatpush.msra.mxu0 %v3107
    %3115 = vmatpush.msra.mxu0 %v3106
    %3116 = vmatpush.msra.mxu0 %v3105
    %3117 = vmatpush.msra.mxu0 %v3104
    %3118 = vmatpush.msra.mxu0 %v3103
    %3119 = vmatpush.msra.mxu0 %v3102
    %3120 = vmatpush.msra.mxu0 %v3101
    %3121 = vmatpush.msra.mxu0 %v3100
    %3122 = vmatpush.msra.mxu0 %v3099
    %3123 = vmatpush.msra.mxu0 %v3098
    %3124 = vmatpush.msra.mxu0 %v3097
    %3125 = vmatpush.msra.mxu0 %v3096
    %3126 = vmatpush.msra.mxu0 %v3095
    %3127 = vmatmul.f32.gmra.mxu0 %v3064
    %v3128 = vpop.f32.mrf.mxu0
    %v3129 = vadd.f32 0.0, %v3128
    %3130 = vdwg.mxu0
    %3133 = vst [vmem:[#allocation1] ss:$2 sm:$0xff] %v3076
    %s3134 = scalar_lea.vmem [#allocation1], 1
    %3135 = vst [vmem:[%s3134] ss:$2 sm:$0xff] %v3077
    %v3136 = vld.sshfl [vmem:[#allocation1] sm:$0xff pattern:$0x75316420]
    %3138 = vmatpush.msra.mxu0 %v3093
    %3139 = vmatpush.msra.mxu0 %v3092
    %3140 = vmatpush.msra.mxu0 %v3091
    %3141 = vmatpush.msra.mxu0 %v3090
    %3142 = vmatpush.msra.mxu0 %v3089
    %3143 = vmatpush.msra.mxu0 %v3088
    %3144 = vmatpush.msra.mxu0 %v3087
    %3145 = vmatpush.msra.mxu0 %v3086
    %3146 = vmatpush.msra.mxu0 %v3085
    %3147 = vmatpush.msra.mxu0 %v3084
    %3148 = vmatpush.msra.mxu0 %v3083
    %3149 = vmatpush.msra.mxu0 %v3082
    %3150 = vmatpush.msra.mxu0 %v3081
    %3151 = vmatpush.msra.mxu0 %v3080
    %3152 = vmatpush.msra.mxu0 %v3079
    %3153 = vmatpush.msra.mxu0 %v3078
    %3154 = vmatmul.f32.gmra.mxu0 %v3136
    %v3155 = vpop.f32.mrf.mxu0
    %v3156 = vadd.f32 %v3129, %v3155
    %3157 = vdwg.mxu0
    %3158 = vst [vmem:[#allocation1] ss:$2 sm:$0xff] %v3064
    %v3159 = vld.sshfl [vmem:[#allocation1] sm:$0xff pattern:$0x75316420]
    %s3160 = scalar_lea.vmem [#allocation1], 16
    %3161 = vst [vmem:[%s3160] ss:$2 sm:$0xff] %v3066
    %v3162 = vld.sshfl [vmem:[#allocation1 + $0x10] sm:$0xff pattern:$0x75316420]
    %v3163 = vrot.slane %v3159, 1
    %v3164 = vrot.slane %v3162, 1
    %v3167 = vsel %vm2619, %v3163, 0.0
    %v3168 = vsel %vm2619, %v3164, 0.0
    %s3169 = scalar_lea.vmem [#allocation12], 256
    %v3170 = vld [vmem:[%s3169] sm:$0xff]
    %v3171 = vld [vmem:[%s3169 + $0x8] sm:$0xff]
    %v3172 = vld [vmem:[%s3169 + $0x10] sm:$0xff]
    %v3173 = vld [vmem:[%s3169 + $0x18] sm:$0xff]
    %v3174 = vld [vmem:[%s3169 + $0x20] sm:$0xff]
    %v3175 = vld [vmem:[%s3169 + $0x28] sm:$0xff]
    %v3176 = vld [vmem:[%s3169 + $0x30] sm:$0xff]
    %v3177 = vld [vmem:[%s3169 + $0x38] sm:$0xff]
    %v3178 = vld [vmem:[%s3169 + $0x40] sm:$0xff]
    %v3179 = vld [vmem:[%s3169 + $0x48] sm:$0xff]
    %v3180 = vld [vmem:[%s3169 + $0x50] sm:$0xff]
    %v3181 = vld [vmem:[%s3169 + $0x58] sm:$0xff]
    %v3182 = vld [vmem:[%s3169 + $0x60] sm:$0xff]
    %v3183 = vld [vmem:[%s3169 + $0x68] sm:$0xff]
    %v3184 = vld [vmem:[%s3169 + $0x70] sm:$0xff]
    %v3185 = vld [vmem:[%s3169 + $0x78] sm:$0xff]
    %3188 = vst [vmem:[#allocation1] ss:$2 sm:$0xff] %v3167
    %s3189 = scalar_lea.vmem [#allocation1], 1
    %3190 = vst [vmem:[%s3189] ss:$2 sm:$0xff] %v3168
    %v3191 = vld.sshfl [vmem:[#allocation1] sm:$0xff pattern:$0x75316420]
    %3193 = vmatpush.msra.mxu0 %v3185
    %3194 = vmatpush.msra.mxu0 %v3184
    %3195 = vmatpush.msra.mxu0 %v3183
    %3196 = vmatpush.msra.mxu0 %v3182
    %3197 = vmatpush.msra.mxu0 %v3181
    %3198 = vmatpush.msra.mxu0 %v3180
    %3199 = vmatpush.msra.mxu0 %v3179
    %3200 = vmatpush.msra.mxu0 %v3178
    %3201 = vmatpush.msra.mxu0 %v3177
    %3202 = vmatpush.msra.mxu0 %v3176
    %3203 = vmatpush.msra.mxu0 %v3175
    %3204 = vmatpush.msra.mxu0 %v3174
    %3205 = vmatpush.msra.mxu0 %v3173
    %3206 = vmatpush.msra.mxu0 %v3172
    %3207 = vmatpush.msra.mxu0 %v3171
    %3208 = vmatpush.msra.mxu0 %v3170
    %3209 = vmatmul.f32.gmra.mxu0 %v3191
    %v3210 = vpop.f32.mrf.mxu0
    %v3211 = vadd.f32 0.0, %v3210
    %3212 = vdwg.mxu0
    %v3213 = vadd.f32 %v3156, %v3211
    %v3214 = vld [vmem:[%s35] sm:$0x1]
    %v3215 = vld [vmem:[%s37] sm:$0x1]
    %v3216 = vrot.slane %v3213, 4
    %v3217 = vadd.f32 %v3213, %v3216
    %v3218 = vrot.slane %v3217, 2
    %v3219 = vadd.f32 %v3217, %v3218
    %v3220 = vrot.slane %v3219, 1
    %v3221 = vadd.f32 %v3219, %v3220
    %v3222 = vmul.f32 %v3213, %v3213
    %v3223 = vrot.slane %v3222, 4
    %v3224 = vadd.f32 %v3222, %v3223
    %v3225 = vrot.slane %v3224, 2
    %v3226 = vadd.f32 %v3224, %v3225
    %v3227 = vrot.slane %v3226, 1
    %v3228 = vadd.f32 %v3226, %v3227
    %3229 = vmatpush.msra.mxu0 %v2921
    %3230 = vmatpush.msra.mxu0 %v2920
    %3231 = vmatpush.msra.mxu0 %v2919
    %3232 = vmatpush.msra.mxu0 %v2918
    %3233 = vmatpush.msra.mxu0 %v2917
    %3234 = vmatpush.msra.mxu0 %v2916
    %3235 = vmatpush.msra.mxu0 %v2915
    %3236 = vmatpush.msra.mxu0 %v2914
    %3237 = vmatpush.msra.mxu0 %v2913
    %3238 = vmatpush.msra.mxu0 %v2912
    %3239 = vmatpush.msra.mxu0 %v2911
    %3240 = vmatpush.msra.mxu0 %v2910
    %3241 = vmatpush.msra.mxu0 %v2909
    %3242 = vmatpush.msra.mxu0 %v2908
    %3243 = vmatpush.msra.mxu0 %v2907
    %3244 = vmatpush.msra.mxu0 %v2906
    %3245 = vmatmul.f32.gmra.mxu0 %v3221
    %v3246 = vpop.f32.mrf.mxu0
    %v3247 = vadd.f32 0.0, %v3246
    %3248 = vdwg.mxu0
    %3249 = vmatpush.msra.mxu0 %v2921
    %3250 = vmatpush.msra.mxu0 %v2920
    %3251 = vmatpush.msra.mxu0 %v2919
    %3252 = vmatpush.msra.mxu0 %v2918
    %3253 = vmatpush.msra.mxu0 %v2917
    %3254 = vmatpush.msra.mxu0 %v2916
    %3255 = vmatpush.msra.mxu0 %v2915
    %3256 = vmatpush.msra.mxu0 %v2914
    %3257 = vmatpush.msra.mxu0 %v2913
    %3258 = vmatpush.msra.mxu0 %v2912
    %3259 = vmatpush.msra.mxu0 %v2911
    %3260 = vmatpush.msra.mxu0 %v2910
    %3261 = vmatpush.msra.mxu0 %v2909
    %3262 = vmatpush.msra.mxu0 %v2908
    %3263 = vmatpush.msra.mxu0 %v2907
    %3264 = vmatpush.msra.mxu0 %v2906
    %3265 = vmatmul.f32.gmra.mxu0 %v3228
    %v3266 = vpop.f32.mrf.mxu0
    %v3267 = vadd.f32 0.0, %v3266
    %3268 = vdwg.mxu0
    %v3269 = vmul.f32 %v3247, %v2992
    %v3270 = vmul.f32 %v3267, %v2992
    %v3271 = vmul.f32 %v3269, %v3269
    %v3272 = vsub.f32 %v3270, %v3271
    %v3273 = vadd.f32 %v3272, 1e-05
    %v3274 = vrsqrt.pop %v3273
    %v3275 = vmul.f32 %v3274, %v3273
    %v3276 = vmul.f32 %v3275, %v3274
    %v3277 = vmul.f32 0.5, %v3276
    %v3278 = vsub.f32 1.5, %v3277
    %v3279 = vmul.f32 %v3274, %v3278
    %vm3280 = vweird.f32 %v3273
    %vm3281 = vweird.f32 %v3274
    %vm3282 = vmor %vm3280, %vm3281
    %v3283 = vsel %vm3282, %v3274, %v3279
    %v3284 = vmul.f32 %v3214, %v3283
    %v3285 = vmul.f32 %v3269, %v3284
    %v3286 = vsub.f32 %v3215, %v3285
    %v3288 = vsel %vm3011, %v3284, 0
    %3290 = vmatpush.msra.mxu0 0.0
    %3291 = vmatpush.msra.mxu0 0.0
    %3292 = vmatpush.msra.mxu0 0.0
    %3293 = vmatpush.msra.mxu0 0.0
    %3294 = vmatpush.msra.mxu0 0.0
    %3295 = vmatpush.msra.mxu0 0.0
    %3296 = vmatpush.msra.mxu0 0.0
    %3297 = vmatpush.msra.mxu0 0.0
    %3298 = vmatpush.msra.mxu0 0.0
    %3299 = vmatpush.msra.mxu0 0.0
    %3300 = vmatpush.msra.mxu0 0.0
    %3301 = vmatpush.msra.mxu0 0.0
    %3302 = vmatpush.msra.mxu0 %v2945
    %3303 = vmatpush.msra.mxu0 %v2944
    %3304 = vmatpush.msra.mxu0 %v2943
    %3305 = vmatpush.msra.mxu0 %v2942
    %3306 = vmatmul.f32.gmra.mxu0 %v3288
    %v3307 = vpop.f32.mrf.mxu0
    %v3308 = vadd.f32 0.0, %v3307
    %3309 = vdwg.mxu0
    %v3311 = vsel %vm3011, %v3286, 0
    %3313 = vmatpush.msra.mxu0 0.0
    %3314 = vmatpush.msra.mxu0 0.0
    %3315 = vmatpush.msra.mxu0 0.0
    %3316 = vmatpush.msra.mxu0 0.0
    %3317 = vmatpush.msra.mxu0 0.0
    %3318 = vmatpush.msra.mxu0 0.0
    %3319 = vmatpush.msra.mxu0 0.0
    %3320 = vmatpush.msra.mxu0 0.0
    %3321 = vmatpush.msra.mxu0 0.0
    %3322 = vmatpush.msra.mxu0 0.0
    %3323 = vmatpush.msra.mxu0 0.0
    %3324 = vmatpush.msra.mxu0 0.0
    %3325 = vmatpush.msra.mxu0 %v2945
    %3326 = vmatpush.msra.mxu0 %v2944
    %3327 = vmatpush.msra.mxu0 %v2943
    %3328 = vmatpush.msra.mxu0 %v2942
    %3329 = vmatmul.f32.gmra.mxu0 %v3311
    %v3330 = vpop.f32.mrf.mxu0
    %v3331 = vadd.f32 0.0, %v3330
    %3332 = vdwg.mxu0
    %v3333 = vperm.slane %v3308, 0
    %v3334 = vmul.f32 %v3213, %v3333
    %v3335 = vperm.slane %v3331, 0
    %v3336 = vadd.f32 %v3334, %v3335
    %vm3337 = vcmp.gt.f32.partialorder %v3336, 0.0
    %v3338 = vmul.f32 %v3336, 0.03
    %v3339 = vsel %vm3337, %v3336, %v3338
    %v3341 = vrot.slane %v3339, 4
    %3343 = vst [vmem:[#allocation1] ss:$2 sm:$0xff] %v3339
    %v3344 = vld.sshfl [vmem:[#allocation1] sm:$0xff pattern:$0x75316420]
    %s3345 = scalar_lea.vmem [#allocation1], 16
    %3346 = vst [vmem:[%s3345] ss:$2 sm:$0xff] %v3341
    %v3347 = vld.sshfl [vmem:[#allocation1 + $0x10] sm:$0xff pattern:$0x75316420]
    %3348 = vrot.lane.b32.xlu0 %v3344, 96
    %v3349 = vpop.permute.xlu0 %3348
    %3350 = vrot.lane.b32.xlu0 %v3347, 96
    %v3351 = vpop.permute.xlu0 %3350
    %vm3354 = vcmask 785408
    %v3355 = vsel %vm3354, %v3349, %v3339
    %v3356 = vsel %vm3354, %v3351, %v3341
    %v3357 = vmax.f32 %v3339, %v3355
    %v3358 = vmax.f32 %v3341, %v3356
    %v3361 = vrot.slane %v3357, 2
    %v3362 = vrot.slane %v3358, 2
    %vm3363 = vcmask 1041408
    %v3364 = vsel %vm3363, %v3357, %v3361
    %vm3365 = vcmask 1043458
    %v3366 = vsel %vm3365, %v3357, %v3361
    %v3367 = vrot.slane %v3366, 2
    %v3368 = vsel %vm3363, %v3358, %v3362
    %v3369 = vsel %vm3365, %v3358, %v3362
    %v3370 = vrot.slane %v3369, 2
    %v3375 = vrot.slane %v3364, 7
    %v3376 = vrot.slane %v3375, 2
    %v3377 = vrot.slane %v3367, 7
    %v3378 = vrot.slane %v3377, 2
    %v3379 = vrot.slane %v3368, 7
    %v3380 = vrot.slane %v3379, 2
    %v3381 = vrot.slane %v3370, 7
    %v3382 = vrot.slane %v3381, 2
    %v3387 = vmax.f32 %v3364, %v3376
    %v3388 = vmax.f32 %v3367, %v3378
    %v3389 = vmax.f32 %v3368, %v3380
    %v3390 = vmax.f32 %v3370, %v3382
    %v3393 = vperm.slane %v3387, 0
    %v3394 = vperm.slane %v3389, 0
    %v3397 = vsel %vm548, 0.0, %v3393
    %v3398 = vsel %vm548, 0.0, %v3394
    %v3399 = vld [vmem:[#allocation13] sm:$0xff]
    %v3400 = vld [vmem:[#allocation13 + $0x8] sm:$0xff]
    %v3401 = vld [vmem:[#allocation13 + $0x10] sm:$0xff]
    %v3402 = vld [vmem:[#allocation13 + $0x18] sm:$0xff]
    %v3403 = vld [vmem:[#allocation13 + $0x20] sm:$0xff]
    %v3404 = vld [vmem:[#allocation13 + $0x28] sm:$0xff]
    %v3405 = vld [vmem:[#allocation13 + $0x30] sm:$0xff]
    %v3406 = vld [vmem:[#allocation13 + $0x38] sm:$0xff]
    %v3407 = vld [vmem:[#allocation13 + $0x40] sm:$0xff]
    %v3408 = vld [vmem:[#allocation13 + $0x48] sm:$0xff]
    %v3409 = vld [vmem:[#allocation13 + $0x50] sm:$0xff]
    %v3410 = vld [vmem:[#allocation13 + $0x58] sm:$0xff]
    %v3411 = vld [vmem:[#allocation13 + $0x60] sm:$0xff]
    %v3412 = vld [vmem:[#allocation13 + $0x68] sm:$0xff]
    %v3413 = vld [vmem:[#allocation13 + $0x70] sm:$0xff]
    %v3414 = vld [vmem:[#allocation13 + $0x78] sm:$0xff]
    %s3415 = scalar_lea.vmem [#allocation13], 128
    %v3416 = vld [vmem:[%s3415] sm:$0xff]
    %v3417 = vld [vmem:[%s3415 + $0x8] sm:$0xff]
    %v3418 = vld [vmem:[%s3415 + $0x10] sm:$0xff]
    %v3419 = vld [vmem:[%s3415 + $0x18] sm:$0xff]
    %v3420 = vld [vmem:[%s3415 + $0x20] sm:$0xff]
    %v3421 = vld [vmem:[%s3415 + $0x28] sm:$0xff]
    %v3422 = vld [vmem:[%s3415 + $0x30] sm:$0xff]
    %v3423 = vld [vmem:[%s3415 + $0x38] sm:$0xff]
    %v3424 = vld [vmem:[%s3415 + $0x40] sm:$0xff]
    %v3425 = vld [vmem:[%s3415 + $0x48] sm:$0xff]
    %v3426 = vld [vmem:[%s3415 + $0x50] sm:$0xff]
    %v3427 = vld [vmem:[%s3415 + $0x58] sm:$0xff]
    %v3428 = vld [vmem:[%s3415 + $0x60] sm:$0xff]
    %v3429 = vld [vmem:[%s3415 + $0x68] sm:$0xff]
    %v3430 = vld [vmem:[%s3415 + $0x70] sm:$0xff]
    %v3431 = vld [vmem:[%s3415 + $0x78] sm:$0xff]
    %v3434 = vperm.slane %v3388, 0
    %v3435 = vperm.slane %v3390, 0
    %v3436 = vsel %vm1653, %v3434, %v3393
    %v3437 = vsel %vm1594, %v3394, %v3436
    %v3438 = vsel %vm1596, %v3435, %v3437
    %3440 = vmatpush.msra.mxu0 %v3431
    %3441 = vmatpush.msra.mxu0 %v3430
    %3442 = vmatpush.msra.mxu0 %v3429
    %3443 = vmatpush.msra.mxu0 %v3428
    %3444 = vmatpush.msra.mxu0 %v3427
    %3445 = vmatpush.msra.mxu0 %v3426
    %3446 = vmatpush.msra.mxu0 %v3425
    %3447 = vmatpush.msra.mxu0 %v3424
    %3448 = vmatpush.msra.mxu0 %v3423
    %3449 = vmatpush.msra.mxu0 %v3422
    %3450 = vmatpush.msra.mxu0 %v3421
    %3451 = vmatpush.msra.mxu0 %v3420
    %3452 = vmatpush.msra.mxu0 %v3419
    %3453 = vmatpush.msra.mxu0 %v3418
    %3454 = vmatpush.msra.mxu0 %v3417
    %3455 = vmatpush.msra.mxu0 %v3416
    %3456 = vmatmul.f32.gmra.mxu0 %v3438
    %v3457 = vpop.f32.mrf.mxu0
    %v3458 = vadd.f32 0.0, %v3457
    %3459 = vdwg.mxu0
    %3462 = vst [vmem:[#allocation1] ss:$4 sm:$0xff] %v3397
    %s3463 = scalar_lea.vmem [#allocation1], 1
    %3464 = vst [vmem:[%s3463] ss:$4 sm:$0xff] %v3398
    %v3465 = vld.sshfl [vmem:[#allocation1] sm:$0xff pattern:$0x73625140]
    %3467 = vmatpush.msra.mxu0 %v3414
    %3468 = vmatpush.msra.mxu0 %v3413
    %3469 = vmatpush.msra.mxu0 %v3412
    %3470 = vmatpush.msra.mxu0 %v3411
    %3471 = vmatpush.msra.mxu0 %v3410
    %3472 = vmatpush.msra.mxu0 %v3409
    %3473 = vmatpush.msra.mxu0 %v3408
    %3474 = vmatpush.msra.mxu0 %v3407
    %3475 = vmatpush.msra.mxu0 %v3406
    %3476 = vmatpush.msra.mxu0 %v3405
    %3477 = vmatpush.msra.mxu0 %v3404
    %3478 = vmatpush.msra.mxu0 %v3403
    %3479 = vmatpush.msra.mxu0 %v3402
    %3480 = vmatpush.msra.mxu0 %v3401
    %3481 = vmatpush.msra.mxu0 %v3400
    %3482 = vmatpush.msra.mxu0 %v3399
    %3483 = vmatmul.f32.gmra.mxu0 %v3465
    %v3484 = vpop.f32.mrf.mxu0
    %v3485 = vadd.f32 %v3458, %v3484
    %3486 = vdwg.mxu0
    %v3487 = vsel %vm548, %v3388, 0.0
    %v3488 = vsel %vm548, %v3390, 0.0
    %s3489 = scalar_lea.vmem [#allocation13], 256
    %v3490 = vld [vmem:[%s3489] sm:$0xff]
    %v3491 = vld [vmem:[%s3489 + $0x8] sm:$0xff]
    %v3492 = vld [vmem:[%s3489 + $0x10] sm:$0xff]
    %v3493 = vld [vmem:[%s3489 + $0x18] sm:$0xff]
    %v3494 = vld [vmem:[%s3489 + $0x20] sm:$0xff]
    %v3495 = vld [vmem:[%s3489 + $0x28] sm:$0xff]
    %v3496 = vld [vmem:[%s3489 + $0x30] sm:$0xff]
    %v3497 = vld [vmem:[%s3489 + $0x38] sm:$0xff]
    %v3498 = vld [vmem:[%s3489 + $0x40] sm:$0xff]
    %v3499 = vld [vmem:[%s3489 + $0x48] sm:$0xff]
    %v3500 = vld [vmem:[%s3489 + $0x50] sm:$0xff]
    %v3501 = vld [vmem:[%s3489 + $0x58] sm:$0xff]
    %v3502 = vld [vmem:[%s3489 + $0x60] sm:$0xff]
    %v3503 = vld [vmem:[%s3489 + $0x68] sm:$0xff]
    %v3504 = vld [vmem:[%s3489 + $0x70] sm:$0xff]
    %v3505 = vld [vmem:[%s3489 + $0x78] sm:$0xff]
    %3508 = vst [vmem:[#allocation1] ss:$4 sm:$0xff] %v3487
    %s3509 = scalar_lea.vmem [#allocation1], 1
    %3510 = vst [vmem:[%s3509] ss:$4 sm:$0xff] %v3488
    %v3511 = vld.sshfl [vmem:[#allocation1] sm:$0xff pattern:$0x73625140]
    %3513 = vmatpush.msra.mxu0 %v3505
    %3514 = vmatpush.msra.mxu0 %v3504
    %3515 = vmatpush.msra.mxu0 %v3503
    %3516 = vmatpush.msra.mxu0 %v3502
    %3517 = vmatpush.msra.mxu0 %v3501
    %3518 = vmatpush.msra.mxu0 %v3500
    %3519 = vmatpush.msra.mxu0 %v3499
    %3520 = vmatpush.msra.mxu0 %v3498
    %3521 = vmatpush.msra.mxu0 %v3497
    %3522 = vmatpush.msra.mxu0 %v3496
    %3523 = vmatpush.msra.mxu0 %v3495
    %3524 = vmatpush.msra.mxu0 %v3494
    %3525 = vmatpush.msra.mxu0 %v3493
    %3526 = vmatpush.msra.mxu0 %v3492
    %3527 = vmatpush.msra.mxu0 %v3491
    %3528 = vmatpush.msra.mxu0 %v3490
    %3529 = vmatmul.f32.gmra.mxu0 %v3511
    %v3530 = vpop.f32.mrf.mxu0
    %v3531 = vadd.f32 0.0, %v3530
    %3532 = vdwg.mxu0
    %v3533 = vadd.f32 %v3485, %v3531
    %v3534 = vld [vmem:[%s41] sm:$0x1]
    %v3535 = vld [vmem:[%s43] sm:$0x1]
    %vm3536 = vcmask 1043456
    %v3537 = vsel %vm3536, %v3533, 0.0
    %v3538 = vrot.slane %v3537, 4
    %v3539 = vadd.f32 %v3537, %v3538
    %v3540 = vrot.slane %v3539, 2
    %v3541 = vadd.f32 %v3539, %v3540
    %v3542 = vrot.slane %v3541, 1
    %v3543 = vadd.f32 %v3541, %v3542
    %v3544 = vmul.f32 %v3533, %v3533
    %v3545 = vsel %vm3536, %v3544, 0.0
    %v3546 = vrot.slane %v3545, 4
    %v3547 = vadd.f32 %v3545, %v3546
    %v3548 = vrot.slane %v3547, 2
    %v3549 = vadd.f32 %v3547, %v3548
    %v3550 = vrot.slane %v3549, 1
    %v3551 = vadd.f32 %v3549, %v3550
    %vm3552 = vcmp.lt.s32.totalorder %v723, 0
    %v3553 = vsub.s32 0, %v723
    %v3554 = vsel %vm3552, %v3553, %v723
    %v3555 = vshrl.u32 %v3554, 6
    %v3556 = vand.u32 %v3554, 63
    %v3557 = vsub.s32 0, %v3556
    %v3558 = vsel %vm3552, %v3557, %v3556
    %vm3559 = vcmp.lt.s32.totalorder %v724, 0
    %v3560 = vsub.s32 0, %v724
    %v3561 = vsel %vm3559, %v3560, %v724
    %v3562 = vshrl.u32 %v3561, 6
    %v3563 = vand.u32 %v3561, 63
    %v3564 = vsub.s32 0, %v3563
    %v3565 = vsel %vm3559, %v3564, %v3563
    %vm3566 = vcmp.lt.s32.totalorder %v725, 0
    %v3567 = vsub.s32 0, %v725
    %v3568 = vsel %vm3566, %v3567, %v725
    %v3569 = vshrl.u32 %v3568, 6
    %v3570 = vand.u32 %v3568, 63
    %v3571 = vsub.s32 0, %v3570
    %v3572 = vsel %vm3566, %v3571, %v3570
    %vm3573 = vcmp.lt.s32.totalorder %v726, 0
    %v3574 = vsub.s32 0, %v726
    %v3575 = vsel %vm3573, %v3574, %v726
    %v3576 = vshrl.u32 %v3575, 6
    %v3577 = vand.u32 %v3575, 63
    %v3578 = vsub.s32 0, %v3577
    %v3579 = vsel %vm3573, %v3578, %v3577
    %vm3580 = vcmp.lt.s32.totalorder %v727, 0
    %v3581 = vsub.s32 0, %v727
    %v3582 = vsel %vm3580, %v3581, %v727
    %v3583 = vshrl.u32 %v3582, 6
    %v3584 = vand.u32 %v3582, 63
    %v3585 = vsub.s32 0, %v3584
    %v3586 = vsel %vm3580, %v3585, %v3584
    %vm3587 = vcmp.lt.s32.totalorder %v728, 0
    %v3588 = vsub.s32 0, %v728
    %v3589 = vsel %vm3587, %v3588, %v728
    %v3590 = vshrl.u32 %v3589, 6
    %v3591 = vand.u32 %v3589, 63
    %v3592 = vsub.s32 0, %v3591
    %v3593 = vsel %vm3587, %v3592, %v3591
    %vm3594 = vcmp.lt.s32.totalorder %v729, 0
    %v3595 = vsub.s32 0, %v729
    %v3596 = vsel %vm3594, %v3595, %v729
    %v3597 = vshrl.u32 %v3596, 6
    %v3598 = vand.u32 %v3596, 63
    %v3599 = vsub.s32 0, %v3598
    %v3600 = vsel %vm3594, %v3599, %v3598
    %vm3601 = vcmp.lt.s32.totalorder %v730, 0
    %v3602 = vsub.s32 0, %v730
    %v3603 = vsel %vm3601, %v3602, %v730
    %v3604 = vshrl.u32 %v3603, 6
    %v3605 = vand.u32 %v3603, 63
    %v3606 = vsub.s32 0, %v3605
    %v3607 = vsel %vm3601, %v3606, %v3605
    %vm3608 = vcmp.lt.s32.totalorder %v731, 0
    %v3609 = vsub.s32 0, %v731
    %v3610 = vsel %vm3608, %v3609, %v731
    %v3611 = vshrl.u32 %v3610, 6
    %v3612 = vand.u32 %v3610, 63
    %v3613 = vsub.s32 0, %v3612
    %v3614 = vsel %vm3608, %v3613, %v3612
    %vm3615 = vcmp.lt.s32.totalorder %v732, 0
    %v3616 = vsub.s32 0, %v732
    %v3617 = vsel %vm3615, %v3616, %v732
    %v3618 = vshrl.u32 %v3617, 6
    %v3619 = vand.u32 %v3617, 63
    %v3620 = vsub.s32 0, %v3619
    %v3621 = vsel %vm3615, %v3620, %v3619
    %vm3622 = vcmp.lt.s32.totalorder %v733, 0
    %v3623 = vsub.s32 0, %v733
    %v3624 = vsel %vm3622, %v3623, %v733
    %v3625 = vshrl.u32 %v3624, 6
    %v3626 = vand.u32 %v3624, 63
    %v3627 = vsub.s32 0, %v3626
    %v3628 = vsel %vm3622, %v3627, %v3626
    %vm3629 = vcmp.lt.s32.totalorder %v734, 0
    %v3630 = vsub.s32 0, %v734
    %v3631 = vsel %vm3629, %v3630, %v734
    %v3632 = vshrl.u32 %v3631, 6
    %v3633 = vand.u32 %v3631, 63
    %v3634 = vsub.s32 0, %v3633
    %v3635 = vsel %vm3629, %v3634, %v3633
    %vm3636 = vcmp.lt.s32.totalorder %v735, 0
    %v3637 = vsub.s32 0, %v735
    %v3638 = vsel %vm3636, %v3637, %v735
    %v3639 = vshrl.u32 %v3638, 6
    %v3640 = vand.u32 %v3638, 63
    %v3641 = vsub.s32 0, %v3640
    %v3642 = vsel %vm3636, %v3641, %v3640
    %vm3643 = vcmp.lt.s32.totalorder %v736, 0
    %v3644 = vsub.s32 0, %v736
    %v3645 = vsel %vm3643, %v3644, %v736
    %v3646 = vshrl.u32 %v3645, 6
    %v3647 = vand.u32 %v3645, 63
    %v3648 = vsub.s32 0, %v3647
    %v3649 = vsel %vm3643, %v3648, %v3647
    %vm3650 = vcmp.lt.s32.totalorder %v737, 0
    %v3651 = vsub.s32 0, %v737
    %v3652 = vsel %vm3650, %v3651, %v737
    %v3653 = vshrl.u32 %v3652, 6
    %v3654 = vand.u32 %v3652, 63
    %v3655 = vsub.s32 0, %v3654
    %v3656 = vsel %vm3650, %v3655, %v3654
    %vm3657 = vcmp.lt.s32.totalorder %v738, 0
    %v3658 = vsub.s32 0, %v738
    %v3659 = vsel %vm3657, %v3658, %v738
    %v3660 = vshrl.u32 %v3659, 6
    %v3661 = vand.u32 %v3659, 63
    %v3662 = vsub.s32 0, %v3661
    %v3663 = vsel %vm3657, %v3662, %v3661
    %vm3664 = vcmp.ne.s32.totalorder %v3558, 0
    %vm3665 = vcmp.ne.s32.totalorder %v3565, 0
    %vm3666 = vcmp.ne.s32.totalorder %v3572, 0
    %vm3667 = vcmp.ne.s32.totalorder %v3579, 0
    %vm3668 = vcmp.ne.s32.totalorder %v3586, 0
    %vm3669 = vcmp.ne.s32.totalorder %v3593, 0
    %vm3670 = vcmp.ne.s32.totalorder %v3600, 0
    %vm3671 = vcmp.ne.s32.totalorder %v3607, 0
    %vm3672 = vcmp.ne.s32.totalorder %v3614, 0
    %vm3673 = vcmp.ne.s32.totalorder %v3621, 0
    %vm3674 = vcmp.ne.s32.totalorder %v3628, 0
    %vm3675 = vcmp.ne.s32.totalorder %v3635, 0
    %vm3676 = vcmp.ne.s32.totalorder %v3642, 0
    %vm3677 = vcmp.ne.s32.totalorder %v3649, 0
    %vm3678 = vcmp.ne.s32.totalorder %v3656, 0
    %vm3679 = vcmp.ne.s32.totalorder %v3663, 0
    %vm3680 = vcmp.lt.s32.totalorder %v3558, 0
    %vm3681 = vcmp.lt.s32.totalorder %v3565, 0
    %vm3682 = vcmp.lt.s32.totalorder %v3572, 0
    %vm3683 = vcmp.lt.s32.totalorder %v3579, 0
    %vm3684 = vcmp.lt.s32.totalorder %v3586, 0
    %vm3685 = vcmp.lt.s32.totalorder %v3593, 0
    %vm3686 = vcmp.lt.s32.totalorder %v3600, 0
    %vm3687 = vcmp.lt.s32.totalorder %v3607, 0
    %vm3688 = vcmp.lt.s32.totalorder %v3614, 0
    %vm3689 = vcmp.lt.s32.totalorder %v3621, 0
    %vm3690 = vcmp.lt.s32.totalorder %v3628, 0
    %vm3691 = vcmp.lt.s32.totalorder %v3635, 0
    %vm3692 = vcmp.lt.s32.totalorder %v3642, 0
    %vm3693 = vcmp.lt.s32.totalorder %v3649, 0
    %vm3694 = vcmp.lt.s32.totalorder %v3656, 0
    %vm3695 = vcmp.lt.s32.totalorder %v3663, 0
    %vm3696 = vmand %vm3680, %vm3664
    %vm3697 = vmand %vm3681, %vm3665
    %vm3698 = vmand %vm3682, %vm3666
    %vm3699 = vmand %vm3683, %vm3667
    %vm3700 = vmand %vm3684, %vm3668
    %vm3701 = vmand %vm3685, %vm3669
    %vm3702 = vmand %vm3686, %vm3670
    %vm3703 = vmand %vm3687, %vm3671
    %vm3704 = vmand %vm3688, %vm3672
    %vm3705 = vmand %vm3689, %vm3673
    %vm3706 = vmand %vm3690, %vm3674
    %vm3707 = vmand %vm3691, %vm3675
    %vm3708 = vmand %vm3692, %vm3676
    %vm3709 = vmand %vm3693, %vm3677
    %vm3710 = vmand %vm3694, %vm3678
    %vm3711 = vmand %vm3695, %vm3679
    %v3712 = vadd.s32 %v3558, 64
    %v3713 = vadd.s32 %v3565, 64
    %v3714 = vadd.s32 %v3572, 64
    %v3715 = vadd.s32 %v3579, 64
    %v3716 = vadd.s32 %v3586, 64
    %v3717 = vadd.s32 %v3593, 64
    %v3718 = vadd.s32 %v3600, 64
    %v3719 = vadd.s32 %v3607, 64
    %v3720 = vadd.s32 %v3614, 64
    %v3721 = vadd.s32 %v3621, 64
    %v3722 = vadd.s32 %v3628, 64
    %v3723 = vadd.s32 %v3635, 64
    %v3724 = vadd.s32 %v3642, 64
    %v3725 = vadd.s32 %v3649, 64
    %v3726 = vadd.s32 %v3656, 64
    %v3727 = vadd.s32 %v3663, 64
    %v3728 = vsel %vm3696, %v3712, %v3558
    %v3729 = vsel %vm3697, %v3713, %v3565
    %v3730 = vsel %vm3698, %v3714, %v3572
    %v3731 = vsel %vm3699, %v3715, %v3579
    %v3732 = vsel %vm3700, %v3716, %v3586
    %v3733 = vsel %vm3701, %v3717, %v3593
    %v3734 = vsel %vm3702, %v3718, %v3600
    %v3735 = vsel %vm3703, %v3719, %v3607
    %v3736 = vsel %vm3704, %v3720, %v3614
    %v3737 = vsel %vm3705, %v3721, %v3621
    %v3738 = vsel %vm3706, %v3722, %v3628
    %v3739 = vsel %vm3707, %v3723, %v3635
    %v3740 = vsel %vm3708, %v3724, %v3642
    %v3741 = vsel %vm3709, %v3725, %v3649
    %v3742 = vsel %vm3710, %v3726, %v3656
    %v3743 = vsel %vm3711, %v3727, %v3663
    %vm3744 = vcmp.eq.s32.totalorder %v3728, %v932
    %vm3745 = vcmp.eq.s32.totalorder %v3729, %v932
    %vm3746 = vcmp.eq.s32.totalorder %v3730, %v932
    %vm3747 = vcmp.eq.s32.totalorder %v3731, %v932
    %vm3748 = vcmp.eq.s32.totalorder %v3732, %v932
    %vm3749 = vcmp.eq.s32.totalorder %v3733, %v932
    %vm3750 = vcmp.eq.s32.totalorder %v3734, %v932
    %vm3751 = vcmp.eq.s32.totalorder %v3735, %v932
    %vm3752 = vcmp.eq.s32.totalorder %v3736, %v932
    %vm3753 = vcmp.eq.s32.totalorder %v3737, %v932
    %vm3754 = vcmp.eq.s32.totalorder %v3738, %v932
    %vm3755 = vcmp.eq.s32.totalorder %v3739, %v932
    %vm3756 = vcmp.eq.s32.totalorder %v3740, %v932
    %vm3757 = vcmp.eq.s32.totalorder %v3741, %v932
    %vm3758 = vcmp.eq.s32.totalorder %v3742, %v932
    %vm3759 = vcmp.eq.s32.totalorder %v3743, %v932
    %v3760 = vsel %vm3744, 1, 0
    %v3761 = vsel %vm3745, 1, 0
    %v3762 = vsel %vm3746, 1, 0
    %v3763 = vsel %vm3747, 1, 0
    %v3764 = vsel %vm3748, 1, 0
    %v3765 = vsel %vm3749, 1, 0
    %v3766 = vsel %vm3750, 1, 0
    %v3767 = vsel %vm3751, 1, 0
    %v3768 = vsel %vm3752, 1, 0
    %v3769 = vsel %vm3753, 1, 0
    %v3770 = vsel %vm3754, 1, 0
    %v3771 = vsel %vm3755, 1, 0
    %v3772 = vsel %vm3756, 1, 0
    %v3773 = vsel %vm3757, 1, 0
    %v3774 = vsel %vm3758, 1, 0
    %v3775 = vsel %vm3759, 1, 0
    %v3776 = vcvt.s32.f32 %v3760
    %v3777 = vcvt.s32.f32 %v3761
    %v3778 = vcvt.s32.f32 %v3762
    %v3779 = vcvt.s32.f32 %v3763
    %v3780 = vcvt.s32.f32 %v3764
    %v3781 = vcvt.s32.f32 %v3765
    %v3782 = vcvt.s32.f32 %v3766
    %v3783 = vcvt.s32.f32 %v3767
    %v3784 = vcvt.s32.f32 %v3768
    %v3785 = vcvt.s32.f32 %v3769
    %v3786 = vcvt.s32.f32 %v3770
    %v3787 = vcvt.s32.f32 %v3771
    %v3788 = vcvt.s32.f32 %v3772
    %v3789 = vcvt.s32.f32 %v3773
    %v3790 = vcvt.s32.f32 %v3774
    %v3791 = vcvt.s32.f32 %v3775
    %vm3792 = vcmp.lt.s32.totalorder %v932, 0
    %v3793 = vsub.s32 0, %v932
    %v3794 = vsel %vm3792, %v3793, %v932
    %v3795 = vshrl.u32 %v3794, 6
    %v3796 = vand.u32 %v3794, 63
    %v3797 = vsub.s32 0, %v3796
    %v3798 = vsel %vm3792, %v3797, %v3796
    %vm3799 = vcmp.ne.s32.totalorder %v3798, 0
    %vm3800 = vcmp.lt.s32.totalorder %v3798, 0
    %vm3801 = vmand %vm3800, %vm3799
    %v3802 = vadd.s32 %v3798, 64
    %v3803 = vsel %vm3801, %v3802, %v3798
    %vm3804 = vcmp.eq.s32.totalorder %v723, %v3803
    %vm3805 = vcmp.eq.s32.totalorder %v724, %v3803
    %vm3806 = vcmp.eq.s32.totalorder %v725, %v3803
    %vm3807 = vcmp.eq.s32.totalorder %v726, %v3803
    %vm3808 = vcmp.eq.s32.totalorder %v727, %v3803
    %vm3809 = vcmp.eq.s32.totalorder %v728, %v3803
    %vm3810 = vcmp.eq.s32.totalorder %v729, %v3803
    %vm3811 = vcmp.eq.s32.totalorder %v730, %v3803
    %v3812 = vsel %vm3804, 1, 0
    %v3813 = vsel %vm3805, 1, 0
    %v3814 = vsel %vm3806, 1, 0
    %v3815 = vsel %vm3807, 1, 0
    %v3816 = vsel %vm3808, 1, 0
    %v3817 = vsel %vm3809, 1, 0
    %v3818 = vsel %vm3810, 1, 0
    %v3819 = vsel %vm3811, 1, 0
    %v3820 = vcvt.s32.f32 %v3812
    %v3821 = vcvt.s32.f32 %v3813
    %v3822 = vcvt.s32.f32 %v3814
    %v3823 = vcvt.s32.f32 %v3815
    %v3824 = vcvt.s32.f32 %v3816
    %v3825 = vcvt.s32.f32 %v3817
    %v3826 = vcvt.s32.f32 %v3818
    %v3827 = vcvt.s32.f32 %v3819
    %3828 = vmatpush.msra.mxu0 %v3791
    %3829 = vmatpush.msra.mxu0 %v3790
    %3830 = vmatpush.msra.mxu0 %v3789
    %3831 = vmatpush.msra.mxu0 %v3788
    %3832 = vmatpush.msra.mxu0 %v3787
    %3833 = vmatpush.msra.mxu0 %v3786
    %3834 = vmatpush.msra.mxu0 %v3785
    %3835 = vmatpush.msra.mxu0 %v3784
    %3836 = vmatpush.msra.mxu0 %v3783
    %3837 = vmatpush.msra.mxu0 %v3782
    %3838 = vmatpush.msra.mxu0 %v3781
    %3839 = vmatpush.msra.mxu0 %v3780
    %3840 = vmatpush.msra.mxu0 %v3779
    %3841 = vmatpush.msra.mxu0 %v3778
    %3842 = vmatpush.msra.mxu0 %v3777
    %3843 = vmatpush.msra.mxu0 %v3776
    %3844 = vmatmul.f32.gmra.mxu0 %v3543
    %v3845 = vpop.f32.mrf.mxu0
    %v3846 = vadd.f32 0.0, %v3845
    %3847 = vdwg.mxu0
    %3848 = vmatpush.msra.mxu0 %v3791
    %3849 = vmatpush.msra.mxu0 %v3790
    %3850 = vmatpush.msra.mxu0 %v3789
    %3851 = vmatpush.msra.mxu0 %v3788
    %3852 = vmatpush.msra.mxu0 %v3787
    %3853 = vmatpush.msra.mxu0 %v3786
    %3854 = vmatpush.msra.mxu0 %v3785
    %3855 = vmatpush.msra.mxu0 %v3784
    %3856 = vmatpush.msra.mxu0 %v3783
    %3857 = vmatpush.msra.mxu0 %v3782
    %3858 = vmatpush.msra.mxu0 %v3781
    %3859 = vmatpush.msra.mxu0 %v3780
    %3860 = vmatpush.msra.mxu0 %v3779
    %3861 = vmatpush.msra.mxu0 %v3778
    %3862 = vmatpush.msra.mxu0 %v3777
    %3863 = vmatpush.msra.mxu0 %v3776
    %3864 = vmatmul.f32.gmra.mxu0 %v3551
    %v3865 = vpop.f32.mrf.mxu0
    %v3866 = vadd.f32 0.0, %v3865
    %3867 = vdwg.mxu0
    %v3868 = vrcp.pop 8.0
    %v3869 = vmul.f32 8.0, %v3868
    %v3870 = vsub.f32 1.0, %v3869
    %v3871 = vmul.f32 %v3868, %v3870
    %v3872 = vadd.f32 %v3868, %v3871
    %vm3873 = vweird.f32 %v3868
    %v3874 = vsel %vm3873, %v3868, %v3872
    %v3875 = vmul.f32 %v3846, %v3874
    %v3876 = vmul.f32 %v3866, %v3874
    %v3877 = vmul.f32 %v3875, %v3875
    %v3878 = vsub.f32 %v3876, %v3877
    %v3879 = vadd.f32 %v3878, 1e-05
    %v3880 = vrsqrt.pop %v3879
    %v3881 = vmul.f32 %v3880, %v3879
    %v3882 = vmul.f32 %v3881, %v3880
    %v3883 = vmul.f32 0.5, %v3882
    %v3884 = vsub.f32 1.5, %v3883
    %v3885 = vmul.f32 %v3880, %v3884
    %vm3886 = vweird.f32 %v3879
    %vm3887 = vweird.f32 %v3880
    %vm3888 = vmor %vm3886, %vm3887
    %v3889 = vsel %vm3888, %v3880, %v3885
    %v3890 = vmul.f32 %v3534, %v3889
    %v3891 = vmul.f32 %v3875, %v3890
    %v3892 = vsub.f32 %v3535, %v3891
    %vm3893 = vcmask 523264
    %v3895 = vsel %vm3893, %v3890, 0
    %3897 = vmatpush.msra.mxu0 0.0
    %3898 = vmatpush.msra.mxu0 0.0
    %3899 = vmatpush.msra.mxu0 0.0
    %3900 = vmatpush.msra.mxu0 0.0
    %3901 = vmatpush.msra.mxu0 0.0
    %3902 = vmatpush.msra.mxu0 0.0
    %3903 = vmatpush.msra.mxu0 0.0
    %3904 = vmatpush.msra.mxu0 0.0
    %3905 = vmatpush.msra.mxu0 %v3827
    %3906 = vmatpush.msra.mxu0 %v3826
    %3907 = vmatpush.msra.mxu0 %v3825
    %3908 = vmatpush.msra.mxu0 %v3824
    %3909 = vmatpush.msra.mxu0 %v3823
    %3910 = vmatpush.msra.mxu0 %v3822
    %3911 = vmatpush.msra.mxu0 %v3821
    %3912 = vmatpush.msra.mxu0 %v3820
    %3913 = vmatmul.f32.gmra.mxu0 %v3895
    %v3914 = vpop.f32.mrf.mxu0
    %v3915 = vadd.f32 0.0, %v3914
    %3916 = vdwg.mxu0
    %v3918 = vsel %vm3893, %v3892, 0
    %3920 = vmatpush.msra.mxu0 0.0
    %3921 = vmatpush.msra.mxu0 0.0
    %3922 = vmatpush.msra.mxu0 0.0
    %3923 = vmatpush.msra.mxu0 0.0
    %3924 = vmatpush.msra.mxu0 0.0
    %3925 = vmatpush.msra.mxu0 0.0
    %3926 = vmatpush.msra.mxu0 0.0
    %3927 = vmatpush.msra.mxu0 0.0
    %3928 = vmatpush.msra.mxu0 %v3827
    %3929 = vmatpush.msra.mxu0 %v3826
    %3930 = vmatpush.msra.mxu0 %v3825
    %3931 = vmatpush.msra.mxu0 %v3824
    %3932 = vmatpush.msra.mxu0 %v3823
    %3933 = vmatpush.msra.mxu0 %v3822
    %3934 = vmatpush.msra.mxu0 %v3821
    %3935 = vmatpush.msra.mxu0 %v3820
    %3936 = vmatmul.f32.gmra.mxu0 %v3918
    %v3937 = vpop.f32.mrf.mxu0
    %v3938 = vadd.f32 0.0, %v3937
    %3939 = vdwg.mxu0
    %v3940 = vperm.slane %v3915, 0
    %v3941 = vmul.f32 %v3533, %v3940
    %v3942 = vperm.slane %v3938, 0
    %v3943 = vadd.f32 %v3941, %v3942
    %vm3944 = vcmp.gt.f32.partialorder %v3943, 0.0
    %v3945 = vmul.f32 %v3943, 0.03
    %v3946 = vsel %vm3944, %v3943, %v3945
    %v3948 = vrot.slane %v3946, 2
    %v3949 = vperm.slane %v3946, 0
    %v3950 = vperm.slane %v3948, 0
    %v3953 = vsel %vm548, 0.0, %v3949
    %v3954 = vsel %vm548, 0.0, %v3950
    %v3955 = vld [vmem:[#allocation15] sm:$0xff]
    %v3956 = vld [vmem:[#allocation15 + $0x8] sm:$0xff]
    %v3957 = vld [vmem:[#allocation15 + $0x10] sm:$0xff]
    %v3958 = vld [vmem:[#allocation15 + $0x18] sm:$0xff]
    %v3959 = vld [vmem:[#allocation15 + $0x20] sm:$0xff]
    %v3960 = vld [vmem:[#allocation15 + $0x28] sm:$0xff]
    %v3961 = vld [vmem:[#allocation15 + $0x30] sm:$0xff]
    %v3962 = vld [vmem:[#allocation15 + $0x38] sm:$0xff]
    %v3963 = vld [vmem:[#allocation15 + $0x40] sm:$0xff]
    %v3964 = vld [vmem:[#allocation15 + $0x48] sm:$0xff]
    %v3965 = vld [vmem:[#allocation15 + $0x50] sm:$0xff]
    %v3966 = vld [vmem:[#allocation15 + $0x58] sm:$0xff]
    %v3967 = vld [vmem:[#allocation15 + $0x60] sm:$0xff]
    %v3968 = vld [vmem:[#allocation15 + $0x68] sm:$0xff]
    %v3969 = vld [vmem:[#allocation15 + $0x70] sm:$0xff]
    %v3970 = vld [vmem:[#allocation15 + $0x78] sm:$0xff]
    %s3971 = scalar_lea.vmem [#allocation15], 128
    %v3972 = vld [vmem:[%s3971] sm:$0xff]
    %v3973 = vld [vmem:[%s3971 + $0x8] sm:$0xff]
    %v3974 = vld [vmem:[%s3971 + $0x10] sm:$0xff]
    %v3975 = vld [vmem:[%s3971 + $0x18] sm:$0xff]
    %v3976 = vld [vmem:[%s3971 + $0x20] sm:$0xff]
    %v3977 = vld [vmem:[%s3971 + $0x28] sm:$0xff]
    %v3978 = vld [vmem:[%s3971 + $0x30] sm:$0xff]
    %v3979 = vld [vmem:[%s3971 + $0x38] sm:$0xff]
    %v3980 = vld [vmem:[%s3971 + $0x40] sm:$0xff]
    %v3981 = vld [vmem:[%s3971 + $0x48] sm:$0xff]
    %v3982 = vld [vmem:[%s3971 + $0x50] sm:$0xff]
    %v3983 = vld [vmem:[%s3971 + $0x58] sm:$0xff]
    %v3984 = vld [vmem:[%s3971 + $0x60] sm:$0xff]
    %v3985 = vld [vmem:[%s3971 + $0x68] sm:$0xff]
    %v3986 = vld [vmem:[%s3971 + $0x70] sm:$0xff]
    %v3987 = vld [vmem:[%s3971 + $0x78] sm:$0xff]
    %3988 = vmatpush.msra.mxu0 %v3987
    %3989 = vmatpush.msra.mxu0 %v3986
    %3990 = vmatpush.msra.mxu0 %v3985
    %3991 = vmatpush.msra.mxu0 %v3984
    %3992 = vmatpush.msra.mxu0 %v3983
    %3993 = vmatpush.msra.mxu0 %v3982
    %3994 = vmatpush.msra.mxu0 %v3981
    %3995 = vmatpush.msra.mxu0 %v3980
    %3996 = vmatpush.msra.mxu0 %v3979
    %3997 = vmatpush.msra.mxu0 %v3978
    %3998 = vmatpush.msra.mxu0 %v3977
    %3999 = vmatpush.msra.mxu0 %v3976
    %4000 = vmatpush.msra.mxu0 %v3975
    %4001 = vmatpush.msra.mxu0 %v3974
    %4002 = vmatpush.msra.mxu0 %v3973
    %4003 = vmatpush.msra.mxu0 %v3972
    %4004 = vmatmul.f32.gmra.mxu0 %v3946
    %v4005 = vpop.f32.mrf.mxu0
    %v4006 = vadd.f32 0.0, %v4005
    %4007 = vdwg.mxu0
    %4010 = vst [vmem:[#allocation1] ss:$4 sm:$0xff] %v3953
    %s4011 = scalar_lea.vmem [#allocation1], 1
    %4012 = vst [vmem:[%s4011] ss:$4 sm:$0xff] %v3954
    %v4013 = vld.sshfl [vmem:[#allocation1] sm:$0xff pattern:$0x73625140]
    %4015 = vmatpush.msra.mxu0 %v3970
    %4016 = vmatpush.msra.mxu0 %v3969
    %4017 = vmatpush.msra.mxu0 %v3968
    %4018 = vmatpush.msra.mxu0 %v3967
    %4019 = vmatpush.msra.mxu0 %v3966
    %4020 = vmatpush.msra.mxu0 %v3965
    %4021 = vmatpush.msra.mxu0 %v3964
    %4022 = vmatpush.msra.mxu0 %v3963
    %4023 = vmatpush.msra.mxu0 %v3962
    %4024 = vmatpush.msra.mxu0 %v3961
    %4025 = vmatpush.msra.mxu0 %v3960
    %4026 = vmatpush.msra.mxu0 %v3959
    %4027 = vmatpush.msra.mxu0 %v3958
    %4028 = vmatpush.msra.mxu0 %v3957
    %4029 = vmatpush.msra.mxu0 %v3956
    %4030 = vmatpush.msra.mxu0 %v3955
    %4031 = vmatmul.f32.gmra.mxu0 %v4013
    %v4032 = vpop.f32.mrf.mxu0
    %v4033 = vadd.f32 %v4006, %v4032
    %4034 = vdwg.mxu0
    %v4035 = vperm.slane %v3946, 1
    %v4036 = vperm.slane %v3948, 1
    %v4039 = vsel %vm548, %v4035, 0.0
    %v4040 = vsel %vm548, %v4036, 0.0
    %s4041 = scalar_lea.vmem [#allocation15], 256
    %v4042 = vld [vmem:[%s4041] sm:$0xff]
    %v4043 = vld [vmem:[%s4041 + $0x8] sm:$0xff]
    %v4044 = vld [vmem:[%s4041 + $0x10] sm:$0xff]
    %v4045 = vld [vmem:[%s4041 + $0x18] sm:$0xff]
    %v4046 = vld [vmem:[%s4041 + $0x20] sm:$0xff]
    %v4047 = vld [vmem:[%s4041 + $0x28] sm:$0xff]
    %v4048 = vld [vmem:[%s4041 + $0x30] sm:$0xff]
    %v4049 = vld [vmem:[%s4041 + $0x38] sm:$0xff]
    %v4050 = vld [vmem:[%s4041 + $0x40] sm:$0xff]
    %v4051 = vld [vmem:[%s4041 + $0x48] sm:$0xff]
    %v4052 = vld [vmem:[%s4041 + $0x50] sm:$0xff]
    %v4053 = vld [vmem:[%s4041 + $0x58] sm:$0xff]
    %v4054 = vld [vmem:[%s4041 + $0x60] sm:$0xff]
    %v4055 = vld [vmem:[%s4041 + $0x68] sm:$0xff]
    %v4056 = vld [vmem:[%s4041 + $0x70] sm:$0xff]
    %v4057 = vld [vmem:[%s4041 + $0x78] sm:$0xff]
    %4060 = vst [vmem:[#allocation1] ss:$4 sm:$0xff] %v4039
    %s4061 = scalar_lea.vmem [#allocation1], 1
    %4062 = vst [vmem:[%s4061] ss:$4 sm:$0xff] %v4040
    %v4063 = vld.sshfl [vmem:[#allocation1] sm:$0xff pattern:$0x73625140]
    %4065 = vmatpush.msra.mxu0 %v4057
    %4066 = vmatpush.msra.mxu0 %v4056
    %4067 = vmatpush.msra.mxu0 %v4055
    %4068 = vmatpush.msra.mxu0 %v4054
    %4069 = vmatpush.msra.mxu0 %v4053
    %4070 = vmatpush.msra.mxu0 %v4052
    %4071 = vmatpush.msra.mxu0 %v4051
    %4072 = vmatpush.msra.mxu0 %v4050
    %4073 = vmatpush.msra.mxu0 %v4049
    %4074 = vmatpush.msra.mxu0 %v4048
    %4075 = vmatpush.msra.mxu0 %v4047
    %4076 = vmatpush.msra.mxu0 %v4046
    %4077 = vmatpush.msra.mxu0 %v4045
    %4078 = vmatpush.msra.mxu0 %v4044
    %4079 = vmatpush.msra.mxu0 %v4043
    %4080 = vmatpush.msra.mxu0 %v4042
    %4081 = vmatmul.f32.gmra.mxu0 %v4063
    %v4082 = vpop.f32.mrf.mxu0
    %v4083 = vadd.f32 0.0, %v4082
    %4084 = vdwg.mxu0
    %v4085 = vadd.f32 %v4033, %v4083
    %v4086 = vld [vmem:[%s47] sm:$0x1]
    %v4087 = vld [vmem:[%s49] sm:$0x1]
    %v4088 = vsel %vm3536, %v4085, 0.0
    %v4089 = vrot.slane %v4088, 4
    %v4090 = vadd.f32 %v4088, %v4089
    %v4091 = vrot.slane %v4090, 2
    %v4092 = vadd.f32 %v4090, %v4091
    %v4093 = vrot.slane %v4092, 1
    %v4094 = vadd.f32 %v4092, %v4093
    %v4095 = vmul.f32 %v4085, %v4085
    %v4096 = vsel %vm3536, %v4095, 0.0
    %v4097 = vrot.slane %v4096, 4
    %v4098 = vadd.f32 %v4096, %v4097
    %v4099 = vrot.slane %v4098, 2
    %v4100 = vadd.f32 %v4098, %v4099
    %v4101 = vrot.slane %v4100, 1
    %v4102 = vadd.f32 %v4100, %v4101
    %4103 = vmatpush.msra.mxu0 %v3791
    %4104 = vmatpush.msra.mxu0 %v3790
    %4105 = vmatpush.msra.mxu0 %v3789
    %4106 = vmatpush.msra.mxu0 %v3788
    %4107 = vmatpush.msra.mxu0 %v3787
    %4108 = vmatpush.msra.mxu0 %v3786
    %4109 = vmatpush.msra.mxu0 %v3785
    %4110 = vmatpush.msra.mxu0 %v3784
    %4111 = vmatpush.msra.mxu0 %v3783
    %4112 = vmatpush.msra.mxu0 %v3782
    %4113 = vmatpush.msra.mxu0 %v3781
    %4114 = vmatpush.msra.mxu0 %v3780
    %4115 = vmatpush.msra.mxu0 %v3779
    %4116 = vmatpush.msra.mxu0 %v3778
    %4117 = vmatpush.msra.mxu0 %v3777
    %4118 = vmatpush.msra.mxu0 %v3776
    %4119 = vmatmul.f32.gmra.mxu0 %v4094
    %v4120 = vpop.f32.mrf.mxu0
    %v4121 = vadd.f32 0.0, %v4120
    %4122 = vdwg.mxu0
    %4123 = vmatpush.msra.mxu0 %v3791
    %4124 = vmatpush.msra.mxu0 %v3790
    %4125 = vmatpush.msra.mxu0 %v3789
    %4126 = vmatpush.msra.mxu0 %v3788
    %4127 = vmatpush.msra.mxu0 %v3787
    %4128 = vmatpush.msra.mxu0 %v3786
    %4129 = vmatpush.msra.mxu0 %v3785
    %4130 = vmatpush.msra.mxu0 %v3784
    %4131 = vmatpush.msra.mxu0 %v3783
    %4132 = vmatpush.msra.mxu0 %v3782
    %4133 = vmatpush.msra.mxu0 %v3781
    %4134 = vmatpush.msra.mxu0 %v3780
    %4135 = vmatpush.msra.mxu0 %v3779
    %4136 = vmatpush.msra.mxu0 %v3778
    %4137 = vmatpush.msra.mxu0 %v3777
    %4138 = vmatpush.msra.mxu0 %v3776
    %4139 = vmatmul.f32.gmra.mxu0 %v4102
    %v4140 = vpop.f32.mrf.mxu0
    %v4141 = vadd.f32 0.0, %v4140
    %4142 = vdwg.mxu0
    %v4143 = vmul.f32 %v4121, %v3874
    %v4144 = vmul.f32 %v4141, %v3874
    %v4145 = vmul.f32 %v4143, %v4143
    %v4146 = vsub.f32 %v4144, %v4145
    %v4147 = vadd.f32 %v4146, 1e-05
    %v4148 = vrsqrt.pop %v4147
    %v4149 = vmul.f32 %v4148, %v4147
    %v4150 = vmul.f32 %v4149, %v4148
    %v4151 = vmul.f32 0.5, %v4150
    %v4152 = vsub.f32 1.5, %v4151
    %v4153 = vmul.f32 %v4148, %v4152
    %vm4154 = vweird.f32 %v4147
    %vm4155 = vweird.f32 %v4148
    %vm4156 = vmor %vm4154, %vm4155
    %v4157 = vsel %vm4156, %v4148, %v4153
    %v4158 = vmul.f32 %v4086, %v4157
    %v4159 = vmul.f32 %v4143, %v4158
    %v4160 = vsub.f32 %v4087, %v4159
    %v4162 = vsel %vm3893, %v4158, 0
    %4164 = vmatpush.msra.mxu0 0.0
    %4165 = vmatpush.msra.mxu0 0.0
    %4166 = vmatpush.msra.mxu0 0.0
    %4167 = vmatpush.msra.mxu0 0.0
    %4168 = vmatpush.msra.mxu0 0.0
    %4169 = vmatpush.msra.mxu0 0.0
    %4170 = vmatpush.msra.mxu0 0.0
    %4171 = vmatpush.msra.mxu0 0.0
    %4172 = vmatpush.msra.mxu0 %v3827
    %4173 = vmatpush.msra.mxu0 %v3826
    %4174 = vmatpush.msra.mxu0 %v3825
    %4175 = vmatpush.msra.mxu0 %v3824
    %4176 = vmatpush.msra.mxu0 %v3823
    %4177 = vmatpush.msra.mxu0 %v3822
    %4178 = vmatpush.msra.mxu0 %v3821
    %4179 = vmatpush.msra.mxu0 %v3820
    %4180 = vmatmul.f32.gmra.mxu0 %v4162
    %v4181 = vpop.f32.mrf.mxu0
    %v4182 = vadd.f32 0.0, %v4181
    %4183 = vdwg.mxu0
    %v4185 = vsel %vm3893, %v4160, 0
    %4187 = vmatpush.msra.mxu0 0.0
    %4188 = vmatpush.msra.mxu0 0.0
    %4189 = vmatpush.msra.mxu0 0.0
    %4190 = vmatpush.msra.mxu0 0.0
    %4191 = vmatpush.msra.mxu0 0.0
    %4192 = vmatpush.msra.mxu0 0.0
    %4193 = vmatpush.msra.mxu0 0.0
    %4194 = vmatpush.msra.mxu0 0.0
    %4195 = vmatpush.msra.mxu0 %v3827
    %4196 = vmatpush.msra.mxu0 %v3826
    %4197 = vmatpush.msra.mxu0 %v3825
    %4198 = vmatpush.msra.mxu0 %v3824
    %4199 = vmatpush.msra.mxu0 %v3823
    %4200 = vmatpush.msra.mxu0 %v3822
    %4201 = vmatpush.msra.mxu0 %v3821
    %4202 = vmatpush.msra.mxu0 %v3820
    %4203 = vmatmul.f32.gmra.mxu0 %v4185
    %v4204 = vpop.f32.mrf.mxu0
    %v4205 = vadd.f32 0.0, %v4204
    %4206 = vdwg.mxu0
    %v4207 = vperm.slane %v4182, 0
    %v4208 = vmul.f32 %v4085, %v4207
    %v4209 = vperm.slane %v4205, 0
    %v4210 = vadd.f32 %v4208, %v4209
    %vm4211 = vcmp.gt.f32.partialorder %v4210, 0.0
    %v4212 = vmul.f32 %v4210, 0.03
    %v4213 = vsel %vm4211, %v4210, %v4212
    %v4214 = vld [vmem:[%s53] sm:$0x1]
    %v4215 = vld [vmem:[#allocation16] sm:$0xff]
    %v4216 = vld [vmem:[#allocation16 + $0x8] sm:$0xff]
    %v4217 = vld [vmem:[#allocation16 + $0x10] sm:$0xff]
    %v4218 = vld [vmem:[#allocation16 + $0x18] sm:$0xff]
    %v4219 = vld [vmem:[#allocation16 + $0x20] sm:$0xff]
    %v4220 = vld [vmem:[#allocation16 + $0x28] sm:$0xff]
    %v4221 = vld [vmem:[#allocation16 + $0x30] sm:$0xff]
    %v4222 = vld [vmem:[#allocation16 + $0x38] sm:$0xff]
    %v4223 = vld [vmem:[#allocation16 + $0x40] sm:$0xff]
    %v4224 = vld [vmem:[#allocation16 + $0x48] sm:$0xff]
    %v4225 = vld [vmem:[#allocation16 + $0x50] sm:$0xff]
    %v4226 = vld [vmem:[#allocation16 + $0x58] sm:$0xff]
    %v4227 = vld [vmem:[#allocation16 + $0x60] sm:$0xff]
    %v4228 = vld [vmem:[#allocation16 + $0x68] sm:$0xff]
    %v4229 = vld [vmem:[#allocation16 + $0x70] sm:$0xff]
    %v4230 = vld [vmem:[#allocation16 + $0x78] sm:$0xff]
    %v4232 = vperm.slane %v4214, 0
    %4234 = vmatpush.msra.mxu0 %v4230
    %4235 = vmatpush.msra.mxu0 %v4229
    %4236 = vmatpush.msra.mxu0 %v4228
    %4237 = vmatpush.msra.mxu0 %v4227
    %4238 = vmatpush.msra.mxu0 %v4226
    %4239 = vmatpush.msra.mxu0 %v4225
    %4240 = vmatpush.msra.mxu0 %v4224
    %4241 = vmatpush.msra.mxu0 %v4223
    %4242 = vmatpush.msra.mxu0 %v4222
    %4243 = vmatpush.msra.mxu0 %v4221
    %4244 = vmatpush.msra.mxu0 %v4220
    %4245 = vmatpush.msra.mxu0 %v4219
    %4246 = vmatpush.msra.mxu0 %v4218
    %4247 = vmatpush.msra.mxu0 %v4217
    %4248 = vmatpush.msra.mxu0 %v4216
    %4249 = vmatpush.msra.mxu0 %v4215
    %4250 = vmatmul.f32.gmra.mxu0 %v4213
    %v4251 = vpop.f32.mrf.mxu0
    %v4252 = vadd.f32 %v4232, %v4251
    %4253 = vdwg.mxu0
    %s4254 = scalar_lea.vmem [#allocation16], 128
    %v4255 = vld [vmem:[%s4254] sm:$0xff]
    %v4256 = vld [vmem:[%s4254 + $0x8] sm:$0xff]
    %v4257 = vld [vmem:[%s4254 + $0x10] sm:$0xff]
    %v4258 = vld [vmem:[%s4254 + $0x18] sm:$0xff]
    %v4259 = vld [vmem:[%s4254 + $0x20] sm:$0xff]
    %v4260 = vld [vmem:[%s4254 + $0x28] sm:$0xff]
    %v4261 = vld [vmem:[%s4254 + $0x30] sm:$0xff]
    %v4262 = vld [vmem:[%s4254 + $0x38] sm:$0xff]
    %v4263 = vld [vmem:[%s4254 + $0x40] sm:$0xff]
    %v4264 = vld [vmem:[%s4254 + $0x48] sm:$0xff]
    %v4265 = vld [vmem:[%s4254 + $0x50] sm:$0xff]
    %v4266 = vld [vmem:[%s4254 + $0x58] sm:$0xff]
    %v4267 = vld [vmem:[%s4254 + $0x60] sm:$0xff]
    %v4268 = vld [vmem:[%s4254 + $0x68] sm:$0xff]
    %v4269 = vld [vmem:[%s4254 + $0x70] sm:$0xff]
    %v4270 = vld [vmem:[%s4254 + $0x78] sm:$0xff]
    %4271 = vmatpush.msra.mxu0 %v4270
    %4272 = vmatpush.msra.mxu0 %v4269
    %4273 = vmatpush.msra.mxu0 %v4268
    %4274 = vmatpush.msra.mxu0 %v4267
    %4275 = vmatpush.msra.mxu0 %v4266
    %4276 = vmatpush.msra.mxu0 %v4265
    %4277 = vmatpush.msra.mxu0 %v4264
    %4278 = vmatpush.msra.mxu0 %v4263
    %4279 = vmatpush.msra.mxu0 %v4262
    %4280 = vmatpush.msra.mxu0 %v4261
    %4281 = vmatpush.msra.mxu0 %v4260
    %4282 = vmatpush.msra.mxu0 %v4259
    %4283 = vmatpush.msra.mxu0 %v4258
    %4284 = vmatpush.msra.mxu0 %v4257
    %4285 = vmatpush.msra.mxu0 %v4256
    %4286 = vmatpush.msra.mxu0 %v4255
    %4287 = vmatmul.f32.gmra.mxu0 %v4213
    %v4288 = vpop.f32.mrf.mxu0
    %v4289 = vadd.f32 %v4232, %v4288
    %4290 = vdwg.mxu0
    %v4292 = vrot.slane %v4252, 1
    %v4293 = vrot.slane %v4252, 2
    %v4294 = vrot.slane %v4252, 3
    %v4299 = vrot.slane %v4289, 1
    %v4300 = vrot.slane %v4289, 2
    %v4301 = vrot.slane %v4289, 3
    %v4302 = vperm.slane %v4289, 0
    %v4303 = vperm.slane %v4299, 0
    %v4304 = vperm.slane %v4300, 0
    %v4305 = vperm.slane %v4301, 0
    %v4310 = vsel %vm548, %v4252, %v4302
    %v4311 = vsel %vm548, %v4292, %v4303
    %v4312 = vsel %vm548, %v4293, %v4304
    %v4313 = vsel %vm548, %v4294, %v4305
    %4314 = vst [vmem:[#allocation1] ss:$2 sm:$0xff] %v3339
    %v4315 = vld.sshfl [vmem:[#allocation1] sm:$0xff pattern:$0x75316420]
    %s4316 = scalar_lea.vmem [#allocation1], 16
    %4317 = vst [vmem:[%s4316] ss:$2 sm:$0xff] %v3341
    %v4318 = vld.sshfl [vmem:[#allocation1 + $0x10] sm:$0xff pattern:$0x75316420]
    %v4319 = vrot.slane %v4315, 7
    %v4320 = vrot.slane %v4318, 7
    %v4323 = vsel %vm548, 0.0, %v4319
    %v4324 = vsel %vm548, 0.0, %v4320
    %v4325 = vld [vmem:[#allocation18] sm:$0xff]
    %v4326 = vld [vmem:[#allocation18 + $0x8] sm:$0xff]
    %v4327 = vld [vmem:[#allocation18 + $0x10] sm:$0xff]
    %v4328 = vld [vmem:[#allocation18 + $0x18] sm:$0xff]
    %v4329 = vld [vmem:[#allocation18 + $0x20] sm:$0xff]
    %v4330 = vld [vmem:[#allocation18 + $0x28] sm:$0xff]
    %v4331 = vld [vmem:[#allocation18 + $0x30] sm:$0xff]
    %v4332 = vld [vmem:[#allocation18 + $0x38] sm:$0xff]
    %v4333 = vld [vmem:[#allocation18 + $0x40] sm:$0xff]
    %v4334 = vld [vmem:[#allocation18 + $0x48] sm:$0xff]
    %v4335 = vld [vmem:[#allocation18 + $0x50] sm:$0xff]
    %v4336 = vld [vmem:[#allocation18 + $0x58] sm:$0xff]
    %v4337 = vld [vmem:[#allocation18 + $0x60] sm:$0xff]
    %v4338 = vld [vmem:[#allocation18 + $0x68] sm:$0xff]
    %v4339 = vld [vmem:[#allocation18 + $0x70] sm:$0xff]
    %v4340 = vld [vmem:[#allocation18 + $0x78] sm:$0xff]
    %s4341 = scalar_lea.vmem [#allocation18], 128
    %v4342 = vld [vmem:[%s4341] sm:$0xff]
    %v4343 = vld [vmem:[%s4341 + $0x8] sm:$0xff]
    %v4344 = vld [vmem:[%s4341 + $0x10] sm:$0xff]
    %v4345 = vld [vmem:[%s4341 + $0x18] sm:$0xff]
    %v4346 = vld [vmem:[%s4341 + $0x20] sm:$0xff]
    %v4347 = vld [vmem:[%s4341 + $0x28] sm:$0xff]
    %v4348 = vld [vmem:[%s4341 + $0x30] sm:$0xff]
    %v4349 = vld [vmem:[%s4341 + $0x38] sm:$0xff]
    %v4350 = vld [vmem:[%s4341 + $0x40] sm:$0xff]
    %v4351 = vld [vmem:[%s4341 + $0x48] sm:$0xff]
    %v4352 = vld [vmem:[%s4341 + $0x50] sm:$0xff]
    %v4353 = vld [vmem:[%s4341 + $0x58] sm:$0xff]
    %v4354 = vld [vmem:[%s4341 + $0x60] sm:$0xff]
    %v4355 = vld [vmem:[%s4341 + $0x68] sm:$0xff]
    %v4356 = vld [vmem:[%s4341 + $0x70] sm:$0xff]
    %v4357 = vld [vmem:[%s4341 + $0x78] sm:$0xff]
    %4358 = vmatpush.msra.mxu0 %v4357
    %4359 = vmatpush.msra.mxu0 %v4356
    %4360 = vmatpush.msra.mxu0 %v4355
    %4361 = vmatpush.msra.mxu0 %v4354
    %4362 = vmatpush.msra.mxu0 %v4353
    %4363 = vmatpush.msra.mxu0 %v4352
    %4364 = vmatpush.msra.mxu0 %v4351
    %4365 = vmatpush.msra.mxu0 %v4350
    %4366 = vmatpush.msra.mxu0 %v4349
    %4367 = vmatpush.msra.mxu0 %v4348
    %4368 = vmatpush.msra.mxu0 %v4347
    %4369 = vmatpush.msra.mxu0 %v4346
    %4370 = vmatpush.msra.mxu0 %v4345
    %4371 = vmatpush.msra.mxu0 %v4344
    %4372 = vmatpush.msra.mxu0 %v4343
    %4373 = vmatpush.msra.mxu0 %v4342
    %4374 = vmatmul.f32.gmra.mxu0 %v3339
    %v4375 = vpop.f32.mrf.mxu0
    %v4376 = vadd.f32 0.0, %v4375
    %4377 = vdwg.mxu0
    %4380 = vst [vmem:[#allocation1] ss:$2 sm:$0xff] %v4323
    %s4381 = scalar_lea.vmem [#allocation1], 1
    %4382 = vst [vmem:[%s4381] ss:$2 sm:$0xff] %v4324
    %v4383 = vld.sshfl [vmem:[#allocation1] sm:$0xff pattern:$0x75316420]
    %4385 = vmatpush.msra.mxu0 %v4340
    %4386 = vmatpush.msra.mxu0 %v4339
    %4387 = vmatpush.msra.mxu0 %v4338
    %4388 = vmatpush.msra.mxu0 %v4337
    %4389 = vmatpush.msra.mxu0 %v4336
    %4390 = vmatpush.msra.mxu0 %v4335
    %4391 = vmatpush.msra.mxu0 %v4334
    %4392 = vmatpush.msra.mxu0 %v4333
    %4393 = vmatpush.msra.mxu0 %v4332
    %4394 = vmatpush.msra.mxu0 %v4331
    %4395 = vmatpush.msra.mxu0 %v4330
    %4396 = vmatpush.msra.mxu0 %v4329
    %4397 = vmatpush.msra.mxu0 %v4328
    %4398 = vmatpush.msra.mxu0 %v4327
    %4399 = vmatpush.msra.mxu0 %v4326
    %4400 = vmatpush.msra.mxu0 %v4325
    %4401 = vmatmul.f32.gmra.mxu0 %v4383
    %v4402 = vpop.f32.mrf.mxu0
    %v4403 = vadd.f32 %v4376, %v4402
    %4404 = vdwg.mxu0
    %4405 = vst [vmem:[#allocation1] ss:$2 sm:$0xff] %v3339
    %v4406 = vld.sshfl [vmem:[#allocation1] sm:$0xff pattern:$0x75316420]
    %s4407 = scalar_lea.vmem [#allocation1], 16
    %4408 = vst [vmem:[%s4407] ss:$2 sm:$0xff] %v3341
    %v4409 = vld.sshfl [vmem:[#allocation1 + $0x10] sm:$0xff pattern:$0x75316420]
    %v4410 = vrot.slane %v4406, 1
    %v4411 = vrot.slane %v4409, 1
    %v4414 = vsel %vm2619, %v4410, 0.0
    %v4415 = vsel %vm2619, %v4411, 0.0
    %s4416 = scalar_lea.vmem [#allocation18], 256
    %v4417 = vld [vmem:[%s4416] sm:$0xff]
    %v4418 = vld [vmem:[%s4416 + $0x8] sm:$0xff]
    %v4419 = vld [vmem:[%s4416 + $0x10] sm:$0xff]
    %v4420 = vld [vmem:[%s4416 + $0x18] sm:$0xff]
    %v4421 = vld [vmem:[%s4416 + $0x20] sm:$0xff]
    %v4422 = vld [vmem:[%s4416 + $0x28] sm:$0xff]
    %v4423 = vld [vmem:[%s4416 + $0x30] sm:$0xff]
    %v4424 = vld [vmem:[%s4416 + $0x38] sm:$0xff]
    %v4425 = vld [vmem:[%s4416 + $0x40] sm:$0xff]
    %v4426 = vld [vmem:[%s4416 + $0x48] sm:$0xff]
    %v4427 = vld [vmem:[%s4416 + $0x50] sm:$0xff]
    %v4428 = vld [vmem:[%s4416 + $0x58] sm:$0xff]
    %v4429 = vld [vmem:[%s4416 + $0x60] sm:$0xff]
    %v4430 = vld [vmem:[%s4416 + $0x68] sm:$0xff]
    %v4431 = vld [vmem:[%s4416 + $0x70] sm:$0xff]
    %v4432 = vld [vmem:[%s4416 + $0x78] sm:$0xff]
    %4435 = vst [vmem:[#allocation1] ss:$2 sm:$0xff] %v4414
    %s4436 = scalar_lea.vmem [#allocation1], 1
    %4437 = vst [vmem:[%s4436] ss:$2 sm:$0xff] %v4415
    %v4438 = vld.sshfl [vmem:[#allocation1] sm:$0xff pattern:$0x75316420]
    %4440 = vmatpush.msra.mxu0 %v4432
    %4441 = vmatpush.msra.mxu0 %v4431
    %4442 = vmatpush.msra.mxu0 %v4430
    %4443 = vmatpush.msra.mxu0 %v4429
    %4444 = vmatpush.msra.mxu0 %v4428
    %4445 = vmatpush.msra.mxu0 %v4427
    %4446 = vmatpush.msra.mxu0 %v4426
    %4447 = vmatpush.msra.mxu0 %v4425
    %4448 = vmatpush.msra.mxu0 %v4424
    %4449 = vmatpush.msra.mxu0 %v4423
    %4450 = vmatpush.msra.mxu0 %v4422
    %4451 = vmatpush.msra.mxu0 %v4421
    %4452 = vmatpush.msra.mxu0 %v4420
    %4453 = vmatpush.msra.mxu0 %v4419
    %4454 = vmatpush.msra.mxu0 %v4418
    %4455 = vmatpush.msra.mxu0 %v4417
    %4456 = vmatmul.f32.gmra.mxu0 %v4438
    %v4457 = vpop.f32.mrf.mxu0
    %v4458 = vadd.f32 0.0, %v4457
    %4459 = vdwg.mxu0
    %v4460 = vadd.f32 %v4403, %v4458
    %4465 = vst [vmem:[#allocation1] ss:$4 sm:$0xff] %v4310
    %s4466 = scalar_lea.vmem [#allocation1], 1
    %4467 = vst [vmem:[%s4466] ss:$4 sm:$0xff] %v4311
    %v4468 = vld.sshfl [vmem:[#allocation1] sm:$0xff pattern:$0x73625140]
    %s4469 = scalar_lea.vmem [#allocation1], 32
    %4470 = vst [vmem:[%s4469] ss:$4 sm:$0xff] %v4312
    %s4471 = scalar_lea.vmem [#allocation1], 33
    %4472 = vst [vmem:[%s4471] ss:$4 sm:$0xff] %v4313
    %v4473 = vld.sshfl [vmem:[#allocation1 + $0x20] sm:$0xff pattern:$0x73625140]
    %v4474 = vrot.slane %v4468, 7
    %v4475 = vrot.slane %v4473, 7
    %v4478 = vsel %vm548, 0.0, %v4474
    %v4479 = vsel %vm548, 0.0, %v4475
    %v4480 = vld [vmem:[#allocation19] sm:$0xff]
    %v4481 = vld [vmem:[#allocation19 + $0x8] sm:$0xff]
    %v4482 = vld [vmem:[#allocation19 + $0x10] sm:$0xff]
    %v4483 = vld [vmem:[#allocation19 + $0x18] sm:$0xff]
    %v4484 = vld [vmem:[#allocation19 + $0x20] sm:$0xff]
    %v4485 = vld [vmem:[#allocation19 + $0x28] sm:$0xff]
    %v4486 = vld [vmem:[#allocation19 + $0x30] sm:$0xff]
    %v4487 = vld [vmem:[#allocation19 + $0x38] sm:$0xff]
    %v4488 = vld [vmem:[#allocation19 + $0x40] sm:$0xff]
    %v4489 = vld [vmem:[#allocation19 + $0x48] sm:$0xff]
    %v4490 = vld [vmem:[#allocation19 + $0x50] sm:$0xff]
    %v4491 = vld [vmem:[#allocation19 + $0x58] sm:$0xff]
    %v4492 = vld [vmem:[#allocation19 + $0x60] sm:$0xff]
    %v4493 = vld [vmem:[#allocation19 + $0x68] sm:$0xff]
    %v4494 = vld [vmem:[#allocation19 + $0x70] sm:$0xff]
    %v4495 = vld [vmem:[#allocation19 + $0x78] sm:$0xff]
    %4498 = vst [vmem:[#allocation1] ss:$2 sm:$0xff] %v4478
    %s4499 = scalar_lea.vmem [#allocation1], 1
    %4500 = vst [vmem:[%s4499] ss:$2 sm:$0xff] %v4479
    %v4501 = vld.sshfl [vmem:[#allocation1] sm:$0xff pattern:$0x75316420]
    %4503 = vmatpush.msra.mxu0 %v4495
    %4504 = vmatpush.msra.mxu0 %v4494
    %4505 = vmatpush.msra.mxu0 %v4493
    %4506 = vmatpush.msra.mxu0 %v4492
    %4507 = vmatpush.msra.mxu0 %v4491
    %4508 = vmatpush.msra.mxu0 %v4490
    %4509 = vmatpush.msra.mxu0 %v4489
    %4510 = vmatpush.msra.mxu0 %v4488
    %4511 = vmatpush.msra.mxu0 %v4487
    %4512 = vmatpush.msra.mxu0 %v4486
    %4513 = vmatpush.msra.mxu0 %v4485
    %4514 = vmatpush.msra.mxu0 %v4484
    %4515 = vmatpush.msra.mxu0 %v4483
    %4516 = vmatpush.msra.mxu0 %v4482
    %4517 = vmatpush.msra.mxu0 %v4481
    %4518 = vmatpush.msra.mxu0 %v4480
    %4519 = vmatmul.f32.gmra.mxu0 %v4501
    %v4520 = vpop.f32.mrf.mxu0
    %v4521 = vadd.f32 0.0, %v4520
    %4522 = vdwg.mxu0
    %v4523 = vadd.f32 %v4460, %v4521
    %s4524 = scalar_lea.vmem [#allocation19], 128
    %v4525 = vld [vmem:[%s4524] sm:$0xff]
    %v4526 = vld [vmem:[%s4524 + $0x8] sm:$0xff]
    %v4527 = vld [vmem:[%s4524 + $0x10] sm:$0xff]
    %v4528 = vld [vmem:[%s4524 + $0x18] sm:$0xff]
    %v4529 = vld [vmem:[%s4524 + $0x20] sm:$0xff]
    %v4530 = vld [vmem:[%s4524 + $0x28] sm:$0xff]
    %v4531 = vld [vmem:[%s4524 + $0x30] sm:$0xff]
    %v4532 = vld [vmem:[%s4524 + $0x38] sm:$0xff]
    %v4533 = vld [vmem:[%s4524 + $0x40] sm:$0xff]
    %v4534 = vld [vmem:[%s4524 + $0x48] sm:$0xff]
    %v4535 = vld [vmem:[%s4524 + $0x50] sm:$0xff]
    %v4536 = vld [vmem:[%s4524 + $0x58] sm:$0xff]
    %v4537 = vld [vmem:[%s4524 + $0x60] sm:$0xff]
    %v4538 = vld [vmem:[%s4524 + $0x68] sm:$0xff]
    %v4539 = vld [vmem:[%s4524 + $0x70] sm:$0xff]
    %v4540 = vld [vmem:[%s4524 + $0x78] sm:$0xff]
    %4541 = vst [vmem:[#allocation1] ss:$4 sm:$0xff] %v4310
    %s4542 = scalar_lea.vmem [#allocation1], 1
    %4543 = vst [vmem:[%s4542] ss:$4 sm:$0xff] %v4311
    %s4544 = scalar_lea.vmem [#allocation1], 2
    %4545 = vst [vmem:[%s4544] ss:$4 sm:$0xff] %v4312
    %s4546 = scalar_lea.vmem [#allocation1], 3
    %4547 = vst [vmem:[%s4546] ss:$4 sm:$0xff] %v4313
    %v4548 = vld.sshfl [vmem:[#allocation1] sm:$0xff pattern:$0x73625140]
    %4550 = vmatpush.msra.mxu0 %v4540
    %4551 = vmatpush.msra.mxu0 %v4539
    %4552 = vmatpush.msra.mxu0 %v4538
    %4553 = vmatpush.msra.mxu0 %v4537
    %4554 = vmatpush.msra.mxu0 %v4536
    %4555 = vmatpush.msra.mxu0 %v4535
    %4556 = vmatpush.msra.mxu0 %v4534
    %4557 = vmatpush.msra.mxu0 %v4533
    %4558 = vmatpush.msra.mxu0 %v4532
    %4559 = vmatpush.msra.mxu0 %v4531
    %4560 = vmatpush.msra.mxu0 %v4530
    %4561 = vmatpush.msra.mxu0 %v4529
    %4562 = vmatpush.msra.mxu0 %v4528
    %4563 = vmatpush.msra.mxu0 %v4527
    %4564 = vmatpush.msra.mxu0 %v4526
    %4565 = vmatpush.msra.mxu0 %v4525
    %4566 = vmatmul.f32.gmra.mxu0 %v4548
    %v4567 = vpop.f32.mrf.mxu0
    %v4568 = vadd.f32 0.0, %v4567
    %4569 = vdwg.mxu0
    %v4570 = vadd.f32 %v4523, %v4568
    %4571 = vst [vmem:[#allocation1] ss:$4 sm:$0xff] %v4310
    %s4572 = scalar_lea.vmem [#allocation1], 1
    %4573 = vst [vmem:[%s4572] ss:$4 sm:$0xff] %v4311
    %v4574 = vld.sshfl [vmem:[#allocation1] sm:$0xff pattern:$0x73625140]
    %s4575 = scalar_lea.vmem [#allocation1], 32
    %4576 = vst [vmem:[%s4575] ss:$4 sm:$0xff] %v4312
    %s4577 = scalar_lea.vmem [#allocation1], 33
    %4578 = vst [vmem:[%s4577] ss:$4 sm:$0xff] %v4313
    %v4579 = vld.sshfl [vmem:[#allocation1 + $0x20] sm:$0xff pattern:$0x73625140]
    %v4580 = vrot.slane %v4574, 1
    %v4581 = vrot.slane %v4579, 1
    %v4584 = vsel %vm2619, %v4580, 0.0
    %v4585 = vsel %vm2619, %v4581, 0.0
    %s4586 = scalar_lea.vmem [#allocation19], 256
    %v4587 = vld [vmem:[%s4586] sm:$0xff]
    %v4588 = vld [vmem:[%s4586 + $0x8] sm:$0xff]
    %v4589 = vld [vmem:[%s4586 + $0x10] sm:$0xff]
    %v4590 = vld [vmem:[%s4586 + $0x18] sm:$0xff]
    %v4591 = vld [vmem:[%s4586 + $0x20] sm:$0xff]
    %v4592 = vld [vmem:[%s4586 + $0x28] sm:$0xff]
    %v4593 = vld [vmem:[%s4586 + $0x30] sm:$0xff]
    %v4594 = vld [vmem:[%s4586 + $0x38] sm:$0xff]
    %v4595 = vld [vmem:[%s4586 + $0x40] sm:$0xff]
    %v4596 = vld [vmem:[%s4586 + $0x48] sm:$0xff]
    %v4597 = vld [vmem:[%s4586 + $0x50] sm:$0xff]
    %v4598 = vld [vmem:[%s4586 + $0x58] sm:$0xff]
    %v4599 = vld [vmem:[%s4586 + $0x60] sm:$0xff]
    %v4600 = vld [vmem:[%s4586 + $0x68] sm:$0xff]
    %v4601 = vld [vmem:[%s4586 + $0x70] sm:$0xff]
    %v4602 = vld [vmem:[%s4586 + $0x78] sm:$0xff]
    %4605 = vst [vmem:[#allocation1] ss:$2 sm:$0xff] %v4584
    %s4606 = scalar_lea.vmem [#allocation1], 1
    %4607 = vst [vmem:[%s4606] ss:$2 sm:$0xff] %v4585
    %v4608 = vld.sshfl [vmem:[#allocation1] sm:$0xff pattern:$0x75316420]
    %4610 = vmatpush.msra.mxu0 %v4602
    %4611 = vmatpush.msra.mxu0 %v4601
    %4612 = vmatpush.msra.mxu0 %v4600
    %4613 = vmatpush.msra.mxu0 %v4599
    %4614 = vmatpush.msra.mxu0 %v4598
    %4615 = vmatpush.msra.mxu0 %v4597
    %4616 = vmatpush.msra.mxu0 %v4596
    %4617 = vmatpush.msra.mxu0 %v4595
    %4618 = vmatpush.msra.mxu0 %v4594
    %4619 = vmatpush.msra.mxu0 %v4593
    %4620 = vmatpush.msra.mxu0 %v4592
    %4621 = vmatpush.msra.mxu0 %v4591
    %4622 = vmatpush.msra.mxu0 %v4590
    %4623 = vmatpush.msra.mxu0 %v4589
    %4624 = vmatpush.msra.mxu0 %v4588
    %4625 = vmatpush.msra.mxu0 %v4587
    %4626 = vmatmul.f32.gmra.mxu0 %v4608
    %v4627 = vpop.f32.mrf.mxu0
    %v4628 = vadd.f32 0.0, %v4627
    %4629 = vdwg.mxu0
    %v4630 = vadd.f32 %v4570, %v4628
    %v4631 = vld [vmem:[%s59] sm:$0x1]
    %v4632 = vld [vmem:[%s61] sm:$0x1]
    %v4633 = vrot.slane %v4630, 4
    %v4634 = vadd.f32 %v4630, %v4633
    %v4635 = vrot.slane %v4634, 2
    %v4636 = vadd.f32 %v4634, %v4635
    %v4637 = vrot.slane %v4636, 1
    %v4638 = vadd.f32 %v4636, %v4637
    %v4639 = vmul.f32 %v4630, %v4630
    %v4640 = vrot.slane %v4639, 4
    %v4641 = vadd.f32 %v4639, %v4640
    %v4642 = vrot.slane %v4641, 2
    %v4643 = vadd.f32 %v4641, %v4642
    %v4644 = vrot.slane %v4643, 1
    %v4645 = vadd.f32 %v4643, %v4644
    %4646 = vmatpush.msra.mxu0 %v2921
    %4647 = vmatpush.msra.mxu0 %v2920
    %4648 = vmatpush.msra.mxu0 %v2919
    %4649 = vmatpush.msra.mxu0 %v2918
    %4650 = vmatpush.msra.mxu0 %v2917
    %4651 = vmatpush.msra.mxu0 %v2916
    %4652 = vmatpush.msra.mxu0 %v2915
    %4653 = vmatpush.msra.mxu0 %v2914
    %4654 = vmatpush.msra.mxu0 %v2913
    %4655 = vmatpush.msra.mxu0 %v2912
    %4656 = vmatpush.msra.mxu0 %v2911
    %4657 = vmatpush.msra.mxu0 %v2910
    %4658 = vmatpush.msra.mxu0 %v2909
    %4659 = vmatpush.msra.mxu0 %v2908
    %4660 = vmatpush.msra.mxu0 %v2907
    %4661 = vmatpush.msra.mxu0 %v2906
    %4662 = vmatmul.f32.gmra.mxu0 %v4638
    %v4663 = vpop.f32.mrf.mxu0
    %v4664 = vadd.f32 0.0, %v4663
    %4665 = vdwg.mxu0
    %4666 = vmatpush.msra.mxu0 %v2921
    %4667 = vmatpush.msra.mxu0 %v2920
    %4668 = vmatpush.msra.mxu0 %v2919
    %4669 = vmatpush.msra.mxu0 %v2918
    %4670 = vmatpush.msra.mxu0 %v2917
    %4671 = vmatpush.msra.mxu0 %v2916
    %4672 = vmatpush.msra.mxu0 %v2915
    %4673 = vmatpush.msra.mxu0 %v2914
    %4674 = vmatpush.msra.mxu0 %v2913
    %4675 = vmatpush.msra.mxu0 %v2912
    %4676 = vmatpush.msra.mxu0 %v2911
    %4677 = vmatpush.msra.mxu0 %v2910
    %4678 = vmatpush.msra.mxu0 %v2909
    %4679 = vmatpush.msra.mxu0 %v2908
    %4680 = vmatpush.msra.mxu0 %v2907
    %4681 = vmatpush.msra.mxu0 %v2906
    %4682 = vmatmul.f32.gmra.mxu0 %v4645
    %v4683 = vpop.f32.mrf.mxu0
    %v4684 = vadd.f32 0.0, %v4683
    %4685 = vdwg.mxu0
    %v4686 = vmul.f32 %v4664, %v2992
    %v4687 = vmul.f32 %v4684, %v2992
    %v4688 = vmul.f32 %v4686, %v4686
    %v4689 = vsub.f32 %v4687, %v4688
    %v4690 = vadd.f32 %v4689, 1e-05
    %v4691 = vrsqrt.pop %v4690
    %v4692 = vmul.f32 %v4691, %v4690
    %v4693 = vmul.f32 %v4692, %v4691
    %v4694 = vmul.f32 0.5, %v4693
    %v4695 = vsub.f32 1.5, %v4694
    %v4696 = vmul.f32 %v4691, %v4695
    %vm4697 = vweird.f32 %v4690
    %vm4698 = vweird.f32 %v4691
    %vm4699 = vmor %vm4697, %vm4698
    %v4700 = vsel %vm4699, %v4691, %v4696
    %v4701 = vmul.f32 %v4631, %v4700
    %v4702 = vmul.f32 %v4686, %v4701
    %v4703 = vsub.f32 %v4632, %v4702
    %v4705 = vsel %vm3011, %v4701, 0
    %4707 = vmatpush.msra.mxu0 0.0
    %4708 = vmatpush.msra.mxu0 0.0
    %4709 = vmatpush.msra.mxu0 0.0
    %4710 = vmatpush.msra.mxu0 0.0
    %4711 = vmatpush.msra.mxu0 0.0
    %4712 = vmatpush.msra.mxu0 0.0
    %4713 = vmatpush.msra.mxu0 0.0
    %4714 = vmatpush.msra.mxu0 0.0
    %4715 = vmatpush.msra.mxu0 0.0
    %4716 = vmatpush.msra.mxu0 0.0
    %4717 = vmatpush.msra.mxu0 0.0
    %4718 = vmatpush.msra.mxu0 0.0
    %4719 = vmatpush.msra.mxu0 %v2945
    %4720 = vmatpush.msra.mxu0 %v2944
    %4721 = vmatpush.msra.mxu0 %v2943
    %4722 = vmatpush.msra.mxu0 %v2942
    %4723 = vmatmul.f32.gmra.mxu0 %v4705
    %v4724 = vpop.f32.mrf.mxu0
    %v4725 = vadd.f32 0.0, %v4724
    %4726 = vdwg.mxu0
    %v4728 = vsel %vm3011, %v4703, 0
    %4730 = vmatpush.msra.mxu0 0.0
    %4731 = vmatpush.msra.mxu0 0.0
    %4732 = vmatpush.msra.mxu0 0.0
    %4733 = vmatpush.msra.mxu0 0.0
    %4734 = vmatpush.msra.mxu0 0.0
    %4735 = vmatpush.msra.mxu0 0.0
    %4736 = vmatpush.msra.mxu0 0.0
    %4737 = vmatpush.msra.mxu0 0.0
    %4738 = vmatpush.msra.mxu0 0.0
    %4739 = vmatpush.msra.mxu0 0.0
    %4740 = vmatpush.msra.mxu0 0.0
    %4741 = vmatpush.msra.mxu0 0.0
    %4742 = vmatpush.msra.mxu0 %v2945
    %4743 = vmatpush.msra.mxu0 %v2944
    %4744 = vmatpush.msra.mxu0 %v2943
    %4745 = vmatpush.msra.mxu0 %v2942
    %4746 = vmatmul.f32.gmra.mxu0 %v4728
    %v4747 = vpop.f32.mrf.mxu0
    %v4748 = vadd.f32 0.0, %v4747
    %4749 = vdwg.mxu0
    %v4750 = vperm.slane %v4725, 0
    %v4751 = vmul.f32 %v4630, %v4750
    %v4752 = vperm.slane %v4748, 0
    %v4753 = vadd.f32 %v4751, %v4752
    %vm4754 = vcmp.gt.f32.partialorder %v4753, 0.0
    %v4755 = vmul.f32 %v4753, 0.03
    %v4756 = vsel %vm4754, %v4753, %v4755
    %v4758 = vrot.slane %v4756, 4
    %4759 = vst [vmem:[#allocation1] ss:$2 sm:$0xff] %v4756
    %v4760 = vld.sshfl [vmem:[#allocation1] sm:$0xff pattern:$0x75316420]
    %s4761 = scalar_lea.vmem [#allocation1], 16
    %4762 = vst [vmem:[%s4761] ss:$2 sm:$0xff] %v4758
    %v4763 = vld.sshfl [vmem:[#allocation1 + $0x10] sm:$0xff pattern:$0x75316420]
    %v4764 = vrot.slane %v4760, 7
    %v4765 = vrot.slane %v4763, 7
    %v4768 = vsel %vm548, 0.0, %v4764
    %v4769 = vsel %vm548, 0.0, %v4765
    %v4770 = vld [vmem:[#allocation21] sm:$0xff]
    %v4771 = vld [vmem:[#allocation21 + $0x8] sm:$0xff]
    %v4772 = vld [vmem:[#allocation21 + $0x10] sm:$0xff]
    %v4773 = vld [vmem:[#allocation21 + $0x18] sm:$0xff]
    %v4774 = vld [vmem:[#allocation21 + $0x20] sm:$0xff]
    %v4775 = vld [vmem:[#allocation21 + $0x28] sm:$0xff]
    %v4776 = vld [vmem:[#allocation21 + $0x30] sm:$0xff]
    %v4777 = vld [vmem:[#allocation21 + $0x38] sm:$0xff]
    %v4778 = vld [vmem:[#allocation21 + $0x40] sm:$0xff]
    %v4779 = vld [vmem:[#allocation21 + $0x48] sm:$0xff]
    %v4780 = vld [vmem:[#allocation21 + $0x50] sm:$0xff]
    %v4781 = vld [vmem:[#allocation21 + $0x58] sm:$0xff]
    %v4782 = vld [vmem:[#allocation21 + $0x60] sm:$0xff]
    %v4783 = vld [vmem:[#allocation21 + $0x68] sm:$0xff]
    %v4784 = vld [vmem:[#allocation21 + $0x70] sm:$0xff]
    %v4785 = vld [vmem:[#allocation21 + $0x78] sm:$0xff]
    %s4786 = scalar_lea.vmem [#allocation21], 128
    %v4787 = vld [vmem:[%s4786] sm:$0xff]
    %v4788 = vld [vmem:[%s4786 + $0x8] sm:$0xff]
    %v4789 = vld [vmem:[%s4786 + $0x10] sm:$0xff]
    %v4790 = vld [vmem:[%s4786 + $0x18] sm:$0xff]
    %v4791 = vld [vmem:[%s4786 + $0x20] sm:$0xff]
    %v4792 = vld [vmem:[%s4786 + $0x28] sm:$0xff]
    %v4793 = vld [vmem:[%s4786 + $0x30] sm:$0xff]
    %v4794 = vld [vmem:[%s4786 + $0x38] sm:$0xff]
    %v4795 = vld [vmem:[%s4786 + $0x40] sm:$0xff]
    %v4796 = vld [vmem:[%s4786 + $0x48] sm:$0xff]
    %v4797 = vld [vmem:[%s4786 + $0x50] sm:$0xff]
    %v4798 = vld [vmem:[%s4786 + $0x58] sm:$0xff]
    %v4799 = vld [vmem:[%s4786 + $0x60] sm:$0xff]
    %v4800 = vld [vmem:[%s4786 + $0x68] sm:$0xff]
    %v4801 = vld [vmem:[%s4786 + $0x70] sm:$0xff]
    %v4802 = vld [vmem:[%s4786 + $0x78] sm:$0xff]
    %4803 = vmatpush.msra.mxu0 %v4802
    %4804 = vmatpush.msra.mxu0 %v4801
    %4805 = vmatpush.msra.mxu0 %v4800
    %4806 = vmatpush.msra.mxu0 %v4799
    %4807 = vmatpush.msra.mxu0 %v4798
    %4808 = vmatpush.msra.mxu0 %v4797
    %4809 = vmatpush.msra.mxu0 %v4796
    %4810 = vmatpush.msra.mxu0 %v4795
    %4811 = vmatpush.msra.mxu0 %v4794
    %4812 = vmatpush.msra.mxu0 %v4793
    %4813 = vmatpush.msra.mxu0 %v4792
    %4814 = vmatpush.msra.mxu0 %v4791
    %4815 = vmatpush.msra.mxu0 %v4790
    %4816 = vmatpush.msra.mxu0 %v4789
    %4817 = vmatpush.msra.mxu0 %v4788
    %4818 = vmatpush.msra.mxu0 %v4787
    %4819 = vmatmul.f32.gmra.mxu0 %v4756
    %v4820 = vpop.f32.mrf.mxu0
    %v4821 = vadd.f32 0.0, %v4820
    %4822 = vdwg.mxu0
    %4825 = vst [vmem:[#allocation1] ss:$2 sm:$0xff] %v4768
    %s4826 = scalar_lea.vmem [#allocation1], 1
    %4827 = vst [vmem:[%s4826] ss:$2 sm:$0xff] %v4769
    %v4828 = vld.sshfl [vmem:[#allocation1] sm:$0xff pattern:$0x75316420]
    %4830 = vmatpush.msra.mxu0 %v4785
    %4831 = vmatpush.msra.mxu0 %v4784
    %4832 = vmatpush.msra.mxu0 %v4783
    %4833 = vmatpush.msra.mxu0 %v4782
    %4834 = vmatpush.msra.mxu0 %v4781
    %4835 = vmatpush.msra.mxu0 %v4780
    %4836 = vmatpush.msra.mxu0 %v4779
    %4837 = vmatpush.msra.mxu0 %v4778
    %4838 = vmatpush.msra.mxu0 %v4777
    %4839 = vmatpush.msra.mxu0 %v4776
    %4840 = vmatpush.msra.mxu0 %v4775
    %4841 = vmatpush.msra.mxu0 %v4774
    %4842 = vmatpush.msra.mxu0 %v4773
    %4843 = vmatpush.msra.mxu0 %v4772
    %4844 = vmatpush.msra.mxu0 %v4771
    %4845 = vmatpush.msra.mxu0 %v4770
    %4846 = vmatmul.f32.gmra.mxu0 %v4828
    %v4847 = vpop.f32.mrf.mxu0
    %v4848 = vadd.f32 %v4821, %v4847
    %4849 = vdwg.mxu0
    %4850 = vst [vmem:[#allocation1] ss:$2 sm:$0xff] %v4756
    %v4851 = vld.sshfl [vmem:[#allocation1] sm:$0xff pattern:$0x75316420]
    %s4852 = scalar_lea.vmem [#allocation1], 16
    %4853 = vst [vmem:[%s4852] ss:$2 sm:$0xff] %v4758
    %v4854 = vld.sshfl [vmem:[#allocation1 + $0x10] sm:$0xff pattern:$0x75316420]
    %v4855 = vrot.slane %v4851, 1
    %v4856 = vrot.slane %v4854, 1
    %v4859 = vsel %vm2619, %v4855, 0.0
    %v4860 = vsel %vm2619, %v4856, 0.0
    %s4861 = scalar_lea.vmem [#allocation21], 256
    %v4862 = vld [vmem:[%s4861] sm:$0xff]
    %v4863 = vld [vmem:[%s4861 + $0x8] sm:$0xff]
    %v4864 = vld [vmem:[%s4861 + $0x10] sm:$0xff]
    %v4865 = vld [vmem:[%s4861 + $0x18] sm:$0xff]
    %v4866 = vld [vmem:[%s4861 + $0x20] sm:$0xff]
    %v4867 = vld [vmem:[%s4861 + $0x28] sm:$0xff]
    %v4868 = vld [vmem:[%s4861 + $0x30] sm:$0xff]
    %v4869 = vld [vmem:[%s4861 + $0x38] sm:$0xff]
    %v4870 = vld [vmem:[%s4861 + $0x40] sm:$0xff]
    %v4871 = vld [vmem:[%s4861 + $0x48] sm:$0xff]
    %v4872 = vld [vmem:[%s4861 + $0x50] sm:$0xff]
    %v4873 = vld [vmem:[%s4861 + $0x58] sm:$0xff]
    %v4874 = vld [vmem:[%s4861 + $0x60] sm:$0xff]
    %v4875 = vld [vmem:[%s4861 + $0x68] sm:$0xff]
    %v4876 = vld [vmem:[%s4861 + $0x70] sm:$0xff]
    %v4877 = vld [vmem:[%s4861 + $0x78] sm:$0xff]
    %4880 = vst [vmem:[#allocation1] ss:$2 sm:$0xff] %v4859
    %s4881 = scalar_lea.vmem [#allocation1], 1
    %4882 = vst [vmem:[%s4881] ss:$2 sm:$0xff] %v4860
    %v4883 = vld.sshfl [vmem:[#allocation1] sm:$0xff pattern:$0x75316420]
    %4885 = vmatpush.msra.mxu0 %v4877
    %4886 = vmatpush.msra.mxu0 %v4876
    %4887 = vmatpush.msra.mxu0 %v4875
    %4888 = vmatpush.msra.mxu0 %v4874
    %4889 = vmatpush.msra.mxu0 %v4873
    %4890 = vmatpush.msra.mxu0 %v4872
    %4891 = vmatpush.msra.mxu0 %v4871
    %4892 = vmatpush.msra.mxu0 %v4870
    %4893 = vmatpush.msra.mxu0 %v4869
    %4894 = vmatpush.msra.mxu0 %v4868
    %4895 = vmatpush.msra.mxu0 %v4867
    %4896 = vmatpush.msra.mxu0 %v4866
    %4897 = vmatpush.msra.mxu0 %v4865
    %4898 = vmatpush.msra.mxu0 %v4864
    %4899 = vmatpush.msra.mxu0 %v4863
    %4900 = vmatpush.msra.mxu0 %v4862
    %4901 = vmatmul.f32.gmra.mxu0 %v4883
    %v4902 = vpop.f32.mrf.mxu0
    %v4903 = vadd.f32 0.0, %v4902
    %4904 = vdwg.mxu0
    %v4905 = vadd.f32 %v4848, %v4903
    %v4906 = vld [vmem:[%s65] sm:$0x1]
    %v4907 = vld [vmem:[%s67] sm:$0x1]
    %v4908 = vrot.slane %v4905, 4
    %v4909 = vadd.f32 %v4905, %v4908
    %v4910 = vrot.slane %v4909, 2
    %v4911 = vadd.f32 %v4909, %v4910
    %v4912 = vrot.slane %v4911, 1
    %v4913 = vadd.f32 %v4911, %v4912
    %v4914 = vmul.f32 %v4905, %v4905
    %v4915 = vrot.slane %v4914, 4
    %v4916 = vadd.f32 %v4914, %v4915
    %v4917 = vrot.slane %v4916, 2
    %v4918 = vadd.f32 %v4916, %v4917
    %v4919 = vrot.slane %v4918, 1
    %v4920 = vadd.f32 %v4918, %v4919
    %4921 = vmatpush.msra.mxu0 %v2921
    %4922 = vmatpush.msra.mxu0 %v2920
    %4923 = vmatpush.msra.mxu0 %v2919
    %4924 = vmatpush.msra.mxu0 %v2918
    %4925 = vmatpush.msra.mxu0 %v2917
    %4926 = vmatpush.msra.mxu0 %v2916
    %4927 = vmatpush.msra.mxu0 %v2915
    %4928 = vmatpush.msra.mxu0 %v2914
    %4929 = vmatpush.msra.mxu0 %v2913
    %4930 = vmatpush.msra.mxu0 %v2912
    %4931 = vmatpush.msra.mxu0 %v2911
    %4932 = vmatpush.msra.mxu0 %v2910
    %4933 = vmatpush.msra.mxu0 %v2909
    %4934 = vmatpush.msra.mxu0 %v2908
    %4935 = vmatpush.msra.mxu0 %v2907
    %4936 = vmatpush.msra.mxu0 %v2906
    %4937 = vmatmul.f32.gmra.mxu0 %v4913
    %v4938 = vpop.f32.mrf.mxu0
    %v4939 = vadd.f32 0.0, %v4938
    %4940 = vdwg.mxu0
    %4941 = vmatpush.msra.mxu0 %v2921
    %4942 = vmatpush.msra.mxu0 %v2920
    %4943 = vmatpush.msra.mxu0 %v2919
    %4944 = vmatpush.msra.mxu0 %v2918
    %4945 = vmatpush.msra.mxu0 %v2917
    %4946 = vmatpush.msra.mxu0 %v2916
    %4947 = vmatpush.msra.mxu0 %v2915
    %4948 = vmatpush.msra.mxu0 %v2914
    %4949 = vmatpush.msra.mxu0 %v2913
    %4950 = vmatpush.msra.mxu0 %v2912
    %4951 = vmatpush.msra.mxu0 %v2911
    %4952 = vmatpush.msra.mxu0 %v2910
    %4953 = vmatpush.msra.mxu0 %v2909
    %4954 = vmatpush.msra.mxu0 %v2908
    %4955 = vmatpush.msra.mxu0 %v2907
    %4956 = vmatpush.msra.mxu0 %v2906
    %4957 = vmatmul.f32.gmra.mxu0 %v4920
    %v4958 = vpop.f32.mrf.mxu0
    %v4959 = vadd.f32 0.0, %v4958
    %4960 = vdwg.mxu0
    %v4961 = vmul.f32 %v4939, %v2992
    %v4962 = vmul.f32 %v4959, %v2992
    %v4963 = vmul.f32 %v4961, %v4961
    %v4964 = vsub.f32 %v4962, %v4963
    %v4965 = vadd.f32 %v4964, 1e-05
    %v4966 = vrsqrt.pop %v4965
    %v4967 = vmul.f32 %v4966, %v4965
    %v4968 = vmul.f32 %v4967, %v4966
    %v4969 = vmul.f32 0.5, %v4968
    %v4970 = vsub.f32 1.5, %v4969
    %v4971 = vmul.f32 %v4966, %v4970
    %vm4972 = vweird.f32 %v4965
    %vm4973 = vweird.f32 %v4966
    %vm4974 = vmor %vm4972, %vm4973
    %v4975 = vsel %vm4974, %v4966, %v4971
    %v4976 = vmul.f32 %v4906, %v4975
    %v4977 = vmul.f32 %v4961, %v4976
    %v4978 = vsub.f32 %v4907, %v4977
    %v4980 = vsel %vm3011, %v4976, 0
    %4982 = vmatpush.msra.mxu0 0.0
    %4983 = vmatpush.msra.mxu0 0.0
    %4984 = vmatpush.msra.mxu0 0.0
    %4985 = vmatpush.msra.mxu0 0.0
    %4986 = vmatpush.msra.mxu0 0.0
    %4987 = vmatpush.msra.mxu0 0.0
    %4988 = vmatpush.msra.mxu0 0.0
    %4989 = vmatpush.msra.mxu0 0.0
    %4990 = vmatpush.msra.mxu0 0.0
    %4991 = vmatpush.msra.mxu0 0.0
    %4992 = vmatpush.msra.mxu0 0.0
    %4993 = vmatpush.msra.mxu0 0.0
    %4994 = vmatpush.msra.mxu0 %v2945
    %4995 = vmatpush.msra.mxu0 %v2944
    %4996 = vmatpush.msra.mxu0 %v2943
    %4997 = vmatpush.msra.mxu0 %v2942
    %4998 = vmatmul.f32.gmra.mxu0 %v4980
    %v4999 = vpop.f32.mrf.mxu0
    %v5000 = vadd.f32 0.0, %v4999
    %5001 = vdwg.mxu0
    %v5003 = vsel %vm3011, %v4978, 0
    %5005 = vmatpush.msra.mxu0 0.0
    %5006 = vmatpush.msra.mxu0 0.0
    %5007 = vmatpush.msra.mxu0 0.0
    %5008 = vmatpush.msra.mxu0 0.0
    %5009 = vmatpush.msra.mxu0 0.0
    %5010 = vmatpush.msra.mxu0 0.0
    %5011 = vmatpush.msra.mxu0 0.0
    %5012 = vmatpush.msra.mxu0 0.0
    %5013 = vmatpush.msra.mxu0 0.0
    %5014 = vmatpush.msra.mxu0 0.0
    %5015 = vmatpush.msra.mxu0 0.0
    %5016 = vmatpush.msra.mxu0 0.0
    %5017 = vmatpush.msra.mxu0 %v2945
    %5018 = vmatpush.msra.mxu0 %v2944
    %5019 = vmatpush.msra.mxu0 %v2943
    %5020 = vmatpush.msra.mxu0 %v2942
    %5021 = vmatmul.f32.gmra.mxu0 %v5003
    %v5022 = vpop.f32.mrf.mxu0
    %v5023 = vadd.f32 0.0, %v5022
    %5024 = vdwg.mxu0
    %v5025 = vperm.slane %v5000, 0
    %v5026 = vmul.f32 %v4905, %v5025
    %v5027 = vperm.slane %v5023, 0
    %v5028 = vadd.f32 %v5026, %v5027
    %vm5029 = vcmp.gt.f32.partialorder %v5028, 0.0
    %v5030 = vmul.f32 %v5028, 0.03
    %v5031 = vsel %vm5029, %v5028, %v5030
    %v5032 = vld [vmem:[%s71] sm:$0x1]
    %v5033 = vld [vmem:[#allocation22] sm:$0xff]
    %v5034 = vld [vmem:[#allocation22 + $0x8] sm:$0xff]
    %v5035 = vld [vmem:[#allocation22 + $0x10] sm:$0xff]
    %v5036 = vld [vmem:[#allocation22 + $0x18] sm:$0xff]
    %v5037 = vld [vmem:[#allocation22 + $0x20] sm:$0xff]
    %v5038 = vld [vmem:[#allocation22 + $0x28] sm:$0xff]
    %v5039 = vld [vmem:[#allocation22 + $0x30] sm:$0xff]
    %v5040 = vld [vmem:[#allocation22 + $0x38] sm:$0xff]
    %v5041 = vld [vmem:[#allocation22 + $0x40] sm:$0xff]
    %v5042 = vld [vmem:[#allocation22 + $0x48] sm:$0xff]
    %v5043 = vld [vmem:[#allocation22 + $0x50] sm:$0xff]
    %v5044 = vld [vmem:[#allocation22 + $0x58] sm:$0xff]
    %v5045 = vld [vmem:[#allocation22 + $0x60] sm:$0xff]
    %v5046 = vld [vmem:[#allocation22 + $0x68] sm:$0xff]
    %v5047 = vld [vmem:[#allocation22 + $0x70] sm:$0xff]
    %v5048 = vld [vmem:[#allocation22 + $0x78] sm:$0xff]
    %v5050 = vperm.slane %v5032, 0
    %5052 = vmatpush.msra.mxu0 %v5048
    %5053 = vmatpush.msra.mxu0 %v5047
    %5054 = vmatpush.msra.mxu0 %v5046
    %5055 = vmatpush.msra.mxu0 %v5045
    %5056 = vmatpush.msra.mxu0 %v5044
    %5057 = vmatpush.msra.mxu0 %v5043
    %5058 = vmatpush.msra.mxu0 %v5042
    %5059 = vmatpush.msra.mxu0 %v5041
    %5060 = vmatpush.msra.mxu0 %v5040
    %5061 = vmatpush.msra.mxu0 %v5039
    %5062 = vmatpush.msra.mxu0 %v5038
    %5063 = vmatpush.msra.mxu0 %v5037
    %5064 = vmatpush.msra.mxu0 %v5036
    %5065 = vmatpush.msra.mxu0 %v5035
    %5066 = vmatpush.msra.mxu0 %v5034
    %5067 = vmatpush.msra.mxu0 %v5033
    %5068 = vmatmul.f32.gmra.mxu0 %v5031
    %v5069 = vpop.f32.mrf.mxu0
    %v5070 = vadd.f32 %v5050, %v5069
    %5071 = vdwg.mxu0
    %s5072 = scalar_lea.vmem [#allocation22], 128
    %v5073 = vld [vmem:[%s5072] sm:$0xff]
    %v5074 = vld [vmem:[%s5072 + $0x8] sm:$0xff]
    %v5075 = vld [vmem:[%s5072 + $0x10] sm:$0xff]
    %v5076 = vld [vmem:[%s5072 + $0x18] sm:$0xff]
    %v5077 = vld [vmem:[%s5072 + $0x20] sm:$0xff]
    %v5078 = vld [vmem:[%s5072 + $0x28] sm:$0xff]
    %v5079 = vld [vmem:[%s5072 + $0x30] sm:$0xff]
    %v5080 = vld [vmem:[%s5072 + $0x38] sm:$0xff]
    %v5081 = vld [vmem:[%s5072 + $0x40] sm:$0xff]
    %v5082 = vld [vmem:[%s5072 + $0x48] sm:$0xff]
    %v5083 = vld [vmem:[%s5072 + $0x50] sm:$0xff]
    %v5084 = vld [vmem:[%s5072 + $0x58] sm:$0xff]
    %v5085 = vld [vmem:[%s5072 + $0x60] sm:$0xff]
    %v5086 = vld [vmem:[%s5072 + $0x68] sm:$0xff]
    %v5087 = vld [vmem:[%s5072 + $0x70] sm:$0xff]
    %v5088 = vld [vmem:[%s5072 + $0x78] sm:$0xff]
    %5089 = vmatpush.msra.mxu0 %v5088
    %5090 = vmatpush.msra.mxu0 %v5087
    %5091 = vmatpush.msra.mxu0 %v5086
    %5092 = vmatpush.msra.mxu0 %v5085
    %5093 = vmatpush.msra.mxu0 %v5084
    %5094 = vmatpush.msra.mxu0 %v5083
    %5095 = vmatpush.msra.mxu0 %v5082
    %5096 = vmatpush.msra.mxu0 %v5081
    %5097 = vmatpush.msra.mxu0 %v5080
    %5098 = vmatpush.msra.mxu0 %v5079
    %5099 = vmatpush.msra.mxu0 %v5078
    %5100 = vmatpush.msra.mxu0 %v5077
    %5101 = vmatpush.msra.mxu0 %v5076
    %5102 = vmatpush.msra.mxu0 %v5075
    %5103 = vmatpush.msra.mxu0 %v5074
    %5104 = vmatpush.msra.mxu0 %v5073
    %5105 = vmatmul.f32.gmra.mxu0 %v5031
    %v5106 = vpop.f32.mrf.mxu0
    %v5107 = vadd.f32 %v5050, %v5106
    %5108 = vdwg.mxu0
    %v5110 = vrot.slane %v5070, 1
    %v5111 = vrot.slane %v5070, 2
    %v5112 = vrot.slane %v5070, 3
    %v5113 = vrot.slane %v5070, 4
    %v5114 = vrot.slane %v5070, 5
    %v5115 = vrot.slane %v5070, 6
    %v5116 = vrot.slane %v5070, 7
    %v5125 = vrot.slane %v5107, 1
    %v5126 = vrot.slane %v5107, 2
    %v5127 = vrot.slane %v5107, 3
    %v5128 = vrot.slane %v5107, 4
    %v5129 = vrot.slane %v5107, 5
    %v5130 = vrot.slane %v5107, 6
    %v5131 = vrot.slane %v5107, 7
    %v5132 = vperm.slane %v5107, 0
    %v5133 = vperm.slane %v5125, 0
    %v5134 = vperm.slane %v5126, 0
    %v5135 = vperm.slane %v5127, 0
    %v5136 = vperm.slane %v5128, 0
    %v5137 = vperm.slane %v5129, 0
    %v5138 = vperm.slane %v5130, 0
    %v5139 = vperm.slane %v5131, 0
    %v5148 = vsel %vm548, %v5070, %v5132
    %v5149 = vsel %vm548, %v5110, %v5133
    %v5150 = vsel %vm548, %v5111, %v5134
    %v5151 = vsel %vm548, %v5112, %v5135
    %v5152 = vsel %vm548, %v5113, %v5136
    %v5153 = vsel %vm548, %v5114, %v5137
    %v5154 = vsel %vm548, %v5115, %v5138
    %v5155 = vsel %vm548, %v5116, %v5139
    %v5156 = vrot.slane %v2440, 7
    %v5157 = vrot.slane %v2441, 7
    %v5160 = vsel %vm548, 0.0, %v5156
    %v5161 = vsel %vm548, 0.0, %v5157
    %v5162 = vld [vmem:[#allocation24] sm:$0xff]
    %v5163 = vld [vmem:[#allocation24 + $0x8] sm:$0xff]
    %v5164 = vld [vmem:[#allocation24 + $0x10] sm:$0xff]
    %v5165 = vld [vmem:[#allocation24 + $0x18] sm:$0xff]
    %v5166 = vld [vmem:[#allocation24 + $0x20] sm:$0xff]
    %v5167 = vld [vmem:[#allocation24 + $0x28] sm:$0xff]
    %v5168 = vld [vmem:[#allocation24 + $0x30] sm:$0xff]
    %v5169 = vld [vmem:[#allocation24 + $0x38] sm:$0xff]
    %v5170 = vld [vmem:[#allocation24 + $0x40] sm:$0xff]
    %v5171 = vld [vmem:[#allocation24 + $0x48] sm:$0xff]
    %v5172 = vld [vmem:[#allocation24 + $0x50] sm:$0xff]
    %v5173 = vld [vmem:[#allocation24 + $0x58] sm:$0xff]
    %v5174 = vld [vmem:[#allocation24 + $0x60] sm:$0xff]
    %v5175 = vld [vmem:[#allocation24 + $0x68] sm:$0xff]
    %v5176 = vld [vmem:[#allocation24 + $0x70] sm:$0xff]
    %v5177 = vld [vmem:[#allocation24 + $0x78] sm:$0xff]
    %s5178 = scalar_lea.vmem [#allocation24], 128
    %v5179 = vld [vmem:[%s5178] sm:$0xff]
    %v5180 = vld [vmem:[%s5178 + $0x8] sm:$0xff]
    %v5181 = vld [vmem:[%s5178 + $0x10] sm:$0xff]
    %v5182 = vld [vmem:[%s5178 + $0x18] sm:$0xff]
    %v5183 = vld [vmem:[%s5178 + $0x20] sm:$0xff]
    %v5184 = vld [vmem:[%s5178 + $0x28] sm:$0xff]
    %v5185 = vld [vmem:[%s5178 + $0x30] sm:$0xff]
    %v5186 = vld [vmem:[%s5178 + $0x38] sm:$0xff]
    %v5187 = vld [vmem:[%s5178 + $0x40] sm:$0xff]
    %v5188 = vld [vmem:[%s5178 + $0x48] sm:$0xff]
    %v5189 = vld [vmem:[%s5178 + $0x50] sm:$0xff]
    %v5190 = vld [vmem:[%s5178 + $0x58] sm:$0xff]
    %v5191 = vld [vmem:[%s5178 + $0x60] sm:$0xff]
    %v5192 = vld [vmem:[%s5178 + $0x68] sm:$0xff]
    %v5193 = vld [vmem:[%s5178 + $0x70] sm:$0xff]
    %v5194 = vld [vmem:[%s5178 + $0x78] sm:$0xff]
    %5195 = vmatpush.msra.mxu0 %v5194
    %5196 = vmatpush.msra.mxu0 %v5193
    %5197 = vmatpush.msra.mxu0 %v5192
    %5198 = vmatpush.msra.mxu0 %v5191
    %5199 = vmatpush.msra.mxu0 %v5190
    %5200 = vmatpush.msra.mxu0 %v5189
    %5201 = vmatpush.msra.mxu0 %v5188
    %5202 = vmatpush.msra.mxu0 %v5187
    %5203 = vmatpush.msra.mxu0 %v5186
    %5204 = vmatpush.msra.mxu0 %v5185
    %5205 = vmatpush.msra.mxu0 %v5184
    %5206 = vmatpush.msra.mxu0 %v5183
    %5207 = vmatpush.msra.mxu0 %v5182
    %5208 = vmatpush.msra.mxu0 %v5181
    %5209 = vmatpush.msra.mxu0 %v5180
    %5210 = vmatpush.msra.mxu0 %v5179
    %5211 = vmatmul.f32.gmra.mxu0 %v2440
    %v5212 = vpop.f32.mrf.mxu0
    %v5213 = vadd.f32 0.0, %v5212
    %5214 = vmatmul.f32.gmra.mxu0 %v2441
    %v5215 = vpop.f32.mrf.mxu0
    %v5216 = vadd.f32 0.0, %v5215
    %5217 = vdwg.mxu0
    %5218 = vmatpush.msra.mxu0 %v5177
    %5219 = vmatpush.msra.mxu0 %v5176
    %5220 = vmatpush.msra.mxu0 %v5175
    %5221 = vmatpush.msra.mxu0 %v5174
    %5222 = vmatpush.msra.mxu0 %v5173
    %5223 = vmatpush.msra.mxu0 %v5172
    %5224 = vmatpush.msra.mxu0 %v5171
    %5225 = vmatpush.msra.mxu0 %v5170
    %5226 = vmatpush.msra.mxu0 %v5169
    %5227 = vmatpush.msra.mxu0 %v5168
    %5228 = vmatpush.msra.mxu0 %v5167
    %5229 = vmatpush.msra.mxu0 %v5166
    %5230 = vmatpush.msra.mxu0 %v5165
    %5231 = vmatpush.msra.mxu0 %v5164
    %5232 = vmatpush.msra.mxu0 %v5163
    %5233 = vmatpush.msra.mxu0 %v5162
    %5234 = vmatmul.f32.gmra.mxu0 %v5160
    %v5235 = vpop.f32.mrf.mxu0
    %v5236 = vadd.f32 %v5213, %v5235
    %5237 = vmatmul.f32.gmra.mxu0 %v5161
    %v5238 = vpop.f32.mrf.mxu0
    %v5239 = vadd.f32 %v5216, %v5238
    %5240 = vdwg.mxu0
    %v5241 = vrot.slane %v2440, 1
    %v5242 = vrot.slane %v2441, 1
    %v5245 = vsel %vm641, %v5241, 0.0
    %v5246 = vsel %vm641, %v5242, 0.0
    %s5247 = scalar_lea.vmem [#allocation24], 256
    %v5248 = vld [vmem:[%s5247] sm:$0xff]
    %v5249 = vld [vmem:[%s5247 + $0x8] sm:$0xff]
    %v5250 = vld [vmem:[%s5247 + $0x10] sm:$0xff]
    %v5251 = vld [vmem:[%s5247 + $0x18] sm:$0xff]
    %v5252 = vld [vmem:[%s5247 + $0x20] sm:$0xff]
    %v5253 = vld [vmem:[%s5247 + $0x28] sm:$0xff]
    %v5254 = vld [vmem:[%s5247 + $0x30] sm:$0xff]
    %v5255 = vld [vmem:[%s5247 + $0x38] sm:$0xff]
    %v5256 = vld [vmem:[%s5247 + $0x40] sm:$0xff]
    %v5257 = vld [vmem:[%s5247 + $0x48] sm:$0xff]
    %v5258 = vld [vmem:[%s5247 + $0x50] sm:$0xff]
    %v5259 = vld [vmem:[%s5247 + $0x58] sm:$0xff]
    %v5260 = vld [vmem:[%s5247 + $0x60] sm:$0xff]
    %v5261 = vld [vmem:[%s5247 + $0x68] sm:$0xff]
    %v5262 = vld [vmem:[%s5247 + $0x70] sm:$0xff]
    %v5263 = vld [vmem:[%s5247 + $0x78] sm:$0xff]
    %5264 = vmatpush.msra.mxu0 %v5263
    %5265 = vmatpush.msra.mxu0 %v5262
    %5266 = vmatpush.msra.mxu0 %v5261
    %5267 = vmatpush.msra.mxu0 %v5260
    %5268 = vmatpush.msra.mxu0 %v5259
    %5269 = vmatpush.msra.mxu0 %v5258
    %5270 = vmatpush.msra.mxu0 %v5257
    %5271 = vmatpush.msra.mxu0 %v5256
    %5272 = vmatpush.msra.mxu0 %v5255
    %5273 = vmatpush.msra.mxu0 %v5254
    %5274 = vmatpush.msra.mxu0 %v5253
    %5275 = vmatpush.msra.mxu0 %v5252
    %5276 = vmatpush.msra.mxu0 %v5251
    %5277 = vmatpush.msra.mxu0 %v5250
    %5278 = vmatpush.msra.mxu0 %v5249
    %5279 = vmatpush.msra.mxu0 %v5248
    %5280 = vmatmul.f32.gmra.mxu0 %v5245
    %v5281 = vpop.f32.mrf.mxu0
    %v5282 = vadd.f32 0.0, %v5281
    %5283 = vmatmul.f32.gmra.mxu0 %v5246
    %v5284 = vpop.f32.mrf.mxu0
    %v5285 = vadd.f32 0.0, %v5284
    %5286 = vdwg.mxu0
    %v5287 = vadd.f32 %v5236, %v5282
    %v5288 = vadd.f32 %v5239, %v5285
    %5297 = vst [vmem:[#allocation1] ss:$4 sm:$0xff] %v5148
    %s5298 = scalar_lea.vmem [#allocation1], 1
    %5299 = vst [vmem:[%s5298] ss:$4 sm:$0xff] %v5149
    %s5300 = scalar_lea.vmem [#allocation1], 2
    %5301 = vst [vmem:[%s5300] ss:$4 sm:$0xff] %v5150
    %s5302 = scalar_lea.vmem [#allocation1], 3
    %5303 = vst [vmem:[%s5302] ss:$4 sm:$0xff] %v5151
    %v5304 = vld.sshfl [vmem:[#allocation1] sm:$0xff pattern:$0x73625140]
    %s5305 = scalar_lea.vmem [#allocation1], 32
    %5306 = vst [vmem:[%s5305] ss:$4 sm:$0xff] %v5152
    %s5307 = scalar_lea.vmem [#allocation1], 33
    %5308 = vst [vmem:[%s5307] ss:$4 sm:$0xff] %v5153
    %s5309 = scalar_lea.vmem [#allocation1], 34
    %5310 = vst [vmem:[%s5309] ss:$4 sm:$0xff] %v5154
    %s5311 = scalar_lea.vmem [#allocation1], 35
    %5312 = vst [vmem:[%s5311] ss:$4 sm:$0xff] %v5155
    %v5313 = vld.sshfl [vmem:[#allocation1 + $0x20] sm:$0xff pattern:$0x73625140]
    %v5314 = vrot.slane %v5304, 7
    %v5315 = vrot.slane %v5313, 7
    %v5318 = vsel %vm548, 0.0, %v5314
    %v5319 = vsel %vm548, 0.0, %v5315
    %v5320 = vld [vmem:[#allocation25] sm:$0xff]
    %v5321 = vld [vmem:[#allocation25 + $0x8] sm:$0xff]
    %v5322 = vld [vmem:[#allocation25 + $0x10] sm:$0xff]
    %v5323 = vld [vmem:[#allocation25 + $0x18] sm:$0xff]
    %v5324 = vld [vmem:[#allocation25 + $0x20] sm:$0xff]
    %v5325 = vld [vmem:[#allocation25 + $0x28] sm:$0xff]
    %v5326 = vld [vmem:[#allocation25 + $0x30] sm:$0xff]
    %v5327 = vld [vmem:[#allocation25 + $0x38] sm:$0xff]
    %v5328 = vld [vmem:[#allocation25 + $0x40] sm:$0xff]
    %v5329 = vld [vmem:[#allocation25 + $0x48] sm:$0xff]
    %v5330 = vld [vmem:[#allocation25 + $0x50] sm:$0xff]
    %v5331 = vld [vmem:[#allocation25 + $0x58] sm:$0xff]
    %v5332 = vld [vmem:[#allocation25 + $0x60] sm:$0xff]
    %v5333 = vld [vmem:[#allocation25 + $0x68] sm:$0xff]
    %v5334 = vld [vmem:[#allocation25 + $0x70] sm:$0xff]
    %v5335 = vld [vmem:[#allocation25 + $0x78] sm:$0xff]
    %5336 = vmatpush.msra.mxu0 %v5335
    %5337 = vmatpush.msra.mxu0 %v5334
    %5338 = vmatpush.msra.mxu0 %v5333
    %5339 = vmatpush.msra.mxu0 %v5332
    %5340 = vmatpush.msra.mxu0 %v5331
    %5341 = vmatpush.msra.mxu0 %v5330
    %5342 = vmatpush.msra.mxu0 %v5329
    %5343 = vmatpush.msra.mxu0 %v5328
    %5344 = vmatpush.msra.mxu0 %v5327
    %5345 = vmatpush.msra.mxu0 %v5326
    %5346 = vmatpush.msra.mxu0 %v5325
    %5347 = vmatpush.msra.mxu0 %v5324
    %5348 = vmatpush.msra.mxu0 %v5323
    %5349 = vmatpush.msra.mxu0 %v5322
    %5350 = vmatpush.msra.mxu0 %v5321
    %5351 = vmatpush.msra.mxu0 %v5320
    %5352 = vmatmul.f32.gmra.mxu0 %v5318
    %v5353 = vpop.f32.mrf.mxu0
    %v5354 = vadd.f32 0.0, %v5353
    %5355 = vmatmul.f32.gmra.mxu0 %v5319
    %v5356 = vpop.f32.mrf.mxu0
    %v5357 = vadd.f32 0.0, %v5356
    %5358 = vdwg.mxu0
    %v5359 = vadd.f32 %v5287, %v5354
    %v5360 = vadd.f32 %v5288, %v5357
    %s5361 = scalar_lea.vmem [#allocation25], 128
    %v5362 = vld [vmem:[%s5361] sm:$0xff]
    %v5363 = vld [vmem:[%s5361 + $0x8] sm:$0xff]
    %v5364 = vld [vmem:[%s5361 + $0x10] sm:$0xff]
    %v5365 = vld [vmem:[%s5361 + $0x18] sm:$0xff]
    %v5366 = vld [vmem:[%s5361 + $0x20] sm:$0xff]
    %v5367 = vld [vmem:[%s5361 + $0x28] sm:$0xff]
    %v5368 = vld [vmem:[%s5361 + $0x30] sm:$0xff]
    %v5369 = vld [vmem:[%s5361 + $0x38] sm:$0xff]
    %v5370 = vld [vmem:[%s5361 + $0x40] sm:$0xff]
    %v5371 = vld [vmem:[%s5361 + $0x48] sm:$0xff]
    %v5372 = vld [vmem:[%s5361 + $0x50] sm:$0xff]
    %v5373 = vld [vmem:[%s5361 + $0x58] sm:$0xff]
    %v5374 = vld [vmem:[%s5361 + $0x60] sm:$0xff]
    %v5375 = vld [vmem:[%s5361 + $0x68] sm:$0xff]
    %v5376 = vld [vmem:[%s5361 + $0x70] sm:$0xff]
    %v5377 = vld [vmem:[%s5361 + $0x78] sm:$0xff]
    %5378 = vst [vmem:[#allocation1] ss:$4 sm:$0xff] %v5148
    %s5379 = scalar_lea.vmem [#allocation1], 1
    %5380 = vst [vmem:[%s5379] ss:$4 sm:$0xff] %v5149
    %s5381 = scalar_lea.vmem [#allocation1], 2
    %5382 = vst [vmem:[%s5381] ss:$4 sm:$0xff] %v5150
    %s5383 = scalar_lea.vmem [#allocation1], 3
    %5384 = vst [vmem:[%s5383] ss:$4 sm:$0xff] %v5151
    %s5385 = scalar_lea.vmem [#allocation1], 32
    %5386 = vst [vmem:[%s5385] ss:$4 sm:$0xff] %v5152
    %s5387 = scalar_lea.vmem [#allocation1], 33
    %5388 = vst [vmem:[%s5387] ss:$4 sm:$0xff] %v5153
    %s5389 = scalar_lea.vmem [#allocation1], 34
    %5390 = vst [vmem:[%s5389] ss:$4 sm:$0xff] %v5154
    %s5391 = scalar_lea.vmem [#allocation1], 35
    %5392 = vst [vmem:[%s5391] ss:$4 sm:$0xff] %v5155
    %v5393 = vld.sshfl [vmem:[#allocation1] sm:$0xff pattern:$0x73625140]
    %v5394 = vld.sshfl [vmem:[#allocation1 + $0x20] sm:$0xff pattern:$0x73625140]
    %5397 = vmatpush.msra.mxu0 %v5377
    %5398 = vmatpush.msra.mxu0 %v5376
    %5399 = vmatpush.msra.mxu0 %v5375
    %5400 = vmatpush.msra.mxu0 %v5374
    %5401 = vmatpush.msra.mxu0 %v5373
    %5402 = vmatpush.msra.mxu0 %v5372
    %5403 = vmatpush.msra.mxu0 %v5371
    %5404 = vmatpush.msra.mxu0 %v5370
    %5405 = vmatpush.msra.mxu0 %v5369
    %5406 = vmatpush.msra.mxu0 %v5368
    %5407 = vmatpush.msra.mxu0 %v5367
    %5408 = vmatpush.msra.mxu0 %v5366
    %5409 = vmatpush.msra.mxu0 %v5365
    %5410 = vmatpush.msra.mxu0 %v5364
    %5411 = vmatpush.msra.mxu0 %v5363
    %5412 = vmatpush.msra.mxu0 %v5362
    %5413 = vmatmul.f32.gmra.mxu0 %v5393
    %v5414 = vpop.f32.mrf.mxu0
    %v5415 = vadd.f32 0.0, %v5414
    %5416 = vmatmul.f32.gmra.mxu0 %v5394
    %v5417 = vpop.f32.mrf.mxu0
    %v5418 = vadd.f32 0.0, %v5417
    %5419 = vdwg.mxu0
    %v5420 = vadd.f32 %v5359, %v5415
    %v5421 = vadd.f32 %v5360, %v5418
    %5422 = vst [vmem:[#allocation1] ss:$4 sm:$0xff] %v5148
    %s5423 = scalar_lea.vmem [#allocation1], 1
    %5424 = vst [vmem:[%s5423] ss:$4 sm:$0xff] %v5149
    %s5425 = scalar_lea.vmem [#allocation1], 2
    %5426 = vst [vmem:[%s5425] ss:$4 sm:$0xff] %v5150
    %s5427 = scalar_lea.vmem [#allocation1], 3
    %5428 = vst [vmem:[%s5427] ss:$4 sm:$0xff] %v5151
    %v5429 = vld.sshfl [vmem:[#allocation1] sm:$0xff pattern:$0x73625140]
    %s5430 = scalar_lea.vmem [#allocation1], 32
    %5431 = vst [vmem:[%s5430] ss:$4 sm:$0xff] %v5152
    %s5432 = scalar_lea.vmem [#allocation1], 33
    %5433 = vst [vmem:[%s5432] ss:$4 sm:$0xff] %v5153
    %s5434 = scalar_lea.vmem [#allocation1], 34
    %5435 = vst [vmem:[%s5434] ss:$4 sm:$0xff] %v5154
    %s5436 = scalar_lea.vmem [#allocation1], 35
    %5437 = vst [vmem:[%s5436] ss:$4 sm:$0xff] %v5155
    %v5438 = vld.sshfl [vmem:[#allocation1 + $0x20] sm:$0xff pattern:$0x73625140]
    %v5439 = vrot.slane %v5429, 1
    %v5440 = vrot.slane %v5438, 1
    %v5443 = vsel %vm641, %v5439, 0.0
    %v5444 = vsel %vm641, %v5440, 0.0
    %s5445 = scalar_lea.vmem [#allocation25], 256
    %v5446 = vld [vmem:[%s5445] sm:$0xff]
    %v5447 = vld [vmem:[%s5445 + $0x8] sm:$0xff]
    %v5448 = vld [vmem:[%s5445 + $0x10] sm:$0xff]
    %v5449 = vld [vmem:[%s5445 + $0x18] sm:$0xff]
    %v5450 = vld [vmem:[%s5445 + $0x20] sm:$0xff]
    %v5451 = vld [vmem:[%s5445 + $0x28] sm:$0xff]
    %v5452 = vld [vmem:[%s5445 + $0x30] sm:$0xff]
    %v5453 = vld [vmem:[%s5445 + $0x38] sm:$0xff]
    %v5454 = vld [vmem:[%s5445 + $0x40] sm:$0xff]
    %v5455 = vld [vmem:[%s5445 + $0x48] sm:$0xff]
    %v5456 = vld [vmem:[%s5445 + $0x50] sm:$0xff]
    %v5457 = vld [vmem:[%s5445 + $0x58] sm:$0xff]
    %v5458 = vld [vmem:[%s5445 + $0x60] sm:$0xff]
    %v5459 = vld [vmem:[%s5445 + $0x68] sm:$0xff]
    %v5460 = vld [vmem:[%s5445 + $0x70] sm:$0xff]
    %v5461 = vld [vmem:[%s5445 + $0x78] sm:$0xff]
    %5462 = vmatpush.msra.mxu0 %v5461
    %5463 = vmatpush.msra.mxu0 %v5460
    %5464 = vmatpush.msra.mxu0 %v5459
    %5465 = vmatpush.msra.mxu0 %v5458
    %5466 = vmatpush.msra.mxu0 %v5457
    %5467 = vmatpush.msra.mxu0 %v5456
    %5468 = vmatpush.msra.mxu0 %v5455
    %5469 = vmatpush.msra.mxu0 %v5454
    %5470 = vmatpush.msra.mxu0 %v5453
    %5471 = vmatpush.msra.mxu0 %v5452
    %5472 = vmatpush.msra.mxu0 %v5451
    %5473 = vmatpush.msra.mxu0 %v5450
    %5474 = vmatpush.msra.mxu0 %v5449
    %5475 = vmatpush.msra.mxu0 %v5448
    %5476 = vmatpush.msra.mxu0 %v5447
    %5477 = vmatpush.msra.mxu0 %v5446
    %5478 = vmatmul.f32.gmra.mxu0 %v5443
    %v5479 = vpop.f32.mrf.mxu0
    %v5480 = vadd.f32 0.0, %v5479
    %5481 = vmatmul.f32.gmra.mxu0 %v5444
    %v5482 = vpop.f32.mrf.mxu0
    %v5483 = vadd.f32 0.0, %v5482
    %5484 = vdwg.mxu0
    %v5485 = vadd.f32 %v5420, %v5480
    %v5486 = vadd.f32 %v5421, %v5483
    %v5487 = vld [vmem:[%s77] sm:$0x1]
    %v5488 = vld [vmem:[%s79] sm:$0x1]
    %v5489 = vadd.f32 %v5485, %v5486
    %v5490 = vrot.slane %v5489, 4
    %v5491 = vadd.f32 %v5489, %v5490
    %v5492 = vrot.slane %v5491, 2
    %v5493 = vadd.f32 %v5491, %v5492
    %v5494 = vrot.slane %v5493, 1
    %v5495 = vadd.f32 %v5493, %v5494
    %v5496 = vmul.f32 %v5485, %v5485
    %v5497 = vmul.f32 %v5486, %v5486
    %v5498 = vadd.f32 %v5496, %v5497
    %v5499 = vrot.slane %v5498, 4
    %v5500 = vadd.f32 %v5498, %v5499
    %v5501 = vrot.slane %v5500, 2
    %v5502 = vadd.f32 %v5500, %v5501
    %v5503 = vrot.slane %v5502, 1
    %v5504 = vadd.f32 %v5502, %v5503
    %5505 = vmatpush.msra.mxu0 %v2031
    %5506 = vmatpush.msra.mxu0 %v2030
    %5507 = vmatpush.msra.mxu0 %v2029
    %5508 = vmatpush.msra.mxu0 %v2028
    %5509 = vmatpush.msra.mxu0 %v2027
    %5510 = vmatpush.msra.mxu0 %v2026
    %5511 = vmatpush.msra.mxu0 %v2025
    %5512 = vmatpush.msra.mxu0 %v2024
    %5513 = vmatpush.msra.mxu0 %v2023
    %5514 = vmatpush.msra.mxu0 %v2022
    %5515 = vmatpush.msra.mxu0 %v2021
    %5516 = vmatpush.msra.mxu0 %v2020
    %5517 = vmatpush.msra.mxu0 %v2019
    %5518 = vmatpush.msra.mxu0 %v2018
    %5519 = vmatpush.msra.mxu0 %v2017
    %5520 = vmatpush.msra.mxu0 %v2016
    %5521 = vmatmul.f32.gmra.mxu0 %v5495
    %v5522 = vpop.f32.mrf.mxu0
    %v5523 = vadd.f32 0.0, %v5522
    %5524 = vdwg.mxu0
    %5525 = vmatpush.msra.mxu0 %v2031
    %5526 = vmatpush.msra.mxu0 %v2030
    %5527 = vmatpush.msra.mxu0 %v2029
    %5528 = vmatpush.msra.mxu0 %v2028
    %5529 = vmatpush.msra.mxu0 %v2027
    %5530 = vmatpush.msra.mxu0 %v2026
    %5531 = vmatpush.msra.mxu0 %v2025
    %5532 = vmatpush.msra.mxu0 %v2024
    %5533 = vmatpush.msra.mxu0 %v2023
    %5534 = vmatpush.msra.mxu0 %v2022
    %5535 = vmatpush.msra.mxu0 %v2021
    %5536 = vmatpush.msra.mxu0 %v2020
    %5537 = vmatpush.msra.mxu0 %v2019
    %5538 = vmatpush.msra.mxu0 %v2018
    %5539 = vmatpush.msra.mxu0 %v2017
    %5540 = vmatpush.msra.mxu0 %v2016
    %5541 = vmatmul.f32.gmra.mxu0 %v5504
    %v5542 = vpop.f32.mrf.mxu0
    %v5543 = vadd.f32 0.0, %v5542
    %5544 = vdwg.mxu0
    %v5545 = vmul.f32 %v5523, %v2096
    %v5546 = vmul.f32 %v5543, %v2096
    %v5547 = vmul.f32 %v5545, %v5545
    %v5548 = vsub.f32 %v5546, %v5547
    %v5549 = vadd.f32 %v5548, 1e-05
    %v5550 = vrsqrt.pop %v5549
    %v5551 = vmul.f32 %v5550, %v5549
    %v5552 = vmul.f32 %v5551, %v5550
    %v5553 = vmul.f32 0.5, %v5552
    %v5554 = vsub.f32 1.5, %v5553
    %v5555 = vmul.f32 %v5550, %v5554
    %vm5556 = vweird.f32 %v5549
    %vm5557 = vweird.f32 %v5550
    %vm5558 = vmor %vm5556, %vm5557
    %v5559 = vsel %vm5558, %v5550, %v5555
    %v5560 = vmul.f32 %v5487, %v5559
    %v5561 = vmul.f32 %v5545, %v5560
    %v5562 = vsub.f32 %v5488, %v5561
    %v5564 = vsel %vm564, %v5560, 0
    %5566 = vmatpush.msra.mxu0 0.0
    %5567 = vmatpush.msra.mxu0 0.0
    %5568 = vmatpush.msra.mxu0 0.0
    %5569 = vmatpush.msra.mxu0 0.0
    %5570 = vmatpush.msra.mxu0 0.0
    %5571 = vmatpush.msra.mxu0 0.0
    %5572 = vmatpush.msra.mxu0 0.0
    %5573 = vmatpush.msra.mxu0 0.0
    %5574 = vmatpush.msra.mxu0 0.0
    %5575 = vmatpush.msra.mxu0 0.0
    %5576 = vmatpush.msra.mxu0 0.0
    %5577 = vmatpush.msra.mxu0 0.0
    %5578 = vmatpush.msra.mxu0 0.0
    %5579 = vmatpush.msra.mxu0 0.0
    %5580 = vmatpush.msra.mxu0 %v2049
    %5581 = vmatpush.msra.mxu0 %v2048
    %5582 = vmatmul.f32.gmra.mxu0 %v5564
    %v5583 = vpop.f32.mrf.mxu0
    %v5584 = vadd.f32 0.0, %v5583
    %5585 = vdwg.mxu0
    %v5587 = vsel %vm564, %v5562, 0
    %5589 = vmatpush.msra.mxu0 0.0
    %5590 = vmatpush.msra.mxu0 0.0
    %5591 = vmatpush.msra.mxu0 0.0
    %5592 = vmatpush.msra.mxu0 0.0
    %5593 = vmatpush.msra.mxu0 0.0
    %5594 = vmatpush.msra.mxu0 0.0
    %5595 = vmatpush.msra.mxu0 0.0
    %5596 = vmatpush.msra.mxu0 0.0
    %5597 = vmatpush.msra.mxu0 0.0
    %5598 = vmatpush.msra.mxu0 0.0
    %5599 = vmatpush.msra.mxu0 0.0
    %5600 = vmatpush.msra.mxu0 0.0
    %5601 = vmatpush.msra.mxu0 0.0
    %5602 = vmatpush.msra.mxu0 0.0
    %5603 = vmatpush.msra.mxu0 %v2049
    %5604 = vmatpush.msra.mxu0 %v2048
    %5605 = vmatmul.f32.gmra.mxu0 %v5587
    %v5606 = vpop.f32.mrf.mxu0
    %v5607 = vadd.f32 0.0, %v5606
    %5608 = vdwg.mxu0
    %v5609 = vperm.slane %v5584, 0
    %v5610 = vmul.f32 %v5485, %v5609
    %v5611 = vmul.f32 %v5486, %v5609
    %v5612 = vperm.slane %v5607, 0
    %v5613 = vadd.f32 %v5610, %v5612
    %v5614 = vadd.f32 %v5611, %v5612
    %vm5615 = vcmp.gt.f32.partialorder %v5613, 0.0
    %vm5616 = vcmp.gt.f32.partialorder %v5614, 0.0
    %v5617 = vmul.f32 %v5613, 0.03
    %v5618 = vmul.f32 %v5614, 0.03
    %v5619 = vsel %vm5615, %v5613, %v5617
    %v5620 = vsel %vm5616, %v5614, %v5618
    %v5623 = vrot.slane %v5619, 7
    %v5624 = vrot.slane %v5620, 7
    %v5627 = vsel %vm548, 0.0, %v5623
    %v5628 = vsel %vm548, 0.0, %v5624
    %v5629 = vld [vmem:[#allocation27] sm:$0xff]
    %v5630 = vld [vmem:[#allocation27 + $0x8] sm:$0xff]
    %v5631 = vld [vmem:[#allocation27 + $0x10] sm:$0xff]
    %v5632 = vld [vmem:[#allocation27 + $0x18] sm:$0xff]
    %v5633 = vld [vmem:[#allocation27 + $0x20] sm:$0xff]
    %v5634 = vld [vmem:[#allocation27 + $0x28] sm:$0xff]
    %v5635 = vld [vmem:[#allocation27 + $0x30] sm:$0xff]
    %v5636 = vld [vmem:[#allocation27 + $0x38] sm:$0xff]
    %v5637 = vld [vmem:[#allocation27 + $0x40] sm:$0xff]
    %v5638 = vld [vmem:[#allocation27 + $0x48] sm:$0xff]
    %v5639 = vld [vmem:[#allocation27 + $0x50] sm:$0xff]
    %v5640 = vld [vmem:[#allocation27 + $0x58] sm:$0xff]
    %v5641 = vld [vmem:[#allocation27 + $0x60] sm:$0xff]
    %v5642 = vld [vmem:[#allocation27 + $0x68] sm:$0xff]
    %v5643 = vld [vmem:[#allocation27 + $0x70] sm:$0xff]
    %v5644 = vld [vmem:[#allocation27 + $0x78] sm:$0xff]
    %s5645 = scalar_lea.vmem [#allocation27], 128
    %v5646 = vld [vmem:[%s5645] sm:$0xff]
    %v5647 = vld [vmem:[%s5645 + $0x8] sm:$0xff]
    %v5648 = vld [vmem:[%s5645 + $0x10] sm:$0xff]
    %v5649 = vld [vmem:[%s5645 + $0x18] sm:$0xff]
    %v5650 = vld [vmem:[%s5645 + $0x20] sm:$0xff]
    %v5651 = vld [vmem:[%s5645 + $0x28] sm:$0xff]
    %v5652 = vld [vmem:[%s5645 + $0x30] sm:$0xff]
    %v5653 = vld [vmem:[%s5645 + $0x38] sm:$0xff]
    %v5654 = vld [vmem:[%s5645 + $0x40] sm:$0xff]
    %v5655 = vld [vmem:[%s5645 + $0x48] sm:$0xff]
    %v5656 = vld [vmem:[%s5645 + $0x50] sm:$0xff]
    %v5657 = vld [vmem:[%s5645 + $0x58] sm:$0xff]
    %v5658 = vld [vmem:[%s5645 + $0x60] sm:$0xff]
    %v5659 = vld [vmem:[%s5645 + $0x68] sm:$0xff]
    %v5660 = vld [vmem:[%s5645 + $0x70] sm:$0xff]
    %v5661 = vld [vmem:[%s5645 + $0x78] sm:$0xff]
    %5662 = vmatpush.msra.mxu0 %v5661
    %5663 = vmatpush.msra.mxu0 %v5660
    %5664 = vmatpush.msra.mxu0 %v5659
    %5665 = vmatpush.msra.mxu0 %v5658
    %5666 = vmatpush.msra.mxu0 %v5657
    %5667 = vmatpush.msra.mxu0 %v5656
    %5668 = vmatpush.msra.mxu0 %v5655
    %5669 = vmatpush.msra.mxu0 %v5654
    %5670 = vmatpush.msra.mxu0 %v5653
    %5671 = vmatpush.msra.mxu0 %v5652
    %5672 = vmatpush.msra.mxu0 %v5651
    %5673 = vmatpush.msra.mxu0 %v5650
    %5674 = vmatpush.msra.mxu0 %v5649
    %5675 = vmatpush.msra.mxu0 %v5648
    %5676 = vmatpush.msra.mxu0 %v5647
    %5677 = vmatpush.msra.mxu0 %v5646
    %5678 = vmatmul.f32.gmra.mxu0 %v5619
    %v5679 = vpop.f32.mrf.mxu0
    %v5680 = vadd.f32 0.0, %v5679
    %5681 = vmatmul.f32.gmra.mxu0 %v5620
    %v5682 = vpop.f32.mrf.mxu0
    %v5683 = vadd.f32 0.0, %v5682
    %5684 = vdwg.mxu0
    %5685 = vmatpush.msra.mxu0 %v5644
    %5686 = vmatpush.msra.mxu0 %v5643
    %5687 = vmatpush.msra.mxu0 %v5642
    %5688 = vmatpush.msra.mxu0 %v5641
    %5689 = vmatpush.msra.mxu0 %v5640
    %5690 = vmatpush.msra.mxu0 %v5639
    %5691 = vmatpush.msra.mxu0 %v5638
    %5692 = vmatpush.msra.mxu0 %v5637
    %5693 = vmatpush.msra.mxu0 %v5636
    %5694 = vmatpush.msra.mxu0 %v5635
    %5695 = vmatpush.msra.mxu0 %v5634
    %5696 = vmatpush.msra.mxu0 %v5633
    %5697 = vmatpush.msra.mxu0 %v5632
    %5698 = vmatpush.msra.mxu0 %v5631
    %5699 = vmatpush.msra.mxu0 %v5630
    %5700 = vmatpush.msra.mxu0 %v5629
    %5701 = vmatmul.f32.gmra.mxu0 %v5627
    %v5702 = vpop.f32.mrf.mxu0
    %v5703 = vadd.f32 %v5680, %v5702
    %5704 = vmatmul.f32.gmra.mxu0 %v5628
    %v5705 = vpop.f32.mrf.mxu0
    %v5706 = vadd.f32 %v5683, %v5705
    %5707 = vdwg.mxu0
    %v5708 = vrot.slane %v5619, 1
    %v5709 = vrot.slane %v5620, 1
    %v5712 = vsel %vm641, %v5708, 0.0
    %v5713 = vsel %vm641, %v5709, 0.0
    %s5714 = scalar_lea.vmem [#allocation27], 256
    %v5715 = vld [vmem:[%s5714] sm:$0xff]
    %v5716 = vld [vmem:[%s5714 + $0x8] sm:$0xff]
    %v5717 = vld [vmem:[%s5714 + $0x10] sm:$0xff]
    %v5718 = vld [vmem:[%s5714 + $0x18] sm:$0xff]
    %v5719 = vld [vmem:[%s5714 + $0x20] sm:$0xff]
    %v5720 = vld [vmem:[%s5714 + $0x28] sm:$0xff]
    %v5721 = vld [vmem:[%s5714 + $0x30] sm:$0xff]
    %v5722 = vld [vmem:[%s5714 + $0x38] sm:$0xff]
    %v5723 = vld [vmem:[%s5714 + $0x40] sm:$0xff]
    %v5724 = vld [vmem:[%s5714 + $0x48] sm:$0xff]
    %v5725 = vld [vmem:[%s5714 + $0x50] sm:$0xff]
    %v5726 = vld [vmem:[%s5714 + $0x58] sm:$0xff]
    %v5727 = vld [vmem:[%s5714 + $0x60] sm:$0xff]
    %v5728 = vld [vmem:[%s5714 + $0x68] sm:$0xff]
    %v5729 = vld [vmem:[%s5714 + $0x70] sm:$0xff]
    %v5730 = vld [vmem:[%s5714 + $0x78] sm:$0xff]
    %5731 = vmatpush.msra.mxu0 %v5730
    %5732 = vmatpush.msra.mxu0 %v5729
    %5733 = vmatpush.msra.mxu0 %v5728
    %5734 = vmatpush.msra.mxu0 %v5727
    %5735 = vmatpush.msra.mxu0 %v5726
    %5736 = vmatpush.msra.mxu0 %v5725
    %5737 = vmatpush.msra.mxu0 %v5724
    %5738 = vmatpush.msra.mxu0 %v5723
    %5739 = vmatpush.msra.mxu0 %v5722
    %5740 = vmatpush.msra.mxu0 %v5721
    %5741 = vmatpush.msra.mxu0 %v5720
    %5742 = vmatpush.msra.mxu0 %v5719
    %5743 = vmatpush.msra.mxu0 %v5718
    %5744 = vmatpush.msra.mxu0 %v5717
    %5745 = vmatpush.msra.mxu0 %v5716
    %5746 = vmatpush.msra.mxu0 %v5715
    %5747 = vmatmul.f32.gmra.mxu0 %v5712
    %v5748 = vpop.f32.mrf.mxu0
    %v5749 = vadd.f32 0.0, %v5748
    %5750 = vmatmul.f32.gmra.mxu0 %v5713
    %v5751 = vpop.f32.mrf.mxu0
    %v5752 = vadd.f32 0.0, %v5751
    %5753 = vdwg.mxu0
    %v5754 = vadd.f32 %v5703, %v5749
    %v5755 = vadd.f32 %v5706, %v5752
    %v5756 = vld [vmem:[%s83] sm:$0x1]
    %v5757 = vld [vmem:[%s85] sm:$0x1]
    %v5758 = vadd.f32 %v5754, %v5755
    %v5759 = vrot.slane %v5758, 4
    %v5760 = vadd.f32 %v5758, %v5759
    %v5761 = vrot.slane %v5760, 2
    %v5762 = vadd.f32 %v5760, %v5761
    %v5763 = vrot.slane %v5762, 1
    %v5764 = vadd.f32 %v5762, %v5763
    %v5765 = vmul.f32 %v5754, %v5754
    %v5766 = vmul.f32 %v5755, %v5755
    %v5767 = vadd.f32 %v5765, %v5766
    %v5768 = vrot.slane %v5767, 4
    %v5769 = vadd.f32 %v5767, %v5768
    %v5770 = vrot.slane %v5769, 2
    %v5771 = vadd.f32 %v5769, %v5770
    %v5772 = vrot.slane %v5771, 1
    %v5773 = vadd.f32 %v5771, %v5772
    %5774 = vmatpush.msra.mxu0 %v2031
    %5775 = vmatpush.msra.mxu0 %v2030
    %5776 = vmatpush.msra.mxu0 %v2029
    %5777 = vmatpush.msra.mxu0 %v2028
    %5778 = vmatpush.msra.mxu0 %v2027
    %5779 = vmatpush.msra.mxu0 %v2026
    %5780 = vmatpush.msra.mxu0 %v2025
    %5781 = vmatpush.msra.mxu0 %v2024
    %5782 = vmatpush.msra.mxu0 %v2023
    %5783 = vmatpush.msra.mxu0 %v2022
    %5784 = vmatpush.msra.mxu0 %v2021
    %5785 = vmatpush.msra.mxu0 %v2020
    %5786 = vmatpush.msra.mxu0 %v2019
    %5787 = vmatpush.msra.mxu0 %v2018
    %5788 = vmatpush.msra.mxu0 %v2017
    %5789 = vmatpush.msra.mxu0 %v2016
    %5790 = vmatmul.f32.gmra.mxu0 %v5764
    %v5791 = vpop.f32.mrf.mxu0
    %v5792 = vadd.f32 0.0, %v5791
    %5793 = vdwg.mxu0
    %5794 = vmatpush.msra.mxu0 %v2031
    %5795 = vmatpush.msra.mxu0 %v2030
    %5796 = vmatpush.msra.mxu0 %v2029
    %5797 = vmatpush.msra.mxu0 %v2028
    %5798 = vmatpush.msra.mxu0 %v2027
    %5799 = vmatpush.msra.mxu0 %v2026
    %5800 = vmatpush.msra.mxu0 %v2025
    %5801 = vmatpush.msra.mxu0 %v2024
    %5802 = vmatpush.msra.mxu0 %v2023
    %5803 = vmatpush.msra.mxu0 %v2022
    %5804 = vmatpush.msra.mxu0 %v2021
    %5805 = vmatpush.msra.mxu0 %v2020
    %5806 = vmatpush.msra.mxu0 %v2019
    %5807 = vmatpush.msra.mxu0 %v2018
    %5808 = vmatpush.msra.mxu0 %v2017
    %5809 = vmatpush.msra.mxu0 %v2016
    %5810 = vmatmul.f32.gmra.mxu0 %v5773
    %v5811 = vpop.f32.mrf.mxu0
    %v5812 = vadd.f32 0.0, %v5811
    %5813 = vdwg.mxu0
    %v5814 = vmul.f32 %v5792, %v2096
    %v5815 = vmul.f32 %v5812, %v2096
    %v5816 = vmul.f32 %v5814, %v5814
    %v5817 = vsub.f32 %v5815, %v5816
    %v5818 = vadd.f32 %v5817, 1e-05
    %v5819 = vrsqrt.pop %v5818
    %v5820 = vmul.f32 %v5819, %v5818
    %v5821 = vmul.f32 %v5820, %v5819
    %v5822 = vmul.f32 0.5, %v5821
    %v5823 = vsub.f32 1.5, %v5822
    %v5824 = vmul.f32 %v5819, %v5823
    %vm5825 = vweird.f32 %v5818
    %vm5826 = vweird.f32 %v5819
    %vm5827 = vmor %vm5825, %vm5826
    %v5828 = vsel %vm5827, %v5819, %v5824
    %v5829 = vmul.f32 %v5756, %v5828
    %v5830 = vmul.f32 %v5814, %v5829
    %v5831 = vsub.f32 %v5757, %v5830
    %v5833 = vsel %vm564, %v5829, 0
    %5835 = vmatpush.msra.mxu0 0.0
    %5836 = vmatpush.msra.mxu0 0.0
    %5837 = vmatpush.msra.mxu0 0.0
    %5838 = vmatpush.msra.mxu0 0.0
    %5839 = vmatpush.msra.mxu0 0.0
    %5840 = vmatpush.msra.mxu0 0.0
    %5841 = vmatpush.msra.mxu0 0.0
    %5842 = vmatpush.msra.mxu0 0.0
    %5843 = vmatpush.msra.mxu0 0.0
    %5844 = vmatpush.msra.mxu0 0.0
    %5845 = vmatpush.msra.mxu0 0.0
    %5846 = vmatpush.msra.mxu0 0.0
    %5847 = vmatpush.msra.mxu0 0.0
    %5848 = vmatpush.msra.mxu0 0.0
    %5849 = vmatpush.msra.mxu0 %v2049
    %5850 = vmatpush.msra.mxu0 %v2048
    %5851 = vmatmul.f32.gmra.mxu0 %v5833
    %v5852 = vpop.f32.mrf.mxu0
    %v5853 = vadd.f32 0.0, %v5852
    %5854 = vdwg.mxu0
    %v5856 = vsel %vm564, %v5831, 0
    %5858 = vmatpush.msra.mxu0 0.0
    %5859 = vmatpush.msra.mxu0 0.0
    %5860 = vmatpush.msra.mxu0 0.0
    %5861 = vmatpush.msra.mxu0 0.0
    %5862 = vmatpush.msra.mxu0 0.0
    %5863 = vmatpush.msra.mxu0 0.0
    %5864 = vmatpush.msra.mxu0 0.0
    %5865 = vmatpush.msra.mxu0 0.0
    %5866 = vmatpush.msra.mxu0 0.0
    %5867 = vmatpush.msra.mxu0 0.0
    %5868 = vmatpush.msra.mxu0 0.0
    %5869 = vmatpush.msra.mxu0 0.0
    %5870 = vmatpush.msra.mxu0 0.0
    %5871 = vmatpush.msra.mxu0 0.0
    %5872 = vmatpush.msra.mxu0 %v2049
    %5873 = vmatpush.msra.mxu0 %v2048
    %5874 = vmatmul.f32.gmra.mxu0 %v5856
    %v5875 = vpop.f32.mrf.mxu0
    %v5876 = vadd.f32 0.0, %v5875
    %5877 = vdwg.mxu0
    %v5878 = vperm.slane %v5853, 0
    %v5879 = vmul.f32 %v5754, %v5878
    %v5880 = vmul.f32 %v5755, %v5878
    %v5881 = vperm.slane %v5876, 0
    %v5882 = vadd.f32 %v5879, %v5881
    %v5883 = vadd.f32 %v5880, %v5881
    %vm5884 = vcmp.gt.f32.partialorder %v5882, 0.0
    %vm5885 = vcmp.gt.f32.partialorder %v5883, 0.0
    %v5886 = vmul.f32 %v5882, 0.03
    %v5887 = vmul.f32 %v5883, 0.03
    %v5888 = vsel %vm5884, %v5882, %v5886
    %v5889 = vsel %vm5885, %v5883, %v5887
    %v5890 = vld [vmem:[%s89] sm:$0x1]
    %v5891 = vld [vmem:[#allocation28] sm:$0xff]
    %v5892 = vld [vmem:[#allocation28 + $0x8] sm:$0xff]
    %v5893 = vld [vmem:[#allocation28 + $0x10] sm:$0xff]
    %v5894 = vld [vmem:[#allocation28 + $0x18] sm:$0xff]
    %v5895 = vld [vmem:[#allocation28 + $0x20] sm:$0xff]
    %v5896 = vld [vmem:[#allocation28 + $0x28] sm:$0xff]
    %v5897 = vld [vmem:[#allocation28 + $0x30] sm:$0xff]
    %v5898 = vld [vmem:[#allocation28 + $0x38] sm:$0xff]
    %v5899 = vld [vmem:[#allocation28 + $0x40] sm:$0xff]
    %v5900 = vld [vmem:[#allocation28 + $0x48] sm:$0xff]
    %v5901 = vld [vmem:[#allocation28 + $0x50] sm:$0xff]
    %v5902 = vld [vmem:[#allocation28 + $0x58] sm:$0xff]
    %v5903 = vld [vmem:[#allocation28 + $0x60] sm:$0xff]
    %v5904 = vld [vmem:[#allocation28 + $0x68] sm:$0xff]
    %v5905 = vld [vmem:[#allocation28 + $0x70] sm:$0xff]
    %v5906 = vld [vmem:[#allocation28 + $0x78] sm:$0xff]
    %v5908 = vperm.slane %v5890, 0
    %5910 = vmatpush.msra.mxu0 %v5906
    %5911 = vmatpush.msra.mxu0 %v5905
    %5912 = vmatpush.msra.mxu0 %v5904
    %5913 = vmatpush.msra.mxu0 %v5903
    %5914 = vmatpush.msra.mxu0 %v5902
    %5915 = vmatpush.msra.mxu0 %v5901
    %5916 = vmatpush.msra.mxu0 %v5900
    %5917 = vmatpush.msra.mxu0 %v5899
    %5918 = vmatpush.msra.mxu0 %v5898
    %5919 = vmatpush.msra.mxu0 %v5897
    %5920 = vmatpush.msra.mxu0 %v5896
    %5921 = vmatpush.msra.mxu0 %v5895
    %5922 = vmatpush.msra.mxu0 %v5894
    %5923 = vmatpush.msra.mxu0 %v5893
    %5924 = vmatpush.msra.mxu0 %v5892
    %5925 = vmatpush.msra.mxu0 %v5891
    %5926 = vmatmul.f32.gmra.mxu0 %v5888
    %v5927 = vpop.f32.mrf.mxu0
    %v5928 = vadd.f32 %v5908, %v5927
    %5929 = vmatmul.f32.gmra.mxu0 %v5889
    %v5930 = vpop.f32.mrf.mxu0
    %v5931 = vadd.f32 %v5908, %v5930
    %5932 = vdwg.mxu0
    %s5933 = scalar_lea.vmem [#allocation28], 128
    %v5934 = vld [vmem:[%s5933] sm:$0xff]
    %v5935 = vld [vmem:[%s5933 + $0x8] sm:$0xff]
    %v5936 = vld [vmem:[%s5933 + $0x10] sm:$0xff]
    %v5937 = vld [vmem:[%s5933 + $0x18] sm:$0xff]
    %v5938 = vld [vmem:[%s5933 + $0x20] sm:$0xff]
    %v5939 = vld [vmem:[%s5933 + $0x28] sm:$0xff]
    %v5940 = vld [vmem:[%s5933 + $0x30] sm:$0xff]
    %v5941 = vld [vmem:[%s5933 + $0x38] sm:$0xff]
    %v5942 = vld [vmem:[%s5933 + $0x40] sm:$0xff]
    %v5943 = vld [vmem:[%s5933 + $0x48] sm:$0xff]
    %v5944 = vld [vmem:[%s5933 + $0x50] sm:$0xff]
    %v5945 = vld [vmem:[%s5933 + $0x58] sm:$0xff]
    %v5946 = vld [vmem:[%s5933 + $0x60] sm:$0xff]
    %v5947 = vld [vmem:[%s5933 + $0x68] sm:$0xff]
    %v5948 = vld [vmem:[%s5933 + $0x70] sm:$0xff]
    %v5949 = vld [vmem:[%s5933 + $0x78] sm:$0xff]
    %5950 = vmatpush.msra.mxu0 %v5949
    %5951 = vmatpush.msra.mxu0 %v5948
    %5952 = vmatpush.msra.mxu0 %v5947
    %5953 = vmatpush.msra.mxu0 %v5946
    %5954 = vmatpush.msra.mxu0 %v5945
    %5955 = vmatpush.msra.mxu0 %v5944
    %5956 = vmatpush.msra.mxu0 %v5943
    %5957 = vmatpush.msra.mxu0 %v5942
    %5958 = vmatpush.msra.mxu0 %v5941
    %5959 = vmatpush.msra.mxu0 %v5940
    %5960 = vmatpush.msra.mxu0 %v5939
    %5961 = vmatpush.msra.mxu0 %v5938
    %5962 = vmatpush.msra.mxu0 %v5937
    %5963 = vmatpush.msra.mxu0 %v5936
    %5964 = vmatpush.msra.mxu0 %v5935
    %5965 = vmatpush.msra.mxu0 %v5934
    %5966 = vmatmul.f32.gmra.mxu0 %v5888
    %v5967 = vpop.f32.mrf.mxu0
    %v5968 = vadd.f32 %v5908, %v5967
    %5969 = vmatmul.f32.gmra.mxu0 %v5889
    %v5970 = vpop.f32.mrf.mxu0
    %v5971 = vadd.f32 %v5908, %v5970
    %5972 = vdwg.mxu0
    %v5975 = vrot.slane %v5928, 1
    %v5976 = vrot.slane %v5928, 2
    %v5977 = vrot.slane %v5928, 3
    %v5978 = vrot.slane %v5928, 4
    %v5979 = vrot.slane %v5928, 5
    %v5980 = vrot.slane %v5928, 6
    %v5981 = vrot.slane %v5928, 7
    %v5982 = vrot.slane %v5931, 1
    %v5983 = vrot.slane %v5931, 2
    %v5984 = vrot.slane %v5931, 3
    %v5985 = vrot.slane %v5931, 4
    %v5986 = vrot.slane %v5931, 5
    %v5987 = vrot.slane %v5931, 6
    %v5988 = vrot.slane %v5931, 7
    %v6005 = vrot.slane %v5968, 1
    %v6006 = vrot.slane %v5968, 2
    %v6007 = vrot.slane %v5968, 3
    %v6008 = vrot.slane %v5968, 4
    %v6009 = vrot.slane %v5968, 5
    %v6010 = vrot.slane %v5968, 6
    %v6011 = vrot.slane %v5968, 7
    %v6012 = vrot.slane %v5971, 1
    %v6013 = vrot.slane %v5971, 2
    %v6014 = vrot.slane %v5971, 3
    %v6015 = vrot.slane %v5971, 4
    %v6016 = vrot.slane %v5971, 5
    %v6017 = vrot.slane %v5971, 6
    %v6018 = vrot.slane %v5971, 7
    %v6019 = vperm.slane %v5968, 0
    %v6020 = vperm.slane %v6005, 0
    %v6021 = vperm.slane %v6006, 0
    %v6022 = vperm.slane %v6007, 0
    %v6023 = vperm.slane %v6008, 0
    %v6024 = vperm.slane %v6009, 0
    %v6025 = vperm.slane %v6010, 0
    %v6026 = vperm.slane %v6011, 0
    %v6027 = vperm.slane %v5971, 0
    %v6028 = vperm.slane %v6012, 0
    %v6029 = vperm.slane %v6013, 0
    %v6030 = vperm.slane %v6014, 0
    %v6031 = vperm.slane %v6015, 0
    %v6032 = vperm.slane %v6016, 0
    %v6033 = vperm.slane %v6017, 0
    %v6034 = vperm.slane %v6018, 0
    %v6051 = vsel %vm548, %v5928, %v6019
    %v6052 = vsel %vm548, %v5975, %v6020
    %v6053 = vsel %vm548, %v5976, %v6021
    %v6054 = vsel %vm548, %v5977, %v6022
    %v6055 = vsel %vm548, %v5978, %v6023
    %v6056 = vsel %vm548, %v5979, %v6024
    %v6057 = vsel %vm548, %v5980, %v6025
    %v6058 = vsel %vm548, %v5981, %v6026
    %v6059 = vsel %vm548, %v5931, %v6027
    %v6060 = vsel %vm548, %v5982, %v6028
    %v6061 = vsel %vm548, %v5983, %v6029
    %v6062 = vsel %vm548, %v5984, %v6030
    %v6063 = vsel %vm548, %v5985, %v6031
    %v6064 = vsel %vm548, %v5986, %v6032
    %v6065 = vsel %vm548, %v5987, %v6033
    %v6066 = vsel %vm548, %v5988, %v6034
    %v6067 = vrot.slane %v1445, 7
    %v6068 = vrot.slane %v1446, 7
    %v6069 = vsel %vm548, %v6067, %v6068
    %v6070 = vrot.slane %v1447, 7
    %v6071 = vrot.slane %v1448, 7
    %v6072 = vsel %vm548, %v6070, %v6071
    %v6077 = vsel %vm548, 0.0, %v6067
    %v6078 = vsel %vm548, 0.0, %v6070
    %v6079 = vld [vmem:[#allocation30] sm:$0xff]
    %v6080 = vld [vmem:[#allocation30 + $0x8] sm:$0xff]
    %v6081 = vld [vmem:[#allocation30 + $0x10] sm:$0xff]
    %v6082 = vld [vmem:[#allocation30 + $0x18] sm:$0xff]
    %v6083 = vld [vmem:[#allocation30 + $0x20] sm:$0xff]
    %v6084 = vld [vmem:[#allocation30 + $0x28] sm:$0xff]
    %v6085 = vld [vmem:[#allocation30 + $0x30] sm:$0xff]
    %v6086 = vld [vmem:[#allocation30 + $0x38] sm:$0xff]
    %v6087 = vld [vmem:[#allocation30 + $0x40] sm:$0xff]
    %v6088 = vld [vmem:[#allocation30 + $0x48] sm:$0xff]
    %v6089 = vld [vmem:[#allocation30 + $0x50] sm:$0xff]
    %v6090 = vld [vmem:[#allocation30 + $0x58] sm:$0xff]
    %v6091 = vld [vmem:[#allocation30 + $0x60] sm:$0xff]
    %v6092 = vld [vmem:[#allocation30 + $0x68] sm:$0xff]
    %v6093 = vld [vmem:[#allocation30 + $0x70] sm:$0xff]
    %v6094 = vld [vmem:[#allocation30 + $0x78] sm:$0xff]
    %s6095 = scalar_lea.vmem [#allocation30], 128
    %v6096 = vld [vmem:[%s6095] sm:$0xff]
    %v6097 = vld [vmem:[%s6095 + $0x8] sm:$0xff]
    %v6098 = vld [vmem:[%s6095 + $0x10] sm:$0xff]
    %v6099 = vld [vmem:[%s6095 + $0x18] sm:$0xff]
    %v6100 = vld [vmem:[%s6095 + $0x20] sm:$0xff]
    %v6101 = vld [vmem:[%s6095 + $0x28] sm:$0xff]
    %v6102 = vld [vmem:[%s6095 + $0x30] sm:$0xff]
    %v6103 = vld [vmem:[%s6095 + $0x38] sm:$0xff]
    %v6104 = vld [vmem:[%s6095 + $0x40] sm:$0xff]
    %v6105 = vld [vmem:[%s6095 + $0x48] sm:$0xff]
    %v6106 = vld [vmem:[%s6095 + $0x50] sm:$0xff]
    %v6107 = vld [vmem:[%s6095 + $0x58] sm:$0xff]
    %v6108 = vld [vmem:[%s6095 + $0x60] sm:$0xff]
    %v6109 = vld [vmem:[%s6095 + $0x68] sm:$0xff]
    %v6110 = vld [vmem:[%s6095 + $0x70] sm:$0xff]
    %v6111 = vld [vmem:[%s6095 + $0x78] sm:$0xff]
    %6112 = vmatpush.msra.mxu0 %v6111
    %6113 = vmatpush.msra.mxu0 %v6110
    %6114 = vmatpush.msra.mxu0 %v6109
    %6115 = vmatpush.msra.mxu0 %v6108
    %6116 = vmatpush.msra.mxu0 %v6107
    %6117 = vmatpush.msra.mxu0 %v6106
    %6118 = vmatpush.msra.mxu0 %v6105
    %6119 = vmatpush.msra.mxu0 %v6104
    %6120 = vmatpush.msra.mxu0 %v6103
    %6121 = vmatpush.msra.mxu0 %v6102
    %6122 = vmatpush.msra.mxu0 %v6101
    %6123 = vmatpush.msra.mxu0 %v6100
    %6124 = vmatpush.msra.mxu0 %v6099
    %6125 = vmatpush.msra.mxu0 %v6098
    %6126 = vmatpush.msra.mxu0 %v6097
    %6127 = vmatpush.msra.mxu0 %v6096
    %6128 = vmatmul.f32.gmra.mxu0 %v1445
    %v6129 = vpop.f32.mrf.mxu0
    %v6130 = vadd.f32 0.0, %v6129
    %6131 = vmatmul.f32.gmra.mxu0 %v1446
    %v6132 = vpop.f32.mrf.mxu0
    %v6133 = vadd.f32 0.0, %v6132
    %6134 = vmatmul.f32.gmra.mxu0 %v1447
    %v6135 = vpop.f32.mrf.mxu0
    %v6136 = vadd.f32 0.0, %v6135
    %6137 = vmatmul.f32.gmra.mxu0 %v1448
    %v6138 = vpop.f32.mrf.mxu0
    %v6139 = vadd.f32 0.0, %v6138
    %6140 = vdwg.mxu0
    %6141 = vmatpush.msra.mxu0 %v6094
    %6142 = vmatpush.msra.mxu0 %v6093
    %6143 = vmatpush.msra.mxu0 %v6092
    %6144 = vmatpush.msra.mxu0 %v6091
    %6145 = vmatpush.msra.mxu0 %v6090
    %6146 = vmatpush.msra.mxu0 %v6089
    %6147 = vmatpush.msra.mxu0 %v6088
    %6148 = vmatpush.msra.mxu0 %v6087
    %6149 = vmatpush.msra.mxu0 %v6086
    %6150 = vmatpush.msra.mxu0 %v6085
    %6151 = vmatpush.msra.mxu0 %v6084
    %6152 = vmatpush.msra.mxu0 %v6083
    %6153 = vmatpush.msra.mxu0 %v6082
    %6154 = vmatpush.msra.mxu0 %v6081
    %6155 = vmatpush.msra.mxu0 %v6080
    %6156 = vmatpush.msra.mxu0 %v6079
    %6157 = vmatmul.f32.gmra.mxu0 %v6077
    %v6158 = vpop.f32.mrf.mxu0
    %v6159 = vadd.f32 %v6130, %v6158
    %6160 = vmatmul.f32.gmra.mxu0 %v6069
    %v6161 = vpop.f32.mrf.mxu0
    %v6162 = vadd.f32 %v6133, %v6161
    %6163 = vmatmul.f32.gmra.mxu0 %v6078
    %v6164 = vpop.f32.mrf.mxu0
    %v6165 = vadd.f32 %v6136, %v6164
    %6166 = vmatmul.f32.gmra.mxu0 %v6072
    %v6167 = vpop.f32.mrf.mxu0
    %v6168 = vadd.f32 %v6139, %v6167
    %6169 = vdwg.mxu0
    %v6170 = vrot.slane %v1445, 1
    %v6171 = vrot.slane %v1446, 1
    %v6172 = vsel %vm641, %v6170, %v6171
    %v6173 = vrot.slane %v1447, 1
    %v6174 = vrot.slane %v1448, 1
    %v6175 = vsel %vm641, %v6173, %v6174
    %v6180 = vsel %vm641, %v6171, 0.0
    %v6181 = vsel %vm641, %v6174, 0.0
    %s6182 = scalar_lea.vmem [#allocation30], 256
    %v6183 = vld [vmem:[%s6182] sm:$0xff]
    %v6184 = vld [vmem:[%s6182 + $0x8] sm:$0xff]
    %v6185 = vld [vmem:[%s6182 + $0x10] sm:$0xff]
    %v6186 = vld [vmem:[%s6182 + $0x18] sm:$0xff]
    %v6187 = vld [vmem:[%s6182 + $0x20] sm:$0xff]
    %v6188 = vld [vmem:[%s6182 + $0x28] sm:$0xff]
    %v6189 = vld [vmem:[%s6182 + $0x30] sm:$0xff]
    %v6190 = vld [vmem:[%s6182 + $0x38] sm:$0xff]
    %v6191 = vld [vmem:[%s6182 + $0x40] sm:$0xff]
    %v6192 = vld [vmem:[%s6182 + $0x48] sm:$0xff]
    %v6193 = vld [vmem:[%s6182 + $0x50] sm:$0xff]
    %v6194 = vld [vmem:[%s6182 + $0x58] sm:$0xff]
    %v6195 = vld [vmem:[%s6182 + $0x60] sm:$0xff]
    %v6196 = vld [vmem:[%s6182 + $0x68] sm:$0xff]
    %v6197 = vld [vmem:[%s6182 + $0x70] sm:$0xff]
    %v6198 = vld [vmem:[%s6182 + $0x78] sm:$0xff]
    %6199 = vmatpush.msra.mxu0 %v6198
    %6200 = vmatpush.msra.mxu0 %v6197
    %6201 = vmatpush.msra.mxu0 %v6196
    %6202 = vmatpush.msra.mxu0 %v6195
    %6203 = vmatpush.msra.mxu0 %v6194
    %6204 = vmatpush.msra.mxu0 %v6193
    %6205 = vmatpush.msra.mxu0 %v6192
    %6206 = vmatpush.msra.mxu0 %v6191
    %6207 = vmatpush.msra.mxu0 %v6190
    %6208 = vmatpush.msra.mxu0 %v6189
    %6209 = vmatpush.msra.mxu0 %v6188
    %6210 = vmatpush.msra.mxu0 %v6187
    %6211 = vmatpush.msra.mxu0 %v6186
    %6212 = vmatpush.msra.mxu0 %v6185
    %6213 = vmatpush.msra.mxu0 %v6184
    %6214 = vmatpush.msra.mxu0 %v6183
    %6215 = vmatmul.f32.gmra.mxu0 %v6172
    %v6216 = vpop.f32.mrf.mxu0
    %v6217 = vadd.f32 0.0, %v6216
    %6218 = vmatmul.f32.gmra.mxu0 %v6180
    %v6219 = vpop.f32.mrf.mxu0
    %v6220 = vadd.f32 0.0, %v6219
    %6221 = vmatmul.f32.gmra.mxu0 %v6175
    %v6222 = vpop.f32.mrf.mxu0
    %v6223 = vadd.f32 0.0, %v6222
    %6224 = vmatmul.f32.gmra.mxu0 %v6181
    %v6225 = vpop.f32.mrf.mxu0
    %v6226 = vadd.f32 0.0, %v6225
    %6227 = vdwg.mxu0
    %v6228 = vadd.f32 %v6159, %v6217
    %v6229 = vadd.f32 %v6162, %v6220
    %v6230 = vadd.f32 %v6165, %v6223
    %v6231 = vadd.f32 %v6168, %v6226
    %6248 = vst [vmem:[#allocation1] ss:$4 sm:$0xff] %v6051
    %s6249 = scalar_lea.vmem [#allocation1], 1
    %6250 = vst [vmem:[%s6249] ss:$4 sm:$0xff] %v6052
    %s6251 = scalar_lea.vmem [#allocation1], 2
    %6252 = vst [vmem:[%s6251] ss:$4 sm:$0xff] %v6053
    %s6253 = scalar_lea.vmem [#allocation1], 3
    %6254 = vst [vmem:[%s6253] ss:$4 sm:$0xff] %v6054
    %s6255 = scalar_lea.vmem [#allocation1], 32
    %6256 = vst [vmem:[%s6255] ss:$4 sm:$0xff] %v6055
    %s6257 = scalar_lea.vmem [#allocation1], 33
    %6258 = vst [vmem:[%s6257] ss:$4 sm:$0xff] %v6056
    %s6259 = scalar_lea.vmem [#allocation1], 34
    %6260 = vst [vmem:[%s6259] ss:$4 sm:$0xff] %v6057
    %s6261 = scalar_lea.vmem [#allocation1], 35
    %6262 = vst [vmem:[%s6261] ss:$4 sm:$0xff] %v6058
    %v6263 = vld.sshfl [vmem:[#allocation1] sm:$0xff pattern:$0x73625140]
    %v6264 = vld.sshfl [vmem:[#allocation1 + $0x20] sm:$0xff pattern:$0x73625140]
    %6265 = vst [vmem:[#allocation1] ss:$4 sm:$0xff] %v6059
    %6266 = vst [vmem:[%s6249] ss:$4 sm:$0xff] %v6060
    %6267 = vst [vmem:[%s6251] ss:$4 sm:$0xff] %v6061
    %6268 = vst [vmem:[%s6253] ss:$4 sm:$0xff] %v6062
    %6269 = vst [vmem:[%s6255] ss:$4 sm:$0xff] %v6063
    %6270 = vst [vmem:[%s6257] ss:$4 sm:$0xff] %v6064
    %6271 = vst [vmem:[%s6259] ss:$4 sm:$0xff] %v6065
    %6272 = vst [vmem:[%s6261] ss:$4 sm:$0xff] %v6066
    %v6273 = vld.sshfl [vmem:[#allocation1] sm:$0xff pattern:$0x73625140]
    %v6274 = vld.sshfl [vmem:[#allocation1 + $0x20] sm:$0xff pattern:$0x73625140]
    %v6275 = vrot.slane %v6263, 7
    %v6276 = vrot.slane %v6264, 7
    %v6277 = vsel %vm548, %v6275, %v6276
    %v6278 = vrot.slane %v6273, 7
    %v6279 = vrot.slane %v6274, 7
    %v6280 = vsel %vm548, %v6278, %v6279
    %v6285 = vsel %vm548, 0.0, %v6275
    %v6286 = vsel %vm548, 0.0, %v6278
    %v6287 = vld [vmem:[#allocation31] sm:$0xff]
    %v6288 = vld [vmem:[#allocation31 + $0x8] sm:$0xff]
    %v6289 = vld [vmem:[#allocation31 + $0x10] sm:$0xff]
    %v6290 = vld [vmem:[#allocation31 + $0x18] sm:$0xff]
    %v6291 = vld [vmem:[#allocation31 + $0x20] sm:$0xff]
    %v6292 = vld [vmem:[#allocation31 + $0x28] sm:$0xff]
    %v6293 = vld [vmem:[#allocation31 + $0x30] sm:$0xff]
    %v6294 = vld [vmem:[#allocation31 + $0x38] sm:$0xff]
    %v6295 = vld [vmem:[#allocation31 + $0x40] sm:$0xff]
    %v6296 = vld [vmem:[#allocation31 + $0x48] sm:$0xff]
    %v6297 = vld [vmem:[#allocation31 + $0x50] sm:$0xff]
    %v6298 = vld [vmem:[#allocation31 + $0x58] sm:$0xff]
    %v6299 = vld [vmem:[#allocation31 + $0x60] sm:$0xff]
    %v6300 = vld [vmem:[#allocation31 + $0x68] sm:$0xff]
    %v6301 = vld [vmem:[#allocation31 + $0x70] sm:$0xff]
    %v6302 = vld [vmem:[#allocation31 + $0x78] sm:$0xff]
    %6303 = vmatpush.msra.mxu0 %v6302
    %6304 = vmatpush.msra.mxu0 %v6301
    %6305 = vmatpush.msra.mxu0 %v6300
    %6306 = vmatpush.msra.mxu0 %v6299
    %6307 = vmatpush.msra.mxu0 %v6298
    %6308 = vmatpush.msra.mxu0 %v6297
    %6309 = vmatpush.msra.mxu0 %v6296
    %6310 = vmatpush.msra.mxu0 %v6295
    %6311 = vmatpush.msra.mxu0 %v6294
    %6312 = vmatpush.msra.mxu0 %v6293
    %6313 = vmatpush.msra.mxu0 %v6292
    %6314 = vmatpush.msra.mxu0 %v6291
    %6315 = vmatpush.msra.mxu0 %v6290
    %6316 = vmatpush.msra.mxu0 %v6289
    %6317 = vmatpush.msra.mxu0 %v6288
    %6318 = vmatpush.msra.mxu0 %v6287
    %6319 = vmatmul.f32.gmra.mxu0 %v6285
    %v6320 = vpop.f32.mrf.mxu0
    %v6321 = vadd.f32 0.0, %v6320
    %6322 = vmatmul.f32.gmra.mxu0 %v6277
    %v6323 = vpop.f32.mrf.mxu0
    %v6324 = vadd.f32 0.0, %v6323
    %6325 = vmatmul.f32.gmra.mxu0 %v6286
    %v6326 = vpop.f32.mrf.mxu0
    %v6327 = vadd.f32 0.0, %v6326
    %6328 = vmatmul.f32.gmra.mxu0 %v6280
    %v6329 = vpop.f32.mrf.mxu0
    %v6330 = vadd.f32 0.0, %v6329
    %6331 = vdwg.mxu0
    %v6332 = vadd.f32 %v6228, %v6321
    %v6333 = vadd.f32 %v6229, %v6324
    %v6334 = vadd.f32 %v6230, %v6327
    %v6335 = vadd.f32 %v6231, %v6330
    %s6336 = scalar_lea.vmem [#allocation31], 128
    %v6337 = vld [vmem:[%s6336] sm:$0xff]
    %v6338 = vld [vmem:[%s6336 + $0x8] sm:$0xff]
    %v6339 = vld [vmem:[%s6336 + $0x10] sm:$0xff]
    %v6340 = vld [vmem:[%s6336 + $0x18] sm:$0xff]
    %v6341 = vld [vmem:[%s6336 + $0x20] sm:$0xff]
    %v6342 = vld [vmem:[%s6336 + $0x28] sm:$0xff]
    %v6343 = vld [vmem:[%s6336 + $0x30] sm:$0xff]
    %v6344 = vld [vmem:[%s6336 + $0x38] sm:$0xff]
    %v6345 = vld [vmem:[%s6336 + $0x40] sm:$0xff]
    %v6346 = vld [vmem:[%s6336 + $0x48] sm:$0xff]
    %v6347 = vld [vmem:[%s6336 + $0x50] sm:$0xff]
    %v6348 = vld [vmem:[%s6336 + $0x58] sm:$0xff]
    %v6349 = vld [vmem:[%s6336 + $0x60] sm:$0xff]
    %v6350 = vld [vmem:[%s6336 + $0x68] sm:$0xff]
    %v6351 = vld [vmem:[%s6336 + $0x70] sm:$0xff]
    %v6352 = vld [vmem:[%s6336 + $0x78] sm:$0xff]
    %6353 = vst [vmem:[#allocation1] ss:$4 sm:$0xff] %v6051
    %s6354 = scalar_lea.vmem [#allocation1], 1
    %6355 = vst [vmem:[%s6354] ss:$4 sm:$0xff] %v6052
    %s6356 = scalar_lea.vmem [#allocation1], 2
    %6357 = vst [vmem:[%s6356] ss:$4 sm:$0xff] %v6053
    %s6358 = scalar_lea.vmem [#allocation1], 3
    %6359 = vst [vmem:[%s6358] ss:$4 sm:$0xff] %v6054
    %s6360 = scalar_lea.vmem [#allocation1], 32
    %6361 = vst [vmem:[%s6360] ss:$4 sm:$0xff] %v6055
    %s6362 = scalar_lea.vmem [#allocation1], 33
    %6363 = vst [vmem:[%s6362] ss:$4 sm:$0xff] %v6056
    %s6364 = scalar_lea.vmem [#allocation1], 34
    %6365 = vst [vmem:[%s6364] ss:$4 sm:$0xff] %v6057
    %s6366 = scalar_lea.vmem [#allocation1], 35
    %6367 = vst [vmem:[%s6366] ss:$4 sm:$0xff] %v6058
    %v6368 = vld.sshfl [vmem:[#allocation1] sm:$0xff pattern:$0x73625140]
    %v6369 = vld.sshfl [vmem:[#allocation1 + $0x20] sm:$0xff pattern:$0x73625140]
    %6370 = vst [vmem:[#allocation1] ss:$4 sm:$0xff] %v6059
    %6371 = vst [vmem:[%s6354] ss:$4 sm:$0xff] %v6060
    %6372 = vst [vmem:[%s6356] ss:$4 sm:$0xff] %v6061
    %6373 = vst [vmem:[%s6358] ss:$4 sm:$0xff] %v6062
    %6374 = vst [vmem:[%s6360] ss:$4 sm:$0xff] %v6063
    %6375 = vst [vmem:[%s6362] ss:$4 sm:$0xff] %v6064
    %6376 = vst [vmem:[%s6364] ss:$4 sm:$0xff] %v6065
    %6377 = vst [vmem:[%s6366] ss:$4 sm:$0xff] %v6066
    %v6378 = vld.sshfl [vmem:[#allocation1] sm:$0xff pattern:$0x73625140]
    %v6379 = vld.sshfl [vmem:[#allocation1 + $0x20] sm:$0xff pattern:$0x73625140]
    %6384 = vmatpush.msra.mxu0 %v6352
    %6385 = vmatpush.msra.mxu0 %v6351
    %6386 = vmatpush.msra.mxu0 %v6350
    %6387 = vmatpush.msra.mxu0 %v6349
    %6388 = vmatpush.msra.mxu0 %v6348
    %6389 = vmatpush.msra.mxu0 %v6347
    %6390 = vmatpush.msra.mxu0 %v6346
    %6391 = vmatpush.msra.mxu0 %v6345
    %6392 = vmatpush.msra.mxu0 %v6344
    %6393 = vmatpush.msra.mxu0 %v6343
    %6394 = vmatpush.msra.mxu0 %v6342
    %6395 = vmatpush.msra.mxu0 %v6341
    %6396 = vmatpush.msra.mxu0 %v6340
    %6397 = vmatpush.msra.mxu0 %v6339
    %6398 = vmatpush.msra.mxu0 %v6338
    %6399 = vmatpush.msra.mxu0 %v6337
    %6400 = vmatmul.f32.gmra.mxu0 %v6368
    %v6401 = vpop.f32.mrf.mxu0
    %v6402 = vadd.f32 0.0, %v6401
    %6403 = vmatmul.f32.gmra.mxu0 %v6369
    %v6404 = vpop.f32.mrf.mxu0
    %v6405 = vadd.f32 0.0, %v6404
    %6406 = vmatmul.f32.gmra.mxu0 %v6378
    %v6407 = vpop.f32.mrf.mxu0
    %v6408 = vadd.f32 0.0, %v6407
    %6409 = vmatmul.f32.gmra.mxu0 %v6379
    %v6410 = vpop.f32.mrf.mxu0
    %v6411 = vadd.f32 0.0, %v6410
    %6412 = vdwg.mxu0
    %v6413 = vadd.f32 %v6332, %v6402
    %v6414 = vadd.f32 %v6333, %v6405
    %v6415 = vadd.f32 %v6334, %v6408
    %v6416 = vadd.f32 %v6335, %v6411
    %6417 = vst [vmem:[#allocation1] ss:$4 sm:$0xff] %v6051
    %s6418 = scalar_lea.vmem [#allocation1], 1
    %6419 = vst [vmem:[%s6418] ss:$4 sm:$0xff] %v6052
    %s6420 = scalar_lea.vmem [#allocation1], 2
    %6421 = vst [vmem:[%s6420] ss:$4 sm:$0xff] %v6053
    %s6422 = scalar_lea.vmem [#allocation1], 3
    %6423 = vst [vmem:[%s6422] ss:$4 sm:$0xff] %v6054
    %s6424 = scalar_lea.vmem [#allocation1], 32
    %6425 = vst [vmem:[%s6424] ss:$4 sm:$0xff] %v6055
    %s6426 = scalar_lea.vmem [#allocation1], 33
    %6427 = vst [vmem:[%s6426] ss:$4 sm:$0xff] %v6056
    %s6428 = scalar_lea.vmem [#allocation1], 34
    %6429 = vst [vmem:[%s6428] ss:$4 sm:$0xff] %v6057
    %s6430 = scalar_lea.vmem [#allocation1], 35
    %6431 = vst [vmem:[%s6430] ss:$4 sm:$0xff] %v6058
    %v6432 = vld.sshfl [vmem:[#allocation1] sm:$0xff pattern:$0x73625140]
    %v6433 = vld.sshfl [vmem:[#allocation1 + $0x20] sm:$0xff pattern:$0x73625140]
    %6434 = vst [vmem:[#allocation1] ss:$4 sm:$0xff] %v6059
    %6435 = vst [vmem:[%s6418] ss:$4 sm:$0xff] %v6060
    %6436 = vst [vmem:[%s6420] ss:$4 sm:$0xff] %v6061
    %6437 = vst [vmem:[%s6422] ss:$4 sm:$0xff] %v6062
    %6438 = vst [vmem:[%s6424] ss:$4 sm:$0xff] %v6063
    %6439 = vst [vmem:[%s6426] ss:$4 sm:$0xff] %v6064
    %6440 = vst [vmem:[%s6428] ss:$4 sm:$0xff] %v6065
    %6441 = vst [vmem:[%s6430] ss:$4 sm:$0xff] %v6066
    %v6442 = vld.sshfl [vmem:[#allocation1] sm:$0xff pattern:$0x73625140]
    %v6443 = vld.sshfl [vmem:[#allocation1 + $0x20] sm:$0xff pattern:$0x73625140]
    %v6444 = vrot.slane %v6432, 1
    %v6445 = vrot.slane %v6433, 1
    %v6446 = vsel %vm641, %v6444, %v6445
    %v6447 = vrot.slane %v6442, 1
    %v6448 = vrot.slane %v6443, 1
    %v6449 = vsel %vm641, %v6447, %v6448
    %v6454 = vsel %vm641, %v6445, 0.0
    %v6455 = vsel %vm641, %v6448, 0.0
    %s6456 = scalar_lea.vmem [#allocation31], 256
    %v6457 = vld [vmem:[%s6456] sm:$0xff]
    %v6458 = vld [vmem:[%s6456 + $0x8] sm:$0xff]
    %v6459 = vld [vmem:[%s6456 + $0x10] sm:$0xff]
    %v6460 = vld [vmem:[%s6456 + $0x18] sm:$0xff]
    %v6461 = vld [vmem:[%s6456 + $0x20] sm:$0xff]
    %v6462 = vld [vmem:[%s6456 + $0x28] sm:$0xff]
    %v6463 = vld [vmem:[%s6456 + $0x30] sm:$0xff]
    %v6464 = vld [vmem:[%s6456 + $0x38] sm:$0xff]
    %v6465 = vld [vmem:[%s6456 + $0x40] sm:$0xff]
    %v6466 = vld [vmem:[%s6456 + $0x48] sm:$0xff]
    %v6467 = vld [vmem:[%s6456 + $0x50] sm:$0xff]
    %v6468 = vld [vmem:[%s6456 + $0x58] sm:$0xff]
    %v6469 = vld [vmem:[%s6456 + $0x60] sm:$0xff]
    %v6470 = vld [vmem:[%s6456 + $0x68] sm:$0xff]
    %v6471 = vld [vmem:[%s6456 + $0x70] sm:$0xff]
    %v6472 = vld [vmem:[%s6456 + $0x78] sm:$0xff]
    %6473 = vmatpush.msra.mxu0 %v6472
    %6474 = vmatpush.msra.mxu0 %v6471
    %6475 = vmatpush.msra.mxu0 %v6470
    %6476 = vmatpush.msra.mxu0 %v6469
    %6477 = vmatpush.msra.mxu0 %v6468
    %6478 = vmatpush.msra.mxu0 %v6467
    %6479 = vmatpush.msra.mxu0 %v6466
    %6480 = vmatpush.msra.mxu0 %v6465
    %6481 = vmatpush.msra.mxu0 %v6464
    %6482 = vmatpush.msra.mxu0 %v6463
    %6483 = vmatpush.msra.mxu0 %v6462
    %6484 = vmatpush.msra.mxu0 %v6461
    %6485 = vmatpush.msra.mxu0 %v6460
    %6486 = vmatpush.msra.mxu0 %v6459
    %6487 = vmatpush.msra.mxu0 %v6458
    %6488 = vmatpush.msra.mxu0 %v6457
    %6489 = vmatmul.f32.gmra.mxu0 %v6446
    %v6490 = vpop.f32.mrf.mxu0
    %v6491 = vadd.f32 0.0, %v6490
    %6492 = vmatmul.f32.gmra.mxu0 %v6454
    %v6493 = vpop.f32.mrf.mxu0
    %v6494 = vadd.f32 0.0, %v6493
    %6495 = vmatmul.f32.gmra.mxu0 %v6449
    %v6496 = vpop.f32.mrf.mxu0
    %v6497 = vadd.f32 0.0, %v6496
    %6498 = vmatmul.f32.gmra.mxu0 %v6455
    %v6499 = vpop.f32.mrf.mxu0
    %v6500 = vadd.f32 0.0, %v6499
    %6501 = vdwg.mxu0
    %v6502 = vadd.f32 %v6413, %v6491
    %v6503 = vadd.f32 %v6414, %v6494
    %v6504 = vadd.f32 %v6415, %v6497
    %v6505 = vadd.f32 %v6416, %v6500
    %v6506 = vld [vmem:[%s95] sm:$0x1]
    %v6507 = vld [vmem:[%s97] sm:$0x1]
    %v6508 = vadd.f32 %v6502, %v6503
    %v6509 = vadd.f32 %v6508, %v6504
    %v6510 = vadd.f32 %v6509, %v6505
    %v6511 = vrot.slane %v6510, 4
    %v6512 = vadd.f32 %v6510, %v6511
    %v6513 = vrot.slane %v6512, 2
    %v6514 = vadd.f32 %v6512, %v6513
    %v6515 = vrot.slane %v6514, 1
    %v6516 = vadd.f32 %v6514, %v6515
    %v6517 = vmul.f32 %v6502, %v6502
    %v6518 = vmul.f32 %v6503, %v6503
    %v6519 = vmul.f32 %v6504, %v6504
    %v6520 = vmul.f32 %v6505, %v6505
    %v6521 = vadd.f32 %v6517, %v6518
    %v6522 = vadd.f32 %v6521, %v6519
    %v6523 = vadd.f32 %v6522, %v6520
    %v6524 = vrot.slane %v6523, 4
    %v6525 = vadd.f32 %v6523, %v6524
    %v6526 = vrot.slane %v6525, 2
    %v6527 = vadd.f32 %v6525, %v6526
    %v6528 = vrot.slane %v6527, 1
    %v6529 = vadd.f32 %v6527, %v6528
    %6530 = vmatpush.msra.mxu0 %v980
    %6531 = vmatpush.msra.mxu0 %v979
    %6532 = vmatpush.msra.mxu0 %v978
    %6533 = vmatpush.msra.mxu0 %v977
    %6534 = vmatpush.msra.mxu0 %v976
    %6535 = vmatpush.msra.mxu0 %v975
    %6536 = vmatpush.msra.mxu0 %v974
    %6537 = vmatpush.msra.mxu0 %v973
    %6538 = vmatpush.msra.mxu0 %v972
    %6539 = vmatpush.msra.mxu0 %v971
    %6540 = vmatpush.msra.mxu0 %v970
    %6541 = vmatpush.msra.mxu0 %v969
    %6542 = vmatpush.msra.mxu0 %v968
    %6543 = vmatpush.msra.mxu0 %v967
    %6544 = vmatpush.msra.mxu0 %v966
    %6545 = vmatpush.msra.mxu0 %v965
    %6546 = vmatmul.f32.gmra.mxu0 %v6516
    %v6547 = vpop.f32.mrf.mxu0
    %v6548 = vadd.f32 0.0, %v6547
    %6549 = vdwg.mxu0
    %6550 = vmatpush.msra.mxu0 %v980
    %6551 = vmatpush.msra.mxu0 %v979
    %6552 = vmatpush.msra.mxu0 %v978
    %6553 = vmatpush.msra.mxu0 %v977
    %6554 = vmatpush.msra.mxu0 %v976
    %6555 = vmatpush.msra.mxu0 %v975
    %6556 = vmatpush.msra.mxu0 %v974
    %6557 = vmatpush.msra.mxu0 %v973
    %6558 = vmatpush.msra.mxu0 %v972
    %6559 = vmatpush.msra.mxu0 %v971
    %6560 = vmatpush.msra.mxu0 %v970
    %6561 = vmatpush.msra.mxu0 %v969
    %6562 = vmatpush.msra.mxu0 %v968
    %6563 = vmatpush.msra.mxu0 %v967
    %6564 = vmatpush.msra.mxu0 %v966
    %6565 = vmatpush.msra.mxu0 %v965
    %6566 = vmatmul.f32.gmra.mxu0 %v6529
    %v6567 = vpop.f32.mrf.mxu0
    %v6568 = vadd.f32 0.0, %v6567
    %6569 = vdwg.mxu0
    %v6570 = vmul.f32 %v6548, %v1042
    %v6571 = vmul.f32 %v6568, %v1042
    %v6572 = vmul.f32 %v6570, %v6570
    %v6573 = vsub.f32 %v6571, %v6572
    %v6574 = vadd.f32 %v6573, 1e-05
    %v6575 = vrsqrt.pop %v6574
    %v6576 = vmul.f32 %v6575, %v6574
    %v6577 = vmul.f32 %v6576, %v6575
    %v6578 = vmul.f32 0.5, %v6577
    %v6579 = vsub.f32 1.5, %v6578
    %v6580 = vmul.f32 %v6575, %v6579
    %vm6581 = vweird.f32 %v6574
    %vm6582 = vweird.f32 %v6575
    %vm6583 = vmor %vm6581, %vm6582
    %v6584 = vsel %vm6583, %v6575, %v6580
    %v6585 = vmul.f32 %v6506, %v6584
    %v6586 = vmul.f32 %v6570, %v6585
    %v6587 = vsub.f32 %v6507, %v6586
    %v6589 = vsel %vm1061, %v6585, 0
    %6591 = vmatpush.msra.mxu0 0.0
    %6592 = vmatpush.msra.mxu0 0.0
    %6593 = vmatpush.msra.mxu0 0.0
    %6594 = vmatpush.msra.mxu0 0.0
    %6595 = vmatpush.msra.mxu0 0.0
    %6596 = vmatpush.msra.mxu0 0.0
    %6597 = vmatpush.msra.mxu0 0.0
    %6598 = vmatpush.msra.mxu0 0.0
    %6599 = vmatpush.msra.mxu0 0.0
    %6600 = vmatpush.msra.mxu0 0.0
    %6601 = vmatpush.msra.mxu0 0.0
    %6602 = vmatpush.msra.mxu0 0.0
    %6603 = vmatpush.msra.mxu0 0.0
    %6604 = vmatpush.msra.mxu0 0.0
    %6605 = vmatpush.msra.mxu0 0.0
    %6606 = vmatpush.msra.mxu0 %v995
    %6607 = vmatmul.f32.gmra.mxu0 %v6589
    %v6608 = vpop.f32.mrf.mxu0
    %v6609 = vadd.f32 0.0, %v6608
    %6610 = vdwg.mxu0
    %v6612 = vsel %vm1061, %v6587, 0
    %6614 = vmatpush.msra.mxu0 0.0
    %6615 = vmatpush.msra.mxu0 0.0
    %6616 = vmatpush.msra.mxu0 0.0
    %6617 = vmatpush.msra.mxu0 0.0
    %6618 = vmatpush.msra.mxu0 0.0
    %6619 = vmatpush.msra.mxu0 0.0
    %6620 = vmatpush.msra.mxu0 0.0
    %6621 = vmatpush.msra.mxu0 0.0
    %6622 = vmatpush.msra.mxu0 0.0
    %6623 = vmatpush.msra.mxu0 0.0
    %6624 = vmatpush.msra.mxu0 0.0
    %6625 = vmatpush.msra.mxu0 0.0
    %6626 = vmatpush.msra.mxu0 0.0
    %6627 = vmatpush.msra.mxu0 0.0
    %6628 = vmatpush.msra.mxu0 0.0
    %6629 = vmatpush.msra.mxu0 %v995
    %6630 = vmatmul.f32.gmra.mxu0 %v6612
    %v6631 = vpop.f32.mrf.mxu0
    %v6632 = vadd.f32 0.0, %v6631
    %6633 = vdwg.mxu0
    %v6634 = vperm.slane %v6609, 0
    %v6635 = vmul.f32 %v6502, %v6634
    %v6636 = vmul.f32 %v6503, %v6634
    %v6637 = vmul.f32 %v6504, %v6634
    %v6638 = vmul.f32 %v6505, %v6634
    %v6639 = vperm.slane %v6632, 0
    %v6640 = vadd.f32 %v6635, %v6639
    %v6641 = vadd.f32 %v6636, %v6639
    %v6642 = vadd.f32 %v6637, %v6639
    %v6643 = vadd.f32 %v6638, %v6639
    %vm6644 = vcmp.gt.f32.partialorder %v6640, 0.0
    %vm6645 = vcmp.gt.f32.partialorder %v6641, 0.0
    %vm6646 = vcmp.gt.f32.partialorder %v6642, 0.0
    %vm6647 = vcmp.gt.f32.partialorder %v6643, 0.0
    %v6648 = vmul.f32 %v6640, 0.03
    %v6649 = vmul.f32 %v6641, 0.03
    %v6650 = vmul.f32 %v6642, 0.03
    %v6651 = vmul.f32 %v6643, 0.03
    %v6652 = vsel %vm6644, %v6640, %v6648
    %v6653 = vsel %vm6645, %v6641, %v6649
    %v6654 = vsel %vm6646, %v6642, %v6650
    %v6655 = vsel %vm6647, %v6643, %v6651
    %v6660 = vrot.slane %v6652, 7
    %v6661 = vrot.slane %v6653, 7
    %v6662 = vsel %vm548, %v6660, %v6661
    %v6663 = vrot.slane %v6654, 7
    %v6664 = vrot.slane %v6655, 7
    %v6665 = vsel %vm548, %v6663, %v6664
    %v6670 = vsel %vm548, 0.0, %v6660
    %v6671 = vsel %vm548, 0.0, %v6663
    %v6672 = vld [vmem:[#allocation33] sm:$0xff]
    %v6673 = vld [vmem:[#allocation33 + $0x8] sm:$0xff]
    %v6674 = vld [vmem:[#allocation33 + $0x10] sm:$0xff]
    %v6675 = vld [vmem:[#allocation33 + $0x18] sm:$0xff]
    %v6676 = vld [vmem:[#allocation33 + $0x20] sm:$0xff]
    %v6677 = vld [vmem:[#allocation33 + $0x28] sm:$0xff]
    %v6678 = vld [vmem:[#allocation33 + $0x30] sm:$0xff]
    %v6679 = vld [vmem:[#allocation33 + $0x38] sm:$0xff]
    %v6680 = vld [vmem:[#allocation33 + $0x40] sm:$0xff]
    %v6681 = vld [vmem:[#allocation33 + $0x48] sm:$0xff]
    %v6682 = vld [vmem:[#allocation33 + $0x50] sm:$0xff]
    %v6683 = vld [vmem:[#allocation33 + $0x58] sm:$0xff]
    %v6684 = vld [vmem:[#allocation33 + $0x60] sm:$0xff]
    %v6685 = vld [vmem:[#allocation33 + $0x68] sm:$0xff]
    %v6686 = vld [vmem:[#allocation33 + $0x70] sm:$0xff]
    %v6687 = vld [vmem:[#allocation33 + $0x78] sm:$0xff]
    %s6688 = scalar_lea.vmem [#allocation33], 128
    %v6689 = vld [vmem:[%s6688] sm:$0xff]
    %v6690 = vld [vmem:[%s6688 + $0x8] sm:$0xff]
    %v6691 = vld [vmem:[%s6688 + $0x10] sm:$0xff]
    %v6692 = vld [vmem:[%s6688 + $0x18] sm:$0xff]
    %v6693 = vld [vmem:[%s6688 + $0x20] sm:$0xff]
    %v6694 = vld [vmem:[%s6688 + $0x28] sm:$0xff]
    %v6695 = vld [vmem:[%s6688 + $0x30] sm:$0xff]
    %v6696 = vld [vmem:[%s6688 + $0x38] sm:$0xff]
    %v6697 = vld [vmem:[%s6688 + $0x40] sm:$0xff]
    %v6698 = vld [vmem:[%s6688 + $0x48] sm:$0xff]
    %v6699 = vld [vmem:[%s6688 + $0x50] sm:$0xff]
    %v6700 = vld [vmem:[%s6688 + $0x58] sm:$0xff]
    %v6701 = vld [vmem:[%s6688 + $0x60] sm:$0xff]
    %v6702 = vld [vmem:[%s6688 + $0x68] sm:$0xff]
    %v6703 = vld [vmem:[%s6688 + $0x70] sm:$0xff]
    %v6704 = vld [vmem:[%s6688 + $0x78] sm:$0xff]
    %6705 = vmatpush.msra.mxu0 %v6704
    %6706 = vmatpush.msra.mxu0 %v6703
    %6707 = vmatpush.msra.mxu0 %v6702
    %6708 = vmatpush.msra.mxu0 %v6701
    %6709 = vmatpush.msra.mxu0 %v6700
    %6710 = vmatpush.msra.mxu0 %v6699
    %6711 = vmatpush.msra.mxu0 %v6698
    %6712 = vmatpush.msra.mxu0 %v6697
    %6713 = vmatpush.msra.mxu0 %v6696
    %6714 = vmatpush.msra.mxu0 %v6695
    %6715 = vmatpush.msra.mxu0 %v6694
    %6716 = vmatpush.msra.mxu0 %v6693
    %6717 = vmatpush.msra.mxu0 %v6692
    %6718 = vmatpush.msra.mxu0 %v6691
    %6719 = vmatpush.msra.mxu0 %v6690
    %6720 = vmatpush.msra.mxu0 %v6689
    %6721 = vmatmul.f32.gmra.mxu0 %v6652
    %v6722 = vpop.f32.mrf.mxu0
    %v6723 = vadd.f32 0.0, %v6722
    %6724 = vmatmul.f32.gmra.mxu0 %v6653
    %v6725 = vpop.f32.mrf.mxu0
    %v6726 = vadd.f32 0.0, %v6725
    %6727 = vmatmul.f32.gmra.mxu0 %v6654
    %v6728 = vpop.f32.mrf.mxu0
    %v6729 = vadd.f32 0.0, %v6728
    %6730 = vmatmul.f32.gmra.mxu0 %v6655
    %v6731 = vpop.f32.mrf.mxu0
    %v6732 = vadd.f32 0.0, %v6731
    %6733 = vdwg.mxu0
    %6734 = vmatpush.msra.mxu0 %v6687
    %6735 = vmatpush.msra.mxu0 %v6686
    %6736 = vmatpush.msra.mxu0 %v6685
    %6737 = vmatpush.msra.mxu0 %v6684
    %6738 = vmatpush.msra.mxu0 %v6683
    %6739 = vmatpush.msra.mxu0 %v6682
    %6740 = vmatpush.msra.mxu0 %v6681
    %6741 = vmatpush.msra.mxu0 %v6680
    %6742 = vmatpush.msra.mxu0 %v6679
    %6743 = vmatpush.msra.mxu0 %v6678
    %6744 = vmatpush.msra.mxu0 %v6677
    %6745 = vmatpush.msra.mxu0 %v6676
    %6746 = vmatpush.msra.mxu0 %v6675
    %6747 = vmatpush.msra.mxu0 %v6674
    %6748 = vmatpush.msra.mxu0 %v6673
    %6749 = vmatpush.msra.mxu0 %v6672
    %6750 = vmatmul.f32.gmra.mxu0 %v6670
    %v6751 = vpop.f32.mrf.mxu0
    %v6752 = vadd.f32 %v6723, %v6751
    %6753 = vmatmul.f32.gmra.mxu0 %v6662
    %v6754 = vpop.f32.mrf.mxu0
    %v6755 = vadd.f32 %v6726, %v6754
    %6756 = vmatmul.f32.gmra.mxu0 %v6671
    %v6757 = vpop.f32.mrf.mxu0
    %v6758 = vadd.f32 %v6729, %v6757
    %6759 = vmatmul.f32.gmra.mxu0 %v6665
    %v6760 = vpop.f32.mrf.mxu0
    %v6761 = vadd.f32 %v6732, %v6760
    %6762 = vdwg.mxu0
    %v6763 = vrot.slane %v6652, 1
    %v6764 = vrot.slane %v6653, 1
    %v6765 = vsel %vm641, %v6763, %v6764
    %v6766 = vrot.slane %v6654, 1
    %v6767 = vrot.slane %v6655, 1
    %v6768 = vsel %vm641, %v6766, %v6767
    %v6773 = vsel %vm641, %v6764, 0.0
    %v6774 = vsel %vm641, %v6767, 0.0
    %s6775 = scalar_lea.vmem [#allocation33], 256
    %v6776 = vld [vmem:[%s6775] sm:$0xff]
    %v6777 = vld [vmem:[%s6775 + $0x8] sm:$0xff]
    %v6778 = vld [vmem:[%s6775 + $0x10] sm:$0xff]
    %v6779 = vld [vmem:[%s6775 + $0x18] sm:$0xff]
    %v6780 = vld [vmem:[%s6775 + $0x20] sm:$0xff]
    %v6781 = vld [vmem:[%s6775 + $0x28] sm:$0xff]
    %v6782 = vld [vmem:[%s6775 + $0x30] sm:$0xff]
    %v6783 = vld [vmem:[%s6775 + $0x38] sm:$0xff]
    %v6784 = vld [vmem:[%s6775 + $0x40] sm:$0xff]
    %v6785 = vld [vmem:[%s6775 + $0x48] sm:$0xff]
    %v6786 = vld [vmem:[%s6775 + $0x50] sm:$0xff]
    %v6787 = vld [vmem:[%s6775 + $0x58] sm:$0xff]
    %v6788 = vld [vmem:[%s6775 + $0x60] sm:$0xff]
    %v6789 = vld [vmem:[%s6775 + $0x68] sm:$0xff]
    %v6790 = vld [vmem:[%s6775 + $0x70] sm:$0xff]
    %v6791 = vld [vmem:[%s6775 + $0x78] sm:$0xff]
    %6792 = vmatpush.msra.mxu0 %v6791
    %6793 = vmatpush.msra.mxu0 %v6790
    %6794 = vmatpush.msra.mxu0 %v6789
    %6795 = vmatpush.msra.mxu0 %v6788
    %6796 = vmatpush.msra.mxu0 %v6787
    %6797 = vmatpush.msra.mxu0 %v6786
    %6798 = vmatpush.msra.mxu0 %v6785
    %6799 = vmatpush.msra.mxu0 %v6784
    %6800 = vmatpush.msra.mxu0 %v6783
    %6801 = vmatpush.msra.mxu0 %v6782
    %6802 = vmatpush.msra.mxu0 %v6781
    %6803 = vmatpush.msra.mxu0 %v6780
    %6804 = vmatpush.msra.mxu0 %v6779
    %6805 = vmatpush.msra.mxu0 %v6778
    %6806 = vmatpush.msra.mxu0 %v6777
    %6807 = vmatpush.msra.mxu0 %v6776
    %6808 = vmatmul.f32.gmra.mxu0 %v6765
    %v6809 = vpop.f32.mrf.mxu0
    %v6810 = vadd.f32 0.0, %v6809
    %6811 = vmatmul.f32.gmra.mxu0 %v6773
    %v6812 = vpop.f32.mrf.mxu0
    %v6813 = vadd.f32 0.0, %v6812
    %6814 = vmatmul.f32.gmra.mxu0 %v6768
    %v6815 = vpop.f32.mrf.mxu0
    %v6816 = vadd.f32 0.0, %v6815
    %6817 = vmatmul.f32.gmra.mxu0 %v6774
    %v6818 = vpop.f32.mrf.mxu0
    %v6819 = vadd.f32 0.0, %v6818
    %6820 = vdwg.mxu0
    %v6821 = vadd.f32 %v6752, %v6810
    %v6822 = vadd.f32 %v6755, %v6813
    %v6823 = vadd.f32 %v6758, %v6816
    %v6824 = vadd.f32 %v6761, %v6819
    %v6825 = vld [vmem:[%s101] sm:$0x1]
    %v6826 = vld [vmem:[%s103] sm:$0x1]
    %v6827 = vadd.f32 %v6821, %v6822
    %v6828 = vadd.f32 %v6827, %v6823
    %v6829 = vadd.f32 %v6828, %v6824
    %v6830 = vrot.slane %v6829, 4
    %v6831 = vadd.f32 %v6829, %v6830
    %v6832 = vrot.slane %v6831, 2
    %v6833 = vadd.f32 %v6831, %v6832
    %v6834 = vrot.slane %v6833, 1
    %v6835 = vadd.f32 %v6833, %v6834
    %v6836 = vmul.f32 %v6821, %v6821
    %v6837 = vmul.f32 %v6822, %v6822
    %v6838 = vmul.f32 %v6823, %v6823
    %v6839 = vmul.f32 %v6824, %v6824
    %v6840 = vadd.f32 %v6836, %v6837
    %v6841 = vadd.f32 %v6840, %v6838
    %v6842 = vadd.f32 %v6841, %v6839
    %v6843 = vrot.slane %v6842, 4
    %v6844 = vadd.f32 %v6842, %v6843
    %v6845 = vrot.slane %v6844, 2
    %v6846 = vadd.f32 %v6844, %v6845
    %v6847 = vrot.slane %v6846, 1
    %v6848 = vadd.f32 %v6846, %v6847
    %6849 = vmatpush.msra.mxu0 %v980
    %6850 = vmatpush.msra.mxu0 %v979
    %6851 = vmatpush.msra.mxu0 %v978
    %6852 = vmatpush.msra.mxu0 %v977
    %6853 = vmatpush.msra.mxu0 %v976
    %6854 = vmatpush.msra.mxu0 %v975
    %6855 = vmatpush.msra.mxu0 %v974
    %6856 = vmatpush.msra.mxu0 %v973
    %6857 = vmatpush.msra.mxu0 %v972
    %6858 = vmatpush.msra.mxu0 %v971
    %6859 = vmatpush.msra.mxu0 %v970
    %6860 = vmatpush.msra.mxu0 %v969
    %6861 = vmatpush.msra.mxu0 %v968
    %6862 = vmatpush.msra.mxu0 %v967
    %6863 = vmatpush.msra.mxu0 %v966
    %6864 = vmatpush.msra.mxu0 %v965
    %6865 = vmatmul.f32.gmra.mxu0 %v6835
    %v6866 = vpop.f32.mrf.mxu0
    %v6867 = vadd.f32 0.0, %v6866
    %6868 = vdwg.mxu0
    %6869 = vmatpush.msra.mxu0 %v980
    %6870 = vmatpush.msra.mxu0 %v979
    %6871 = vmatpush.msra.mxu0 %v978
    %6872 = vmatpush.msra.mxu0 %v977
    %6873 = vmatpush.msra.mxu0 %v976
    %6874 = vmatpush.msra.mxu0 %v975
    %6875 = vmatpush.msra.mxu0 %v974
    %6876 = vmatpush.msra.mxu0 %v973
    %6877 = vmatpush.msra.mxu0 %v972
    %6878 = vmatpush.msra.mxu0 %v971
    %6879 = vmatpush.msra.mxu0 %v970
    %6880 = vmatpush.msra.mxu0 %v969
    %6881 = vmatpush.msra.mxu0 %v968
    %6882 = vmatpush.msra.mxu0 %v967
    %6883 = vmatpush.msra.mxu0 %v966
    %6884 = vmatpush.msra.mxu0 %v965
    %6885 = vmatmul.f32.gmra.mxu0 %v6848
    %v6886 = vpop.f32.mrf.mxu0
    %v6887 = vadd.f32 0.0, %v6886
    %6888 = vdwg.mxu0
    %v6889 = vmul.f32 %v6867, %v1042
    %v6890 = vmul.f32 %v6887, %v1042
    %v6891 = vmul.f32 %v6889, %v6889
    %v6892 = vsub.f32 %v6890, %v6891
    %v6893 = vadd.f32 %v6892, 1e-05
    %v6894 = vrsqrt.pop %v6893
    %v6895 = vmul.f32 %v6894, %v6893
    %v6896 = vmul.f32 %v6895, %v6894
    %v6897 = vmul.f32 0.5, %v6896
    %v6898 = vsub.f32 1.5, %v6897
    %v6899 = vmul.f32 %v6894, %v6898
    %vm6900 = vweird.f32 %v6893
    %vm6901 = vweird.f32 %v6894
    %vm6902 = vmor %vm6900, %vm6901
    %v6903 = vsel %vm6902, %v6894, %v6899
    %v6904 = vmul.f32 %v6825, %v6903
    %v6905 = vmul.f32 %v6889, %v6904
    %v6906 = vsub.f32 %v6826, %v6905
    %v6908 = vsel %vm1061, %v6904, 0
    %6910 = vmatpush.msra.mxu0 0.0
    %6911 = vmatpush.msra.mxu0 0.0
    %6912 = vmatpush.msra.mxu0 0.0
    %6913 = vmatpush.msra.mxu0 0.0
    %6914 = vmatpush.msra.mxu0 0.0
    %6915 = vmatpush.msra.mxu0 0.0
    %6916 = vmatpush.msra.mxu0 0.0
    %6917 = vmatpush.msra.mxu0 0.0
    %6918 = vmatpush.msra.mxu0 0.0
    %6919 = vmatpush.msra.mxu0 0.0
    %6920 = vmatpush.msra.mxu0 0.0
    %6921 = vmatpush.msra.mxu0 0.0
    %6922 = vmatpush.msra.mxu0 0.0
    %6923 = vmatpush.msra.mxu0 0.0
    %6924 = vmatpush.msra.mxu0 0.0
    %6925 = vmatpush.msra.mxu0 %v995
    %6926 = vmatmul.f32.gmra.mxu0 %v6908
    %v6927 = vpop.f32.mrf.mxu0
    %v6928 = vadd.f32 0.0, %v6927
    %6929 = vdwg.mxu0
    %v6931 = vsel %vm1061, %v6906, 0
    %6933 = vmatpush.msra.mxu0 0.0
    %6934 = vmatpush.msra.mxu0 0.0
    %6935 = vmatpush.msra.mxu0 0.0
    %6936 = vmatpush.msra.mxu0 0.0
    %6937 = vmatpush.msra.mxu0 0.0
    %6938 = vmatpush.msra.mxu0 0.0
    %6939 = vmatpush.msra.mxu0 0.0
    %6940 = vmatpush.msra.mxu0 0.0
    %6941 = vmatpush.msra.mxu0 0.0
    %6942 = vmatpush.msra.mxu0 0.0
    %6943 = vmatpush.msra.mxu0 0.0
    %6944 = vmatpush.msra.mxu0 0.0
    %6945 = vmatpush.msra.mxu0 0.0
    %6946 = vmatpush.msra.mxu0 0.0
    %6947 = vmatpush.msra.mxu0 0.0
    %6948 = vmatpush.msra.mxu0 %v995
    %6949 = vmatmul.f32.gmra.mxu0 %v6931
    %v6950 = vpop.f32.mrf.mxu0
    %v6951 = vadd.f32 0.0, %v6950
    %6952 = vdwg.mxu0
    %v6953 = vperm.slane %v6928, 0
    %v6954 = vmul.f32 %v6821, %v6953
    %v6955 = vmul.f32 %v6822, %v6953
    %v6956 = vmul.f32 %v6823, %v6953
    %v6957 = vmul.f32 %v6824, %v6953
    %v6958 = vperm.slane %v6951, 0
    %v6959 = vadd.f32 %v6954, %v6958
    %v6960 = vadd.f32 %v6955, %v6958
    %v6961 = vadd.f32 %v6956, %v6958
    %v6962 = vadd.f32 %v6957, %v6958
    %vm6963 = vcmp.gt.f32.partialorder %v6959, 0.0
    %vm6964 = vcmp.gt.f32.partialorder %v6960, 0.0
    %vm6965 = vcmp.gt.f32.partialorder %v6961, 0.0
    %vm6966 = vcmp.gt.f32.partialorder %v6962, 0.0
    %v6967 = vmul.f32 %v6959, 0.03
    %v6968 = vmul.f32 %v6960, 0.03
    %v6969 = vmul.f32 %v6961, 0.03
    %v6970 = vmul.f32 %v6962, 0.03
    %v6971 = vsel %vm6963, %v6959, %v6967
    %v6972 = vsel %vm6964, %v6960, %v6968
    %v6973 = vsel %vm6965, %v6961, %v6969
    %v6974 = vsel %vm6966, %v6962, %v6970
    %6975 = vst [vmem:[%s105] sm:$0xff] %v6971
    %6976 = vst [vmem:[%s105 + $0x8] sm:$0xff] %v6972
    %6977 = vst [vmem:[%s105 + $0x10] sm:$0xff] %v6973
    %6978 = vst [vmem:[%s105 + $0x18] sm:$0xff] %v6974
    // Predicated region
    $region294: #{cropped_unet_forward.1} parent=1 // pred_check
      _
    $region295: #{cropped_unet_forward.1} parent=1 // pred_check_branch
      %6980 = sbr.rel (0) target = $region297
    $region296: #{cropped_unet_forward.1} parent=1 // pred_region
      _
    $region297: #{cropped_unet_forward.1} parent=1 // pred_fallthru
      _
    // Predicated region
    $region298: #{cropped_unet_forward.1} parent=1 // pred_check
      _
    $region299: #{cropped_unet_forward.1} parent=1 // pred_check_branch
      %6982 = sbr.rel (0) target = $region301
    $region300: #{cropped_unet_forward.1} parent=1 // pred_region
      _
    $region301: #{cropped_unet_forward.1} parent=1 // pred_fallthru
      _
    %6983 = vsyncpa [#allocation3], 1
    %6984 = vsyncpa [#allocation5], 1
    %6985 = vsyncpa [#allocation8], 1
    %6986 = vsyncpa [#allocation11], 1
    %6987 = vsyncpa [#allocation14], 1
    %6988 = vsyncpa [#allocation17], 1
    %6989 = vsyncpa [#allocation20], 1
    %6990 = vsyncpa [#allocation23], 1
    %6991 = vsyncpa [#allocation26], 1
    %6992 = vsyncpa [#allocation29], 1
    %6993 = vsyncpa [#allocation32], 1

</llo_original>
